<compile_context>
chip_gen: v7x
topology: tpu7x:2x2x1
jax: 0.10.0
libtpu: 0.0.40
codegen_flags: <defaults>
</compile_context>

<pallas_src>
import numpy as np
import jax
import jax.numpy as jnp
from jax.experimental import pallas as pl
from jax.experimental.pallas import tpu as pltpu

C_IN = 28 * 28           # 784, fixed by get_mask()
N_HIDDEN = 1024          # Coupling default n_hidden
N_FLOWS = 4              # Flow default n_flows
N_LAYERS = 2 * N_FLOWS   # 8 Coupling layers total

H = 512                  # one mask-parity half: 392 live features padded to 4*128 lanes
D2 = 2 * H               # permuted feature width carried through the kernel


def get_mask():
    """Checkerboard mask, identical to the PyTorch get_mask()."""
    i = np.arange(28).reshape(28, 1)
    j = np.arange(28).reshape(1, 28)
    mask = ((i + j) % 2 == 0).astype(np.float32)
    return mask.reshape(1, 28 * 28)


_MASK_FLAT = get_mask().reshape(-1)
IDX1 = np.where(_MASK_FLAT == 1.0)[0]    # 392 features where mask == 1
IDX0 = np.where(_MASK_FLAT == 0.0)[0]    # 392 features where mask == 0
N_LIVE = int(IDX1.shape[0])              # 392


# ----------------------------- Pallas kernel ---------------------------------
def flow_kernel(z_in_ref, ldj_in_ref,
                w1_ref, b1_ref, w2_ref, b2_ref, wh_ref, bh_ref,
                z_ref, ldj_ref):
    """One grid step == one Coupling layer (reverse=False).

    z layout at the START of every step is [live half | dead half] for THIS
    layer's mask parity; halves are swapped on write-back so the next
    (opposite-parity) layer again sees [live | dead].  z / ldj are carried in
    resident output blocks across the layer axis while the BlockSpec pipeline
    streams the next layer's compacted bf16 weights.
    """
    layer = pl.program_id(0)

    @pl.when(layer == 0)
    def _():
        z_ref[...] = z_in_ref[...]
        ldj_ref[...] = ldj_in_ref[...]

    z = z_ref[...]                       # [B, 2H] f32, pad lanes identically 0
    z_live = z[:, :H]                    # == masked_z restricted to live lanes
    z_dead = z[:, H:]

    # self._nn: Linear -> ReLU -> Linear -> ReLU   (native bf16 x bf16 MXU)
    h1 = jnp.dot(z_live.astype(jnp.bfloat16), w1_ref[...],
                 preferred_element_type=jnp.float32) + b1_ref[...]
    h1 = jnp.maximum(h1, 0.0)
    h2 = jnp.dot(h1.astype(jnp.bfloat16), w2_ref[...],
                 preferred_element_type=jnp.float32) + b2_ref[...]
    h2 = jnp.maximum(h2, 0.0)

    # translation | scale heads fused and compacted to the dead half only
    heads = jnp.dot(h2.astype(jnp.bfloat16), wh_ref[...],
                    preferred_element_type=jnp.float32) + bh_ref[...]
    t = heads[:, :H]
    s = jnp.tanh(heads[:, H:])           # pad columns are exactly 0 -> tanh -> 0

    # forward (reverse=False) coupling update; live half passes through unchanged
    new_dead = z_dead * jnp.exp(s) + t
    # swap halves: the next layer's live half is this layer's dead half
    z_ref[...] = jnp.concatenate([new_dead, z_live], axis=1)
    ldj_ref[...] = ldj_ref[...] + jnp.sum(s, axis=1, keepdims=True)


def _layer_spec(per_layer_shape):
    """Stacked-over-layers array: leading layer axis squeezed, rest full."""
    nd = len(per_layer_shape)
    return pl.BlockSpec((pl.Squeezed(),) + tuple(per_layer_shape),
                        lambda l, _nd=nd: (l,) + (0,) * _nd)


def _resident_spec(shape):
    """Full array, constant block index -> DMA once / stays resident."""
    nd = len(shape)
    return pl.BlockSpec(tuple(shape), lambda l, _nd=nd: (0,) * _nd)


def flow_forward(z, logdet, stacked):
    """Flow.forward with reverse=False: all 2*n_flows Coupling layers fused
    into one pallas_call with a sequential layer grid axis."""
    B = z.shape[0]
    w1, b1, w2, b2, wh, bh = stacked

    # one-time feature permutation: [mask==1 half | mask==0 half], zero-padded
    z_perm = jnp.zeros((B, D2), jnp.float32)
    z_perm = z_perm.at[:, :N_LIVE].set(z[:, IDX1])
    z_perm = z_perm.at[:, H:H + N_LIVE].set(z[:, IDX0])
    ldj2d = logdet.reshape(-1, 1)

    z_o, ldj_o = pl.pallas_call(
        flow_kernel,
        out_shape=(jax.ShapeDtypeStruct((B, D2), jnp.float32),
                   jax.ShapeDtypeStruct((B, 1), jnp.float32)),
        grid=(N_LAYERS,),
        in_specs=[
            _resident_spec((B, D2)),              # z_in (DMA'd once)
            _resident_spec((B, 1)),               # logdet_in
            _layer_spec((H, N_HIDDEN)),           # compact w1          (bf16)
            _layer_spec((1, N_HIDDEN)),           # b1                  (f32)
            _layer_spec((N_HIDDEN, N_HIDDEN)),    # w2                  (bf16)
            _layer_spec((1, N_HIDDEN)),           # b2                  (f32)
            _layer_spec((N_HIDDEN, D2)),          # compact wt|ws fused (bf16)
            _layer_spec((1, D2)),                 # compact bt|bs fused (f32)
        ],
        out_specs=(_resident_spec((B, D2)),
                   _resident_spec((B, 1))),
        compiler_params=pltpu.CompilerParams(
            dimension_semantics=("arbitrary",),
            # ~11 MiB steady state (2x-buffered ~5 MiB bf16 weights + residents)
            vmem_limit_bytes=32 * 1024 * 1024),
    )(z_perm, ldj2d, w1, b1, w2, b2, wh, bh)

    # undo the permutation (after an even number of layers the layout is back
    # to [mask==1 half | mask==0 half])
    z_out = jnp.zeros((B, C_IN), jnp.float32)
    z_out = z_out.at[:, IDX1].set(z_o[:, :N_LIVE])
    z_out = z_out.at[:, IDX0].set(z_o[:, H:H + N_LIVE])
    return z_out, ldj_o.reshape(-1)


# --------------------------- parameter construction --------------------------
def init_coupling_params(key, c_in, n_hidden):
    """Deterministic init matching Coupling.__init__ shapes.

    NOTE: the PyTorch module zero-initializes the scale/translation heads
    (which makes the forward numerically a no-op); small random values are used
    here so the exp/tanh/log-det path is actually exercised.  Weight matrices
    are rounded to bf16 (their storage/streaming dtype); biases stay f32.
    """
    ks = jax.random.split(key, 8)

    def lin(kw, kb, fan_in, fan_out, gain=1.0):
        bound = gain / np.sqrt(fan_in)
        w = jax.random.uniform(kw, (fan_in, fan_out), jnp.float32, -bound, bound)
        b = jax.random.uniform(kb, (1, fan_out), jnp.float32, -bound, bound)
        return w.astype(jnp.bfloat16), b

    w1, b1 = lin(ks[0], ks[1], c_in, n_hidden)
    w2, b2 = lin(ks[2], ks[3], n_hidden, n_hidden)
    wt, bt = lin(ks[4], ks[5], n_hidden, c_in, gain=0.1)   # translation head
    ws, bs = lin(ks[6], ks[7], n_hidden, c_in, gain=0.1)   # scale head (pre-tanh)
    return (w1, b1, w2, b2, wt, bt, ws, bs)


def stack_layer_params(layer_params):
    """Mask-aware compaction + head fusion + stacking over a leading layer axis.

    For layer l the 'live' features are IDX1 (even l) / IDX0 (odd l).  Only the
    live rows of w1 (the rest are multiplied by 0 = masked-out z) and the dead
    columns of the t/s heads (the rest are killed by (1-mask)) survive; both
    are zero-padded 392 -> 512 lanes so every tile stays lane-dense.
    """
    w1_s, b1_s, w2_s, b2_s, wh_s, bh_s = [], [], [], [], [], []
    for l, (w1, b1, w2, b2, wt, bt, ws, bs) in enumerate(layer_params):
        idx_live = IDX1 if l % 2 == 0 else IDX0
        idx_dead = IDX0 if l % 2 == 0 else IDX1

        w1c = jnp.zeros((H, N_HIDDEN), jnp.bfloat16)
        w1c = w1c.at[:N_LIVE, :].set(w1[idx_live, :])

        whc = jnp.zeros((N_HIDDEN, D2), jnp.bfloat16)
        whc = whc.at[:, :N_LIVE].set(wt[:, idx_dead])
        whc = whc.at[:, H:H + N_LIVE].set(ws[:, idx_dead])

        bhc = jnp.zeros((1, D2), jnp.float32)
        bhc = bhc.at[:, :N_LIVE].set(bt[:, idx_dead])
        bhc = bhc.at[:, H:H + N_LIVE].set(bs[:, idx_dead])

        w1_s.append(w1c); b1_s.append(b1)
        w2_s.append(w2);  b2_s.append(b2)
        wh_s.append(whc); bh_s.append(bhc)
    return (jnp.stack(w1_s), jnp.stack(b1_s), jnp.stack(w2_s),
            jnp.stack(b2_s), jnp.stack(wh_s), jnp.stack(bh_s))


# ------------------------------ pure-JAX reference ---------------------------
def coupling_ref(z, ldj2d, mask, params):
    """Reference on the unpadded / unpermuted layout.  Activations are rounded
    to bf16 before each matmul to mirror the kernel's native bf16 MXU math
    (same bf16-rounded weights); dots accumulate in f32 (HIGHEST)."""
    w1, b1, w2, b2, wt, bt, ws, bs = params
    f32 = jnp.float32
    hp = jax.lax.Precision.HIGHEST
    bf = lambda a: a.astype(jnp.bfloat16).astype(f32)
    masked_z = z * mask
    h1 = jax.nn.relu(jnp.dot(bf(masked_z), w1.astype(f32), precision=hp) + b1)
    h2 = jax.nn.relu(jnp.dot(bf(h1), w2.astype(f32), precision=hp) + b2)
    t = jnp.dot(bf(h2), wt.astype(f32), precision=hp) + bt
    s = jnp.tanh(jnp.dot(bf(h2), ws.astype(f32), precision=hp) + bs)
    inv = 1.0 - mask
    z_new = masked_z + inv * (z * jnp.exp(s) + t)
    ldj_new = ldj2d + jnp.sum(inv * s, axis=1, keepdims=True)
    return z_new, ldj_new


# ------------------------------------ main ------------------------------------
if __name__ == "__main__":
    key = jax.random.PRNGKey(0)
    kz, kp = jax.random.split(key, 2)

    B = 8                                      # small batch (sublane-aligned)
    z = jax.random.normal(kz, (B, C_IN), jnp.float32)
    logdet = jnp.zeros((B,), jnp.float32)

    pkeys = jax.random.split(kp, N_LAYERS)
    layer_params = [init_coupling_params(pkeys[i], C_IN, N_HIDDEN)
                    for i in range(N_LAYERS)]
    stacked = stack_layer_params(layer_params)

    # Fused Pallas kernel (single pallas_call for the whole 8-layer chain)
    flow_fn = jax.jit(lambda zz, ld: flow_forward(zz, ld, stacked))
    z_out, ldj_out = flow_fn(z, logdet)
    jax.block_until_ready((z_out, ldj_out))

    # Reference check: chain the per-layer reference with alternating masks
    mask1 = jnp.asarray(get_mask())
    masks784 = []
    for _ in range(N_FLOWS):
        masks784.append(mask1)
        masks784.append(1.0 - mask1)

    z_ref, ldj_ref = z, logdet.reshape(-1, 1)
    for m, p in zip(masks784, layer_params):
        z_ref, ldj_ref = coupling_ref(z_ref, ldj_ref, m, p)
    ldj_ref = ldj_ref.reshape(-1)

    np.testing.assert_allclose(np.asarray(z_out), np.asarray(z_ref),
                               rtol=5e-3, atol=5e-3)
    np.testing.assert_allclose(np.asarray(ldj_out), np.asarray(ldj_ref),
                               rtol=5e-3, atol=5e-3)

    # TODO(synk): reverse=True (inverse) branch of Flow.forward is not implemented.
    print("KERNEL_OK")
</pallas_src>

<mosaic_0001>
module attributes {stable_mosaic.version = 11 : i64} {
  func.func @flow_kernel(%arg0: i32, %arg1: memref<8x1024xf32, #tpu.memory_space<vmem>>, %arg2: memref<8x1xf32, #tpu.memory_space<vmem>>, %arg3: memref<1x512x1024xbf16, #tpu.memory_space<vmem>>, %arg4: memref<1x1x1024xf32, #tpu.memory_space<vmem>>, %arg5: memref<1x1024x1024xbf16, #tpu.memory_space<vmem>>, %arg6: memref<1x1x1024xf32, #tpu.memory_space<vmem>>, %arg7: memref<1x1024x1024xbf16, #tpu.memory_space<vmem>>, %arg8: memref<1x1x1024xf32, #tpu.memory_space<vmem>>, %arg9: memref<8x1024xf32, #tpu.memory_space<vmem>>, %arg10: memref<8x1xf32, #tpu.memory_space<vmem>>) attributes {dimension_semantics = [#tpu.dimension_semantics<arbitrary>], iteration_bounds = array<i64: 8>, scalar_prefetch = 0 : i64, scratch_operands = 0 : i64, tpu.core_type = #tpu.core_type<tc>, window_params = [{pipeline_mode = #tpu.pipeline_mode<synchronous>, transform_indices = @transform_0, window_bounds = array<i64: 8, 1024>}, {pipeline_mode = #tpu.pipeline_mode<synchronous>, transform_indices = @transform_1, window_bounds = array<i64: 8, 1>}, {transform_indices = @transform_2, window_bounds = array<i64: 1, 512, 1024>}, {transform_indices = @transform_3, window_bounds = array<i64: 1, 1, 1024>}, {transform_indices = @transform_4, window_bounds = array<i64: 1, 1024, 1024>}, {transform_indices = @transform_5, window_bounds = array<i64: 1, 1, 1024>}, {transform_indices = @transform_6, window_bounds = array<i64: 1, 1024, 1024>}, {transform_indices = @transform_7, window_bounds = array<i64: 1, 1, 1024>}, {pipeline_mode = #tpu.pipeline_mode<synchronous>, transform_indices = @transform_8, window_bounds = array<i64: 8, 1024>}, {pipeline_mode = #tpu.pipeline_mode<synchronous>, transform_indices = @transform_9, window_bounds = array<i64: 8, 1>}]} {
    %c0_i32 = arith.constant 0 : i32
    %0 = arith.cmpi eq, %arg0, %c0_i32 : i32
    %1 = arith.extui %0 : i1 to i32
    %c0_i32_0 = arith.constant 0 : i32
    %2 = arith.cmpi ne, %1, %c0_i32_0 : i32
    scf.if %2 {
      %c0_31 = arith.constant 0 : index
      %c0_32 = arith.constant 0 : index
      %47 = vector.load %arg1[%c0_31, %c0_32] : memref<8x1024xf32, #tpu.memory_space<vmem>>, vector<8x1024xf32>
      %c0_33 = arith.constant 0 : index
      %c0_34 = arith.constant 0 : index
      %48 = vector.load %arg9[%c0_33, %c0_34] : memref<8x1024xf32, #tpu.memory_space<vmem>>, vector<8x1024xf32>
      tpu.vector_store %arg9[%c0_33, %c0_34], %47 {strides = array<i32>} : memref<8x1024xf32, #tpu.memory_space<vmem>>, vector<8x1024xf32>,
      %c0_35 = arith.constant 0 : index
      %c0_36 = arith.constant 0 : index
      %49 = vector.load %arg2[%c0_35, %c0_36] : memref<8x1xf32, #tpu.memory_space<vmem>>, vector<8x1xf32>
      %c0_37 = arith.constant 0 : index
      %c0_38 = arith.constant 0 : index
      %50 = vector.load %arg10[%c0_37, %c0_38] : memref<8x1xf32, #tpu.memory_space<vmem>>, vector<8x1xf32>
      tpu.vector_store %arg10[%c0_37, %c0_38], %49 {strides = array<i32>} : memref<8x1xf32, #tpu.memory_space<vmem>>, vector<8x1xf32>,
    } else {
    }
    %c0 = arith.constant 0 : index
    %c0_1 = arith.constant 0 : index
    %3 = vector.load %arg9[%c0, %c0_1] : memref<8x1024xf32, #tpu.memory_space<vmem>>, vector<8x1024xf32>
    %4 = vector.extract_strided_slice %3 {offsets = [0, 0], sizes = [8, 512], strides = [1, 1]} : vector<8x1024xf32> to vector<8x512xf32>
    %5 = vector.extract_strided_slice %3 {offsets = [0, 512], sizes = [8, 512], strides = [1, 1]} : vector<8x1024xf32> to vector<8x512xf32>
    %6 = arith.truncf %4 : vector<8x512xf32> to vector<8x512xbf16>
    %c0_2 = arith.constant 0 : index
    %c0_3 = arith.constant 0 : index
    %c0_4 = arith.constant 0 : index
    %7 = vector.load %arg3[%c0_2, %c0_3, %c0_4] : memref<1x512x1024xbf16, #tpu.memory_space<vmem>>, vector<1x512x1024xbf16>
    %8 = vector.shape_cast %7 : vector<1x512x1024xbf16> to vector<512x1024xbf16>
    %cst = arith.constant dense<0.000000e+00> : vector<8x1024xf32>
    %9 = tpu.matmul %6, %8, %cst {dimension_numbers = #tpu.dot_dimension_numbers<[1], [0], [0], [1], [0, 0, 1, 1], [], []>} : vector<8x512xbf16>, vector<512x1024xbf16>, vector<8x1024xf32> -> vector<8x1024xf32>
    %c0_5 = arith.constant 0 : index
    %c0_6 = arith.constant 0 : index
    %c0_7 = arith.constant 0 : index
    %10 = vector.load %arg4[%c0_5, %c0_6, %c0_7] : memref<1x1x1024xf32, #tpu.memory_space<vmem>>, vector<1x1x1024xf32>
    %11 = vector.shape_cast %10 : vector<1x1x1024xf32> to vector<1x1024xf32>
    %12 = vector.broadcast %11 : vector<1x1024xf32> to vector<8x1024xf32>
    %13 = arith.addf %9, %12 : vector<8x1024xf32>
    %cst_8 = arith.constant 0.000000e+00 : f32
    %14 = vector.broadcast %cst_8 : f32 to vector<8x1024xf32>
    %15 = arith.maximumf %13, %14 : vector<8x1024xf32>
    %16 = arith.truncf %15 : vector<8x1024xf32> to vector<8x1024xbf16>
    %c0_9 = arith.constant 0 : index
    %c0_10 = arith.constant 0 : index
    %c0_11 = arith.constant 0 : index
    %17 = vector.load %arg5[%c0_9, %c0_10, %c0_11] : memref<1x1024x1024xbf16, #tpu.memory_space<vmem>>, vector<1x1024x1024xbf16>
    %18 = vector.shape_cast %17 : vector<1x1024x1024xbf16> to vector<1024x1024xbf16>
    %cst_12 = arith.constant dense<0.000000e+00> : vector<8x1024xf32>
    %19 = tpu.matmul %16, %18, %cst_12 {dimension_numbers = #tpu.dot_dimension_numbers<[1], [0], [0], [1], [0, 0, 1, 1], [], []>} : vector<8x1024xbf16>, vector<1024x1024xbf16>, vector<8x1024xf32> -> vector<8x1024xf32>
    %c0_13 = arith.constant 0 : index
    %c0_14 = arith.constant 0 : index
    %c0_15 = arith.constant 0 : index
    %20 = vector.load %arg6[%c0_13, %c0_14, %c0_15] : memref<1x1x1024xf32, #tpu.memory_space<vmem>>, vector<1x1x1024xf32>
    %21 = vector.shape_cast %20 : vector<1x1x1024xf32> to vector<1x1024xf32>
    %22 = vector.broadcast %21 : vector<1x1024xf32> to vector<8x1024xf32>
    %23 = arith.addf %19, %22 : vector<8x1024xf32>
    %cst_16 = arith.constant 0.000000e+00 : f32
    %24 = vector.broadcast %cst_16 : f32 to vector<8x1024xf32>
    %25 = arith.maximumf %23, %24 : vector<8x1024xf32>
    %26 = arith.truncf %25 : vector<8x1024xf32> to vector<8x1024xbf16>
    %c0_17 = arith.constant 0 : index
    %c0_18 = arith.constant 0 : index
    %c0_19 = arith.constant 0 : index
    %27 = vector.load %arg7[%c0_17, %c0_18, %c0_19] : memref<1x1024x1024xbf16, #tpu.memory_space<vmem>>, vector<1x1024x1024xbf16>
    %28 = vector.shape_cast %27 : vector<1x1024x1024xbf16> to vector<1024x1024xbf16>
    %cst_20 = arith.constant dense<0.000000e+00> : vector<8x1024xf32>
    %29 = tpu.matmul %26, %28, %cst_20 {dimension_numbers = #tpu.dot_dimension_numbers<[1], [0], [0], [1], [0, 0, 1, 1], [], []>} : vector<8x1024xbf16>, vector<1024x1024xbf16>, vector<8x1024xf32> -> vector<8x1024xf32>
    %c0_21 = arith.constant 0 : index
    %c0_22 = arith.constant 0 : index
    %c0_23 = arith.constant 0 : index
    %30 = vector.load %arg8[%c0_21, %c0_22, %c0_23] : memref<1x1x1024xf32, #tpu.memory_space<vmem>>, vector<1x1x1024xf32>
    %31 = vector.shape_cast %30 : vector<1x1x1024xf32> to vector<1x1024xf32>
    %32 = vector.broadcast %31 : vector<1x1024xf32> to vector<8x1024xf32>
    %33 = arith.addf %29, %32 : vector<8x1024xf32>
    %34 = vector.extract_strided_slice %33 {offsets = [0, 0], sizes = [8, 512], strides = [1, 1]} : vector<8x1024xf32> to vector<8x512xf32>
    %35 = vector.extract_strided_slice %33 {offsets = [0, 512], sizes = [8, 512], strides = [1, 1]} : vector<8x1024xf32> to vector<8x512xf32>
    %36 = math.tanh %35 : vector<8x512xf32>
    %37 = math.exp %36 : vector<8x512xf32>
    %38 = arith.mulf %5, %37 : vector<8x512xf32>
    %39 = arith.addf %38, %34 : vector<8x512xf32>
    %40 = tpu.concatenate %39, %4 in 1 : vector<8x512xf32>, vector<8x512xf32> -> vector<8x1024xf32>
    %c0_24 = arith.constant 0 : index
    %c0_25 = arith.constant 0 : index
    %41 = vector.load %arg9[%c0_24, %c0_25] : memref<8x1024xf32, #tpu.memory_space<vmem>>, vector<8x1024xf32>
    tpu.vector_store %arg9[%c0_24, %c0_25], %40 {strides = array<i32>} : memref<8x1024xf32, #tpu.memory_space<vmem>>, vector<8x1024xf32>,
    %c0_26 = arith.constant 0 : index
    %c0_27 = arith.constant 0 : index
    %42 = vector.load %arg10[%c0_26, %c0_27] : memref<8x1xf32, #tpu.memory_space<vmem>>, vector<8x1xf32>
    %cst_28 = arith.constant dense<0.000000e+00> : vector<8xf32>
    %43 = vector.multi_reduction <add>, %36, %cst_28 [1] : vector<8x512xf32> to vector<8xf32>
    %44 = vector.shape_cast %43 : vector<8xf32> to vector<8x1xf32>
    %45 = arith.addf %42, %44 : vector<8x1xf32>
    %c0_29 = arith.constant 0 : index
    %c0_30 = arith.constant 0 : index
    %46 = vector.load %arg10[%c0_29, %c0_30] : memref<8x1xf32, #tpu.memory_space<vmem>>, vector<8x1xf32>
    tpu.vector_store %arg10[%c0_29, %c0_30], %45 {strides = array<i32>} : memref<8x1xf32, #tpu.memory_space<vmem>>, vector<8x1xf32>,
    return
  }
  func.func @transform_0(%arg0: i32) -> (i32, i32) {
    %c0_i32 = arith.constant 0 : i32
    %c0_i32_0 = arith.constant 0 : i32
    %c0_i32_1 = arith.constant 0 : i32
    return %c0_i32, %c0_i32_0 : i32, i32
  }
  func.func @transform_1(%arg0: i32) -> (i32, i32) {
    %c0_i32 = arith.constant 0 : i32
    %c0_i32_0 = arith.constant 0 : i32
    %c0_i32_1 = arith.constant 0 : i32
    return %c0_i32, %c0_i32_0 : i32, i32
  }
  func.func @transform_2(%arg0: i32) -> (i32, i32, i32) {
    %c0_i32 = arith.constant 0 : i32
    %c0_i32_0 = arith.constant 0 : i32
    %c0_i32_1 = arith.constant 0 : i32
    return %arg0, %c0_i32, %c0_i32_0 : i32, i32, i32
  }
  func.func @transform_3(%arg0: i32) -> (i32, i32, i32) {
    %c0_i32 = arith.constant 0 : i32
    %c0_i32_0 = arith.constant 0 : i32
    %c0_i32_1 = arith.constant 0 : i32
    return %arg0, %c0_i32, %c0_i32_0 : i32, i32, i32
  }
  func.func @transform_4(%arg0: i32) -> (i32, i32, i32) {
    %c0_i32 = arith.constant 0 : i32
    %c0_i32_0 = arith.constant 0 : i32
    %c0_i32_1 = arith.constant 0 : i32
    return %arg0, %c0_i32, %c0_i32_0 : i32, i32, i32
  }
  func.func @transform_5(%arg0: i32) -> (i32, i32, i32) {
    %c0_i32 = arith.constant 0 : i32
    %c0_i32_0 = arith.constant 0 : i32
    %c0_i32_1 = arith.constant 0 : i32
    return %arg0, %c0_i32, %c0_i32_0 : i32, i32, i32
  }
  func.func @transform_6(%arg0: i32) -> (i32, i32, i32) {
    %c0_i32 = arith.constant 0 : i32
    %c0_i32_0 = arith.constant 0 : i32
    %c0_i32_1 = arith.constant 0 : i32
    return %arg0, %c0_i32, %c0_i32_0 : i32, i32, i32
  }
  func.func @transform_7(%arg0: i32) -> (i32, i32, i32) {
    %c0_i32 = arith.constant 0 : i32
    %c0_i32_0 = arith.constant 0 : i32
    %c0_i32_1 = arith.constant 0 : i32
    return %arg0, %c0_i32, %c0_i32_0 : i32, i32, i32
  }
  func.func @transform_8(%arg0: i32) -> (i32, i32) {
    %c0_i32 = arith.constant 0 : i32
    %c0_i32_0 = arith.constant 0 : i32
    %c0_i32_1 = arith.constant 0 : i32
    return %c0_i32, %c0_i32_0 : i32, i32
  }
  func.func @transform_9(%arg0: i32) -> (i32, i32) {
    %c0_i32 = arith.constant 0 : i32
    %c0_i32_0 = arith.constant 0 : i32
    %c0_i32_1 = arith.constant 0 : i32
    return %c0_i32, %c0_i32_0 : i32, i32
  }
}

</mosaic_0001>

<llo_original>
// kernel: _lambda_.1
$region0: #{_lambda_.1}
  #allocation0 [shape = 'u32[]', space=smem, size = 0x4, offset = 0x4, fixed_abs, tag = 'smem constant byte address 0x4 - core index']
  #allocation1 [shape = 'u32[144,128]{1,0:T(1,128)}', space=vmem, size = 0x12000, scoped, tag = 'internal scratch']
  %s0 = inlined_call_operand.hbm [shape: f32[8,1024], index: 0, kind: input, shape index: {}]
  %s1 = inlined_call_operand.hbm [shape: f32[8,1], index: 1, kind: input, shape index: {}]
  %s2 = inlined_call_operand.hbm [shape: bf16[8,512,1024], index: 2, kind: input, shape index: {}]
  %s3 = inlined_call_operand.hbm [shape: f32[8,1,1024], index: 3, kind: input, shape index: {}]
  %s4 = inlined_call_operand.vmem [shape: bf16[8,1024,1024], index: 4, kind: input, shape index: {}]
  %s5 = inlined_call_operand.hbm [shape: f32[8,1,1024], index: 5, kind: input, shape index: {}]
  %s6 = inlined_call_operand.vmem [shape: bf16[8,1024,1024], index: 6, kind: input, shape index: {}]
  %s7 = inlined_call_operand.hbm [shape: f32[8,1,1024], index: 7, kind: input, shape index: {}]
  %s8 = inlined_call_operand.hbm [shape: f32[8,1024], index: 8, kind: output, shape index: {0}]
  %s9 = inlined_call_operand.hbm [shape: f32[8,1], index: 9, kind: output, shape index: {1}]
  %10 = xla_tuple %s8, %s9
  %s11 = sld [smem:[#allocation0]]
  $region101: #{_lambda_.1} parent=0
    _
  %s13 = ssub.s32 1, %s11
  %s14 = scalar_select 0, %s13, %s11
  $region1: #{_lambda_.1} parent=0
    #allocation2 [shape = 'u8[32768]{0}', space=vmem, size = 0x8000, scoped, tag = 'input window, operand 0, single buffered']
    #allocation3 [shape = 's32[2]{0}', space=sflag, size = 0x8, scoped, tag = 'scoped memory for _lambda_.1']
    #allocation4 [shape = 's32[2]{0}', space=sflag, size = 0x8, scoped, tag = 'scoped memory for _lambda_.1']
    #allocation5 [shape = 'u8[4096]{0}', space=vmem, size = 0x1000, scoped, tag = 'input window, operand 1, single buffered']
    #allocation6 [shape = 's32[1]{0}', space=sflag, size = 0x4, scoped, tag = 'scoped memory for _lambda_.1']
    #allocation7 [shape = 'u8[2097152]{0}', space=vmem, size = 0x200000, scoped, tag = 'input window, operand 2']
    #allocation8 [shape = 'u8[8192]{0}', space=vmem, size = 0x2000, scoped, tag = 'input window, operand 3']
    #allocation9 [shape = 'u8[8192]{0}', space=vmem, size = 0x2000, scoped, tag = 'input window, operand 5']
    #allocation10 [shape = 'u8[8192]{0}', space=vmem, size = 0x2000, scoped, tag = 'input window, operand 7']
    #allocation11 [shape = 'u8[32768]{0}', space=vmem, size = 0x8000, scoped, tag = 'output window, operand 0, single buffered']
    #allocation12 [shape = 'u8[4096]{0}', space=vmem, size = 0x1000, scoped, tag = 'output window, operand 1, single buffered']
    #allocation13 [shape = 's32[1]{0}', space=sflag, size = 0x4, scoped, tag = 'scoped memory for _lambda_.1']
    %15 = vsyncpa [#allocation3], 0
    %16 = vsyncpa [#allocation6], 0
    %17 = vsyncpa [#allocation4], 0
    %18 = vsyncpa [#allocation13], 0
    loop: start=0, step=1, limit=10
    $region2: #{_lambda_.1} parent=1 // loop_pre_header
      _
    $region3: #{_lambda_.1} parent=1 // loop_header
      %s20 = sphi 0, %s24
      %p21 = scmp.ge.s32.totalorder %s20, 10
      %s28 = sphi 0, %s28
      %s30 = sphi 0, %s28
      %s31 = sphi 0, %s30
      %s45 = sphi 0, %s31
      %s49 = sphi 0, %s49
      %s51 = sphi 0, %s49
      %s52 = sphi 0, %s51
      %s66 = sphi 0, %s52
      %s72 = sphi 0, %s74
      %s75 = sphi 0, %s72
      %s76 = sphi 0, %s75
      %s92 = sphi 0, %s76
      %s98 = sphi 0, %s100
      %s101 = sphi 0, %s98
      %s102 = sphi 0, %s101
      %s118 = sphi 0, %s102
      %s124 = sphi 0, %s126
      %s127 = sphi 0, %s124
      %s128 = sphi 0, %s127
      %s144 = sphi 0, %s128
      %s150 = sphi 0, %s152
      %s153 = sphi 0, %s150
      %s154 = sphi 0, %s153
      %s170 = sphi 0, %s154
      %s176 = sphi 0, %s178
      %s179 = sphi 0, %s176
      %s180 = sphi 0, %s179
      %s196 = sphi 0, %s180
      %s202 = sphi 0, %s204
      %s205 = sphi 0, %s202
      %s206 = sphi 0, %s205
      %s222 = sphi 0, %s206
      %s226 = sphi 0, %s226
      %s228 = sphi 0, %s226
      %s229 = sphi 0, %s228
      %s243 = sphi 0, %s229
      %s247 = sphi 0, %s247
      %s249 = sphi 0, %s247
      %s250 = sphi 0, %s249
      %s264 = sphi 0, %s250
    $region4: #{_lambda_.1} parent=1 // loop_header_branch
      %23 = sbr.rel (%p21) target = $region8
    $region5: #{_lambda_.1} parent=1 // loop_body
      %s25 = ssub.s32 %s20, 1
      %s26 = ssub.s32 %s20, 2
      %s27 = sadd.s32 %s20, 1
      %s29 = sadd.s32 %s28, 1
      %p32 = scmp.eq.s32.totalorder %s20, 7
      %p33 = scmp.ne.s32.totalorder %s28, %s30
      %p34 = scmp.eq.s32.totalorder %s20, 0
      %p35 = por %p33, %p34
      %p36 = scmp.ne.s32.totalorder %s28, %s30
      %p37 = scmp.eq.s32.totalorder %s25, 7
      %p38 = por %p36, %p37
      %p39 = scmp.ne.s32.totalorder %s30, %s31
      %p40 = scmp.eq.s32.totalorder %s25, 0
      %p41 = por %p39, %p40
      %p42 = scmp.ne.s32.totalorder %s30, %s31
      %p43 = scmp.eq.s32.totalorder %s26, 7
      %p44 = por %p42, %p43
      %p46 = scmp.ne.s32.totalorder %s31, %s45
      %p47 = scmp.eq.s32.totalorder %s26, 0
      %p48 = por %p46, %p47
      %s50 = sadd.s32 %s49, 1
      %p53 = scmp.eq.s32.totalorder %s20, 7
      %p54 = scmp.ne.s32.totalorder %s49, %s51
      %p55 = scmp.eq.s32.totalorder %s20, 0
      %p56 = por %p54, %p55
      %p57 = scmp.ne.s32.totalorder %s49, %s51
      %p58 = scmp.eq.s32.totalorder %s25, 7
      %p59 = por %p57, %p58
      %p60 = scmp.ne.s32.totalorder %s51, %s52
      %p61 = scmp.eq.s32.totalorder %s25, 0
      %p62 = por %p60, %p61
      %p63 = scmp.ne.s32.totalorder %s51, %s52
      %p64 = scmp.eq.s32.totalorder %s26, 7
      %p65 = por %p63, %p64
      %p67 = scmp.ne.s32.totalorder %s52, %s66
      %p68 = scmp.eq.s32.totalorder %s26, 0
      %p69 = por %p67, %p68
      %s70 = ssub.s32 %s20, %s27
      %p71 = scmp.eq.s32.totalorder %s70, 0
      %s73 = sadd.s32 %s72, 1
      %s74 = scalar_select %p71, %s72, %s73
      %p77 = pneg %p71
      %p78 = scmp.eq.s32.totalorder %s20, 7
      %p79 = por %p77, %p78
      %p80 = scmp.ne.s32.totalorder %s72, %s75
      %p81 = scmp.eq.s32.totalorder %s20, 0
      %p82 = por %p80, %p81
      %p83 = scmp.ne.s32.totalorder %s72, %s75
      %p84 = scmp.eq.s32.totalorder %s25, 7
      %p85 = por %p83, %p84
      %p86 = scmp.ne.s32.totalorder %s75, %s76
      %p87 = scmp.eq.s32.totalorder %s25, 0
      %p88 = por %p86, %p87
      %p89 = scmp.ne.s32.totalorder %s75, %s76
      %p90 = scmp.eq.s32.totalorder %s26, 7
      %p91 = por %p89, %p90
      %p93 = scmp.ne.s32.totalorder %s76, %s92
      %p94 = scmp.eq.s32.totalorder %s26, 0
      %p95 = por %p93, %p94
      %s96 = ssub.s32 %s20, %s27
      %p97 = scmp.eq.s32.totalorder %s96, 0
      %s99 = sadd.s32 %s98, 1
      %s100 = scalar_select %p97, %s98, %s99
      %p103 = pneg %p97
      %p104 = scmp.eq.s32.totalorder %s20, 7
      %p105 = por %p103, %p104
      %p106 = scmp.ne.s32.totalorder %s98, %s101
      %p107 = scmp.eq.s32.totalorder %s20, 0
      %p108 = por %p106, %p107
      %p109 = scmp.ne.s32.totalorder %s98, %s101
      %p110 = scmp.eq.s32.totalorder %s25, 7
      %p111 = por %p109, %p110
      %p112 = scmp.ne.s32.totalorder %s101, %s102
      %p113 = scmp.eq.s32.totalorder %s25, 0
      %p114 = por %p112, %p113
      %p115 = scmp.ne.s32.totalorder %s101, %s102
      %p116 = scmp.eq.s32.totalorder %s26, 7
      %p117 = por %p115, %p116
      %p119 = scmp.ne.s32.totalorder %s102, %s118
      %p120 = scmp.eq.s32.totalorder %s26, 0
      %p121 = por %p119, %p120
      %s122 = ssub.s32 %s20, %s27
      %p123 = scmp.eq.s32.totalorder %s122, 0
      %s125 = sadd.s32 %s124, 1
      %s126 = scalar_select %p123, %s124, %s125
      %p129 = pneg %p123
      %p130 = scmp.eq.s32.totalorder %s20, 7
      %p131 = por %p129, %p130
      %p132 = scmp.ne.s32.totalorder %s124, %s127
      %p133 = scmp.eq.s32.totalorder %s20, 0
      %p134 = por %p132, %p133
      %p135 = scmp.ne.s32.totalorder %s124, %s127
      %p136 = scmp.eq.s32.totalorder %s25, 7
      %p137 = por %p135, %p136
      %p138 = scmp.ne.s32.totalorder %s127, %s128
      %p139 = scmp.eq.s32.totalorder %s25, 0
      %p140 = por %p138, %p139
      %p141 = scmp.ne.s32.totalorder %s127, %s128
      %p142 = scmp.eq.s32.totalorder %s26, 7
      %p143 = por %p141, %p142
      %p145 = scmp.ne.s32.totalorder %s128, %s144
      %p146 = scmp.eq.s32.totalorder %s26, 0
      %p147 = por %p145, %p146
      %s148 = ssub.s32 %s20, %s27
      %p149 = scmp.eq.s32.totalorder %s148, 0
      %s151 = sadd.s32 %s150, 1
      %s152 = scalar_select %p149, %s150, %s151
      %p155 = pneg %p149
      %p156 = scmp.eq.s32.totalorder %s20, 7
      %p157 = por %p155, %p156
      %p158 = scmp.ne.s32.totalorder %s150, %s153
      %p159 = scmp.eq.s32.totalorder %s20, 0
      %p160 = por %p158, %p159
      %p161 = scmp.ne.s32.totalorder %s150, %s153
      %p162 = scmp.eq.s32.totalorder %s25, 7
      %p163 = por %p161, %p162
      %p164 = scmp.ne.s32.totalorder %s153, %s154
      %p165 = scmp.eq.s32.totalorder %s25, 0
      %p166 = por %p164, %p165
      %p167 = scmp.ne.s32.totalorder %s153, %s154
      %p168 = scmp.eq.s32.totalorder %s26, 7
      %p169 = por %p167, %p168
      %p171 = scmp.ne.s32.totalorder %s154, %s170
      %p172 = scmp.eq.s32.totalorder %s26, 0
      %p173 = por %p171, %p172
      %s174 = ssub.s32 %s20, %s27
      %p175 = scmp.eq.s32.totalorder %s174, 0
      %s177 = sadd.s32 %s176, 1
      %s178 = scalar_select %p175, %s176, %s177
      %p181 = pneg %p175
      %p182 = scmp.eq.s32.totalorder %s20, 7
      %p183 = por %p181, %p182
      %p184 = scmp.ne.s32.totalorder %s176, %s179
      %p185 = scmp.eq.s32.totalorder %s20, 0
      %p186 = por %p184, %p185
      %p187 = scmp.ne.s32.totalorder %s176, %s179
      %p188 = scmp.eq.s32.totalorder %s25, 7
      %p189 = por %p187, %p188
      %p190 = scmp.ne.s32.totalorder %s179, %s180
      %p191 = scmp.eq.s32.totalorder %s25, 0
      %p192 = por %p190, %p191
      %p193 = scmp.ne.s32.totalorder %s179, %s180
      %p194 = scmp.eq.s32.totalorder %s26, 7
      %p195 = por %p193, %p194
      %p197 = scmp.ne.s32.totalorder %s180, %s196
      %p198 = scmp.eq.s32.totalorder %s26, 0
      %p199 = por %p197, %p198
      %s200 = ssub.s32 %s20, %s27
      %p201 = scmp.eq.s32.totalorder %s200, 0
      %s203 = sadd.s32 %s202, 1
      %s204 = scalar_select %p201, %s202, %s203
      %p207 = pneg %p201
      %p208 = scmp.eq.s32.totalorder %s20, 7
      %p209 = por %p207, %p208
      %p210 = scmp.ne.s32.totalorder %s202, %s205
      %p211 = scmp.eq.s32.totalorder %s20, 0
      %p212 = por %p210, %p211
      %p213 = scmp.ne.s32.totalorder %s202, %s205
      %p214 = scmp.eq.s32.totalorder %s25, 7
      %p215 = por %p213, %p214
      %p216 = scmp.ne.s32.totalorder %s205, %s206
      %p217 = scmp.eq.s32.totalorder %s25, 0
      %p218 = por %p216, %p217
      %p219 = scmp.ne.s32.totalorder %s205, %s206
      %p220 = scmp.eq.s32.totalorder %s26, 7
      %p221 = por %p219, %p220
      %p223 = scmp.ne.s32.totalorder %s206, %s222
      %p224 = scmp.eq.s32.totalorder %s26, 0
      %p225 = por %p223, %p224
      %s227 = sadd.s32 %s226, 1
      %p230 = scmp.eq.s32.totalorder %s20, 7
      %p231 = scmp.ne.s32.totalorder %s226, %s228
      %p232 = scmp.eq.s32.totalorder %s20, 0
      %p233 = por %p231, %p232
      %p234 = scmp.ne.s32.totalorder %s226, %s228
      %p235 = scmp.eq.s32.totalorder %s25, 7
      %p236 = por %p234, %p235
      %p237 = scmp.ne.s32.totalorder %s228, %s229
      %p238 = scmp.eq.s32.totalorder %s25, 0
      %p239 = por %p237, %p238
      %p240 = scmp.ne.s32.totalorder %s228, %s229
      %p241 = scmp.eq.s32.totalorder %s26, 7
      %p242 = por %p240, %p241
      %p244 = scmp.ne.s32.totalorder %s229, %s243
      %p245 = scmp.eq.s32.totalorder %s26, 0
      %p246 = por %p244, %p245
      %s248 = sadd.s32 %s247, 1
      %p251 = scmp.eq.s32.totalorder %s20, 7
      %p252 = scmp.ne.s32.totalorder %s247, %s249
      %p253 = scmp.eq.s32.totalorder %s20, 0
      %p254 = por %p252, %p253
      %p255 = scmp.ne.s32.totalorder %s247, %s249
      %p256 = scmp.eq.s32.totalorder %s25, 7
      %p257 = por %p255, %p256
      %p258 = scmp.ne.s32.totalorder %s249, %s250
      %p259 = scmp.eq.s32.totalorder %s25, 0
      %p260 = por %p258, %p259
      %p261 = scmp.ne.s32.totalorder %s249, %s250
      %p262 = scmp.eq.s32.totalorder %s26, 7
      %p263 = por %p261, %p262
      %p265 = scmp.ne.s32.totalorder %s250, %s264
      %p266 = scmp.eq.s32.totalorder %s26, 0
      %p267 = por %p265, %p266
      %p268 = scmp.le.s32.totalorder 1, %s20
      %p269 = scmp.lt.s32.totalorder %s20, 9
      %p270 = pnand %p268, %p269
      %p271 = pneg %p270
      // Predicated region
      $region9: #{_lambda_.1} parent=5 // pred_check
        _
      $region10: #{_lambda_.1} parent=5 // pred_check_branch
        %273 = sbr.rel (%p270) target = $region12
      $region11: #{_lambda_.1} parent=5 // pred_region
        %s274 = ssub.s32 %s20, 1
        // Predicated region
        $region13: #{_lambda_.1} parent=11 // pred_check
          %p275 = pneg %p41
        $region14: #{_lambda_.1} parent=11 // pred_check_branch
          %277 = sbr.rel (%p275) target = $region16
        $region15: #{_lambda_.1} parent=11 // pred_region
          %s279 = ssub.s32 1024, 1024
          %280 = vsyncadd [#allocation3], %s279
          %s282 = sshll.u32 [#allocation2], 4
          %s283 = int_to_ptr.vmem [resolvable:$true] %s282
          %285 = dma.hbm_to_vmem [thread:$0]  %s0, 1024, %s283, [#allocation3]
        $region16: #{_lambda_.1} parent=11 // pred_fallthru
          _
        // Predicated region
        $region17: #{_lambda_.1} parent=11 // pred_check
          %p286 = pneg %p62
        $region18: #{_lambda_.1} parent=11 // pred_check_branch
          %288 = sbr.rel (%p286) target = $region20
        $region19: #{_lambda_.1} parent=11 // pred_region
          %s290 = ssub.s32 128, 128
          %291 = vsyncadd [#allocation6], %s290
          %s293 = sshll.u32 [#allocation5], 4
          %s294 = int_to_ptr.vmem [resolvable:$true] %s293
          %296 = dma.hbm_to_vmem [thread:$0]  %s1, 128, %s294, [#allocation6]
        $region20: #{_lambda_.1} parent=11 // pred_fallthru
          _
      $region12: #{_lambda_.1} parent=5 // pred_fallthru
        _
      %p297 = scmp.lt.s32.totalorder %s20, 8
      // Predicated region
      $region21: #{_lambda_.1} parent=5 // pred_check
        %p298 = pneg %p297
      $region22: #{_lambda_.1} parent=5 // pred_check_branch
        %300 = sbr.rel (%p298) target = $region24
      $region23: #{_lambda_.1} parent=5 // pred_region
        // Predicated region
        $region25: #{_lambda_.1} parent=23 // pred_check
          %p301 = pneg %p82
        $region26: #{_lambda_.1} parent=23 // pred_check_branch
          %303 = sbr.rel (%p301) target = $region28
        $region27: #{_lambda_.1} parent=23 // pred_region
          %s304 = sand.u32 %s20, 1
          %s305 = scalar_lea.sflag [#allocation3], %s304
          %s306 = sand.u32 %s72, 1
          %s307 = smul.addr %s306, 2048
          %s308 = scalar_lea.vmem [#allocation7], %s307
          %s310 = ssub.s32 32768, 32768
          %311 = vsyncadd %s305, %s310
          %s312 = smul.addr %s20, 512
          %s313 = smul.addr %s312, 64
          %s314 = scalar_lea.hbm %s2, %s313
          %s315 = sshll.u32 %s308, 4
          %s316 = int_to_ptr.vmem [resolvable:$true] %s315
          %321 = dma.hbm_to_vmem [thread:$0]  %s314, 32768, %s316, %s305, 512, 512, 32
        $region28: #{_lambda_.1} parent=23 // pred_fallthru
          _
        // Predicated region
        $region29: #{_lambda_.1} parent=23 // pred_check
          %p322 = pneg %p108
        $region30: #{_lambda_.1} parent=23 // pred_check_branch
          %324 = sbr.rel (%p322) target = $region32
        $region31: #{_lambda_.1} parent=23 // pred_region
          %s325 = sand.u32 %s20, 1
          %s326 = scalar_lea.sflag [#allocation3], %s325
          %s327 = sand.u32 %s98, 1
          %s328 = smul.addr %s327, 8
          %s329 = scalar_lea.vmem [#allocation8], %s328
          %s331 = ssub.s32 128, 128
          %332 = vsyncadd %s326, %s331
          %s333 = smul.addr %s20, 8
          %s334 = smul.addr %s333, 16
          %s335 = scalar_lea.hbm %s3, %s334
          %s337 = sshll.u32 %s329, 4
          %s338 = int_to_ptr.vmem [resolvable:$true] %s337
          %340 = dma.hbm_to_vmem [thread:$0]  %s335, 128, %s338, %s326
        $region32: #{_lambda_.1} parent=23 // pred_fallthru
          _
        // Predicated region
        $region33: #{_lambda_.1} parent=23 // pred_check
          %p341 = pneg %p134
        $region34: #{_lambda_.1} parent=23 // pred_check_branch
          %343 = sbr.rel (%p341) target = $region36
        $region35: #{_lambda_.1} parent=23 // pred_region
          %p344 = scmp.lt.s32.totalorder %s20, 7
          %s345 = scalar_select %p344, %s20, 7
          %s346 = smul.addr %s345, 1024
          %s347 = smul.addr %s346, 4
          %s348 = scalar_lea.vmem %s4, %s347
        $region36: #{_lambda_.1} parent=23 // pred_fallthru
          _
        // Predicated region
        $region37: #{_lambda_.1} parent=23 // pred_check
          %p349 = pneg %p160
        $region38: #{_lambda_.1} parent=23 // pred_check_branch
          %351 = sbr.rel (%p349) target = $region40
        $region39: #{_lambda_.1} parent=23 // pred_region
          %s352 = sand.u32 %s20, 1
          %s353 = scalar_lea.sflag [#allocation3], %s352
          %s354 = sand.u32 %s150, 1
          %s355 = smul.addr %s354, 8
          %s356 = scalar_lea.vmem [#allocation9], %s355
          %s358 = ssub.s32 128, 128
          %359 = vsyncadd %s353, %s358
          %s360 = smul.addr %s20, 8
          %s361 = smul.addr %s360, 16
          %s362 = scalar_lea.hbm %s5, %s361
          %s364 = sshll.u32 %s356, 4
          %s365 = int_to_ptr.vmem [resolvable:$true] %s364
          %367 = dma.hbm_to_vmem [thread:$0]  %s362, 128, %s365, %s353
        $region40: #{_lambda_.1} parent=23 // pred_fallthru
          _
        // Predicated region
        $region41: #{_lambda_.1} parent=23 // pred_check
          %p368 = pneg %p186
        $region42: #{_lambda_.1} parent=23 // pred_check_branch
          %370 = sbr.rel (%p368) target = $region44
        $region43: #{_lambda_.1} parent=23 // pred_region
          %p371 = scmp.lt.s32.totalorder %s20, 7
          %s372 = scalar_select %p371, %s20, 7
          %s373 = smul.addr %s372, 1024
          %s374 = smul.addr %s373, 4
          %s375 = scalar_lea.vmem %s6, %s374
        $region44: #{_lambda_.1} parent=23 // pred_fallthru
          _
        // Predicated region
        $region45: #{_lambda_.1} parent=23 // pred_check
          %p376 = pneg %p212
        $region46: #{_lambda_.1} parent=23 // pred_check_branch
          %378 = sbr.rel (%p376) target = $region48
        $region47: #{_lambda_.1} parent=23 // pred_region
          %s379 = sand.u32 %s20, 1
          %s380 = scalar_lea.sflag [#allocation3], %s379
          %s381 = sand.u32 %s202, 1
          %s382 = smul.addr %s381, 8
          %s383 = scalar_lea.vmem [#allocation10], %s382
          %s385 = ssub.s32 128, 128
          %386 = vsyncadd %s380, %s385
          %s387 = smul.addr %s20, 8
          %s388 = smul.addr %s387, 16
          %s389 = scalar_lea.hbm %s7, %s388
          %s391 = sshll.u32 %s383, 4
          %s392 = int_to_ptr.vmem [resolvable:$true] %s391
          %394 = dma.hbm_to_vmem [thread:$0]  %s389, 128, %s392, %s380
        $region48: #{_lambda_.1} parent=23 // pred_fallthru
          _
      $region24: #{_lambda_.1} parent=5 // pred_fallthru
        _
      %p395 = scmp.le.s32.totalorder 1, %s20
      %p396 = scmp.lt.s32.totalorder %s20, 9
      %p397 = pnand %p395, %p396
      %p398 = pneg %p397
      // Predicated region
      $region49: #{_lambda_.1} parent=5 // pred_check
        _
      $region50: #{_lambda_.1} parent=5 // pred_check_branch
        %400 = sbr.rel (%p397) target = $region52
      $region51: #{_lambda_.1} parent=5 // pred_region
        %s401 = ssub.s32 %s20, 1
        // Predicated region
        $region53: #{_lambda_.1} parent=51 // pred_check
          %p402 = pneg %p41
        $region54: #{_lambda_.1} parent=51 // pred_check_branch
          %404 = sbr.rel (%p402) target = $region56
        $region55: #{_lambda_.1} parent=51 // pred_region
          %405 = dma.done [#allocation3], 1024
        $region56: #{_lambda_.1} parent=51 // pred_fallthru
          _
        // Predicated region
        $region57: #{_lambda_.1} parent=51 // pred_check
          %p406 = pneg %p62
        $region58: #{_lambda_.1} parent=51 // pred_check_branch
          %408 = sbr.rel (%p406) target = $region60
        $region59: #{_lambda_.1} parent=51 // pred_region
          %409 = dma.done [#allocation6], 128
        $region60: #{_lambda_.1} parent=51 // pred_fallthru
          _
        %s410 = sand.u32 %s25, 1
        %s411 = scalar_lea.sflag [#allocation3], %s410
        %s412 = sand.u32 %s75, 1
        %s413 = smul.addr %s412, 2048
        %s414 = scalar_lea.vmem [#allocation7], %s413
        // Predicated region
        $region61: #{_lambda_.1} parent=51 // pred_check
          %p415 = pneg %p88
        $region62: #{_lambda_.1} parent=51 // pred_check_branch
          %417 = sbr.rel (%p415) target = $region64
        $region63: #{_lambda_.1} parent=51 // pred_region
          %418 = dma.done %s411, 32768
        $region64: #{_lambda_.1} parent=51 // pred_fallthru
          _
        %s419 = sand.u32 %s25, 1
        %s420 = scalar_lea.sflag [#allocation3], %s419
        %s421 = sand.u32 %s101, 1
        %s422 = smul.addr %s421, 8
        %s423 = scalar_lea.vmem [#allocation8], %s422
        // Predicated region
        $region65: #{_lambda_.1} parent=51 // pred_check
          %p424 = pneg %p114
        $region66: #{_lambda_.1} parent=51 // pred_check_branch
          %426 = sbr.rel (%p424) target = $region68
        $region67: #{_lambda_.1} parent=51 // pred_region
          %427 = dma.done %s420, 128
        $region68: #{_lambda_.1} parent=51 // pred_fallthru
          _
        %s428 = sand.u32 %s25, 1
        %s429 = scalar_lea.sflag [#allocation3], %s428
        %s430 = sand.u32 %s153, 1
        %s431 = smul.addr %s430, 8
        %s432 = scalar_lea.vmem [#allocation9], %s431
        // Predicated region
        $region69: #{_lambda_.1} parent=51 // pred_check
          %p433 = pneg %p166
        $region70: #{_lambda_.1} parent=51 // pred_check_branch
          %435 = sbr.rel (%p433) target = $region72
        $region71: #{_lambda_.1} parent=51 // pred_region
          %436 = dma.done %s429, 128
        $region72: #{_lambda_.1} parent=51 // pred_fallthru
          _
        %s437 = sand.u32 %s25, 1
        %s438 = scalar_lea.sflag [#allocation3], %s437
        %s439 = sand.u32 %s205, 1
        %s440 = smul.addr %s439, 8
        %s441 = scalar_lea.vmem [#allocation10], %s440
        // Predicated region
        $region73: #{_lambda_.1} parent=51 // pred_check
          %p442 = pneg %p218
        $region74: #{_lambda_.1} parent=51 // pred_check_branch
          %444 = sbr.rel (%p442) target = $region76
        $region75: #{_lambda_.1} parent=51 // pred_region
          %445 = dma.done %s438, 128
        $region76: #{_lambda_.1} parent=51 // pred_fallthru
          _
        %p446 = pneg %p41
        %p447 = pneg %p38
        %p448 = pneg %p62
        %p449 = pneg %p59
        %s450 = sand.u32 %s25, 1
        %s451 = scalar_lea.sflag [#allocation3], %s450
        %s452 = sand.u32 %s75, 1
        %s453 = smul.addr %s452, 2048
        %s454 = scalar_lea.vmem [#allocation7], %s453
        %p455 = pneg %p88
        %p456 = pneg %p85
        %s457 = sand.u32 %s25, 1
        %s458 = scalar_lea.sflag [#allocation3], %s457
        %s459 = sand.u32 %s101, 1
        %s460 = smul.addr %s459, 8
        %s461 = scalar_lea.vmem [#allocation8], %s460
        %p462 = pneg %p114
        %p463 = pneg %p111
        %p464 = scmp.lt.s32.totalorder %s25, 7
        %s465 = scalar_select %p464, %s25, 7
        %s466 = smul.addr %s465, 1024
        %s467 = smul.addr %s466, 4
        %s468 = scalar_lea.vmem %s4, %s467
        %p469 = pneg %p140
        %p470 = pneg %p137
        %s471 = sand.u32 %s25, 1
        %s472 = scalar_lea.sflag [#allocation3], %s471
        %s473 = sand.u32 %s153, 1
        %s474 = smul.addr %s473, 8
        %s475 = scalar_lea.vmem [#allocation9], %s474
        %p476 = pneg %p166
        %p477 = pneg %p163
        %p478 = scmp.lt.s32.totalorder %s25, 7
        %s479 = scalar_select %p478, %s25, 7
        %s480 = smul.addr %s479, 1024
        %s481 = smul.addr %s480, 4
        %s482 = scalar_lea.vmem %s6, %s481
        %p483 = pneg %p192
        %p484 = pneg %p189
        %s485 = sand.u32 %s25, 1
        %s486 = scalar_lea.sflag [#allocation3], %s485
        %s487 = sand.u32 %s205, 1
        %s488 = smul.addr %s487, 8
        %s489 = scalar_lea.vmem [#allocation10], %s488
        %p490 = pneg %p218
        %p491 = pneg %p215
        %p492 = pneg %p239
        %p493 = pneg %p236
        %p494 = pneg %p260
        %p495 = pneg %p257
        %p496 = scmp.lt.s32.totalorder %s25, 7
        %s497 = scalar_select %p496, %s25, 7
        %s498 = smul.addr %s497, 1024
        %s499 = smul.addr %s498, 4
        %s500 = scalar_lea.vmem %s4, %s499
        %p501 = scmp.lt.s32.totalorder %s25, 7
        %s502 = scalar_select %p501, %s25, 7
        %s503 = smul.addr %s502, 1024
        %s504 = smul.addr %s503, 4
        %s505 = scalar_lea.vmem %s6, %s504
        %p506 = scmp.eq.s32.totalorder %s25, 0
        // Predicated region
        $region77: #{_lambda_.1} parent=51 // pred_check
          %p507 = pneg %p506
        $region78: #{_lambda_.1} parent=51 // pred_check_branch
          %509 = sbr.rel (%p507) target = $region80
        $region79: #{_lambda_.1} parent=51 // pred_region
          %v510 = vld [vmem:[#allocation2] sm:$0xff]
          %v511 = vld [vmem:[#allocation2 + $0x8] sm:$0xff]
          %v512 = vld [vmem:[#allocation2 + $0x10] sm:$0xff]
          %v513 = vld [vmem:[#allocation2 + $0x18] sm:$0xff]
          %v514 = vld [vmem:[#allocation2 + $0x20] sm:$0xff]
          %v515 = vld [vmem:[#allocation2 + $0x28] sm:$0xff]
          %v516 = vld [vmem:[#allocation2 + $0x30] sm:$0xff]
          %v517 = vld [vmem:[#allocation2 + $0x38] sm:$0xff]
          %518 = vst [vmem:[#allocation11] sm:$0xff] %v510
          %519 = vst [vmem:[#allocation11 + $0x8] sm:$0xff] %v511
          %520 = vst [vmem:[#allocation11 + $0x10] sm:$0xff] %v512
          %521 = vst [vmem:[#allocation11 + $0x18] sm:$0xff] %v513
          %522 = vst [vmem:[#allocation11 + $0x20] sm:$0xff] %v514
          %523 = vst [vmem:[#allocation11 + $0x28] sm:$0xff] %v515
          %524 = vst [vmem:[#allocation11 + $0x30] sm:$0xff] %v516
          %525 = vst [vmem:[#allocation11 + $0x38] sm:$0xff] %v517
          %v526 = vld [vmem:[#allocation5] sm:$0xff]
          %vm527 = vcmask 7168
          %528 = vst.msk [vmem:[#allocation12] sm:$0xff] %vm527, %v526
        $region80: #{_lambda_.1} parent=51 // pred_fallthru
          _
        %v529 = vld [vmem:[#allocation11] sm:$0xff]
        %v530 = vld [vmem:[#allocation11 + $0x8] sm:$0xff]
        %v531 = vld [vmem:[#allocation11 + $0x10] sm:$0xff]
        %v532 = vld [vmem:[#allocation11 + $0x18] sm:$0xff]
        %v533 = vld [vmem:[#allocation11 + $0x20] sm:$0xff]
        %v534 = vld [vmem:[#allocation11 + $0x28] sm:$0xff]
        %v535 = vld [vmem:[#allocation11 + $0x30] sm:$0xff]
        %v536 = vld [vmem:[#allocation11 + $0x38] sm:$0xff]
        %v537 = vpack.c.bf16 %v529, %v529
        %v538 = vpack.c.bf16 %v530, %v530
        %v539 = vpack.c.bf16 %v531, %v531
        %v540 = vpack.c.bf16 %v532, %v532
        %v541 = vld [vmem:[%s414] sm:$0xff]
        %v542 = vld [vmem:[%s414 + $0x8] sm:$0xff]
        %v543 = vld [vmem:[%s414 + $0x10] sm:$0xff]
        %v544 = vld [vmem:[%s414 + $0x18] sm:$0xff]
        %v545 = vld [vmem:[%s414 + $0x20] sm:$0xff]
        %v546 = vld [vmem:[%s414 + $0x28] sm:$0xff]
        %v547 = vld [vmem:[%s414 + $0x30] sm:$0xff]
        %v548 = vld [vmem:[%s414 + $0x38] sm:$0xff]
        %v549 = vld [vmem:[%s414 + $0x40] sm:$0xff]
        %v550 = vld [vmem:[%s414 + $0x48] sm:$0xff]
        %v551 = vld [vmem:[%s414 + $0x50] sm:$0xff]
        %v552 = vld [vmem:[%s414 + $0x58] sm:$0xff]
        %v553 = vld [vmem:[%s414 + $0x60] sm:$0xff]
        %v554 = vld [vmem:[%s414 + $0x68] sm:$0xff]
        %v555 = vld [vmem:[%s414 + $0x70] sm:$0xff]
        %v556 = vld [vmem:[%s414 + $0x78] sm:$0xff]
        %v557 = vld [vmem:[%s414 + $0x80] sm:$0xff]
        %v558 = vld [vmem:[%s414 + $0x88] sm:$0xff]
        %v559 = vld [vmem:[%s414 + $0x90] sm:$0xff]
        %v560 = vld [vmem:[%s414 + $0x98] sm:$0xff]
        %v561 = vld [vmem:[%s414 + $0xa0] sm:$0xff]
        %v562 = vld [vmem:[%s414 + $0xa8] sm:$0xff]
        %v563 = vld [vmem:[%s414 + $0xb0] sm:$0xff]
        %v564 = vld [vmem:[%s414 + $0xb8] sm:$0xff]
        %v565 = vld [vmem:[%s414 + $0xc0] sm:$0xff]
        %v566 = vld [vmem:[%s414 + $0xc8] sm:$0xff]
        %v567 = vld [vmem:[%s414 + $0xd0] sm:$0xff]
        %v568 = vld [vmem:[%s414 + $0xd8] sm:$0xff]
        %v569 = vld [vmem:[%s414 + $0xe0] sm:$0xff]
        %v570 = vld [vmem:[%s414 + $0xe8] sm:$0xff]
        %v571 = vld [vmem:[%s414 + $0xf0] sm:$0xff]
        %v572 = vld [vmem:[%s414 + $0xf8] sm:$0xff]
        %v573 = vld [vmem:[%s414 + $0x100] sm:$0xff]
        %v574 = vld [vmem:[%s414 + $0x108] sm:$0xff]
        %v575 = vld [vmem:[%s414 + $0x110] sm:$0xff]
        %v576 = vld [vmem:[%s414 + $0x118] sm:$0xff]
        %v577 = vld [vmem:[%s414 + $0x120] sm:$0xff]
        %v578 = vld [vmem:[%s414 + $0x128] sm:$0xff]
        %v579 = vld [vmem:[%s414 + $0x130] sm:$0xff]
        %v580 = vld [vmem:[%s414 + $0x138] sm:$0xff]
        %v581 = vld [vmem:[%s414 + $0x140] sm:$0xff]
        %v582 = vld [vmem:[%s414 + $0x148] sm:$0xff]
        %v583 = vld [vmem:[%s414 + $0x150] sm:$0xff]
        %v584 = vld [vmem:[%s414 + $0x158] sm:$0xff]
        %v585 = vld [vmem:[%s414 + $0x160] sm:$0xff]
        %v586 = vld [vmem:[%s414 + $0x168] sm:$0xff]
        %v587 = vld [vmem:[%s414 + $0x170] sm:$0xff]
        %v588 = vld [vmem:[%s414 + $0x178] sm:$0xff]
        %v589 = vld [vmem:[%s414 + $0x180] sm:$0xff]
        %v590 = vld [vmem:[%s414 + $0x188] sm:$0xff]
        %v591 = vld [vmem:[%s414 + $0x190] sm:$0xff]
        %v592 = vld [vmem:[%s414 + $0x198] sm:$0xff]
        %v593 = vld [vmem:[%s414 + $0x1a0] sm:$0xff]
        %v594 = vld [vmem:[%s414 + $0x1a8] sm:$0xff]
        %v595 = vld [vmem:[%s414 + $0x1b0] sm:$0xff]
        %v596 = vld [vmem:[%s414 + $0x1b8] sm:$0xff]
        %v597 = vld [vmem:[%s414 + $0x1c0] sm:$0xff]
        %v598 = vld [vmem:[%s414 + $0x1c8] sm:$0xff]
        %v599 = vld [vmem:[%s414 + $0x1d0] sm:$0xff]
        %v600 = vld [vmem:[%s414 + $0x1d8] sm:$0xff]
        %v601 = vld [vmem:[%s414 + $0x1e0] sm:$0xff]
        %v602 = vld [vmem:[%s414 + $0x1e8] sm:$0xff]
        %v603 = vld [vmem:[%s414 + $0x1f0] sm:$0xff]
        %v604 = vld [vmem:[%s414 + $0x1f8] sm:$0xff]
        %v605 = vld [vmem:[%s414 + $0x200] sm:$0xff]
        %v606 = vld [vmem:[%s414 + $0x208] sm:$0xff]
        %v607 = vld [vmem:[%s414 + $0x210] sm:$0xff]
        %v608 = vld [vmem:[%s414 + $0x218] sm:$0xff]
        %v609 = vld [vmem:[%s414 + $0x220] sm:$0xff]
        %v610 = vld [vmem:[%s414 + $0x228] sm:$0xff]
        %v611 = vld [vmem:[%s414 + $0x230] sm:$0xff]
        %v612 = vld [vmem:[%s414 + $0x238] sm:$0xff]
        %v613 = vld [vmem:[%s414 + $0x240] sm:$0xff]
        %v614 = vld [vmem:[%s414 + $0x248] sm:$0xff]
        %v615 = vld [vmem:[%s414 + $0x250] sm:$0xff]
        %v616 = vld [vmem:[%s414 + $0x258] sm:$0xff]
        %v617 = vld [vmem:[%s414 + $0x260] sm:$0xff]
        %v618 = vld [vmem:[%s414 + $0x268] sm:$0xff]
        %v619 = vld [vmem:[%s414 + $0x270] sm:$0xff]
        %v620 = vld [vmem:[%s414 + $0x278] sm:$0xff]
        %v621 = vld [vmem:[%s414 + $0x280] sm:$0xff]
        %v622 = vld [vmem:[%s414 + $0x288] sm:$0xff]
        %v623 = vld [vmem:[%s414 + $0x290] sm:$0xff]
        %v624 = vld [vmem:[%s414 + $0x298] sm:$0xff]
        %v625 = vld [vmem:[%s414 + $0x2a0] sm:$0xff]
        %v626 = vld [vmem:[%s414 + $0x2a8] sm:$0xff]
        %v627 = vld [vmem:[%s414 + $0x2b0] sm:$0xff]
        %v628 = vld [vmem:[%s414 + $0x2b8] sm:$0xff]
        %v629 = vld [vmem:[%s414 + $0x2c0] sm:$0xff]
        %v630 = vld [vmem:[%s414 + $0x2c8] sm:$0xff]
        %v631 = vld [vmem:[%s414 + $0x2d0] sm:$0xff]
        %v632 = vld [vmem:[%s414 + $0x2d8] sm:$0xff]
        %v633 = vld [vmem:[%s414 + $0x2e0] sm:$0xff]
        %v634 = vld [vmem:[%s414 + $0x2e8] sm:$0xff]
        %v635 = vld [vmem:[%s414 + $0x2f0] sm:$0xff]
        %v636 = vld [vmem:[%s414 + $0x2f8] sm:$0xff]
        %v637 = vld [vmem:[%s414 + $0x300] sm:$0xff]
        %v638 = vld [vmem:[%s414 + $0x308] sm:$0xff]
        %v639 = vld [vmem:[%s414 + $0x310] sm:$0xff]
        %v640 = vld [vmem:[%s414 + $0x318] sm:$0xff]
        %v641 = vld [vmem:[%s414 + $0x320] sm:$0xff]
        %v642 = vld [vmem:[%s414 + $0x328] sm:$0xff]
        %v643 = vld [vmem:[%s414 + $0x330] sm:$0xff]
        %v644 = vld [vmem:[%s414 + $0x338] sm:$0xff]
        %v645 = vld [vmem:[%s414 + $0x340] sm:$0xff]
        %v646 = vld [vmem:[%s414 + $0x348] sm:$0xff]
        %v647 = vld [vmem:[%s414 + $0x350] sm:$0xff]
        %v648 = vld [vmem:[%s414 + $0x358] sm:$0xff]
        %v649 = vld [vmem:[%s414 + $0x360] sm:$0xff]
        %v650 = vld [vmem:[%s414 + $0x368] sm:$0xff]
        %v651 = vld [vmem:[%s414 + $0x370] sm:$0xff]
        %v652 = vld [vmem:[%s414 + $0x378] sm:$0xff]
        %v653 = vld [vmem:[%s414 + $0x380] sm:$0xff]
        %v654 = vld [vmem:[%s414 + $0x388] sm:$0xff]
        %v655 = vld [vmem:[%s414 + $0x390] sm:$0xff]
        %v656 = vld [vmem:[%s414 + $0x398] sm:$0xff]
        %v657 = vld [vmem:[%s414 + $0x3a0] sm:$0xff]
        %v658 = vld [vmem:[%s414 + $0x3a8] sm:$0xff]
        %v659 = vld [vmem:[%s414 + $0x3b0] sm:$0xff]
        %v660 = vld [vmem:[%s414 + $0x3b8] sm:$0xff]
        %v661 = vld [vmem:[%s414 + $0x3c0] sm:$0xff]
        %v662 = vld [vmem:[%s414 + $0x3c8] sm:$0xff]
        %v663 = vld [vmem:[%s414 + $0x3d0] sm:$0xff]
        %v664 = vld [vmem:[%s414 + $0x3d8] sm:$0xff]
        %v665 = vld [vmem:[%s414 + $0x3e0] sm:$0xff]
        %v666 = vld [vmem:[%s414 + $0x3e8] sm:$0xff]
        %v667 = vld [vmem:[%s414 + $0x3f0] sm:$0xff]
        %v668 = vld [vmem:[%s414 + $0x3f8] sm:$0xff]
        %v669 = vld [vmem:[%s414 + $0x400] sm:$0xff]
        %v670 = vld [vmem:[%s414 + $0x408] sm:$0xff]
        %v671 = vld [vmem:[%s414 + $0x410] sm:$0xff]
        %v672 = vld [vmem:[%s414 + $0x418] sm:$0xff]
        %v673 = vld [vmem:[%s414 + $0x420] sm:$0xff]
        %v674 = vld [vmem:[%s414 + $0x428] sm:$0xff]
        %v675 = vld [vmem:[%s414 + $0x430] sm:$0xff]
        %v676 = vld [vmem:[%s414 + $0x438] sm:$0xff]
        %v677 = vld [vmem:[%s414 + $0x440] sm:$0xff]
        %v678 = vld [vmem:[%s414 + $0x448] sm:$0xff]
        %v679 = vld [vmem:[%s414 + $0x450] sm:$0xff]
        %v680 = vld [vmem:[%s414 + $0x458] sm:$0xff]
        %v681 = vld [vmem:[%s414 + $0x460] sm:$0xff]
        %v682 = vld [vmem:[%s414 + $0x468] sm:$0xff]
        %v683 = vld [vmem:[%s414 + $0x470] sm:$0xff]
        %v684 = vld [vmem:[%s414 + $0x478] sm:$0xff]
        %v685 = vld [vmem:[%s414 + $0x480] sm:$0xff]
        %v686 = vld [vmem:[%s414 + $0x488] sm:$0xff]
        %v687 = vld [vmem:[%s414 + $0x490] sm:$0xff]
        %v688 = vld [vmem:[%s414 + $0x498] sm:$0xff]
        %v689 = vld [vmem:[%s414 + $0x4a0] sm:$0xff]
        %v690 = vld [vmem:[%s414 + $0x4a8] sm:$0xff]
        %v691 = vld [vmem:[%s414 + $0x4b0] sm:$0xff]
        %v692 = vld [vmem:[%s414 + $0x4b8] sm:$0xff]
        %v693 = vld [vmem:[%s414 + $0x4c0] sm:$0xff]
        %v694 = vld [vmem:[%s414 + $0x4c8] sm:$0xff]
        %v695 = vld [vmem:[%s414 + $0x4d0] sm:$0xff]
        %v696 = vld [vmem:[%s414 + $0x4d8] sm:$0xff]
        %v697 = vld [vmem:[%s414 + $0x4e0] sm:$0xff]
        %v698 = vld [vmem:[%s414 + $0x4e8] sm:$0xff]
        %v699 = vld [vmem:[%s414 + $0x4f0] sm:$0xff]
        %v700 = vld [vmem:[%s414 + $0x4f8] sm:$0xff]
        %v701 = vld [vmem:[%s414 + $0x500] sm:$0xff]
        %v702 = vld [vmem:[%s414 + $0x508] sm:$0xff]
        %v703 = vld [vmem:[%s414 + $0x510] sm:$0xff]
        %v704 = vld [vmem:[%s414 + $0x518] sm:$0xff]
        %v705 = vld [vmem:[%s414 + $0x520] sm:$0xff]
        %v706 = vld [vmem:[%s414 + $0x528] sm:$0xff]
        %v707 = vld [vmem:[%s414 + $0x530] sm:$0xff]
        %v708 = vld [vmem:[%s414 + $0x538] sm:$0xff]
        %v709 = vld [vmem:[%s414 + $0x540] sm:$0xff]
        %v710 = vld [vmem:[%s414 + $0x548] sm:$0xff]
        %v711 = vld [vmem:[%s414 + $0x550] sm:$0xff]
        %v712 = vld [vmem:[%s414 + $0x558] sm:$0xff]
        %v713 = vld [vmem:[%s414 + $0x560] sm:$0xff]
        %v714 = vld [vmem:[%s414 + $0x568] sm:$0xff]
        %v715 = vld [vmem:[%s414 + $0x570] sm:$0xff]
        %v716 = vld [vmem:[%s414 + $0x578] sm:$0xff]
        %v717 = vld [vmem:[%s414 + $0x580] sm:$0xff]
        %v718 = vld [vmem:[%s414 + $0x588] sm:$0xff]
        %v719 = vld [vmem:[%s414 + $0x590] sm:$0xff]
        %v720 = vld [vmem:[%s414 + $0x598] sm:$0xff]
        %v721 = vld [vmem:[%s414 + $0x5a0] sm:$0xff]
        %v722 = vld [vmem:[%s414 + $0x5a8] sm:$0xff]
        %v723 = vld [vmem:[%s414 + $0x5b0] sm:$0xff]
        %v724 = vld [vmem:[%s414 + $0x5b8] sm:$0xff]
        %v725 = vld [vmem:[%s414 + $0x5c0] sm:$0xff]
        %v726 = vld [vmem:[%s414 + $0x5c8] sm:$0xff]
        %v727 = vld [vmem:[%s414 + $0x5d0] sm:$0xff]
        %v728 = vld [vmem:[%s414 + $0x5d8] sm:$0xff]
        %v729 = vld [vmem:[%s414 + $0x5e0] sm:$0xff]
        %v730 = vld [vmem:[%s414 + $0x5e8] sm:$0xff]
        %v731 = vld [vmem:[%s414 + $0x5f0] sm:$0xff]
        %v732 = vld [vmem:[%s414 + $0x5f8] sm:$0xff]
        %v733 = vld [vmem:[%s414 + $0x600] sm:$0xff]
        %v734 = vld [vmem:[%s414 + $0x608] sm:$0xff]
        %v735 = vld [vmem:[%s414 + $0x610] sm:$0xff]
        %v736 = vld [vmem:[%s414 + $0x618] sm:$0xff]
        %v737 = vld [vmem:[%s414 + $0x620] sm:$0xff]
        %v738 = vld [vmem:[%s414 + $0x628] sm:$0xff]
        %v739 = vld [vmem:[%s414 + $0x630] sm:$0xff]
        %v740 = vld [vmem:[%s414 + $0x638] sm:$0xff]
        %v741 = vld [vmem:[%s414 + $0x640] sm:$0xff]
        %v742 = vld [vmem:[%s414 + $0x648] sm:$0xff]
        %v743 = vld [vmem:[%s414 + $0x650] sm:$0xff]
        %v744 = vld [vmem:[%s414 + $0x658] sm:$0xff]
        %v745 = vld [vmem:[%s414 + $0x660] sm:$0xff]
        %v746 = vld [vmem:[%s414 + $0x668] sm:$0xff]
        %v747 = vld [vmem:[%s414 + $0x670] sm:$0xff]
        %v748 = vld [vmem:[%s414 + $0x678] sm:$0xff]
        %v749 = vld [vmem:[%s414 + $0x680] sm:$0xff]
        %v750 = vld [vmem:[%s414 + $0x688] sm:$0xff]
        %v751 = vld [vmem:[%s414 + $0x690] sm:$0xff]
        %v752 = vld [vmem:[%s414 + $0x698] sm:$0xff]
        %v753 = vld [vmem:[%s414 + $0x6a0] sm:$0xff]
        %v754 = vld [vmem:[%s414 + $0x6a8] sm:$0xff]
        %v755 = vld [vmem:[%s414 + $0x6b0] sm:$0xff]
        %v756 = vld [vmem:[%s414 + $0x6b8] sm:$0xff]
        %v757 = vld [vmem:[%s414 + $0x6c0] sm:$0xff]
        %v758 = vld [vmem:[%s414 + $0x6c8] sm:$0xff]
        %v759 = vld [vmem:[%s414 + $0x6d0] sm:$0xff]
        %v760 = vld [vmem:[%s414 + $0x6d8] sm:$0xff]
        %v761 = vld [vmem:[%s414 + $0x6e0] sm:$0xff]
        %v762 = vld [vmem:[%s414 + $0x6e8] sm:$0xff]
        %v763 = vld [vmem:[%s414 + $0x6f0] sm:$0xff]
        %v764 = vld [vmem:[%s414 + $0x6f8] sm:$0xff]
        %v765 = vld [vmem:[%s414 + $0x700] sm:$0xff]
        %v766 = vld [vmem:[%s414 + $0x708] sm:$0xff]
        %v767 = vld [vmem:[%s414 + $0x710] sm:$0xff]
        %v768 = vld [vmem:[%s414 + $0x718] sm:$0xff]
        %v769 = vld [vmem:[%s414 + $0x720] sm:$0xff]
        %v770 = vld [vmem:[%s414 + $0x728] sm:$0xff]
        %v771 = vld [vmem:[%s414 + $0x730] sm:$0xff]
        %v772 = vld [vmem:[%s414 + $0x738] sm:$0xff]
        %v773 = vld [vmem:[%s414 + $0x740] sm:$0xff]
        %v774 = vld [vmem:[%s414 + $0x748] sm:$0xff]
        %v775 = vld [vmem:[%s414 + $0x750] sm:$0xff]
        %v776 = vld [vmem:[%s414 + $0x758] sm:$0xff]
        %v777 = vld [vmem:[%s414 + $0x760] sm:$0xff]
        %v778 = vld [vmem:[%s414 + $0x768] sm:$0xff]
        %v779 = vld [vmem:[%s414 + $0x770] sm:$0xff]
        %v780 = vld [vmem:[%s414 + $0x778] sm:$0xff]
        %v781 = vld [vmem:[%s414 + $0x780] sm:$0xff]
        %v782 = vld [vmem:[%s414 + $0x788] sm:$0xff]
        %v783 = vld [vmem:[%s414 + $0x790] sm:$0xff]
        %v784 = vld [vmem:[%s414 + $0x798] sm:$0xff]
        %v785 = vld [vmem:[%s414 + $0x7a0] sm:$0xff]
        %v786 = vld [vmem:[%s414 + $0x7a8] sm:$0xff]
        %v787 = vld [vmem:[%s414 + $0x7b0] sm:$0xff]
        %v788 = vld [vmem:[%s414 + $0x7b8] sm:$0xff]
        %v789 = vld [vmem:[%s414 + $0x7c0] sm:$0xff]
        %v790 = vld [vmem:[%s414 + $0x7c8] sm:$0xff]
        %v791 = vld [vmem:[%s414 + $0x7d0] sm:$0xff]
        %v792 = vld [vmem:[%s414 + $0x7d8] sm:$0xff]
        %v793 = vld [vmem:[%s414 + $0x7e0] sm:$0xff]
        %v794 = vld [vmem:[%s414 + $0x7e8] sm:$0xff]
        %v795 = vld [vmem:[%s414 + $0x7f0] sm:$0xff]
        %v796 = vld [vmem:[%s414 + $0x7f8] sm:$0xff]
        %v797 = vld [vmem:[%s423] sm:$0xff]
        %v799 = vlaneseq
        %v800 = vshrl.u32 %v799, 7
        %v801 = vsub.s32 0, %v800
        %v802 = vrot.slane %v797, %v801
        %v803 = vlaneseq
        %v804 = vshrl.u32 %v803, 7
        %v805 = vsub.s32 1, %v804
        %v806 = vrot.slane %v797, %v805
        %v807 = vlaneseq
        %v808 = vshrl.u32 %v807, 7
        %v809 = vsub.s32 2, %v808
        %v810 = vrot.slane %v797, %v809
        %v811 = vlaneseq
        %v812 = vshrl.u32 %v811, 7
        %v813 = vsub.s32 3, %v812
        %v814 = vrot.slane %v797, %v813
        %v815 = vlaneseq
        %v816 = vshrl.u32 %v815, 7
        %v817 = vsub.s32 4, %v816
        %v818 = vrot.slane %v797, %v817
        %v819 = vlaneseq
        %v820 = vshrl.u32 %v819, 7
        %v821 = vsub.s32 5, %v820
        %v822 = vrot.slane %v797, %v821
        %v823 = vlaneseq
        %v824 = vshrl.u32 %v823, 7
        %v825 = vsub.s32 6, %v824
        %v826 = vrot.slane %v797, %v825
        %v827 = vlaneseq
        %v828 = vshrl.u32 %v827, 7
        %v829 = vsub.s32 7, %v828
        %v830 = vrot.slane %v797, %v829
        %v1095 = vunpack.c.l.b16 %v541
        %v1096 = vunpack.c.h.b16 %v541
        %v1097 = vunpack.c.l.b16 %v542
        %v1098 = vunpack.c.h.b16 %v542
        %v1099 = vunpack.c.l.b16 %v543
        %v1100 = vunpack.c.h.b16 %v543
        %v1101 = vunpack.c.l.b16 %v544
        %v1102 = vunpack.c.h.b16 %v544
        %v1103 = vunpack.c.l.b16 %v545
        %v1104 = vunpack.c.h.b16 %v545
        %v1105 = vunpack.c.l.b16 %v546
        %v1106 = vunpack.c.h.b16 %v546
        %v1107 = vunpack.c.l.b16 %v547
        %v1108 = vunpack.c.h.b16 %v547
        %v1109 = vunpack.c.l.b16 %v548
        %v1110 = vunpack.c.h.b16 %v548
        %v1111 = vunpack.c.l.b16 %v549
        %v1112 = vunpack.c.h.b16 %v549
        %v1113 = vunpack.c.l.b16 %v550
        %v1114 = vunpack.c.h.b16 %v550
        %v1115 = vunpack.c.l.b16 %v551
        %v1116 = vunpack.c.h.b16 %v551
        %v1117 = vunpack.c.l.b16 %v552
        %v1118 = vunpack.c.h.b16 %v552
        %v1119 = vunpack.c.l.b16 %v553
        %v1120 = vunpack.c.h.b16 %v553
        %v1121 = vunpack.c.l.b16 %v554
        %v1122 = vunpack.c.h.b16 %v554
        %v1123 = vunpack.c.l.b16 %v555
        %v1124 = vunpack.c.h.b16 %v555
        %v1125 = vunpack.c.l.b16 %v556
        %v1126 = vunpack.c.h.b16 %v556
        %v1127 = vunpack.c.l.b16 %v557
        %v1128 = vunpack.c.h.b16 %v557
        %v1129 = vunpack.c.l.b16 %v558
        %v1130 = vunpack.c.h.b16 %v558
        %v1131 = vunpack.c.l.b16 %v559
        %v1132 = vunpack.c.h.b16 %v559
        %v1133 = vunpack.c.l.b16 %v560
        %v1134 = vunpack.c.h.b16 %v560
        %v1135 = vunpack.c.l.b16 %v561
        %v1136 = vunpack.c.h.b16 %v561
        %v1137 = vunpack.c.l.b16 %v562
        %v1138 = vunpack.c.h.b16 %v562
        %v1139 = vunpack.c.l.b16 %v563
        %v1140 = vunpack.c.h.b16 %v563
        %v1141 = vunpack.c.l.b16 %v564
        %v1142 = vunpack.c.h.b16 %v564
        %v1143 = vunpack.c.l.b16 %v565
        %v1144 = vunpack.c.h.b16 %v565
        %v1145 = vunpack.c.l.b16 %v566
        %v1146 = vunpack.c.h.b16 %v566
        %v1147 = vunpack.c.l.b16 %v567
        %v1148 = vunpack.c.h.b16 %v567
        %v1149 = vunpack.c.l.b16 %v568
        %v1150 = vunpack.c.h.b16 %v568
        %v1151 = vunpack.c.l.b16 %v569
        %v1152 = vunpack.c.h.b16 %v569
        %v1153 = vunpack.c.l.b16 %v570
        %v1154 = vunpack.c.h.b16 %v570
        %v1155 = vunpack.c.l.b16 %v571
        %v1156 = vunpack.c.h.b16 %v571
        %v1157 = vunpack.c.l.b16 %v572
        %v1158 = vunpack.c.h.b16 %v572
        %v1159 = vunpack.c.l.b16 %v573
        %v1160 = vunpack.c.h.b16 %v573
        %v1161 = vunpack.c.l.b16 %v574
        %v1162 = vunpack.c.h.b16 %v574
        %v1163 = vunpack.c.l.b16 %v575
        %v1164 = vunpack.c.h.b16 %v575
        %v1165 = vunpack.c.l.b16 %v576
        %v1166 = vunpack.c.h.b16 %v576
        %v1167 = vunpack.c.l.b16 %v577
        %v1168 = vunpack.c.h.b16 %v577
        %v1169 = vunpack.c.l.b16 %v578
        %v1170 = vunpack.c.h.b16 %v578
        %v1171 = vunpack.c.l.b16 %v579
        %v1172 = vunpack.c.h.b16 %v579
        %v1173 = vunpack.c.l.b16 %v580
        %v1174 = vunpack.c.h.b16 %v580
        %v1175 = vunpack.c.l.b16 %v581
        %v1176 = vunpack.c.h.b16 %v581
        %v1177 = vunpack.c.l.b16 %v582
        %v1178 = vunpack.c.h.b16 %v582
        %v1179 = vunpack.c.l.b16 %v583
        %v1180 = vunpack.c.h.b16 %v583
        %v1181 = vunpack.c.l.b16 %v584
        %v1182 = vunpack.c.h.b16 %v584
        %v1183 = vunpack.c.l.b16 %v585
        %v1184 = vunpack.c.h.b16 %v585
        %v1185 = vunpack.c.l.b16 %v586
        %v1186 = vunpack.c.h.b16 %v586
        %v1187 = vunpack.c.l.b16 %v587
        %v1188 = vunpack.c.h.b16 %v587
        %v1189 = vunpack.c.l.b16 %v588
        %v1190 = vunpack.c.h.b16 %v588
        %v1191 = vunpack.c.l.b16 %v589
        %v1192 = vunpack.c.h.b16 %v589
        %v1193 = vunpack.c.l.b16 %v590
        %v1194 = vunpack.c.h.b16 %v590
        %v1195 = vunpack.c.l.b16 %v591
        %v1196 = vunpack.c.h.b16 %v591
        %v1197 = vunpack.c.l.b16 %v592
        %v1198 = vunpack.c.h.b16 %v592
        %v1199 = vunpack.c.l.b16 %v593
        %v1200 = vunpack.c.h.b16 %v593
        %v1201 = vunpack.c.l.b16 %v594
        %v1202 = vunpack.c.h.b16 %v594
        %v1203 = vunpack.c.l.b16 %v595
        %v1204 = vunpack.c.h.b16 %v595
        %v1205 = vunpack.c.l.b16 %v596
        %v1206 = vunpack.c.h.b16 %v596
        %v1207 = vunpack.c.l.b16 %v597
        %v1208 = vunpack.c.h.b16 %v597
        %v1209 = vunpack.c.l.b16 %v598
        %v1210 = vunpack.c.h.b16 %v598
        %v1211 = vunpack.c.l.b16 %v599
        %v1212 = vunpack.c.h.b16 %v599
        %v1213 = vunpack.c.l.b16 %v600
        %v1214 = vunpack.c.h.b16 %v600
        %v1215 = vunpack.c.l.b16 %v601
        %v1216 = vunpack.c.h.b16 %v601
        %v1217 = vunpack.c.l.b16 %v602
        %v1218 = vunpack.c.h.b16 %v602
        %v1219 = vunpack.c.l.b16 %v603
        %v1220 = vunpack.c.h.b16 %v603
        %v1221 = vunpack.c.l.b16 %v604
        %v1222 = vunpack.c.h.b16 %v604
        %v1223 = vunpack.c.l.b16 %v605
        %v1224 = vunpack.c.h.b16 %v605
        %v1225 = vunpack.c.l.b16 %v606
        %v1226 = vunpack.c.h.b16 %v606
        %v1227 = vunpack.c.l.b16 %v607
        %v1228 = vunpack.c.h.b16 %v607
        %v1229 = vunpack.c.l.b16 %v608
        %v1230 = vunpack.c.h.b16 %v608
        %v1231 = vunpack.c.l.b16 %v609
        %v1232 = vunpack.c.h.b16 %v609
        %v1233 = vunpack.c.l.b16 %v610
        %v1234 = vunpack.c.h.b16 %v610
        %v1235 = vunpack.c.l.b16 %v611
        %v1236 = vunpack.c.h.b16 %v611
        %v1237 = vunpack.c.l.b16 %v612
        %v1238 = vunpack.c.h.b16 %v612
        %v1239 = vunpack.c.l.b16 %v613
        %v1240 = vunpack.c.h.b16 %v613
        %v1241 = vunpack.c.l.b16 %v614
        %v1242 = vunpack.c.h.b16 %v614
        %v1243 = vunpack.c.l.b16 %v615
        %v1244 = vunpack.c.h.b16 %v615
        %v1245 = vunpack.c.l.b16 %v616
        %v1246 = vunpack.c.h.b16 %v616
        %v1247 = vunpack.c.l.b16 %v617
        %v1248 = vunpack.c.h.b16 %v617
        %v1249 = vunpack.c.l.b16 %v618
        %v1250 = vunpack.c.h.b16 %v618
        %v1251 = vunpack.c.l.b16 %v619
        %v1252 = vunpack.c.h.b16 %v619
        %v1253 = vunpack.c.l.b16 %v620
        %v1254 = vunpack.c.h.b16 %v620
        %v1255 = vunpack.c.l.b16 %v621
        %v1256 = vunpack.c.h.b16 %v621
        %v1257 = vunpack.c.l.b16 %v622
        %v1258 = vunpack.c.h.b16 %v622
        %v1259 = vunpack.c.l.b16 %v623
        %v1260 = vunpack.c.h.b16 %v623
        %v1261 = vunpack.c.l.b16 %v624
        %v1262 = vunpack.c.h.b16 %v624
        %v1263 = vunpack.c.l.b16 %v625
        %v1264 = vunpack.c.h.b16 %v625
        %v1265 = vunpack.c.l.b16 %v626
        %v1266 = vunpack.c.h.b16 %v626
        %v1267 = vunpack.c.l.b16 %v627
        %v1268 = vunpack.c.h.b16 %v627
        %v1269 = vunpack.c.l.b16 %v628
        %v1270 = vunpack.c.h.b16 %v628
        %v1271 = vunpack.c.l.b16 %v629
        %v1272 = vunpack.c.h.b16 %v629
        %v1273 = vunpack.c.l.b16 %v630
        %v1274 = vunpack.c.h.b16 %v630
        %v1275 = vunpack.c.l.b16 %v631
        %v1276 = vunpack.c.h.b16 %v631
        %v1277 = vunpack.c.l.b16 %v632
        %v1278 = vunpack.c.h.b16 %v632
        %v1279 = vunpack.c.l.b16 %v633
        %v1280 = vunpack.c.h.b16 %v633
        %v1281 = vunpack.c.l.b16 %v634
        %v1282 = vunpack.c.h.b16 %v634
        %v1283 = vunpack.c.l.b16 %v635
        %v1284 = vunpack.c.h.b16 %v635
        %v1285 = vunpack.c.l.b16 %v636
        %v1286 = vunpack.c.h.b16 %v636
        %v1287 = vunpack.c.l.b16 %v637
        %v1288 = vunpack.c.h.b16 %v637
        %v1289 = vunpack.c.l.b16 %v638
        %v1290 = vunpack.c.h.b16 %v638
        %v1291 = vunpack.c.l.b16 %v639
        %v1292 = vunpack.c.h.b16 %v639
        %v1293 = vunpack.c.l.b16 %v640
        %v1294 = vunpack.c.h.b16 %v640
        %v1295 = vunpack.c.l.b16 %v641
        %v1296 = vunpack.c.h.b16 %v641
        %v1297 = vunpack.c.l.b16 %v642
        %v1298 = vunpack.c.h.b16 %v642
        %v1299 = vunpack.c.l.b16 %v643
        %v1300 = vunpack.c.h.b16 %v643
        %v1301 = vunpack.c.l.b16 %v644
        %v1302 = vunpack.c.h.b16 %v644
        %v1303 = vunpack.c.l.b16 %v645
        %v1304 = vunpack.c.h.b16 %v645
        %v1305 = vunpack.c.l.b16 %v646
        %v1306 = vunpack.c.h.b16 %v646
        %v1307 = vunpack.c.l.b16 %v647
        %v1308 = vunpack.c.h.b16 %v647
        %v1309 = vunpack.c.l.b16 %v648
        %v1310 = vunpack.c.h.b16 %v648
        %v1311 = vunpack.c.l.b16 %v649
        %v1312 = vunpack.c.h.b16 %v649
        %v1313 = vunpack.c.l.b16 %v650
        %v1314 = vunpack.c.h.b16 %v650
        %v1315 = vunpack.c.l.b16 %v651
        %v1316 = vunpack.c.h.b16 %v651
        %v1317 = vunpack.c.l.b16 %v652
        %v1318 = vunpack.c.h.b16 %v652
        %v1319 = vunpack.c.l.b16 %v653
        %v1320 = vunpack.c.h.b16 %v653
        %v1321 = vunpack.c.l.b16 %v654
        %v1322 = vunpack.c.h.b16 %v654
        %v1323 = vunpack.c.l.b16 %v655
        %v1324 = vunpack.c.h.b16 %v655
        %v1325 = vunpack.c.l.b16 %v656
        %v1326 = vunpack.c.h.b16 %v656
        %v1327 = vunpack.c.l.b16 %v657
        %v1328 = vunpack.c.h.b16 %v657
        %v1329 = vunpack.c.l.b16 %v658
        %v1330 = vunpack.c.h.b16 %v658
        %v1331 = vunpack.c.l.b16 %v659
        %v1332 = vunpack.c.h.b16 %v659
        %v1333 = vunpack.c.l.b16 %v660
        %v1334 = vunpack.c.h.b16 %v660
        %v1335 = vunpack.c.l.b16 %v661
        %v1336 = vunpack.c.h.b16 %v661
        %v1337 = vunpack.c.l.b16 %v662
        %v1338 = vunpack.c.h.b16 %v662
        %v1339 = vunpack.c.l.b16 %v663
        %v1340 = vunpack.c.h.b16 %v663
        %v1341 = vunpack.c.l.b16 %v664
        %v1342 = vunpack.c.h.b16 %v664
        %v1343 = vunpack.c.l.b16 %v665
        %v1344 = vunpack.c.h.b16 %v665
        %v1345 = vunpack.c.l.b16 %v666
        %v1346 = vunpack.c.h.b16 %v666
        %v1347 = vunpack.c.l.b16 %v667
        %v1348 = vunpack.c.h.b16 %v667
        %v1349 = vunpack.c.l.b16 %v668
        %v1350 = vunpack.c.h.b16 %v668
        %v1351 = vunpack.c.l.b16 %v669
        %v1352 = vunpack.c.h.b16 %v669
        %v1353 = vunpack.c.l.b16 %v670
        %v1354 = vunpack.c.h.b16 %v670
        %v1355 = vunpack.c.l.b16 %v671
        %v1356 = vunpack.c.h.b16 %v671
        %v1357 = vunpack.c.l.b16 %v672
        %v1358 = vunpack.c.h.b16 %v672
        %v1359 = vunpack.c.l.b16 %v673
        %v1360 = vunpack.c.h.b16 %v673
        %v1361 = vunpack.c.l.b16 %v674
        %v1362 = vunpack.c.h.b16 %v674
        %v1363 = vunpack.c.l.b16 %v675
        %v1364 = vunpack.c.h.b16 %v675
        %v1365 = vunpack.c.l.b16 %v676
        %v1366 = vunpack.c.h.b16 %v676
        %v1367 = vunpack.c.l.b16 %v677
        %v1368 = vunpack.c.h.b16 %v677
        %v1369 = vunpack.c.l.b16 %v678
        %v1370 = vunpack.c.h.b16 %v678
        %v1371 = vunpack.c.l.b16 %v679
        %v1372 = vunpack.c.h.b16 %v679
        %v1373 = vunpack.c.l.b16 %v680
        %v1374 = vunpack.c.h.b16 %v680
        %v1375 = vunpack.c.l.b16 %v681
        %v1376 = vunpack.c.h.b16 %v681
        %v1377 = vunpack.c.l.b16 %v682
        %v1378 = vunpack.c.h.b16 %v682
        %v1379 = vunpack.c.l.b16 %v683
        %v1380 = vunpack.c.h.b16 %v683
        %v1381 = vunpack.c.l.b16 %v684
        %v1382 = vunpack.c.h.b16 %v684
        %v1383 = vunpack.c.l.b16 %v685
        %v1384 = vunpack.c.h.b16 %v685
        %v1385 = vunpack.c.l.b16 %v686
        %v1386 = vunpack.c.h.b16 %v686
        %v1387 = vunpack.c.l.b16 %v687
        %v1388 = vunpack.c.h.b16 %v687
        %v1389 = vunpack.c.l.b16 %v688
        %v1390 = vunpack.c.h.b16 %v688
        %v1391 = vunpack.c.l.b16 %v689
        %v1392 = vunpack.c.h.b16 %v689
        %v1393 = vunpack.c.l.b16 %v690
        %v1394 = vunpack.c.h.b16 %v690
        %v1395 = vunpack.c.l.b16 %v691
        %v1396 = vunpack.c.h.b16 %v691
        %v1397 = vunpack.c.l.b16 %v692
        %v1398 = vunpack.c.h.b16 %v692
        %v1399 = vunpack.c.l.b16 %v693
        %v1400 = vunpack.c.h.b16 %v693
        %v1401 = vunpack.c.l.b16 %v694
        %v1402 = vunpack.c.h.b16 %v694
        %v1403 = vunpack.c.l.b16 %v695
        %v1404 = vunpack.c.h.b16 %v695
        %v1405 = vunpack.c.l.b16 %v696
        %v1406 = vunpack.c.h.b16 %v696
        %v1407 = vunpack.c.l.b16 %v697
        %v1408 = vunpack.c.h.b16 %v697
        %v1409 = vunpack.c.l.b16 %v698
        %v1410 = vunpack.c.h.b16 %v698
        %v1411 = vunpack.c.l.b16 %v699
        %v1412 = vunpack.c.h.b16 %v699
        %v1413 = vunpack.c.l.b16 %v700
        %v1414 = vunpack.c.h.b16 %v700
        %v1415 = vunpack.c.l.b16 %v701
        %v1416 = vunpack.c.h.b16 %v701
        %v1417 = vunpack.c.l.b16 %v702
        %v1418 = vunpack.c.h.b16 %v702
        %v1419 = vunpack.c.l.b16 %v703
        %v1420 = vunpack.c.h.b16 %v703
        %v1421 = vunpack.c.l.b16 %v704
        %v1422 = vunpack.c.h.b16 %v704
        %v1423 = vunpack.c.l.b16 %v705
        %v1424 = vunpack.c.h.b16 %v705
        %v1425 = vunpack.c.l.b16 %v706
        %v1426 = vunpack.c.h.b16 %v706
        %v1427 = vunpack.c.l.b16 %v707
        %v1428 = vunpack.c.h.b16 %v707
        %v1429 = vunpack.c.l.b16 %v708
        %v1430 = vunpack.c.h.b16 %v708
        %v1431 = vunpack.c.l.b16 %v709
        %v1432 = vunpack.c.h.b16 %v709
        %v1433 = vunpack.c.l.b16 %v710
        %v1434 = vunpack.c.h.b16 %v710
        %v1435 = vunpack.c.l.b16 %v711
        %v1436 = vunpack.c.h.b16 %v711
        %v1437 = vunpack.c.l.b16 %v712
        %v1438 = vunpack.c.h.b16 %v712
        %v1439 = vunpack.c.l.b16 %v713
        %v1440 = vunpack.c.h.b16 %v713
        %v1441 = vunpack.c.l.b16 %v714
        %v1442 = vunpack.c.h.b16 %v714
        %v1443 = vunpack.c.l.b16 %v715
        %v1444 = vunpack.c.h.b16 %v715
        %v1445 = vunpack.c.l.b16 %v716
        %v1446 = vunpack.c.h.b16 %v716
        %v1447 = vunpack.c.l.b16 %v717
        %v1448 = vunpack.c.h.b16 %v717
        %v1449 = vunpack.c.l.b16 %v718
        %v1450 = vunpack.c.h.b16 %v718
        %v1451 = vunpack.c.l.b16 %v719
        %v1452 = vunpack.c.h.b16 %v719
        %v1453 = vunpack.c.l.b16 %v720
        %v1454 = vunpack.c.h.b16 %v720
        %v1455 = vunpack.c.l.b16 %v721
        %v1456 = vunpack.c.h.b16 %v721
        %v1457 = vunpack.c.l.b16 %v722
        %v1458 = vunpack.c.h.b16 %v722
        %v1459 = vunpack.c.l.b16 %v723
        %v1460 = vunpack.c.h.b16 %v723
        %v1461 = vunpack.c.l.b16 %v724
        %v1462 = vunpack.c.h.b16 %v724
        %v1463 = vunpack.c.l.b16 %v725
        %v1464 = vunpack.c.h.b16 %v725
        %v1465 = vunpack.c.l.b16 %v726
        %v1466 = vunpack.c.h.b16 %v726
        %v1467 = vunpack.c.l.b16 %v727
        %v1468 = vunpack.c.h.b16 %v727
        %v1469 = vunpack.c.l.b16 %v728
        %v1470 = vunpack.c.h.b16 %v728
        %v1471 = vunpack.c.l.b16 %v729
        %v1472 = vunpack.c.h.b16 %v729
        %v1473 = vunpack.c.l.b16 %v730
        %v1474 = vunpack.c.h.b16 %v730
        %v1475 = vunpack.c.l.b16 %v731
        %v1476 = vunpack.c.h.b16 %v731
        %v1477 = vunpack.c.l.b16 %v732
        %v1478 = vunpack.c.h.b16 %v732
        %v1479 = vunpack.c.l.b16 %v733
        %v1480 = vunpack.c.h.b16 %v733
        %v1481 = vunpack.c.l.b16 %v734
        %v1482 = vunpack.c.h.b16 %v734
        %v1483 = vunpack.c.l.b16 %v735
        %v1484 = vunpack.c.h.b16 %v735
        %v1485 = vunpack.c.l.b16 %v736
        %v1486 = vunpack.c.h.b16 %v736
        %v1487 = vunpack.c.l.b16 %v737
        %v1488 = vunpack.c.h.b16 %v737
        %v1489 = vunpack.c.l.b16 %v738
        %v1490 = vunpack.c.h.b16 %v738
        %v1491 = vunpack.c.l.b16 %v739
        %v1492 = vunpack.c.h.b16 %v739
        %v1493 = vunpack.c.l.b16 %v740
        %v1494 = vunpack.c.h.b16 %v740
        %v1495 = vunpack.c.l.b16 %v741
        %v1496 = vunpack.c.h.b16 %v741
        %v1497 = vunpack.c.l.b16 %v742
        %v1498 = vunpack.c.h.b16 %v742
        %v1499 = vunpack.c.l.b16 %v743
        %v1500 = vunpack.c.h.b16 %v743
        %v1501 = vunpack.c.l.b16 %v744
        %v1502 = vunpack.c.h.b16 %v744
        %v1503 = vunpack.c.l.b16 %v745
        %v1504 = vunpack.c.h.b16 %v745
        %v1505 = vunpack.c.l.b16 %v746
        %v1506 = vunpack.c.h.b16 %v746
        %v1507 = vunpack.c.l.b16 %v747
        %v1508 = vunpack.c.h.b16 %v747
        %v1509 = vunpack.c.l.b16 %v748
        %v1510 = vunpack.c.h.b16 %v748
        %v1511 = vunpack.c.l.b16 %v749
        %v1512 = vunpack.c.h.b16 %v749
        %v1513 = vunpack.c.l.b16 %v750
        %v1514 = vunpack.c.h.b16 %v750
        %v1515 = vunpack.c.l.b16 %v751
        %v1516 = vunpack.c.h.b16 %v751
        %v1517 = vunpack.c.l.b16 %v752
        %v1518 = vunpack.c.h.b16 %v752
        %v1519 = vunpack.c.l.b16 %v753
        %v1520 = vunpack.c.h.b16 %v753
        %v1521 = vunpack.c.l.b16 %v754
        %v1522 = vunpack.c.h.b16 %v754
        %v1523 = vunpack.c.l.b16 %v755
        %v1524 = vunpack.c.h.b16 %v755
        %v1525 = vunpack.c.l.b16 %v756
        %v1526 = vunpack.c.h.b16 %v756
        %v1527 = vunpack.c.l.b16 %v757
        %v1528 = vunpack.c.h.b16 %v757
        %v1529 = vunpack.c.l.b16 %v758
        %v1530 = vunpack.c.h.b16 %v758
        %v1531 = vunpack.c.l.b16 %v759
        %v1532 = vunpack.c.h.b16 %v759
        %v1533 = vunpack.c.l.b16 %v760
        %v1534 = vunpack.c.h.b16 %v760
        %v1535 = vunpack.c.l.b16 %v761
        %v1536 = vunpack.c.h.b16 %v761
        %v1537 = vunpack.c.l.b16 %v762
        %v1538 = vunpack.c.h.b16 %v762
        %v1539 = vunpack.c.l.b16 %v763
        %v1540 = vunpack.c.h.b16 %v763
        %v1541 = vunpack.c.l.b16 %v764
        %v1542 = vunpack.c.h.b16 %v764
        %v1543 = vunpack.c.l.b16 %v765
        %v1544 = vunpack.c.h.b16 %v765
        %v1545 = vunpack.c.l.b16 %v766
        %v1546 = vunpack.c.h.b16 %v766
        %v1547 = vunpack.c.l.b16 %v767
        %v1548 = vunpack.c.h.b16 %v767
        %v1549 = vunpack.c.l.b16 %v768
        %v1550 = vunpack.c.h.b16 %v768
        %v1551 = vunpack.c.l.b16 %v769
        %v1552 = vunpack.c.h.b16 %v769
        %v1553 = vunpack.c.l.b16 %v770
        %v1554 = vunpack.c.h.b16 %v770
        %v1555 = vunpack.c.l.b16 %v771
        %v1556 = vunpack.c.h.b16 %v771
        %v1557 = vunpack.c.l.b16 %v772
        %v1558 = vunpack.c.h.b16 %v772
        %v1559 = vunpack.c.l.b16 %v773
        %v1560 = vunpack.c.h.b16 %v773
        %v1561 = vunpack.c.l.b16 %v774
        %v1562 = vunpack.c.h.b16 %v774
        %v1563 = vunpack.c.l.b16 %v775
        %v1564 = vunpack.c.h.b16 %v775
        %v1565 = vunpack.c.l.b16 %v776
        %v1566 = vunpack.c.h.b16 %v776
        %v1567 = vunpack.c.l.b16 %v777
        %v1568 = vunpack.c.h.b16 %v777
        %v1569 = vunpack.c.l.b16 %v778
        %v1570 = vunpack.c.h.b16 %v778
        %v1571 = vunpack.c.l.b16 %v779
        %v1572 = vunpack.c.h.b16 %v779
        %v1573 = vunpack.c.l.b16 %v780
        %v1574 = vunpack.c.h.b16 %v780
        %v1575 = vunpack.c.l.b16 %v781
        %v1576 = vunpack.c.h.b16 %v781
        %v1577 = vunpack.c.l.b16 %v782
        %v1578 = vunpack.c.h.b16 %v782
        %v1579 = vunpack.c.l.b16 %v783
        %v1580 = vunpack.c.h.b16 %v783
        %v1581 = vunpack.c.l.b16 %v784
        %v1582 = vunpack.c.h.b16 %v784
        %v1583 = vunpack.c.l.b16 %v785
        %v1584 = vunpack.c.h.b16 %v785
        %v1585 = vunpack.c.l.b16 %v786
        %v1586 = vunpack.c.h.b16 %v786
        %v1587 = vunpack.c.l.b16 %v787
        %v1588 = vunpack.c.h.b16 %v787
        %v1589 = vunpack.c.l.b16 %v788
        %v1590 = vunpack.c.h.b16 %v788
        %v1591 = vunpack.c.l.b16 %v789
        %v1592 = vunpack.c.h.b16 %v789
        %v1593 = vunpack.c.l.b16 %v790
        %v1594 = vunpack.c.h.b16 %v790
        %v1595 = vunpack.c.l.b16 %v791
        %v1596 = vunpack.c.h.b16 %v791
        %v1597 = vunpack.c.l.b16 %v792
        %v1598 = vunpack.c.h.b16 %v792
        %v1599 = vunpack.c.l.b16 %v793
        %v1600 = vunpack.c.h.b16 %v793
        %v1601 = vunpack.c.l.b16 %v794
        %v1602 = vunpack.c.h.b16 %v794
        %v1603 = vunpack.c.l.b16 %v795
        %v1604 = vunpack.c.h.b16 %v795
        %v1605 = vunpack.c.l.b16 %v796
        %v1606 = vunpack.c.h.b16 %v796
        %v1607 = vpack.c.b16 %v1103, %v1095
        %v1608 = vpack.c.b16 %v1104, %v1096
        %v1609 = vpack.c.b16 %v1105, %v1097
        %v1610 = vpack.c.b16 %v1106, %v1098
        %v1611 = vpack.c.b16 %v1107, %v1099
        %v1612 = vpack.c.b16 %v1108, %v1100
        %v1613 = vpack.c.b16 %v1109, %v1101
        %v1614 = vpack.c.b16 %v1110, %v1102
        %v1615 = vpack.c.b16 %v1119, %v1111
        %v1616 = vpack.c.b16 %v1120, %v1112
        %v1617 = vpack.c.b16 %v1121, %v1113
        %v1618 = vpack.c.b16 %v1122, %v1114
        %v1619 = vpack.c.b16 %v1123, %v1115
        %v1620 = vpack.c.b16 %v1124, %v1116
        %v1621 = vpack.c.b16 %v1125, %v1117
        %v1622 = vpack.c.b16 %v1126, %v1118
        %v1623 = vpack.c.b16 %v1135, %v1127
        %v1624 = vpack.c.b16 %v1136, %v1128
        %v1625 = vpack.c.b16 %v1137, %v1129
        %v1626 = vpack.c.b16 %v1138, %v1130
        %v1627 = vpack.c.b16 %v1139, %v1131
        %v1628 = vpack.c.b16 %v1140, %v1132
        %v1629 = vpack.c.b16 %v1141, %v1133
        %v1630 = vpack.c.b16 %v1142, %v1134
        %v1631 = vpack.c.b16 %v1151, %v1143
        %v1632 = vpack.c.b16 %v1152, %v1144
        %v1633 = vpack.c.b16 %v1153, %v1145
        %v1634 = vpack.c.b16 %v1154, %v1146
        %v1635 = vpack.c.b16 %v1155, %v1147
        %v1636 = vpack.c.b16 %v1156, %v1148
        %v1637 = vpack.c.b16 %v1157, %v1149
        %v1638 = vpack.c.b16 %v1158, %v1150
        %v1639 = vpack.c.b16 %v1167, %v1159
        %v1640 = vpack.c.b16 %v1168, %v1160
        %v1641 = vpack.c.b16 %v1169, %v1161
        %v1642 = vpack.c.b16 %v1170, %v1162
        %v1643 = vpack.c.b16 %v1171, %v1163
        %v1644 = vpack.c.b16 %v1172, %v1164
        %v1645 = vpack.c.b16 %v1173, %v1165
        %v1646 = vpack.c.b16 %v1174, %v1166
        %v1647 = vpack.c.b16 %v1183, %v1175
        %v1648 = vpack.c.b16 %v1184, %v1176
        %v1649 = vpack.c.b16 %v1185, %v1177
        %v1650 = vpack.c.b16 %v1186, %v1178
        %v1651 = vpack.c.b16 %v1187, %v1179
        %v1652 = vpack.c.b16 %v1188, %v1180
        %v1653 = vpack.c.b16 %v1189, %v1181
        %v1654 = vpack.c.b16 %v1190, %v1182
        %v1655 = vpack.c.b16 %v1199, %v1191
        %v1656 = vpack.c.b16 %v1200, %v1192
        %v1657 = vpack.c.b16 %v1201, %v1193
        %v1658 = vpack.c.b16 %v1202, %v1194
        %v1659 = vpack.c.b16 %v1203, %v1195
        %v1660 = vpack.c.b16 %v1204, %v1196
        %v1661 = vpack.c.b16 %v1205, %v1197
        %v1662 = vpack.c.b16 %v1206, %v1198
        %v1663 = vpack.c.b16 %v1215, %v1207
        %v1664 = vpack.c.b16 %v1216, %v1208
        %v1665 = vpack.c.b16 %v1217, %v1209
        %v1666 = vpack.c.b16 %v1218, %v1210
        %v1667 = vpack.c.b16 %v1219, %v1211
        %v1668 = vpack.c.b16 %v1220, %v1212
        %v1669 = vpack.c.b16 %v1221, %v1213
        %v1670 = vpack.c.b16 %v1222, %v1214
        %v1671 = vpack.c.b16 %v1231, %v1223
        %v1672 = vpack.c.b16 %v1232, %v1224
        %v1673 = vpack.c.b16 %v1233, %v1225
        %v1674 = vpack.c.b16 %v1234, %v1226
        %v1675 = vpack.c.b16 %v1235, %v1227
        %v1676 = vpack.c.b16 %v1236, %v1228
        %v1677 = vpack.c.b16 %v1237, %v1229
        %v1678 = vpack.c.b16 %v1238, %v1230
        %v1679 = vpack.c.b16 %v1247, %v1239
        %v1680 = vpack.c.b16 %v1248, %v1240
        %v1681 = vpack.c.b16 %v1249, %v1241
        %v1682 = vpack.c.b16 %v1250, %v1242
        %v1683 = vpack.c.b16 %v1251, %v1243
        %v1684 = vpack.c.b16 %v1252, %v1244
        %v1685 = vpack.c.b16 %v1253, %v1245
        %v1686 = vpack.c.b16 %v1254, %v1246
        %v1687 = vpack.c.b16 %v1263, %v1255
        %v1688 = vpack.c.b16 %v1264, %v1256
        %v1689 = vpack.c.b16 %v1265, %v1257
        %v1690 = vpack.c.b16 %v1266, %v1258
        %v1691 = vpack.c.b16 %v1267, %v1259
        %v1692 = vpack.c.b16 %v1268, %v1260
        %v1693 = vpack.c.b16 %v1269, %v1261
        %v1694 = vpack.c.b16 %v1270, %v1262
        %v1695 = vpack.c.b16 %v1279, %v1271
        %v1696 = vpack.c.b16 %v1280, %v1272
        %v1697 = vpack.c.b16 %v1281, %v1273
        %v1698 = vpack.c.b16 %v1282, %v1274
        %v1699 = vpack.c.b16 %v1283, %v1275
        %v1700 = vpack.c.b16 %v1284, %v1276
        %v1701 = vpack.c.b16 %v1285, %v1277
        %v1702 = vpack.c.b16 %v1286, %v1278
        %v1703 = vpack.c.b16 %v1295, %v1287
        %v1704 = vpack.c.b16 %v1296, %v1288
        %v1705 = vpack.c.b16 %v1297, %v1289
        %v1706 = vpack.c.b16 %v1298, %v1290
        %v1707 = vpack.c.b16 %v1299, %v1291
        %v1708 = vpack.c.b16 %v1300, %v1292
        %v1709 = vpack.c.b16 %v1301, %v1293
        %v1710 = vpack.c.b16 %v1302, %v1294
        %v1711 = vpack.c.b16 %v1311, %v1303
        %v1712 = vpack.c.b16 %v1312, %v1304
        %v1713 = vpack.c.b16 %v1313, %v1305
        %v1714 = vpack.c.b16 %v1314, %v1306
        %v1715 = vpack.c.b16 %v1315, %v1307
        %v1716 = vpack.c.b16 %v1316, %v1308
        %v1717 = vpack.c.b16 %v1317, %v1309
        %v1718 = vpack.c.b16 %v1318, %v1310
        %v1719 = vpack.c.b16 %v1327, %v1319
        %v1720 = vpack.c.b16 %v1328, %v1320
        %v1721 = vpack.c.b16 %v1329, %v1321
        %v1722 = vpack.c.b16 %v1330, %v1322
        %v1723 = vpack.c.b16 %v1331, %v1323
        %v1724 = vpack.c.b16 %v1332, %v1324
        %v1725 = vpack.c.b16 %v1333, %v1325
        %v1726 = vpack.c.b16 %v1334, %v1326
        %v1727 = vpack.c.b16 %v1343, %v1335
        %v1728 = vpack.c.b16 %v1344, %v1336
        %v1729 = vpack.c.b16 %v1345, %v1337
        %v1730 = vpack.c.b16 %v1346, %v1338
        %v1731 = vpack.c.b16 %v1347, %v1339
        %v1732 = vpack.c.b16 %v1348, %v1340
        %v1733 = vpack.c.b16 %v1349, %v1341
        %v1734 = vpack.c.b16 %v1350, %v1342
        %v1735 = vpack.c.b16 %v1359, %v1351
        %v1736 = vpack.c.b16 %v1360, %v1352
        %v1737 = vpack.c.b16 %v1361, %v1353
        %v1738 = vpack.c.b16 %v1362, %v1354
        %v1739 = vpack.c.b16 %v1363, %v1355
        %v1740 = vpack.c.b16 %v1364, %v1356
        %v1741 = vpack.c.b16 %v1365, %v1357
        %v1742 = vpack.c.b16 %v1366, %v1358
        %v1743 = vpack.c.b16 %v1375, %v1367
        %v1744 = vpack.c.b16 %v1376, %v1368
        %v1745 = vpack.c.b16 %v1377, %v1369
        %v1746 = vpack.c.b16 %v1378, %v1370
        %v1747 = vpack.c.b16 %v1379, %v1371
        %v1748 = vpack.c.b16 %v1380, %v1372
        %v1749 = vpack.c.b16 %v1381, %v1373
        %v1750 = vpack.c.b16 %v1382, %v1374
        %v1751 = vpack.c.b16 %v1391, %v1383
        %v1752 = vpack.c.b16 %v1392, %v1384
        %v1753 = vpack.c.b16 %v1393, %v1385
        %v1754 = vpack.c.b16 %v1394, %v1386
        %v1755 = vpack.c.b16 %v1395, %v1387
        %v1756 = vpack.c.b16 %v1396, %v1388
        %v1757 = vpack.c.b16 %v1397, %v1389
        %v1758 = vpack.c.b16 %v1398, %v1390
        %v1759 = vpack.c.b16 %v1407, %v1399
        %v1760 = vpack.c.b16 %v1408, %v1400
        %v1761 = vpack.c.b16 %v1409, %v1401
        %v1762 = vpack.c.b16 %v1410, %v1402
        %v1763 = vpack.c.b16 %v1411, %v1403
        %v1764 = vpack.c.b16 %v1412, %v1404
        %v1765 = vpack.c.b16 %v1413, %v1405
        %v1766 = vpack.c.b16 %v1414, %v1406
        %v1767 = vpack.c.b16 %v1423, %v1415
        %v1768 = vpack.c.b16 %v1424, %v1416
        %v1769 = vpack.c.b16 %v1425, %v1417
        %v1770 = vpack.c.b16 %v1426, %v1418
        %v1771 = vpack.c.b16 %v1427, %v1419
        %v1772 = vpack.c.b16 %v1428, %v1420
        %v1773 = vpack.c.b16 %v1429, %v1421
        %v1774 = vpack.c.b16 %v1430, %v1422
        %v1775 = vpack.c.b16 %v1439, %v1431
        %v1776 = vpack.c.b16 %v1440, %v1432
        %v1777 = vpack.c.b16 %v1441, %v1433
        %v1778 = vpack.c.b16 %v1442, %v1434
        %v1779 = vpack.c.b16 %v1443, %v1435
        %v1780 = vpack.c.b16 %v1444, %v1436
        %v1781 = vpack.c.b16 %v1445, %v1437
        %v1782 = vpack.c.b16 %v1446, %v1438
        %v1783 = vpack.c.b16 %v1455, %v1447
        %v1784 = vpack.c.b16 %v1456, %v1448
        %v1785 = vpack.c.b16 %v1457, %v1449
        %v1786 = vpack.c.b16 %v1458, %v1450
        %v1787 = vpack.c.b16 %v1459, %v1451
        %v1788 = vpack.c.b16 %v1460, %v1452
        %v1789 = vpack.c.b16 %v1461, %v1453
        %v1790 = vpack.c.b16 %v1462, %v1454
        %v1791 = vpack.c.b16 %v1471, %v1463
        %v1792 = vpack.c.b16 %v1472, %v1464
        %v1793 = vpack.c.b16 %v1473, %v1465
        %v1794 = vpack.c.b16 %v1474, %v1466
        %v1795 = vpack.c.b16 %v1475, %v1467
        %v1796 = vpack.c.b16 %v1476, %v1468
        %v1797 = vpack.c.b16 %v1477, %v1469
        %v1798 = vpack.c.b16 %v1478, %v1470
        %v1799 = vpack.c.b16 %v1487, %v1479
        %v1800 = vpack.c.b16 %v1488, %v1480
        %v1801 = vpack.c.b16 %v1489, %v1481
        %v1802 = vpack.c.b16 %v1490, %v1482
        %v1803 = vpack.c.b16 %v1491, %v1483
        %v1804 = vpack.c.b16 %v1492, %v1484
        %v1805 = vpack.c.b16 %v1493, %v1485
        %v1806 = vpack.c.b16 %v1494, %v1486
        %v1807 = vpack.c.b16 %v1503, %v1495
        %v1808 = vpack.c.b16 %v1504, %v1496
        %v1809 = vpack.c.b16 %v1505, %v1497
        %v1810 = vpack.c.b16 %v1506, %v1498
        %v1811 = vpack.c.b16 %v1507, %v1499
        %v1812 = vpack.c.b16 %v1508, %v1500
        %v1813 = vpack.c.b16 %v1509, %v1501
        %v1814 = vpack.c.b16 %v1510, %v1502
        %v1815 = vpack.c.b16 %v1519, %v1511
        %v1816 = vpack.c.b16 %v1520, %v1512
        %v1817 = vpack.c.b16 %v1521, %v1513
        %v1818 = vpack.c.b16 %v1522, %v1514
        %v1819 = vpack.c.b16 %v1523, %v1515
        %v1820 = vpack.c.b16 %v1524, %v1516
        %v1821 = vpack.c.b16 %v1525, %v1517
        %v1822 = vpack.c.b16 %v1526, %v1518
        %v1823 = vpack.c.b16 %v1535, %v1527
        %v1824 = vpack.c.b16 %v1536, %v1528
        %v1825 = vpack.c.b16 %v1537, %v1529
        %v1826 = vpack.c.b16 %v1538, %v1530
        %v1827 = vpack.c.b16 %v1539, %v1531
        %v1828 = vpack.c.b16 %v1540, %v1532
        %v1829 = vpack.c.b16 %v1541, %v1533
        %v1830 = vpack.c.b16 %v1542, %v1534
        %v1831 = vpack.c.b16 %v1551, %v1543
        %v1832 = vpack.c.b16 %v1552, %v1544
        %v1833 = vpack.c.b16 %v1553, %v1545
        %v1834 = vpack.c.b16 %v1554, %v1546
        %v1835 = vpack.c.b16 %v1555, %v1547
        %v1836 = vpack.c.b16 %v1556, %v1548
        %v1837 = vpack.c.b16 %v1557, %v1549
        %v1838 = vpack.c.b16 %v1558, %v1550
        %v1839 = vpack.c.b16 %v1567, %v1559
        %v1840 = vpack.c.b16 %v1568, %v1560
        %v1841 = vpack.c.b16 %v1569, %v1561
        %v1842 = vpack.c.b16 %v1570, %v1562
        %v1843 = vpack.c.b16 %v1571, %v1563
        %v1844 = vpack.c.b16 %v1572, %v1564
        %v1845 = vpack.c.b16 %v1573, %v1565
        %v1846 = vpack.c.b16 %v1574, %v1566
        %v1847 = vpack.c.b16 %v1583, %v1575
        %v1848 = vpack.c.b16 %v1584, %v1576
        %v1849 = vpack.c.b16 %v1585, %v1577
        %v1850 = vpack.c.b16 %v1586, %v1578
        %v1851 = vpack.c.b16 %v1587, %v1579
        %v1852 = vpack.c.b16 %v1588, %v1580
        %v1853 = vpack.c.b16 %v1589, %v1581
        %v1854 = vpack.c.b16 %v1590, %v1582
        %v1855 = vpack.c.b16 %v1599, %v1591
        %v1856 = vpack.c.b16 %v1600, %v1592
        %v1857 = vpack.c.b16 %v1601, %v1593
        %v1858 = vpack.c.b16 %v1602, %v1594
        %v1859 = vpack.c.b16 %v1603, %v1595
        %v1860 = vpack.c.b16 %v1604, %v1596
        %v1861 = vpack.c.b16 %v1605, %v1597
        %v1862 = vpack.c.b16 %v1606, %v1598
        %2119 = vmatprep.subr.bf16.mxu0 %v1608
        %2120 = vmatpush1.bf16.msra.mxu0 %v1607
        %2121 = vmatprep.subr.bf16.mxu0 %v1616
        %2122 = vmatpush1.bf16.msra.mxu0 %v1615
        %2123 = vmatprep.subr.bf16.mxu0 %v1624
        %2124 = vmatpush1.bf16.msra.mxu0 %v1623
        %2125 = vmatprep.subr.bf16.mxu0 %v1632
        %2126 = vmatpush1.bf16.msra.mxu0 %v1631
        %2127 = vmatprep.subr.bf16.mxu0 %v1640
        %2128 = vmatpush1.bf16.msra.mxu0 %v1639
        %2129 = vmatprep.subr.bf16.mxu0 %v1648
        %2130 = vmatpush1.bf16.msra.mxu0 %v1647
        %2131 = vmatprep.subr.bf16.mxu0 %v1656
        %2132 = vmatpush1.bf16.msra.mxu0 %v1655
        %2133 = vmatprep.subr.bf16.mxu0 %v1664
        %2134 = vmatpush1.bf16.msra.mxu0 %v1663
        %2135 = vmatprep.subr.bf16.mxu0 %v1672
        %2136 = vmatpush1.bf16.msra.mxu0 %v1671
        %2137 = vmatprep.subr.bf16.mxu0 %v1680
        %2138 = vmatpush1.bf16.msra.mxu0 %v1679
        %2139 = vmatprep.subr.bf16.mxu0 %v1688
        %2140 = vmatpush1.bf16.msra.mxu0 %v1687
        %2141 = vmatprep.subr.bf16.mxu0 %v1696
        %2142 = vmatpush1.bf16.msra.mxu0 %v1695
        %2143 = vmatprep.subr.bf16.mxu0 %v1704
        %2144 = vmatpush1.bf16.msra.mxu0 %v1703
        %2145 = vmatprep.subr.bf16.mxu0 %v1712
        %2146 = vmatpush1.bf16.msra.mxu0 %v1711
        %2147 = vmatprep.subr.bf16.mxu0 %v1720
        %2148 = vmatpush1.bf16.msra.mxu0 %v1719
        %2149 = vmatprep.subr.bf16.mxu0 %v1728
        %2150 = vmatpush1.bf16.msra.mxu0 %v1727
        %2151 = vmatprep.mubr.bf16.mxu0 %v538
        %2152 = vmatmul.mubr.bf16.gmra.mrb[0].mxu0 %v537
        %v2153 = vpop.f32.mrb[0].mxu0
        %v2154 = vadd.f32 %v802, %v2153
        %v2155 = vpop.f32.mrb[0].mxu0
        %v2156 = vadd.f32 %v806, %v2155
        %v2157 = vpop.f32.mrb[0].mxu0
        %v2158 = vpop.f32.mrb[0].mxu0
        %2159 = vdwg.mxu0
        %2160 = vmatprep.subr.bf16.mxu0 %v1736
        %2161 = vmatpush1.bf16.msra.mxu0 %v1735
        %2162 = vmatprep.subr.bf16.mxu0 %v1744
        %2163 = vmatpush1.bf16.msra.mxu0 %v1743
        %2164 = vmatprep.subr.bf16.mxu0 %v1752
        %2165 = vmatpush1.bf16.msra.mxu0 %v1751
        %2166 = vmatprep.subr.bf16.mxu0 %v1760
        %2167 = vmatpush1.bf16.msra.mxu0 %v1759
        %2168 = vmatprep.subr.bf16.mxu0 %v1768
        %2169 = vmatpush1.bf16.msra.mxu0 %v1767
        %2170 = vmatprep.subr.bf16.mxu0 %v1776
        %2171 = vmatpush1.bf16.msra.mxu0 %v1775
        %2172 = vmatprep.subr.bf16.mxu0 %v1784
        %2173 = vmatpush1.bf16.msra.mxu0 %v1783
        %2174 = vmatprep.subr.bf16.mxu0 %v1792
        %2175 = vmatpush1.bf16.msra.mxu0 %v1791
        %2176 = vmatprep.subr.bf16.mxu0 %v1800
        %2177 = vmatpush1.bf16.msra.mxu0 %v1799
        %2178 = vmatprep.subr.bf16.mxu0 %v1808
        %2179 = vmatpush1.bf16.msra.mxu0 %v1807
        %2180 = vmatprep.subr.bf16.mxu0 %v1816
        %2181 = vmatpush1.bf16.msra.mxu0 %v1815
        %2182 = vmatprep.subr.bf16.mxu0 %v1824
        %2183 = vmatpush1.bf16.msra.mxu0 %v1823
        %2184 = vmatprep.subr.bf16.mxu0 %v1832
        %2185 = vmatpush1.bf16.msra.mxu0 %v1831
        %2186 = vmatprep.subr.bf16.mxu0 %v1840
        %2187 = vmatpush1.bf16.msra.mxu0 %v1839
        %2188 = vmatprep.subr.bf16.mxu0 %v1848
        %2189 = vmatpush1.bf16.msra.mxu0 %v1847
        %2190 = vmatprep.subr.bf16.mxu0 %v1856
        %2191 = vmatpush1.bf16.msra.mxu0 %v1855
        %2192 = vmatprep.mubr.bf16.mxu0 %v540
        %2193 = vmatmul.mubr.bf16.gmra.mrb[0].mxu0 %v539
        %v2194 = vpop.f32.mrb[0].mxu0
        %v2195 = vadd.f32 %v2154, %v2194
        %v2196 = vpop.f32.mrb[0].mxu0
        %v2197 = vadd.f32 %v2156, %v2196
        %v2198 = vpop.f32.mrb[0].mxu0
        %v2199 = vpop.f32.mrb[0].mxu0
        %2200 = vdwg.mxu0
        %2201 = vmatprep.subr.bf16.mxu0 %v1610
        %2202 = vmatpush1.bf16.msra.mxu0 %v1609
        %2203 = vmatprep.subr.bf16.mxu0 %v1618
        %2204 = vmatpush1.bf16.msra.mxu0 %v1617
        %2205 = vmatprep.subr.bf16.mxu0 %v1626
        %2206 = vmatpush1.bf16.msra.mxu0 %v1625
        %2207 = vmatprep.subr.bf16.mxu0 %v1634
        %2208 = vmatpush1.bf16.msra.mxu0 %v1633
        %2209 = vmatprep.subr.bf16.mxu0 %v1642
        %2210 = vmatpush1.bf16.msra.mxu0 %v1641
        %2211 = vmatprep.subr.bf16.mxu0 %v1650
        %2212 = vmatpush1.bf16.msra.mxu0 %v1649
        %2213 = vmatprep.subr.bf16.mxu0 %v1658
        %2214 = vmatpush1.bf16.msra.mxu0 %v1657
        %2215 = vmatprep.subr.bf16.mxu0 %v1666
        %2216 = vmatpush1.bf16.msra.mxu0 %v1665
        %2217 = vmatprep.subr.bf16.mxu0 %v1674
        %2218 = vmatpush1.bf16.msra.mxu0 %v1673
        %2219 = vmatprep.subr.bf16.mxu0 %v1682
        %2220 = vmatpush1.bf16.msra.mxu0 %v1681
        %2221 = vmatprep.subr.bf16.mxu0 %v1690
        %2222 = vmatpush1.bf16.msra.mxu0 %v1689
        %2223 = vmatprep.subr.bf16.mxu0 %v1698
        %2224 = vmatpush1.bf16.msra.mxu0 %v1697
        %2225 = vmatprep.subr.bf16.mxu0 %v1706
        %2226 = vmatpush1.bf16.msra.mxu0 %v1705
        %2227 = vmatprep.subr.bf16.mxu0 %v1714
        %2228 = vmatpush1.bf16.msra.mxu0 %v1713
        %2229 = vmatprep.subr.bf16.mxu0 %v1722
        %2230 = vmatpush1.bf16.msra.mxu0 %v1721
        %2231 = vmatprep.subr.bf16.mxu0 %v1730
        %2232 = vmatpush1.bf16.msra.mxu0 %v1729
        %2233 = vmatprep.mubr.bf16.mxu0 %v538
        %2234 = vmatmul.mubr.bf16.gmra.mrb[0].mxu0 %v537
        %v2235 = vpop.f32.mrb[0].mxu0
        %v2236 = vadd.f32 %v810, %v2235
        %v2237 = vpop.f32.mrb[0].mxu0
        %v2238 = vadd.f32 %v814, %v2237
        %v2239 = vpop.f32.mrb[0].mxu0
        %v2240 = vpop.f32.mrb[0].mxu0
        %2241 = vdwg.mxu0
        %2242 = vmatprep.subr.bf16.mxu0 %v1738
        %2243 = vmatpush1.bf16.msra.mxu0 %v1737
        %2244 = vmatprep.subr.bf16.mxu0 %v1746
        %2245 = vmatpush1.bf16.msra.mxu0 %v1745
        %2246 = vmatprep.subr.bf16.mxu0 %v1754
        %2247 = vmatpush1.bf16.msra.mxu0 %v1753
        %2248 = vmatprep.subr.bf16.mxu0 %v1762
        %2249 = vmatpush1.bf16.msra.mxu0 %v1761
        %2250 = vmatprep.subr.bf16.mxu0 %v1770
        %2251 = vmatpush1.bf16.msra.mxu0 %v1769
        %2252 = vmatprep.subr.bf16.mxu0 %v1778
        %2253 = vmatpush1.bf16.msra.mxu0 %v1777
        %2254 = vmatprep.subr.bf16.mxu0 %v1786
        %2255 = vmatpush1.bf16.msra.mxu0 %v1785
        %2256 = vmatprep.subr.bf16.mxu0 %v1794
        %2257 = vmatpush1.bf16.msra.mxu0 %v1793
        %2258 = vmatprep.subr.bf16.mxu0 %v1802
        %2259 = vmatpush1.bf16.msra.mxu0 %v1801
        %2260 = vmatprep.subr.bf16.mxu0 %v1810
        %2261 = vmatpush1.bf16.msra.mxu0 %v1809
        %2262 = vmatprep.subr.bf16.mxu0 %v1818
        %2263 = vmatpush1.bf16.msra.mxu0 %v1817
        %2264 = vmatprep.subr.bf16.mxu0 %v1826
        %2265 = vmatpush1.bf16.msra.mxu0 %v1825
        %2266 = vmatprep.subr.bf16.mxu0 %v1834
        %2267 = vmatpush1.bf16.msra.mxu0 %v1833
        %2268 = vmatprep.subr.bf16.mxu0 %v1842
        %2269 = vmatpush1.bf16.msra.mxu0 %v1841
        %2270 = vmatprep.subr.bf16.mxu0 %v1850
        %2271 = vmatpush1.bf16.msra.mxu0 %v1849
        %2272 = vmatprep.subr.bf16.mxu0 %v1858
        %2273 = vmatpush1.bf16.msra.mxu0 %v1857
        %2274 = vmatprep.mubr.bf16.mxu0 %v540
        %2275 = vmatmul.mubr.bf16.gmra.mrb[0].mxu0 %v539
        %v2276 = vpop.f32.mrb[0].mxu0
        %v2277 = vadd.f32 %v2236, %v2276
        %v2278 = vpop.f32.mrb[0].mxu0
        %v2279 = vadd.f32 %v2238, %v2278
        %v2280 = vpop.f32.mrb[0].mxu0
        %v2281 = vpop.f32.mrb[0].mxu0
        %2282 = vdwg.mxu0
        %2283 = vmatprep.subr.bf16.mxu0 %v1612
        %2284 = vmatpush1.bf16.msra.mxu0 %v1611
        %2285 = vmatprep.subr.bf16.mxu0 %v1620
        %2286 = vmatpush1.bf16.msra.mxu0 %v1619
        %2287 = vmatprep.subr.bf16.mxu0 %v1628
        %2288 = vmatpush1.bf16.msra.mxu0 %v1627
        %2289 = vmatprep.subr.bf16.mxu0 %v1636
        %2290 = vmatpush1.bf16.msra.mxu0 %v1635
        %2291 = vmatprep.subr.bf16.mxu0 %v1644
        %2292 = vmatpush1.bf16.msra.mxu0 %v1643
        %2293 = vmatprep.subr.bf16.mxu0 %v1652
        %2294 = vmatpush1.bf16.msra.mxu0 %v1651
        %2295 = vmatprep.subr.bf16.mxu0 %v1660
        %2296 = vmatpush1.bf16.msra.mxu0 %v1659
        %2297 = vmatprep.subr.bf16.mxu0 %v1668
        %2298 = vmatpush1.bf16.msra.mxu0 %v1667
        %2299 = vmatprep.subr.bf16.mxu0 %v1676
        %2300 = vmatpush1.bf16.msra.mxu0 %v1675
        %2301 = vmatprep.subr.bf16.mxu0 %v1684
        %2302 = vmatpush1.bf16.msra.mxu0 %v1683
        %2303 = vmatprep.subr.bf16.mxu0 %v1692
        %2304 = vmatpush1.bf16.msra.mxu0 %v1691
        %2305 = vmatprep.subr.bf16.mxu0 %v1700
        %2306 = vmatpush1.bf16.msra.mxu0 %v1699
        %2307 = vmatprep.subr.bf16.mxu0 %v1708
        %2308 = vmatpush1.bf16.msra.mxu0 %v1707
        %2309 = vmatprep.subr.bf16.mxu0 %v1716
        %2310 = vmatpush1.bf16.msra.mxu0 %v1715
        %2311 = vmatprep.subr.bf16.mxu0 %v1724
        %2312 = vmatpush1.bf16.msra.mxu0 %v1723
        %2313 = vmatprep.subr.bf16.mxu0 %v1732
        %2314 = vmatpush1.bf16.msra.mxu0 %v1731
        %2315 = vmatprep.mubr.bf16.mxu0 %v538
        %2316 = vmatmul.mubr.bf16.gmra.mrb[0].mxu0 %v537
        %v2317 = vpop.f32.mrb[0].mxu0
        %v2318 = vadd.f32 %v818, %v2317
        %v2319 = vpop.f32.mrb[0].mxu0
        %v2320 = vadd.f32 %v822, %v2319
        %v2321 = vpop.f32.mrb[0].mxu0
        %v2322 = vpop.f32.mrb[0].mxu0
        %2323 = vdwg.mxu0
        %2324 = vmatprep.subr.bf16.mxu0 %v1740
        %2325 = vmatpush1.bf16.msra.mxu0 %v1739
        %2326 = vmatprep.subr.bf16.mxu0 %v1748
        %2327 = vmatpush1.bf16.msra.mxu0 %v1747
        %2328 = vmatprep.subr.bf16.mxu0 %v1756
        %2329 = vmatpush1.bf16.msra.mxu0 %v1755
        %2330 = vmatprep.subr.bf16.mxu0 %v1764
        %2331 = vmatpush1.bf16.msra.mxu0 %v1763
        %2332 = vmatprep.subr.bf16.mxu0 %v1772
        %2333 = vmatpush1.bf16.msra.mxu0 %v1771
        %2334 = vmatprep.subr.bf16.mxu0 %v1780
        %2335 = vmatpush1.bf16.msra.mxu0 %v1779
        %2336 = vmatprep.subr.bf16.mxu0 %v1788
        %2337 = vmatpush1.bf16.msra.mxu0 %v1787
        %2338 = vmatprep.subr.bf16.mxu0 %v1796
        %2339 = vmatpush1.bf16.msra.mxu0 %v1795
        %2340 = vmatprep.subr.bf16.mxu0 %v1804
        %2341 = vmatpush1.bf16.msra.mxu0 %v1803
        %2342 = vmatprep.subr.bf16.mxu0 %v1812
        %2343 = vmatpush1.bf16.msra.mxu0 %v1811
        %2344 = vmatprep.subr.bf16.mxu0 %v1820
        %2345 = vmatpush1.bf16.msra.mxu0 %v1819
        %2346 = vmatprep.subr.bf16.mxu0 %v1828
        %2347 = vmatpush1.bf16.msra.mxu0 %v1827
        %2348 = vmatprep.subr.bf16.mxu0 %v1836
        %2349 = vmatpush1.bf16.msra.mxu0 %v1835
        %2350 = vmatprep.subr.bf16.mxu0 %v1844
        %2351 = vmatpush1.bf16.msra.mxu0 %v1843
        %2352 = vmatprep.subr.bf16.mxu0 %v1852
        %2353 = vmatpush1.bf16.msra.mxu0 %v1851
        %2354 = vmatprep.subr.bf16.mxu0 %v1860
        %2355 = vmatpush1.bf16.msra.mxu0 %v1859
        %2356 = vmatprep.mubr.bf16.mxu0 %v540
        %2357 = vmatmul.mubr.bf16.gmra.mrb[0].mxu0 %v539
        %v2358 = vpop.f32.mrb[0].mxu0
        %v2359 = vadd.f32 %v2318, %v2358
        %v2360 = vpop.f32.mrb[0].mxu0
        %v2361 = vadd.f32 %v2320, %v2360
        %v2362 = vpop.f32.mrb[0].mxu0
        %v2363 = vpop.f32.mrb[0].mxu0
        %2364 = vdwg.mxu0
        %2365 = vmatprep.subr.bf16.mxu0 %v1614
        %2366 = vmatpush1.bf16.msra.mxu0 %v1613
        %2367 = vmatprep.subr.bf16.mxu0 %v1622
        %2368 = vmatpush1.bf16.msra.mxu0 %v1621
        %2369 = vmatprep.subr.bf16.mxu0 %v1630
        %2370 = vmatpush1.bf16.msra.mxu0 %v1629
        %2371 = vmatprep.subr.bf16.mxu0 %v1638
        %2372 = vmatpush1.bf16.msra.mxu0 %v1637
        %2373 = vmatprep.subr.bf16.mxu0 %v1646
        %2374 = vmatpush1.bf16.msra.mxu0 %v1645
        %2375 = vmatprep.subr.bf16.mxu0 %v1654
        %2376 = vmatpush1.bf16.msra.mxu0 %v1653
        %2377 = vmatprep.subr.bf16.mxu0 %v1662
        %2378 = vmatpush1.bf16.msra.mxu0 %v1661
        %2379 = vmatprep.subr.bf16.mxu0 %v1670
        %2380 = vmatpush1.bf16.msra.mxu0 %v1669
        %2381 = vmatprep.subr.bf16.mxu0 %v1678
        %2382 = vmatpush1.bf16.msra.mxu0 %v1677
        %2383 = vmatprep.subr.bf16.mxu0 %v1686
        %2384 = vmatpush1.bf16.msra.mxu0 %v1685
        %2385 = vmatprep.subr.bf16.mxu0 %v1694
        %2386 = vmatpush1.bf16.msra.mxu0 %v1693
        %2387 = vmatprep.subr.bf16.mxu0 %v1702
        %2388 = vmatpush1.bf16.msra.mxu0 %v1701
        %2389 = vmatprep.subr.bf16.mxu0 %v1710
        %2390 = vmatpush1.bf16.msra.mxu0 %v1709
        %2391 = vmatprep.subr.bf16.mxu0 %v1718
        %2392 = vmatpush1.bf16.msra.mxu0 %v1717
        %2393 = vmatprep.subr.bf16.mxu0 %v1726
        %2394 = vmatpush1.bf16.msra.mxu0 %v1725
        %2395 = vmatprep.subr.bf16.mxu0 %v1734
        %2396 = vmatpush1.bf16.msra.mxu0 %v1733
        %2397 = vmatprep.mubr.bf16.mxu0 %v538
        %2398 = vmatmul.mubr.bf16.gmra.mrb[0].mxu0 %v537
        %v2399 = vpop.f32.mrb[0].mxu0
        %v2400 = vadd.f32 %v826, %v2399
        %v2401 = vpop.f32.mrb[0].mxu0
        %v2402 = vadd.f32 %v830, %v2401
        %v2403 = vpop.f32.mrb[0].mxu0
        %v2404 = vpop.f32.mrb[0].mxu0
        %2405 = vdwg.mxu0
        %2406 = vmatprep.subr.bf16.mxu0 %v1742
        %2407 = vmatpush1.bf16.msra.mxu0 %v1741
        %2408 = vmatprep.subr.bf16.mxu0 %v1750
        %2409 = vmatpush1.bf16.msra.mxu0 %v1749
        %2410 = vmatprep.subr.bf16.mxu0 %v1758
        %2411 = vmatpush1.bf16.msra.mxu0 %v1757
        %2412 = vmatprep.subr.bf16.mxu0 %v1766
        %2413 = vmatpush1.bf16.msra.mxu0 %v1765
        %2414 = vmatprep.subr.bf16.mxu0 %v1774
        %2415 = vmatpush1.bf16.msra.mxu0 %v1773
        %2416 = vmatprep.subr.bf16.mxu0 %v1782
        %2417 = vmatpush1.bf16.msra.mxu0 %v1781
        %2418 = vmatprep.subr.bf16.mxu0 %v1790
        %2419 = vmatpush1.bf16.msra.mxu0 %v1789
        %2420 = vmatprep.subr.bf16.mxu0 %v1798
        %2421 = vmatpush1.bf16.msra.mxu0 %v1797
        %2422 = vmatprep.subr.bf16.mxu0 %v1806
        %2423 = vmatpush1.bf16.msra.mxu0 %v1805
        %2424 = vmatprep.subr.bf16.mxu0 %v1814
        %2425 = vmatpush1.bf16.msra.mxu0 %v1813
        %2426 = vmatprep.subr.bf16.mxu0 %v1822
        %2427 = vmatpush1.bf16.msra.mxu0 %v1821
        %2428 = vmatprep.subr.bf16.mxu0 %v1830
        %2429 = vmatpush1.bf16.msra.mxu0 %v1829
        %2430 = vmatprep.subr.bf16.mxu0 %v1838
        %2431 = vmatpush1.bf16.msra.mxu0 %v1837
        %2432 = vmatprep.subr.bf16.mxu0 %v1846
        %2433 = vmatpush1.bf16.msra.mxu0 %v1845
        %2434 = vmatprep.subr.bf16.mxu0 %v1854
        %2435 = vmatpush1.bf16.msra.mxu0 %v1853
        %2436 = vmatprep.subr.bf16.mxu0 %v1862
        %2437 = vmatpush1.bf16.msra.mxu0 %v1861
        %2438 = vmatprep.mubr.bf16.mxu0 %v540
        %2439 = vmatmul.mubr.bf16.gmra.mrb[0].mxu0 %v539
        %v2440 = vpop.f32.mrb[0].mxu0
        %v2441 = vadd.f32 %v2400, %v2440
        %v2442 = vpop.f32.mrb[0].mxu0
        %v2443 = vadd.f32 %v2402, %v2442
        %v2444 = vpop.f32.mrb[0].mxu0
        %v2445 = vpop.f32.mrb[0].mxu0
        %2446 = vdwg.mxu0
        %v2447 = vmax.f32 %v2195, 0.0
        %v2448 = vmax.f32 %v2197, 0.0
        %v2449 = vmax.f32 %v2277, 0.0
        %v2450 = vmax.f32 %v2279, 0.0
        %v2451 = vmax.f32 %v2359, 0.0
        %v2452 = vmax.f32 %v2361, 0.0
        %v2453 = vmax.f32 %v2441, 0.0
        %v2454 = vmax.f32 %v2443, 0.0
        %v2455 = vpack.c.bf16 %v2447, %v2447
        %v2456 = vpack.c.bf16 %v2448, %v2448
        %v2457 = vpack.c.bf16 %v2449, %v2449
        %v2458 = vpack.c.bf16 %v2450, %v2450
        %v2459 = vpack.c.bf16 %v2451, %v2451
        %v2460 = vpack.c.bf16 %v2452, %v2452
        %v2461 = vpack.c.bf16 %v2453, %v2453
        %v2462 = vpack.c.bf16 %v2454, %v2454
        %v2463 = vld [vmem:[%s500] sm:$0xff]
        %v2464 = vld [vmem:[%s500 + $0x8] sm:$0xff]
        %v2465 = vld [vmem:[%s500 + $0x10] sm:$0xff]
        %v2466 = vld [vmem:[%s500 + $0x18] sm:$0xff]
        %v2467 = vld [vmem:[%s500 + $0x20] sm:$0xff]
        %v2468 = vld [vmem:[%s500 + $0x28] sm:$0xff]
        %v2469 = vld [vmem:[%s500 + $0x30] sm:$0xff]
        %v2470 = vld [vmem:[%s500 + $0x38] sm:$0xff]
        %v2471 = vld [vmem:[%s500 + $0x40] sm:$0xff]
        %v2472 = vld [vmem:[%s500 + $0x48] sm:$0xff]
        %v2473 = vld [vmem:[%s500 + $0x50] sm:$0xff]
        %v2474 = vld [vmem:[%s500 + $0x58] sm:$0xff]
        %v2475 = vld [vmem:[%s500 + $0x60] sm:$0xff]
        %v2476 = vld [vmem:[%s500 + $0x68] sm:$0xff]
        %v2477 = vld [vmem:[%s500 + $0x70] sm:$0xff]
        %v2478 = vld [vmem:[%s500 + $0x78] sm:$0xff]
        %v2479 = vld [vmem:[%s500 + $0x80] sm:$0xff]
        %v2480 = vld [vmem:[%s500 + $0x88] sm:$0xff]
        %v2481 = vld [vmem:[%s500 + $0x90] sm:$0xff]
        %v2482 = vld [vmem:[%s500 + $0x98] sm:$0xff]
        %v2483 = vld [vmem:[%s500 + $0xa0] sm:$0xff]
        %v2484 = vld [vmem:[%s500 + $0xa8] sm:$0xff]
        %v2485 = vld [vmem:[%s500 + $0xb0] sm:$0xff]
        %v2486 = vld [vmem:[%s500 + $0xb8] sm:$0xff]
        %v2487 = vld [vmem:[%s500 + $0xc0] sm:$0xff]
        %v2488 = vld [vmem:[%s500 + $0xc8] sm:$0xff]
        %v2489 = vld [vmem:[%s500 + $0xd0] sm:$0xff]
        %v2490 = vld [vmem:[%s500 + $0xd8] sm:$0xff]
        %v2491 = vld [vmem:[%s500 + $0xe0] sm:$0xff]
        %v2492 = vld [vmem:[%s500 + $0xe8] sm:$0xff]
        %v2493 = vld [vmem:[%s500 + $0xf0] sm:$0xff]
        %v2494 = vld [vmem:[%s500 + $0xf8] sm:$0xff]
        %v2495 = vld [vmem:[%s500 + $0x100] sm:$0xff]
        %v2496 = vld [vmem:[%s500 + $0x108] sm:$0xff]
        %v2497 = vld [vmem:[%s500 + $0x110] sm:$0xff]
        %v2498 = vld [vmem:[%s500 + $0x118] sm:$0xff]
        %v2499 = vld [vmem:[%s500 + $0x120] sm:$0xff]
        %v2500 = vld [vmem:[%s500 + $0x128] sm:$0xff]
        %v2501 = vld [vmem:[%s500 + $0x130] sm:$0xff]
        %v2502 = vld [vmem:[%s500 + $0x138] sm:$0xff]
        %v2503 = vld [vmem:[%s500 + $0x140] sm:$0xff]
        %v2504 = vld [vmem:[%s500 + $0x148] sm:$0xff]
        %v2505 = vld [vmem:[%s500 + $0x150] sm:$0xff]
        %v2506 = vld [vmem:[%s500 + $0x158] sm:$0xff]
        %v2507 = vld [vmem:[%s500 + $0x160] sm:$0xff]
        %v2508 = vld [vmem:[%s500 + $0x168] sm:$0xff]
        %v2509 = vld [vmem:[%s500 + $0x170] sm:$0xff]
        %v2510 = vld [vmem:[%s500 + $0x178] sm:$0xff]
        %v2511 = vld [vmem:[%s500 + $0x180] sm:$0xff]
        %v2512 = vld [vmem:[%s500 + $0x188] sm:$0xff]
        %v2513 = vld [vmem:[%s500 + $0x190] sm:$0xff]
        %v2514 = vld [vmem:[%s500 + $0x198] sm:$0xff]
        %v2515 = vld [vmem:[%s500 + $0x1a0] sm:$0xff]
        %v2516 = vld [vmem:[%s500 + $0x1a8] sm:$0xff]
        %v2517 = vld [vmem:[%s500 + $0x1b0] sm:$0xff]
        %v2518 = vld [vmem:[%s500 + $0x1b8] sm:$0xff]
        %v2519 = vld [vmem:[%s500 + $0x1c0] sm:$0xff]
        %v2520 = vld [vmem:[%s500 + $0x1c8] sm:$0xff]
        %v2521 = vld [vmem:[%s500 + $0x1d0] sm:$0xff]
        %v2522 = vld [vmem:[%s500 + $0x1d8] sm:$0xff]
        %v2523 = vld [vmem:[%s500 + $0x1e0] sm:$0xff]
        %v2524 = vld [vmem:[%s500 + $0x1e8] sm:$0xff]
        %v2525 = vld [vmem:[%s500 + $0x1f0] sm:$0xff]
        %v2526 = vld [vmem:[%s500 + $0x1f8] sm:$0xff]
        %v2527 = vld [vmem:[%s500 + $0x200] sm:$0xff]
        %v2528 = vld [vmem:[%s500 + $0x208] sm:$0xff]
        %v2529 = vld [vmem:[%s500 + $0x210] sm:$0xff]
        %v2530 = vld [vmem:[%s500 + $0x218] sm:$0xff]
        %v2531 = vld [vmem:[%s500 + $0x220] sm:$0xff]
        %v2532 = vld [vmem:[%s500 + $0x228] sm:$0xff]
        %v2533 = vld [vmem:[%s500 + $0x230] sm:$0xff]
        %v2534 = vld [vmem:[%s500 + $0x238] sm:$0xff]
        %v2535 = vld [vmem:[%s500 + $0x240] sm:$0xff]
        %v2536 = vld [vmem:[%s500 + $0x248] sm:$0xff]
        %v2537 = vld [vmem:[%s500 + $0x250] sm:$0xff]
        %v2538 = vld [vmem:[%s500 + $0x258] sm:$0xff]
        %v2539 = vld [vmem:[%s500 + $0x260] sm:$0xff]
        %v2540 = vld [vmem:[%s500 + $0x268] sm:$0xff]
        %v2541 = vld [vmem:[%s500 + $0x270] sm:$0xff]
        %v2542 = vld [vmem:[%s500 + $0x278] sm:$0xff]
        %v2543 = vld [vmem:[%s500 + $0x280] sm:$0xff]
        %v2544 = vld [vmem:[%s500 + $0x288] sm:$0xff]
        %v2545 = vld [vmem:[%s500 + $0x290] sm:$0xff]
        %v2546 = vld [vmem:[%s500 + $0x298] sm:$0xff]
        %v2547 = vld [vmem:[%s500 + $0x2a0] sm:$0xff]
        %v2548 = vld [vmem:[%s500 + $0x2a8] sm:$0xff]
        %v2549 = vld [vmem:[%s500 + $0x2b0] sm:$0xff]
        %v2550 = vld [vmem:[%s500 + $0x2b8] sm:$0xff]
        %v2551 = vld [vmem:[%s500 + $0x2c0] sm:$0xff]
        %v2552 = vld [vmem:[%s500 + $0x2c8] sm:$0xff]
        %v2553 = vld [vmem:[%s500 + $0x2d0] sm:$0xff]
        %v2554 = vld [vmem:[%s500 + $0x2d8] sm:$0xff]
        %v2555 = vld [vmem:[%s500 + $0x2e0] sm:$0xff]
        %v2556 = vld [vmem:[%s500 + $0x2e8] sm:$0xff]
        %v2557 = vld [vmem:[%s500 + $0x2f0] sm:$0xff]
        %v2558 = vld [vmem:[%s500 + $0x2f8] sm:$0xff]
        %v2559 = vld [vmem:[%s500 + $0x300] sm:$0xff]
        %v2560 = vld [vmem:[%s500 + $0x308] sm:$0xff]
        %v2561 = vld [vmem:[%s500 + $0x310] sm:$0xff]
        %v2562 = vld [vmem:[%s500 + $0x318] sm:$0xff]
        %v2563 = vld [vmem:[%s500 + $0x320] sm:$0xff]
        %v2564 = vld [vmem:[%s500 + $0x328] sm:$0xff]
        %v2565 = vld [vmem:[%s500 + $0x330] sm:$0xff]
        %v2566 = vld [vmem:[%s500 + $0x338] sm:$0xff]
        %v2567 = vld [vmem:[%s500 + $0x340] sm:$0xff]
        %v2568 = vld [vmem:[%s500 + $0x348] sm:$0xff]
        %v2569 = vld [vmem:[%s500 + $0x350] sm:$0xff]
        %v2570 = vld [vmem:[%s500 + $0x358] sm:$0xff]
        %v2571 = vld [vmem:[%s500 + $0x360] sm:$0xff]
        %v2572 = vld [vmem:[%s500 + $0x368] sm:$0xff]
        %v2573 = vld [vmem:[%s500 + $0x370] sm:$0xff]
        %v2574 = vld [vmem:[%s500 + $0x378] sm:$0xff]
        %v2575 = vld [vmem:[%s500 + $0x380] sm:$0xff]
        %v2576 = vld [vmem:[%s500 + $0x388] sm:$0xff]
        %v2577 = vld [vmem:[%s500 + $0x390] sm:$0xff]
        %v2578 = vld [vmem:[%s500 + $0x398] sm:$0xff]
        %v2579 = vld [vmem:[%s500 + $0x3a0] sm:$0xff]
        %v2580 = vld [vmem:[%s500 + $0x3a8] sm:$0xff]
        %v2581 = vld [vmem:[%s500 + $0x3b0] sm:$0xff]
        %v2582 = vld [vmem:[%s500 + $0x3b8] sm:$0xff]
        %v2583 = vld [vmem:[%s500 + $0x3c0] sm:$0xff]
        %v2584 = vld [vmem:[%s500 + $0x3c8] sm:$0xff]
        %v2585 = vld [vmem:[%s500 + $0x3d0] sm:$0xff]
        %v2586 = vld [vmem:[%s500 + $0x3d8] sm:$0xff]
        %v2587 = vld [vmem:[%s500 + $0x3e0] sm:$0xff]
        %v2588 = vld [vmem:[%s500 + $0x3e8] sm:$0xff]
        %v2589 = vld [vmem:[%s500 + $0x3f0] sm:$0xff]
        %v2590 = vld [vmem:[%s500 + $0x3f8] sm:$0xff]
        %v2591 = vld [vmem:[%s500 + $0x400] sm:$0xff]
        %v2592 = vld [vmem:[%s500 + $0x408] sm:$0xff]
        %v2593 = vld [vmem:[%s500 + $0x410] sm:$0xff]
        %v2594 = vld [vmem:[%s500 + $0x418] sm:$0xff]
        %v2595 = vld [vmem:[%s500 + $0x420] sm:$0xff]
        %v2596 = vld [vmem:[%s500 + $0x428] sm:$0xff]
        %v2597 = vld [vmem:[%s500 + $0x430] sm:$0xff]
        %v2598 = vld [vmem:[%s500 + $0x438] sm:$0xff]
        %v2599 = vld [vmem:[%s500 + $0x440] sm:$0xff]
        %v2600 = vld [vmem:[%s500 + $0x448] sm:$0xff]
        %v2601 = vld [vmem:[%s500 + $0x450] sm:$0xff]
        %v2602 = vld [vmem:[%s500 + $0x458] sm:$0xff]
        %v2603 = vld [vmem:[%s500 + $0x460] sm:$0xff]
        %v2604 = vld [vmem:[%s500 + $0x468] sm:$0xff]
        %v2605 = vld [vmem:[%s500 + $0x470] sm:$0xff]
        %v2606 = vld [vmem:[%s500 + $0x478] sm:$0xff]
        %v2607 = vld [vmem:[%s500 + $0x480] sm:$0xff]
        %v2608 = vld [vmem:[%s500 + $0x488] sm:$0xff]
        %v2609 = vld [vmem:[%s500 + $0x490] sm:$0xff]
        %v2610 = vld [vmem:[%s500 + $0x498] sm:$0xff]
        %v2611 = vld [vmem:[%s500 + $0x4a0] sm:$0xff]
        %v2612 = vld [vmem:[%s500 + $0x4a8] sm:$0xff]
        %v2613 = vld [vmem:[%s500 + $0x4b0] sm:$0xff]
        %v2614 = vld [vmem:[%s500 + $0x4b8] sm:$0xff]
        %v2615 = vld [vmem:[%s500 + $0x4c0] sm:$0xff]
        %v2616 = vld [vmem:[%s500 + $0x4c8] sm:$0xff]
        %v2617 = vld [vmem:[%s500 + $0x4d0] sm:$0xff]
        %v2618 = vld [vmem:[%s500 + $0x4d8] sm:$0xff]
        %v2619 = vld [vmem:[%s500 + $0x4e0] sm:$0xff]
        %v2620 = vld [vmem:[%s500 + $0x4e8] sm:$0xff]
        %v2621 = vld [vmem:[%s500 + $0x4f0] sm:$0xff]
        %v2622 = vld [vmem:[%s500 + $0x4f8] sm:$0xff]
        %v2623 = vld [vmem:[%s500 + $0x500] sm:$0xff]
        %v2624 = vld [vmem:[%s500 + $0x508] sm:$0xff]
        %v2625 = vld [vmem:[%s500 + $0x510] sm:$0xff]
        %v2626 = vld [vmem:[%s500 + $0x518] sm:$0xff]
        %v2627 = vld [vmem:[%s500 + $0x520] sm:$0xff]
        %v2628 = vld [vmem:[%s500 + $0x528] sm:$0xff]
        %v2629 = vld [vmem:[%s500 + $0x530] sm:$0xff]
        %v2630 = vld [vmem:[%s500 + $0x538] sm:$0xff]
        %v2631 = vld [vmem:[%s500 + $0x540] sm:$0xff]
        %v2632 = vld [vmem:[%s500 + $0x548] sm:$0xff]
        %v2633 = vld [vmem:[%s500 + $0x550] sm:$0xff]
        %v2634 = vld [vmem:[%s500 + $0x558] sm:$0xff]
        %v2635 = vld [vmem:[%s500 + $0x560] sm:$0xff]
        %v2636 = vld [vmem:[%s500 + $0x568] sm:$0xff]
        %v2637 = vld [vmem:[%s500 + $0x570] sm:$0xff]
        %v2638 = vld [vmem:[%s500 + $0x578] sm:$0xff]
        %v2639 = vld [vmem:[%s500 + $0x580] sm:$0xff]
        %v2640 = vld [vmem:[%s500 + $0x588] sm:$0xff]
        %v2641 = vld [vmem:[%s500 + $0x590] sm:$0xff]
        %v2642 = vld [vmem:[%s500 + $0x598] sm:$0xff]
        %v2643 = vld [vmem:[%s500 + $0x5a0] sm:$0xff]
        %v2644 = vld [vmem:[%s500 + $0x5a8] sm:$0xff]
        %v2645 = vld [vmem:[%s500 + $0x5b0] sm:$0xff]
        %v2646 = vld [vmem:[%s500 + $0x5b8] sm:$0xff]
        %v2647 = vld [vmem:[%s500 + $0x5c0] sm:$0xff]
        %v2648 = vld [vmem:[%s500 + $0x5c8] sm:$0xff]
        %v2649 = vld [vmem:[%s500 + $0x5d0] sm:$0xff]
        %v2650 = vld [vmem:[%s500 + $0x5d8] sm:$0xff]
        %v2651 = vld [vmem:[%s500 + $0x5e0] sm:$0xff]
        %v2652 = vld [vmem:[%s500 + $0x5e8] sm:$0xff]
        %v2653 = vld [vmem:[%s500 + $0x5f0] sm:$0xff]
        %v2654 = vld [vmem:[%s500 + $0x5f8] sm:$0xff]
        %v2655 = vld [vmem:[%s500 + $0x600] sm:$0xff]
        %v2656 = vld [vmem:[%s500 + $0x608] sm:$0xff]
        %v2657 = vld [vmem:[%s500 + $0x610] sm:$0xff]
        %v2658 = vld [vmem:[%s500 + $0x618] sm:$0xff]
        %v2659 = vld [vmem:[%s500 + $0x620] sm:$0xff]
        %v2660 = vld [vmem:[%s500 + $0x628] sm:$0xff]
        %v2661 = vld [vmem:[%s500 + $0x630] sm:$0xff]
        %v2662 = vld [vmem:[%s500 + $0x638] sm:$0xff]
        %v2663 = vld [vmem:[%s500 + $0x640] sm:$0xff]
        %v2664 = vld [vmem:[%s500 + $0x648] sm:$0xff]
        %v2665 = vld [vmem:[%s500 + $0x650] sm:$0xff]
        %v2666 = vld [vmem:[%s500 + $0x658] sm:$0xff]
        %v2667 = vld [vmem:[%s500 + $0x660] sm:$0xff]
        %v2668 = vld [vmem:[%s500 + $0x668] sm:$0xff]
        %v2669 = vld [vmem:[%s500 + $0x670] sm:$0xff]
        %v2670 = vld [vmem:[%s500 + $0x678] sm:$0xff]
        %v2671 = vld [vmem:[%s500 + $0x680] sm:$0xff]
        %v2672 = vld [vmem:[%s500 + $0x688] sm:$0xff]
        %v2673 = vld [vmem:[%s500 + $0x690] sm:$0xff]
        %v2674 = vld [vmem:[%s500 + $0x698] sm:$0xff]
        %v2675 = vld [vmem:[%s500 + $0x6a0] sm:$0xff]
        %v2676 = vld [vmem:[%s500 + $0x6a8] sm:$0xff]
        %v2677 = vld [vmem:[%s500 + $0x6b0] sm:$0xff]
        %v2678 = vld [vmem:[%s500 + $0x6b8] sm:$0xff]
        %v2679 = vld [vmem:[%s500 + $0x6c0] sm:$0xff]
        %v2680 = vld [vmem:[%s500 + $0x6c8] sm:$0xff]
        %v2681 = vld [vmem:[%s500 + $0x6d0] sm:$0xff]
        %v2682 = vld [vmem:[%s500 + $0x6d8] sm:$0xff]
        %v2683 = vld [vmem:[%s500 + $0x6e0] sm:$0xff]
        %v2684 = vld [vmem:[%s500 + $0x6e8] sm:$0xff]
        %v2685 = vld [vmem:[%s500 + $0x6f0] sm:$0xff]
        %v2686 = vld [vmem:[%s500 + $0x6f8] sm:$0xff]
        %v2687 = vld [vmem:[%s500 + $0x700] sm:$0xff]
        %v2688 = vld [vmem:[%s500 + $0x708] sm:$0xff]
        %v2689 = vld [vmem:[%s500 + $0x710] sm:$0xff]
        %v2690 = vld [vmem:[%s500 + $0x718] sm:$0xff]
        %v2691 = vld [vmem:[%s500 + $0x720] sm:$0xff]
        %v2692 = vld [vmem:[%s500 + $0x728] sm:$0xff]
        %v2693 = vld [vmem:[%s500 + $0x730] sm:$0xff]
        %v2694 = vld [vmem:[%s500 + $0x738] sm:$0xff]
        %v2695 = vld [vmem:[%s500 + $0x740] sm:$0xff]
        %v2696 = vld [vmem:[%s500 + $0x748] sm:$0xff]
        %v2697 = vld [vmem:[%s500 + $0x750] sm:$0xff]
        %v2698 = vld [vmem:[%s500 + $0x758] sm:$0xff]
        %v2699 = vld [vmem:[%s500 + $0x760] sm:$0xff]
        %v2700 = vld [vmem:[%s500 + $0x768] sm:$0xff]
        %v2701 = vld [vmem:[%s500 + $0x770] sm:$0xff]
        %v2702 = vld [vmem:[%s500 + $0x778] sm:$0xff]
        %v2703 = vld [vmem:[%s500 + $0x780] sm:$0xff]
        %v2704 = vld [vmem:[%s500 + $0x788] sm:$0xff]
        %v2705 = vld [vmem:[%s500 + $0x790] sm:$0xff]
        %v2706 = vld [vmem:[%s500 + $0x798] sm:$0xff]
        %v2707 = vld [vmem:[%s500 + $0x7a0] sm:$0xff]
        %v2708 = vld [vmem:[%s500 + $0x7a8] sm:$0xff]
        %v2709 = vld [vmem:[%s500 + $0x7b0] sm:$0xff]
        %v2710 = vld [vmem:[%s500 + $0x7b8] sm:$0xff]
        %v2711 = vld [vmem:[%s500 + $0x7c0] sm:$0xff]
        %v2712 = vld [vmem:[%s500 + $0x7c8] sm:$0xff]
        %v2713 = vld [vmem:[%s500 + $0x7d0] sm:$0xff]
        %v2714 = vld [vmem:[%s500 + $0x7d8] sm:$0xff]
        %v2715 = vld [vmem:[%s500 + $0x7e0] sm:$0xff]
        %v2716 = vld [vmem:[%s500 + $0x7e8] sm:$0xff]
        %v2717 = vld [vmem:[%s500 + $0x7f0] sm:$0xff]
        %v2718 = vld [vmem:[%s500 + $0x7f8] sm:$0xff]
        %v2719 = vld [vmem:[%s500 + $0x800] sm:$0xff]
        %v2720 = vld [vmem:[%s500 + $0x808] sm:$0xff]
        %v2721 = vld [vmem:[%s500 + $0x810] sm:$0xff]
        %v2722 = vld [vmem:[%s500 + $0x818] sm:$0xff]
        %v2723 = vld [vmem:[%s500 + $0x820] sm:$0xff]
        %v2724 = vld [vmem:[%s500 + $0x828] sm:$0xff]
        %v2725 = vld [vmem:[%s500 + $0x830] sm:$0xff]
        %v2726 = vld [vmem:[%s500 + $0x838] sm:$0xff]
        %v2727 = vld [vmem:[%s500 + $0x840] sm:$0xff]
        %v2728 = vld [vmem:[%s500 + $0x848] sm:$0xff]
        %v2729 = vld [vmem:[%s500 + $0x850] sm:$0xff]
        %v2730 = vld [vmem:[%s500 + $0x858] sm:$0xff]
        %v2731 = vld [vmem:[%s500 + $0x860] sm:$0xff]
        %v2732 = vld [vmem:[%s500 + $0x868] sm:$0xff]
        %v2733 = vld [vmem:[%s500 + $0x870] sm:$0xff]
        %v2734 = vld [vmem:[%s500 + $0x878] sm:$0xff]
        %v2735 = vld [vmem:[%s500 + $0x880] sm:$0xff]
        %v2736 = vld [vmem:[%s500 + $0x888] sm:$0xff]
        %v2737 = vld [vmem:[%s500 + $0x890] sm:$0xff]
        %v2738 = vld [vmem:[%s500 + $0x898] sm:$0xff]
        %v2739 = vld [vmem:[%s500 + $0x8a0] sm:$0xff]
        %v2740 = vld [vmem:[%s500 + $0x8a8] sm:$0xff]
        %v2741 = vld [vmem:[%s500 + $0x8b0] sm:$0xff]
        %v2742 = vld [vmem:[%s500 + $0x8b8] sm:$0xff]
        %v2743 = vld [vmem:[%s500 + $0x8c0] sm:$0xff]
        %v2744 = vld [vmem:[%s500 + $0x8c8] sm:$0xff]
        %v2745 = vld [vmem:[%s500 + $0x8d0] sm:$0xff]
        %v2746 = vld [vmem:[%s500 + $0x8d8] sm:$0xff]
        %v2747 = vld [vmem:[%s500 + $0x8e0] sm:$0xff]
        %v2748 = vld [vmem:[%s500 + $0x8e8] sm:$0xff]
        %v2749 = vld [vmem:[%s500 + $0x8f0] sm:$0xff]
        %v2750 = vld [vmem:[%s500 + $0x8f8] sm:$0xff]
        %v2751 = vld [vmem:[%s500 + $0x900] sm:$0xff]
        %v2752 = vld [vmem:[%s500 + $0x908] sm:$0xff]
        %v2753 = vld [vmem:[%s500 + $0x910] sm:$0xff]
        %v2754 = vld [vmem:[%s500 + $0x918] sm:$0xff]
        %v2755 = vld [vmem:[%s500 + $0x920] sm:$0xff]
        %v2756 = vld [vmem:[%s500 + $0x928] sm:$0xff]
        %v2757 = vld [vmem:[%s500 + $0x930] sm:$0xff]
        %v2758 = vld [vmem:[%s500 + $0x938] sm:$0xff]
        %v2759 = vld [vmem:[%s500 + $0x940] sm:$0xff]
        %v2760 = vld [vmem:[%s500 + $0x948] sm:$0xff]
        %v2761 = vld [vmem:[%s500 + $0x950] sm:$0xff]
        %v2762 = vld [vmem:[%s500 + $0x958] sm:$0xff]
        %v2763 = vld [vmem:[%s500 + $0x960] sm:$0xff]
        %v2764 = vld [vmem:[%s500 + $0x968] sm:$0xff]
        %v2765 = vld [vmem:[%s500 + $0x970] sm:$0xff]
        %v2766 = vld [vmem:[%s500 + $0x978] sm:$0xff]
        %v2767 = vld [vmem:[%s500 + $0x980] sm:$0xff]
        %v2768 = vld [vmem:[%s500 + $0x988] sm:$0xff]
        %v2769 = vld [vmem:[%s500 + $0x990] sm:$0xff]
        %v2770 = vld [vmem:[%s500 + $0x998] sm:$0xff]
        %v2771 = vld [vmem:[%s500 + $0x9a0] sm:$0xff]
        %v2772 = vld [vmem:[%s500 + $0x9a8] sm:$0xff]
        %v2773 = vld [vmem:[%s500 + $0x9b0] sm:$0xff]
        %v2774 = vld [vmem:[%s500 + $0x9b8] sm:$0xff]
        %v2775 = vld [vmem:[%s500 + $0x9c0] sm:$0xff]
        %v2776 = vld [vmem:[%s500 + $0x9c8] sm:$0xff]
        %v2777 = vld [vmem:[%s500 + $0x9d0] sm:$0xff]
        %v2778 = vld [vmem:[%s500 + $0x9d8] sm:$0xff]
        %v2779 = vld [vmem:[%s500 + $0x9e0] sm:$0xff]
        %v2780 = vld [vmem:[%s500 + $0x9e8] sm:$0xff]
        %v2781 = vld [vmem:[%s500 + $0x9f0] sm:$0xff]
        %v2782 = vld [vmem:[%s500 + $0x9f8] sm:$0xff]
        %v2783 = vld [vmem:[%s500 + $0xa00] sm:$0xff]
        %v2784 = vld [vmem:[%s500 + $0xa08] sm:$0xff]
        %v2785 = vld [vmem:[%s500 + $0xa10] sm:$0xff]
        %v2786 = vld [vmem:[%s500 + $0xa18] sm:$0xff]
        %v2787 = vld [vmem:[%s500 + $0xa20] sm:$0xff]
        %v2788 = vld [vmem:[%s500 + $0xa28] sm:$0xff]
        %v2789 = vld [vmem:[%s500 + $0xa30] sm:$0xff]
        %v2790 = vld [vmem:[%s500 + $0xa38] sm:$0xff]
        %v2791 = vld [vmem:[%s500 + $0xa40] sm:$0xff]
        %v2792 = vld [vmem:[%s500 + $0xa48] sm:$0xff]
        %v2793 = vld [vmem:[%s500 + $0xa50] sm:$0xff]
        %v2794 = vld [vmem:[%s500 + $0xa58] sm:$0xff]
        %v2795 = vld [vmem:[%s500 + $0xa60] sm:$0xff]
        %v2796 = vld [vmem:[%s500 + $0xa68] sm:$0xff]
        %v2797 = vld [vmem:[%s500 + $0xa70] sm:$0xff]
        %v2798 = vld [vmem:[%s500 + $0xa78] sm:$0xff]
        %v2799 = vld [vmem:[%s500 + $0xa80] sm:$0xff]
        %v2800 = vld [vmem:[%s500 + $0xa88] sm:$0xff]
        %v2801 = vld [vmem:[%s500 + $0xa90] sm:$0xff]
        %v2802 = vld [vmem:[%s500 + $0xa98] sm:$0xff]
        %v2803 = vld [vmem:[%s500 + $0xaa0] sm:$0xff]
        %v2804 = vld [vmem:[%s500 + $0xaa8] sm:$0xff]
        %v2805 = vld [vmem:[%s500 + $0xab0] sm:$0xff]
        %v2806 = vld [vmem:[%s500 + $0xab8] sm:$0xff]
        %v2807 = vld [vmem:[%s500 + $0xac0] sm:$0xff]
        %v2808 = vld [vmem:[%s500 + $0xac8] sm:$0xff]
        %v2809 = vld [vmem:[%s500 + $0xad0] sm:$0xff]
        %v2810 = vld [vmem:[%s500 + $0xad8] sm:$0xff]
        %v2811 = vld [vmem:[%s500 + $0xae0] sm:$0xff]
        %v2812 = vld [vmem:[%s500 + $0xae8] sm:$0xff]
        %v2813 = vld [vmem:[%s500 + $0xaf0] sm:$0xff]
        %v2814 = vld [vmem:[%s500 + $0xaf8] sm:$0xff]
        %v2815 = vld [vmem:[%s500 + $0xb00] sm:$0xff]
        %v2816 = vld [vmem:[%s500 + $0xb08] sm:$0xff]
        %v2817 = vld [vmem:[%s500 + $0xb10] sm:$0xff]
        %v2818 = vld [vmem:[%s500 + $0xb18] sm:$0xff]
        %v2819 = vld [vmem:[%s500 + $0xb20] sm:$0xff]
        %v2820 = vld [vmem:[%s500 + $0xb28] sm:$0xff]
        %v2821 = vld [vmem:[%s500 + $0xb30] sm:$0xff]
        %v2822 = vld [vmem:[%s500 + $0xb38] sm:$0xff]
        %v2823 = vld [vmem:[%s500 + $0xb40] sm:$0xff]
        %v2824 = vld [vmem:[%s500 + $0xb48] sm:$0xff]
        %v2825 = vld [vmem:[%s500 + $0xb50] sm:$0xff]
        %v2826 = vld [vmem:[%s500 + $0xb58] sm:$0xff]
        %v2827 = vld [vmem:[%s500 + $0xb60] sm:$0xff]
        %v2828 = vld [vmem:[%s500 + $0xb68] sm:$0xff]
        %v2829 = vld [vmem:[%s500 + $0xb70] sm:$0xff]
        %v2830 = vld [vmem:[%s500 + $0xb78] sm:$0xff]
        %v2831 = vld [vmem:[%s500 + $0xb80] sm:$0xff]
        %v2832 = vld [vmem:[%s500 + $0xb88] sm:$0xff]
        %v2833 = vld [vmem:[%s500 + $0xb90] sm:$0xff]
        %v2834 = vld [vmem:[%s500 + $0xb98] sm:$0xff]
        %v2835 = vld [vmem:[%s500 + $0xba0] sm:$0xff]
        %v2836 = vld [vmem:[%s500 + $0xba8] sm:$0xff]
        %v2837 = vld [vmem:[%s500 + $0xbb0] sm:$0xff]
        %v2838 = vld [vmem:[%s500 + $0xbb8] sm:$0xff]
        %v2839 = vld [vmem:[%s500 + $0xbc0] sm:$0xff]
        %v2840 = vld [vmem:[%s500 + $0xbc8] sm:$0xff]
        %v2841 = vld [vmem:[%s500 + $0xbd0] sm:$0xff]
        %v2842 = vld [vmem:[%s500 + $0xbd8] sm:$0xff]
        %v2843 = vld [vmem:[%s500 + $0xbe0] sm:$0xff]
        %v2844 = vld [vmem:[%s500 + $0xbe8] sm:$0xff]
        %v2845 = vld [vmem:[%s500 + $0xbf0] sm:$0xff]
        %v2846 = vld [vmem:[%s500 + $0xbf8] sm:$0xff]
        %v2847 = vld [vmem:[%s500 + $0xc00] sm:$0xff]
        %v2848 = vld [vmem:[%s500 + $0xc08] sm:$0xff]
        %v2849 = vld [vmem:[%s500 + $0xc10] sm:$0xff]
        %v2850 = vld [vmem:[%s500 + $0xc18] sm:$0xff]
        %v2851 = vld [vmem:[%s500 + $0xc20] sm:$0xff]
        %v2852 = vld [vmem:[%s500 + $0xc28] sm:$0xff]
        %v2853 = vld [vmem:[%s500 + $0xc30] sm:$0xff]
        %v2854 = vld [vmem:[%s500 + $0xc38] sm:$0xff]
        %v2855 = vld [vmem:[%s500 + $0xc40] sm:$0xff]
        %v2856 = vld [vmem:[%s500 + $0xc48] sm:$0xff]
        %v2857 = vld [vmem:[%s500 + $0xc50] sm:$0xff]
        %v2858 = vld [vmem:[%s500 + $0xc58] sm:$0xff]
        %v2859 = vld [vmem:[%s500 + $0xc60] sm:$0xff]
        %v2860 = vld [vmem:[%s500 + $0xc68] sm:$0xff]
        %v2861 = vld [vmem:[%s500 + $0xc70] sm:$0xff]
        %v2862 = vld [vmem:[%s500 + $0xc78] sm:$0xff]
        %v2863 = vld [vmem:[%s500 + $0xc80] sm:$0xff]
        %v2864 = vld [vmem:[%s500 + $0xc88] sm:$0xff]
        %v2865 = vld [vmem:[%s500 + $0xc90] sm:$0xff]
        %v2866 = vld [vmem:[%s500 + $0xc98] sm:$0xff]
        %v2867 = vld [vmem:[%s500 + $0xca0] sm:$0xff]
        %v2868 = vld [vmem:[%s500 + $0xca8] sm:$0xff]
        %v2869 = vld [vmem:[%s500 + $0xcb0] sm:$0xff]
        %v2870 = vld [vmem:[%s500 + $0xcb8] sm:$0xff]
        %v2871 = vld [vmem:[%s500 + $0xcc0] sm:$0xff]
        %v2872 = vld [vmem:[%s500 + $0xcc8] sm:$0xff]
        %v2873 = vld [vmem:[%s500 + $0xcd0] sm:$0xff]
        %v2874 = vld [vmem:[%s500 + $0xcd8] sm:$0xff]
        %v2875 = vld [vmem:[%s500 + $0xce0] sm:$0xff]
        %v2876 = vld [vmem:[%s500 + $0xce8] sm:$0xff]
        %v2877 = vld [vmem:[%s500 + $0xcf0] sm:$0xff]
        %v2878 = vld [vmem:[%s500 + $0xcf8] sm:$0xff]
        %v2879 = vld [vmem:[%s500 + $0xd00] sm:$0xff]
        %v2880 = vld [vmem:[%s500 + $0xd08] sm:$0xff]
        %v2881 = vld [vmem:[%s500 + $0xd10] sm:$0xff]
        %v2882 = vld [vmem:[%s500 + $0xd18] sm:$0xff]
        %v2883 = vld [vmem:[%s500 + $0xd20] sm:$0xff]
        %v2884 = vld [vmem:[%s500 + $0xd28] sm:$0xff]
        %v2885 = vld [vmem:[%s500 + $0xd30] sm:$0xff]
        %v2886 = vld [vmem:[%s500 + $0xd38] sm:$0xff]
        %v2887 = vld [vmem:[%s500 + $0xd40] sm:$0xff]
        %v2888 = vld [vmem:[%s500 + $0xd48] sm:$0xff]
        %v2889 = vld [vmem:[%s500 + $0xd50] sm:$0xff]
        %v2890 = vld [vmem:[%s500 + $0xd58] sm:$0xff]
        %v2891 = vld [vmem:[%s500 + $0xd60] sm:$0xff]
        %v2892 = vld [vmem:[%s500 + $0xd68] sm:$0xff]
        %v2893 = vld [vmem:[%s500 + $0xd70] sm:$0xff]
        %v2894 = vld [vmem:[%s500 + $0xd78] sm:$0xff]
        %v2895 = vld [vmem:[%s500 + $0xd80] sm:$0xff]
        %v2896 = vld [vmem:[%s500 + $0xd88] sm:$0xff]
        %v2897 = vld [vmem:[%s500 + $0xd90] sm:$0xff]
        %v2898 = vld [vmem:[%s500 + $0xd98] sm:$0xff]
        %v2899 = vld [vmem:[%s500 + $0xda0] sm:$0xff]
        %v2900 = vld [vmem:[%s500 + $0xda8] sm:$0xff]
        %v2901 = vld [vmem:[%s500 + $0xdb0] sm:$0xff]
        %v2902 = vld [vmem:[%s500 + $0xdb8] sm:$0xff]
        %v2903 = vld [vmem:[%s500 + $0xdc0] sm:$0xff]
        %v2904 = vld [vmem:[%s500 + $0xdc8] sm:$0xff]
        %v2905 = vld [vmem:[%s500 + $0xdd0] sm:$0xff]
        %v2906 = vld [vmem:[%s500 + $0xdd8] sm:$0xff]
        %v2907 = vld [vmem:[%s500 + $0xde0] sm:$0xff]
        %v2908 = vld [vmem:[%s500 + $0xde8] sm:$0xff]
        %v2909 = vld [vmem:[%s500 + $0xdf0] sm:$0xff]
        %v2910 = vld [vmem:[%s500 + $0xdf8] sm:$0xff]
        %v2911 = vld [vmem:[%s500 + $0xe00] sm:$0xff]
        %v2912 = vld [vmem:[%s500 + $0xe08] sm:$0xff]
        %v2913 = vld [vmem:[%s500 + $0xe10] sm:$0xff]
        %v2914 = vld [vmem:[%s500 + $0xe18] sm:$0xff]
        %v2915 = vld [vmem:[%s500 + $0xe20] sm:$0xff]
        %v2916 = vld [vmem:[%s500 + $0xe28] sm:$0xff]
        %v2917 = vld [vmem:[%s500 + $0xe30] sm:$0xff]
        %v2918 = vld [vmem:[%s500 + $0xe38] sm:$0xff]
        %v2919 = vld [vmem:[%s500 + $0xe40] sm:$0xff]
        %v2920 = vld [vmem:[%s500 + $0xe48] sm:$0xff]
        %v2921 = vld [vmem:[%s500 + $0xe50] sm:$0xff]
        %v2922 = vld [vmem:[%s500 + $0xe58] sm:$0xff]
        %v2923 = vld [vmem:[%s500 + $0xe60] sm:$0xff]
        %v2924 = vld [vmem:[%s500 + $0xe68] sm:$0xff]
        %v2925 = vld [vmem:[%s500 + $0xe70] sm:$0xff]
        %v2926 = vld [vmem:[%s500 + $0xe78] sm:$0xff]
        %v2927 = vld [vmem:[%s500 + $0xe80] sm:$0xff]
        %v2928 = vld [vmem:[%s500 + $0xe88] sm:$0xff]
        %v2929 = vld [vmem:[%s500 + $0xe90] sm:$0xff]
        %v2930 = vld [vmem:[%s500 + $0xe98] sm:$0xff]
        %v2931 = vld [vmem:[%s500 + $0xea0] sm:$0xff]
        %v2932 = vld [vmem:[%s500 + $0xea8] sm:$0xff]
        %v2933 = vld [vmem:[%s500 + $0xeb0] sm:$0xff]
        %v2934 = vld [vmem:[%s500 + $0xeb8] sm:$0xff]
        %v2935 = vld [vmem:[%s500 + $0xec0] sm:$0xff]
        %v2936 = vld [vmem:[%s500 + $0xec8] sm:$0xff]
        %v2937 = vld [vmem:[%s500 + $0xed0] sm:$0xff]
        %v2938 = vld [vmem:[%s500 + $0xed8] sm:$0xff]
        %v2939 = vld [vmem:[%s500 + $0xee0] sm:$0xff]
        %v2940 = vld [vmem:[%s500 + $0xee8] sm:$0xff]
        %v2941 = vld [vmem:[%s500 + $0xef0] sm:$0xff]
        %v2942 = vld [vmem:[%s500 + $0xef8] sm:$0xff]
        %v2943 = vld [vmem:[%s500 + $0xf00] sm:$0xff]
        %v2944 = vld [vmem:[%s500 + $0xf08] sm:$0xff]
        %v2945 = vld [vmem:[%s500 + $0xf10] sm:$0xff]
        %v2946 = vld [vmem:[%s500 + $0xf18] sm:$0xff]
        %v2947 = vld [vmem:[%s500 + $0xf20] sm:$0xff]
        %v2948 = vld [vmem:[%s500 + $0xf28] sm:$0xff]
        %v2949 = vld [vmem:[%s500 + $0xf30] sm:$0xff]
        %v2950 = vld [vmem:[%s500 + $0xf38] sm:$0xff]
        %v2951 = vld [vmem:[%s500 + $0xf40] sm:$0xff]
        %v2952 = vld [vmem:[%s500 + $0xf48] sm:$0xff]
        %v2953 = vld [vmem:[%s500 + $0xf50] sm:$0xff]
        %v2954 = vld [vmem:[%s500 + $0xf58] sm:$0xff]
        %v2955 = vld [vmem:[%s500 + $0xf60] sm:$0xff]
        %v2956 = vld [vmem:[%s500 + $0xf68] sm:$0xff]
        %v2957 = vld [vmem:[%s500 + $0xf70] sm:$0xff]
        %v2958 = vld [vmem:[%s500 + $0xf78] sm:$0xff]
        %v2959 = vld [vmem:[%s500 + $0xf80] sm:$0xff]
        %v2960 = vld [vmem:[%s500 + $0xf88] sm:$0xff]
        %v2961 = vld [vmem:[%s500 + $0xf90] sm:$0xff]
        %v2962 = vld [vmem:[%s500 + $0xf98] sm:$0xff]
        %v2963 = vld [vmem:[%s500 + $0xfa0] sm:$0xff]
        %v2964 = vld [vmem:[%s500 + $0xfa8] sm:$0xff]
        %v2965 = vld [vmem:[%s500 + $0xfb0] sm:$0xff]
        %v2966 = vld [vmem:[%s500 + $0xfb8] sm:$0xff]
        %v2967 = vld [vmem:[%s500 + $0xfc0] sm:$0xff]
        %v2968 = vld [vmem:[%s500 + $0xfc8] sm:$0xff]
        %v2969 = vld [vmem:[%s500 + $0xfd0] sm:$0xff]
        %v2970 = vld [vmem:[%s500 + $0xfd8] sm:$0xff]
        %v2971 = vld [vmem:[%s500 + $0xfe0] sm:$0xff]
        %v2972 = vld [vmem:[%s500 + $0xfe8] sm:$0xff]
        %v2973 = vld [vmem:[%s500 + $0xff0] sm:$0xff]
        %v2974 = vld [vmem:[%s500 + $0xff8] sm:$0xff]
        %v2975 = vld [vmem:[%s432] sm:$0xff]
        %v2977 = vlaneseq
        %v2978 = vshrl.u32 %v2977, 7
        %v2979 = vsub.s32 0, %v2978
        %v2980 = vrot.slane %v2975, %v2979
        %v2981 = vlaneseq
        %v2982 = vshrl.u32 %v2981, 7
        %v2983 = vsub.s32 1, %v2982
        %v2984 = vrot.slane %v2975, %v2983
        %v2985 = vlaneseq
        %v2986 = vshrl.u32 %v2985, 7
        %v2987 = vsub.s32 2, %v2986
        %v2988 = vrot.slane %v2975, %v2987
        %v2989 = vlaneseq
        %v2990 = vshrl.u32 %v2989, 7
        %v2991 = vsub.s32 3, %v2990
        %v2992 = vrot.slane %v2975, %v2991
        %v2993 = vlaneseq
        %v2994 = vshrl.u32 %v2993, 7
        %v2995 = vsub.s32 4, %v2994
        %v2996 = vrot.slane %v2975, %v2995
        %v2997 = vlaneseq
        %v2998 = vshrl.u32 %v2997, 7
        %v2999 = vsub.s32 5, %v2998
        %v3000 = vrot.slane %v2975, %v2999
        %v3001 = vlaneseq
        %v3002 = vshrl.u32 %v3001, 7
        %v3003 = vsub.s32 6, %v3002
        %v3004 = vrot.slane %v2975, %v3003
        %v3005 = vlaneseq
        %v3006 = vshrl.u32 %v3005, 7
        %v3007 = vsub.s32 7, %v3006
        %v3008 = vrot.slane %v2975, %v3007
        %v3529 = vunpack.c.l.b16 %v2463
        %v3530 = vunpack.c.h.b16 %v2463
        %v3531 = vunpack.c.l.b16 %v2464
        %v3532 = vunpack.c.h.b16 %v2464
        %v3533 = vunpack.c.l.b16 %v2465
        %v3534 = vunpack.c.h.b16 %v2465
        %v3535 = vunpack.c.l.b16 %v2466
        %v3536 = vunpack.c.h.b16 %v2466
        %v3537 = vunpack.c.l.b16 %v2467
        %v3538 = vunpack.c.h.b16 %v2467
        %v3539 = vunpack.c.l.b16 %v2468
        %v3540 = vunpack.c.h.b16 %v2468
        %v3541 = vunpack.c.l.b16 %v2469
        %v3542 = vunpack.c.h.b16 %v2469
        %v3543 = vunpack.c.l.b16 %v2470
        %v3544 = vunpack.c.h.b16 %v2470
        %v3545 = vunpack.c.l.b16 %v2471
        %v3546 = vunpack.c.h.b16 %v2471
        %v3547 = vunpack.c.l.b16 %v2472
        %v3548 = vunpack.c.h.b16 %v2472
        %v3549 = vunpack.c.l.b16 %v2473
        %v3550 = vunpack.c.h.b16 %v2473
        %v3551 = vunpack.c.l.b16 %v2474
        %v3552 = vunpack.c.h.b16 %v2474
        %v3553 = vunpack.c.l.b16 %v2475
        %v3554 = vunpack.c.h.b16 %v2475
        %v3555 = vunpack.c.l.b16 %v2476
        %v3556 = vunpack.c.h.b16 %v2476
        %v3557 = vunpack.c.l.b16 %v2477
        %v3558 = vunpack.c.h.b16 %v2477
        %v3559 = vunpack.c.l.b16 %v2478
        %v3560 = vunpack.c.h.b16 %v2478
        %v3561 = vunpack.c.l.b16 %v2479
        %v3562 = vunpack.c.h.b16 %v2479
        %v3563 = vunpack.c.l.b16 %v2480
        %v3564 = vunpack.c.h.b16 %v2480
        %v3565 = vunpack.c.l.b16 %v2481
        %v3566 = vunpack.c.h.b16 %v2481
        %v3567 = vunpack.c.l.b16 %v2482
        %v3568 = vunpack.c.h.b16 %v2482
        %v3569 = vunpack.c.l.b16 %v2483
        %v3570 = vunpack.c.h.b16 %v2483
        %v3571 = vunpack.c.l.b16 %v2484
        %v3572 = vunpack.c.h.b16 %v2484
        %v3573 = vunpack.c.l.b16 %v2485
        %v3574 = vunpack.c.h.b16 %v2485
        %v3575 = vunpack.c.l.b16 %v2486
        %v3576 = vunpack.c.h.b16 %v2486
        %v3577 = vunpack.c.l.b16 %v2487
        %v3578 = vunpack.c.h.b16 %v2487
        %v3579 = vunpack.c.l.b16 %v2488
        %v3580 = vunpack.c.h.b16 %v2488
        %v3581 = vunpack.c.l.b16 %v2489
        %v3582 = vunpack.c.h.b16 %v2489
        %v3583 = vunpack.c.l.b16 %v2490
        %v3584 = vunpack.c.h.b16 %v2490
        %v3585 = vunpack.c.l.b16 %v2491
        %v3586 = vunpack.c.h.b16 %v2491
        %v3587 = vunpack.c.l.b16 %v2492
        %v3588 = vunpack.c.h.b16 %v2492
        %v3589 = vunpack.c.l.b16 %v2493
        %v3590 = vunpack.c.h.b16 %v2493
        %v3591 = vunpack.c.l.b16 %v2494
        %v3592 = vunpack.c.h.b16 %v2494
        %v3593 = vunpack.c.l.b16 %v2495
        %v3594 = vunpack.c.h.b16 %v2495
        %v3595 = vunpack.c.l.b16 %v2496
        %v3596 = vunpack.c.h.b16 %v2496
        %v3597 = vunpack.c.l.b16 %v2497
        %v3598 = vunpack.c.h.b16 %v2497
        %v3599 = vunpack.c.l.b16 %v2498
        %v3600 = vunpack.c.h.b16 %v2498
        %v3601 = vunpack.c.l.b16 %v2499
        %v3602 = vunpack.c.h.b16 %v2499
        %v3603 = vunpack.c.l.b16 %v2500
        %v3604 = vunpack.c.h.b16 %v2500
        %v3605 = vunpack.c.l.b16 %v2501
        %v3606 = vunpack.c.h.b16 %v2501
        %v3607 = vunpack.c.l.b16 %v2502
        %v3608 = vunpack.c.h.b16 %v2502
        %v3609 = vunpack.c.l.b16 %v2503
        %v3610 = vunpack.c.h.b16 %v2503
        %v3611 = vunpack.c.l.b16 %v2504
        %v3612 = vunpack.c.h.b16 %v2504
        %v3613 = vunpack.c.l.b16 %v2505
        %v3614 = vunpack.c.h.b16 %v2505
        %v3615 = vunpack.c.l.b16 %v2506
        %v3616 = vunpack.c.h.b16 %v2506
        %v3617 = vunpack.c.l.b16 %v2507
        %v3618 = vunpack.c.h.b16 %v2507
        %v3619 = vunpack.c.l.b16 %v2508
        %v3620 = vunpack.c.h.b16 %v2508
        %v3621 = vunpack.c.l.b16 %v2509
        %v3622 = vunpack.c.h.b16 %v2509
        %v3623 = vunpack.c.l.b16 %v2510
        %v3624 = vunpack.c.h.b16 %v2510
        %v3625 = vunpack.c.l.b16 %v2511
        %v3626 = vunpack.c.h.b16 %v2511
        %v3627 = vunpack.c.l.b16 %v2512
        %v3628 = vunpack.c.h.b16 %v2512
        %v3629 = vunpack.c.l.b16 %v2513
        %v3630 = vunpack.c.h.b16 %v2513
        %v3631 = vunpack.c.l.b16 %v2514
        %v3632 = vunpack.c.h.b16 %v2514
        %v3633 = vunpack.c.l.b16 %v2515
        %v3634 = vunpack.c.h.b16 %v2515
        %v3635 = vunpack.c.l.b16 %v2516
        %v3636 = vunpack.c.h.b16 %v2516
        %v3637 = vunpack.c.l.b16 %v2517
        %v3638 = vunpack.c.h.b16 %v2517
        %v3639 = vunpack.c.l.b16 %v2518
        %v3640 = vunpack.c.h.b16 %v2518
        %v3641 = vunpack.c.l.b16 %v2519
        %v3642 = vunpack.c.h.b16 %v2519
        %v3643 = vunpack.c.l.b16 %v2520
        %v3644 = vunpack.c.h.b16 %v2520
        %v3645 = vunpack.c.l.b16 %v2521
        %v3646 = vunpack.c.h.b16 %v2521
        %v3647 = vunpack.c.l.b16 %v2522
        %v3648 = vunpack.c.h.b16 %v2522
        %v3649 = vunpack.c.l.b16 %v2523
        %v3650 = vunpack.c.h.b16 %v2523
        %v3651 = vunpack.c.l.b16 %v2524
        %v3652 = vunpack.c.h.b16 %v2524
        %v3653 = vunpack.c.l.b16 %v2525
        %v3654 = vunpack.c.h.b16 %v2525
        %v3655 = vunpack.c.l.b16 %v2526
        %v3656 = vunpack.c.h.b16 %v2526
        %v3657 = vunpack.c.l.b16 %v2527
        %v3658 = vunpack.c.h.b16 %v2527
        %v3659 = vunpack.c.l.b16 %v2528
        %v3660 = vunpack.c.h.b16 %v2528
        %v3661 = vunpack.c.l.b16 %v2529
        %v3662 = vunpack.c.h.b16 %v2529
        %v3663 = vunpack.c.l.b16 %v2530
        %v3664 = vunpack.c.h.b16 %v2530
        %v3665 = vunpack.c.l.b16 %v2531
        %v3666 = vunpack.c.h.b16 %v2531
        %v3667 = vunpack.c.l.b16 %v2532
        %v3668 = vunpack.c.h.b16 %v2532
        %v3669 = vunpack.c.l.b16 %v2533
        %v3670 = vunpack.c.h.b16 %v2533
        %v3671 = vunpack.c.l.b16 %v2534
        %v3672 = vunpack.c.h.b16 %v2534
        %v3673 = vunpack.c.l.b16 %v2535
        %v3674 = vunpack.c.h.b16 %v2535
        %v3675 = vunpack.c.l.b16 %v2536
        %v3676 = vunpack.c.h.b16 %v2536
        %v3677 = vunpack.c.l.b16 %v2537
        %v3678 = vunpack.c.h.b16 %v2537
        %v3679 = vunpack.c.l.b16 %v2538
        %v3680 = vunpack.c.h.b16 %v2538
        %v3681 = vunpack.c.l.b16 %v2539
        %v3682 = vunpack.c.h.b16 %v2539
        %v3683 = vunpack.c.l.b16 %v2540
        %v3684 = vunpack.c.h.b16 %v2540
        %v3685 = vunpack.c.l.b16 %v2541
        %v3686 = vunpack.c.h.b16 %v2541
        %v3687 = vunpack.c.l.b16 %v2542
        %v3688 = vunpack.c.h.b16 %v2542
        %v3689 = vunpack.c.l.b16 %v2543
        %v3690 = vunpack.c.h.b16 %v2543
        %v3691 = vunpack.c.l.b16 %v2544
        %v3692 = vunpack.c.h.b16 %v2544
        %v3693 = vunpack.c.l.b16 %v2545
        %v3694 = vunpack.c.h.b16 %v2545
        %v3695 = vunpack.c.l.b16 %v2546
        %v3696 = vunpack.c.h.b16 %v2546
        %v3697 = vunpack.c.l.b16 %v2547
        %v3698 = vunpack.c.h.b16 %v2547
        %v3699 = vunpack.c.l.b16 %v2548
        %v3700 = vunpack.c.h.b16 %v2548
        %v3701 = vunpack.c.l.b16 %v2549
        %v3702 = vunpack.c.h.b16 %v2549
        %v3703 = vunpack.c.l.b16 %v2550
        %v3704 = vunpack.c.h.b16 %v2550
        %v3705 = vunpack.c.l.b16 %v2551
        %v3706 = vunpack.c.h.b16 %v2551
        %v3707 = vunpack.c.l.b16 %v2552
        %v3708 = vunpack.c.h.b16 %v2552
        %v3709 = vunpack.c.l.b16 %v2553
        %v3710 = vunpack.c.h.b16 %v2553
        %v3711 = vunpack.c.l.b16 %v2554
        %v3712 = vunpack.c.h.b16 %v2554
        %v3713 = vunpack.c.l.b16 %v2555
        %v3714 = vunpack.c.h.b16 %v2555
        %v3715 = vunpack.c.l.b16 %v2556
        %v3716 = vunpack.c.h.b16 %v2556
        %v3717 = vunpack.c.l.b16 %v2557
        %v3718 = vunpack.c.h.b16 %v2557
        %v3719 = vunpack.c.l.b16 %v2558
        %v3720 = vunpack.c.h.b16 %v2558
        %v3721 = vunpack.c.l.b16 %v2559
        %v3722 = vunpack.c.h.b16 %v2559
        %v3723 = vunpack.c.l.b16 %v2560
        %v3724 = vunpack.c.h.b16 %v2560
        %v3725 = vunpack.c.l.b16 %v2561
        %v3726 = vunpack.c.h.b16 %v2561
        %v3727 = vunpack.c.l.b16 %v2562
        %v3728 = vunpack.c.h.b16 %v2562
        %v3729 = vunpack.c.l.b16 %v2563
        %v3730 = vunpack.c.h.b16 %v2563
        %v3731 = vunpack.c.l.b16 %v2564
        %v3732 = vunpack.c.h.b16 %v2564
        %v3733 = vunpack.c.l.b16 %v2565
        %v3734 = vunpack.c.h.b16 %v2565
        %v3735 = vunpack.c.l.b16 %v2566
        %v3736 = vunpack.c.h.b16 %v2566
        %v3737 = vunpack.c.l.b16 %v2567
        %v3738 = vunpack.c.h.b16 %v2567
        %v3739 = vunpack.c.l.b16 %v2568
        %v3740 = vunpack.c.h.b16 %v2568
        %v3741 = vunpack.c.l.b16 %v2569
        %v3742 = vunpack.c.h.b16 %v2569
        %v3743 = vunpack.c.l.b16 %v2570
        %v3744 = vunpack.c.h.b16 %v2570
        %v3745 = vunpack.c.l.b16 %v2571
        %v3746 = vunpack.c.h.b16 %v2571
        %v3747 = vunpack.c.l.b16 %v2572
        %v3748 = vunpack.c.h.b16 %v2572
        %v3749 = vunpack.c.l.b16 %v2573
        %v3750 = vunpack.c.h.b16 %v2573
        %v3751 = vunpack.c.l.b16 %v2574
        %v3752 = vunpack.c.h.b16 %v2574
        %v3753 = vunpack.c.l.b16 %v2575
        %v3754 = vunpack.c.h.b16 %v2575
        %v3755 = vunpack.c.l.b16 %v2576
        %v3756 = vunpack.c.h.b16 %v2576
        %v3757 = vunpack.c.l.b16 %v2577
        %v3758 = vunpack.c.h.b16 %v2577
        %v3759 = vunpack.c.l.b16 %v2578
        %v3760 = vunpack.c.h.b16 %v2578
        %v3761 = vunpack.c.l.b16 %v2579
        %v3762 = vunpack.c.h.b16 %v2579
        %v3763 = vunpack.c.l.b16 %v2580
        %v3764 = vunpack.c.h.b16 %v2580
        %v3765 = vunpack.c.l.b16 %v2581
        %v3766 = vunpack.c.h.b16 %v2581
        %v3767 = vunpack.c.l.b16 %v2582
        %v3768 = vunpack.c.h.b16 %v2582
        %v3769 = vunpack.c.l.b16 %v2583
        %v3770 = vunpack.c.h.b16 %v2583
        %v3771 = vunpack.c.l.b16 %v2584
        %v3772 = vunpack.c.h.b16 %v2584
        %v3773 = vunpack.c.l.b16 %v2585
        %v3774 = vunpack.c.h.b16 %v2585
        %v3775 = vunpack.c.l.b16 %v2586
        %v3776 = vunpack.c.h.b16 %v2586
        %v3777 = vunpack.c.l.b16 %v2587
        %v3778 = vunpack.c.h.b16 %v2587
        %v3779 = vunpack.c.l.b16 %v2588
        %v3780 = vunpack.c.h.b16 %v2588
        %v3781 = vunpack.c.l.b16 %v2589
        %v3782 = vunpack.c.h.b16 %v2589
        %v3783 = vunpack.c.l.b16 %v2590
        %v3784 = vunpack.c.h.b16 %v2590
        %v3785 = vunpack.c.l.b16 %v2591
        %v3786 = vunpack.c.h.b16 %v2591
        %v3787 = vunpack.c.l.b16 %v2592
        %v3788 = vunpack.c.h.b16 %v2592
        %v3789 = vunpack.c.l.b16 %v2593
        %v3790 = vunpack.c.h.b16 %v2593
        %v3791 = vunpack.c.l.b16 %v2594
        %v3792 = vunpack.c.h.b16 %v2594
        %v3793 = vunpack.c.l.b16 %v2595
        %v3794 = vunpack.c.h.b16 %v2595
        %v3795 = vunpack.c.l.b16 %v2596
        %v3796 = vunpack.c.h.b16 %v2596
        %v3797 = vunpack.c.l.b16 %v2597
        %v3798 = vunpack.c.h.b16 %v2597
        %v3799 = vunpack.c.l.b16 %v2598
        %v3800 = vunpack.c.h.b16 %v2598
        %v3801 = vunpack.c.l.b16 %v2599
        %v3802 = vunpack.c.h.b16 %v2599
        %v3803 = vunpack.c.l.b16 %v2600
        %v3804 = vunpack.c.h.b16 %v2600
        %v3805 = vunpack.c.l.b16 %v2601
        %v3806 = vunpack.c.h.b16 %v2601
        %v3807 = vunpack.c.l.b16 %v2602
        %v3808 = vunpack.c.h.b16 %v2602
        %v3809 = vunpack.c.l.b16 %v2603
        %v3810 = vunpack.c.h.b16 %v2603
        %v3811 = vunpack.c.l.b16 %v2604
        %v3812 = vunpack.c.h.b16 %v2604
        %v3813 = vunpack.c.l.b16 %v2605
        %v3814 = vunpack.c.h.b16 %v2605
        %v3815 = vunpack.c.l.b16 %v2606
        %v3816 = vunpack.c.h.b16 %v2606
        %v3817 = vunpack.c.l.b16 %v2607
        %v3818 = vunpack.c.h.b16 %v2607
        %v3819 = vunpack.c.l.b16 %v2608
        %v3820 = vunpack.c.h.b16 %v2608
        %v3821 = vunpack.c.l.b16 %v2609
        %v3822 = vunpack.c.h.b16 %v2609
        %v3823 = vunpack.c.l.b16 %v2610
        %v3824 = vunpack.c.h.b16 %v2610
        %v3825 = vunpack.c.l.b16 %v2611
        %v3826 = vunpack.c.h.b16 %v2611
        %v3827 = vunpack.c.l.b16 %v2612
        %v3828 = vunpack.c.h.b16 %v2612
        %v3829 = vunpack.c.l.b16 %v2613
        %v3830 = vunpack.c.h.b16 %v2613
        %v3831 = vunpack.c.l.b16 %v2614
        %v3832 = vunpack.c.h.b16 %v2614
        %v3833 = vunpack.c.l.b16 %v2615
        %v3834 = vunpack.c.h.b16 %v2615
        %v3835 = vunpack.c.l.b16 %v2616
        %v3836 = vunpack.c.h.b16 %v2616
        %v3837 = vunpack.c.l.b16 %v2617
        %v3838 = vunpack.c.h.b16 %v2617
        %v3839 = vunpack.c.l.b16 %v2618
        %v3840 = vunpack.c.h.b16 %v2618
        %v3841 = vunpack.c.l.b16 %v2619
        %v3842 = vunpack.c.h.b16 %v2619
        %v3843 = vunpack.c.l.b16 %v2620
        %v3844 = vunpack.c.h.b16 %v2620
        %v3845 = vunpack.c.l.b16 %v2621
        %v3846 = vunpack.c.h.b16 %v2621
        %v3847 = vunpack.c.l.b16 %v2622
        %v3848 = vunpack.c.h.b16 %v2622
        %v3849 = vunpack.c.l.b16 %v2623
        %v3850 = vunpack.c.h.b16 %v2623
        %v3851 = vunpack.c.l.b16 %v2624
        %v3852 = vunpack.c.h.b16 %v2624
        %v3853 = vunpack.c.l.b16 %v2625
        %v3854 = vunpack.c.h.b16 %v2625
        %v3855 = vunpack.c.l.b16 %v2626
        %v3856 = vunpack.c.h.b16 %v2626
        %v3857 = vunpack.c.l.b16 %v2627
        %v3858 = vunpack.c.h.b16 %v2627
        %v3859 = vunpack.c.l.b16 %v2628
        %v3860 = vunpack.c.h.b16 %v2628
        %v3861 = vunpack.c.l.b16 %v2629
        %v3862 = vunpack.c.h.b16 %v2629
        %v3863 = vunpack.c.l.b16 %v2630
        %v3864 = vunpack.c.h.b16 %v2630
        %v3865 = vunpack.c.l.b16 %v2631
        %v3866 = vunpack.c.h.b16 %v2631
        %v3867 = vunpack.c.l.b16 %v2632
        %v3868 = vunpack.c.h.b16 %v2632
        %v3869 = vunpack.c.l.b16 %v2633
        %v3870 = vunpack.c.h.b16 %v2633
        %v3871 = vunpack.c.l.b16 %v2634
        %v3872 = vunpack.c.h.b16 %v2634
        %v3873 = vunpack.c.l.b16 %v2635
        %v3874 = vunpack.c.h.b16 %v2635
        %v3875 = vunpack.c.l.b16 %v2636
        %v3876 = vunpack.c.h.b16 %v2636
        %v3877 = vunpack.c.l.b16 %v2637
        %v3878 = vunpack.c.h.b16 %v2637
        %v3879 = vunpack.c.l.b16 %v2638
        %v3880 = vunpack.c.h.b16 %v2638
        %v3881 = vunpack.c.l.b16 %v2639
        %v3882 = vunpack.c.h.b16 %v2639
        %v3883 = vunpack.c.l.b16 %v2640
        %v3884 = vunpack.c.h.b16 %v2640
        %v3885 = vunpack.c.l.b16 %v2641
        %v3886 = vunpack.c.h.b16 %v2641
        %v3887 = vunpack.c.l.b16 %v2642
        %v3888 = vunpack.c.h.b16 %v2642
        %v3889 = vunpack.c.l.b16 %v2643
        %v3890 = vunpack.c.h.b16 %v2643
        %v3891 = vunpack.c.l.b16 %v2644
        %v3892 = vunpack.c.h.b16 %v2644
        %v3893 = vunpack.c.l.b16 %v2645
        %v3894 = vunpack.c.h.b16 %v2645
        %v3895 = vunpack.c.l.b16 %v2646
        %v3896 = vunpack.c.h.b16 %v2646
        %v3897 = vunpack.c.l.b16 %v2647
        %v3898 = vunpack.c.h.b16 %v2647
        %v3899 = vunpack.c.l.b16 %v2648
        %v3900 = vunpack.c.h.b16 %v2648
        %v3901 = vunpack.c.l.b16 %v2649
        %v3902 = vunpack.c.h.b16 %v2649
        %v3903 = vunpack.c.l.b16 %v2650
        %v3904 = vunpack.c.h.b16 %v2650
        %v3905 = vunpack.c.l.b16 %v2651
        %v3906 = vunpack.c.h.b16 %v2651
        %v3907 = vunpack.c.l.b16 %v2652
        %v3908 = vunpack.c.h.b16 %v2652
        %v3909 = vunpack.c.l.b16 %v2653
        %v3910 = vunpack.c.h.b16 %v2653
        %v3911 = vunpack.c.l.b16 %v2654
        %v3912 = vunpack.c.h.b16 %v2654
        %v3913 = vunpack.c.l.b16 %v2655
        %v3914 = vunpack.c.h.b16 %v2655
        %v3915 = vunpack.c.l.b16 %v2656
        %v3916 = vunpack.c.h.b16 %v2656
        %v3917 = vunpack.c.l.b16 %v2657
        %v3918 = vunpack.c.h.b16 %v2657
        %v3919 = vunpack.c.l.b16 %v2658
        %v3920 = vunpack.c.h.b16 %v2658
        %v3921 = vunpack.c.l.b16 %v2659
        %v3922 = vunpack.c.h.b16 %v2659
        %v3923 = vunpack.c.l.b16 %v2660
        %v3924 = vunpack.c.h.b16 %v2660
        %v3925 = vunpack.c.l.b16 %v2661
        %v3926 = vunpack.c.h.b16 %v2661
        %v3927 = vunpack.c.l.b16 %v2662
        %v3928 = vunpack.c.h.b16 %v2662
        %v3929 = vunpack.c.l.b16 %v2663
        %v3930 = vunpack.c.h.b16 %v2663
        %v3931 = vunpack.c.l.b16 %v2664
        %v3932 = vunpack.c.h.b16 %v2664
        %v3933 = vunpack.c.l.b16 %v2665
        %v3934 = vunpack.c.h.b16 %v2665
        %v3935 = vunpack.c.l.b16 %v2666
        %v3936 = vunpack.c.h.b16 %v2666
        %v3937 = vunpack.c.l.b16 %v2667
        %v3938 = vunpack.c.h.b16 %v2667
        %v3939 = vunpack.c.l.b16 %v2668
        %v3940 = vunpack.c.h.b16 %v2668
        %v3941 = vunpack.c.l.b16 %v2669
        %v3942 = vunpack.c.h.b16 %v2669
        %v3943 = vunpack.c.l.b16 %v2670
        %v3944 = vunpack.c.h.b16 %v2670
        %v3945 = vunpack.c.l.b16 %v2671
        %v3946 = vunpack.c.h.b16 %v2671
        %v3947 = vunpack.c.l.b16 %v2672
        %v3948 = vunpack.c.h.b16 %v2672
        %v3949 = vunpack.c.l.b16 %v2673
        %v3950 = vunpack.c.h.b16 %v2673
        %v3951 = vunpack.c.l.b16 %v2674
        %v3952 = vunpack.c.h.b16 %v2674
        %v3953 = vunpack.c.l.b16 %v2675
        %v3954 = vunpack.c.h.b16 %v2675
        %v3955 = vunpack.c.l.b16 %v2676
        %v3956 = vunpack.c.h.b16 %v2676
        %v3957 = vunpack.c.l.b16 %v2677
        %v3958 = vunpack.c.h.b16 %v2677
        %v3959 = vunpack.c.l.b16 %v2678
        %v3960 = vunpack.c.h.b16 %v2678
        %v3961 = vunpack.c.l.b16 %v2679
        %v3962 = vunpack.c.h.b16 %v2679
        %v3963 = vunpack.c.l.b16 %v2680
        %v3964 = vunpack.c.h.b16 %v2680
        %v3965 = vunpack.c.l.b16 %v2681
        %v3966 = vunpack.c.h.b16 %v2681
        %v3967 = vunpack.c.l.b16 %v2682
        %v3968 = vunpack.c.h.b16 %v2682
        %v3969 = vunpack.c.l.b16 %v2683
        %v3970 = vunpack.c.h.b16 %v2683
        %v3971 = vunpack.c.l.b16 %v2684
        %v3972 = vunpack.c.h.b16 %v2684
        %v3973 = vunpack.c.l.b16 %v2685
        %v3974 = vunpack.c.h.b16 %v2685
        %v3975 = vunpack.c.l.b16 %v2686
        %v3976 = vunpack.c.h.b16 %v2686
        %v3977 = vunpack.c.l.b16 %v2687
        %v3978 = vunpack.c.h.b16 %v2687
        %v3979 = vunpack.c.l.b16 %v2688
        %v3980 = vunpack.c.h.b16 %v2688
        %v3981 = vunpack.c.l.b16 %v2689
        %v3982 = vunpack.c.h.b16 %v2689
        %v3983 = vunpack.c.l.b16 %v2690
        %v3984 = vunpack.c.h.b16 %v2690
        %v3985 = vunpack.c.l.b16 %v2691
        %v3986 = vunpack.c.h.b16 %v2691
        %v3987 = vunpack.c.l.b16 %v2692
        %v3988 = vunpack.c.h.b16 %v2692
        %v3989 = vunpack.c.l.b16 %v2693
        %v3990 = vunpack.c.h.b16 %v2693
        %v3991 = vunpack.c.l.b16 %v2694
        %v3992 = vunpack.c.h.b16 %v2694
        %v3993 = vunpack.c.l.b16 %v2695
        %v3994 = vunpack.c.h.b16 %v2695
        %v3995 = vunpack.c.l.b16 %v2696
        %v3996 = vunpack.c.h.b16 %v2696
        %v3997 = vunpack.c.l.b16 %v2697
        %v3998 = vunpack.c.h.b16 %v2697
        %v3999 = vunpack.c.l.b16 %v2698
        %v4000 = vunpack.c.h.b16 %v2698
        %v4001 = vunpack.c.l.b16 %v2699
        %v4002 = vunpack.c.h.b16 %v2699
        %v4003 = vunpack.c.l.b16 %v2700
        %v4004 = vunpack.c.h.b16 %v2700
        %v4005 = vunpack.c.l.b16 %v2701
        %v4006 = vunpack.c.h.b16 %v2701
        %v4007 = vunpack.c.l.b16 %v2702
        %v4008 = vunpack.c.h.b16 %v2702
        %v4009 = vunpack.c.l.b16 %v2703
        %v4010 = vunpack.c.h.b16 %v2703
        %v4011 = vunpack.c.l.b16 %v2704
        %v4012 = vunpack.c.h.b16 %v2704
        %v4013 = vunpack.c.l.b16 %v2705
        %v4014 = vunpack.c.h.b16 %v2705
        %v4015 = vunpack.c.l.b16 %v2706
        %v4016 = vunpack.c.h.b16 %v2706
        %v4017 = vunpack.c.l.b16 %v2707
        %v4018 = vunpack.c.h.b16 %v2707
        %v4019 = vunpack.c.l.b16 %v2708
        %v4020 = vunpack.c.h.b16 %v2708
        %v4021 = vunpack.c.l.b16 %v2709
        %v4022 = vunpack.c.h.b16 %v2709
        %v4023 = vunpack.c.l.b16 %v2710
        %v4024 = vunpack.c.h.b16 %v2710
        %v4025 = vunpack.c.l.b16 %v2711
        %v4026 = vunpack.c.h.b16 %v2711
        %v4027 = vunpack.c.l.b16 %v2712
        %v4028 = vunpack.c.h.b16 %v2712
        %v4029 = vunpack.c.l.b16 %v2713
        %v4030 = vunpack.c.h.b16 %v2713
        %v4031 = vunpack.c.l.b16 %v2714
        %v4032 = vunpack.c.h.b16 %v2714
        %v4033 = vunpack.c.l.b16 %v2715
        %v4034 = vunpack.c.h.b16 %v2715
        %v4035 = vunpack.c.l.b16 %v2716
        %v4036 = vunpack.c.h.b16 %v2716
        %v4037 = vunpack.c.l.b16 %v2717
        %v4038 = vunpack.c.h.b16 %v2717
        %v4039 = vunpack.c.l.b16 %v2718
        %v4040 = vunpack.c.h.b16 %v2718
        %v4041 = vunpack.c.l.b16 %v2719
        %v4042 = vunpack.c.h.b16 %v2719
        %v4043 = vunpack.c.l.b16 %v2720
        %v4044 = vunpack.c.h.b16 %v2720
        %v4045 = vunpack.c.l.b16 %v2721
        %v4046 = vunpack.c.h.b16 %v2721
        %v4047 = vunpack.c.l.b16 %v2722
        %v4048 = vunpack.c.h.b16 %v2722
        %v4049 = vunpack.c.l.b16 %v2723
        %v4050 = vunpack.c.h.b16 %v2723
        %v4051 = vunpack.c.l.b16 %v2724
        %v4052 = vunpack.c.h.b16 %v2724
        %v4053 = vunpack.c.l.b16 %v2725
        %v4054 = vunpack.c.h.b16 %v2725
        %v4055 = vunpack.c.l.b16 %v2726
        %v4056 = vunpack.c.h.b16 %v2726
        %v4057 = vunpack.c.l.b16 %v2727
        %v4058 = vunpack.c.h.b16 %v2727
        %v4059 = vunpack.c.l.b16 %v2728
        %v4060 = vunpack.c.h.b16 %v2728
        %v4061 = vunpack.c.l.b16 %v2729
        %v4062 = vunpack.c.h.b16 %v2729
        %v4063 = vunpack.c.l.b16 %v2730
        %v4064 = vunpack.c.h.b16 %v2730
        %v4065 = vunpack.c.l.b16 %v2731
        %v4066 = vunpack.c.h.b16 %v2731
        %v4067 = vunpack.c.l.b16 %v2732
        %v4068 = vunpack.c.h.b16 %v2732
        %v4069 = vunpack.c.l.b16 %v2733
        %v4070 = vunpack.c.h.b16 %v2733
        %v4071 = vunpack.c.l.b16 %v2734
        %v4072 = vunpack.c.h.b16 %v2734
        %v4073 = vunpack.c.l.b16 %v2735
        %v4074 = vunpack.c.h.b16 %v2735
        %v4075 = vunpack.c.l.b16 %v2736
        %v4076 = vunpack.c.h.b16 %v2736
        %v4077 = vunpack.c.l.b16 %v2737
        %v4078 = vunpack.c.h.b16 %v2737
        %v4079 = vunpack.c.l.b16 %v2738
        %v4080 = vunpack.c.h.b16 %v2738
        %v4081 = vunpack.c.l.b16 %v2739
        %v4082 = vunpack.c.h.b16 %v2739
        %v4083 = vunpack.c.l.b16 %v2740
        %v4084 = vunpack.c.h.b16 %v2740
        %v4085 = vunpack.c.l.b16 %v2741
        %v4086 = vunpack.c.h.b16 %v2741
        %v4087 = vunpack.c.l.b16 %v2742
        %v4088 = vunpack.c.h.b16 %v2742
        %v4089 = vunpack.c.l.b16 %v2743
        %v4090 = vunpack.c.h.b16 %v2743
        %v4091 = vunpack.c.l.b16 %v2744
        %v4092 = vunpack.c.h.b16 %v2744
        %v4093 = vunpack.c.l.b16 %v2745
        %v4094 = vunpack.c.h.b16 %v2745
        %v4095 = vunpack.c.l.b16 %v2746
        %v4096 = vunpack.c.h.b16 %v2746
        %v4097 = vunpack.c.l.b16 %v2747
        %v4098 = vunpack.c.h.b16 %v2747
        %v4099 = vunpack.c.l.b16 %v2748
        %v4100 = vunpack.c.h.b16 %v2748
        %v4101 = vunpack.c.l.b16 %v2749
        %v4102 = vunpack.c.h.b16 %v2749
        %v4103 = vunpack.c.l.b16 %v2750
        %v4104 = vunpack.c.h.b16 %v2750
        %v4105 = vunpack.c.l.b16 %v2751
        %v4106 = vunpack.c.h.b16 %v2751
        %v4107 = vunpack.c.l.b16 %v2752
        %v4108 = vunpack.c.h.b16 %v2752
        %v4109 = vunpack.c.l.b16 %v2753
        %v4110 = vunpack.c.h.b16 %v2753
        %v4111 = vunpack.c.l.b16 %v2754
        %v4112 = vunpack.c.h.b16 %v2754
        %v4113 = vunpack.c.l.b16 %v2755
        %v4114 = vunpack.c.h.b16 %v2755
        %v4115 = vunpack.c.l.b16 %v2756
        %v4116 = vunpack.c.h.b16 %v2756
        %v4117 = vunpack.c.l.b16 %v2757
        %v4118 = vunpack.c.h.b16 %v2757
        %v4119 = vunpack.c.l.b16 %v2758
        %v4120 = vunpack.c.h.b16 %v2758
        %v4121 = vunpack.c.l.b16 %v2759
        %v4122 = vunpack.c.h.b16 %v2759
        %v4123 = vunpack.c.l.b16 %v2760
        %v4124 = vunpack.c.h.b16 %v2760
        %v4125 = vunpack.c.l.b16 %v2761
        %v4126 = vunpack.c.h.b16 %v2761
        %v4127 = vunpack.c.l.b16 %v2762
        %v4128 = vunpack.c.h.b16 %v2762
        %v4129 = vunpack.c.l.b16 %v2763
        %v4130 = vunpack.c.h.b16 %v2763
        %v4131 = vunpack.c.l.b16 %v2764
        %v4132 = vunpack.c.h.b16 %v2764
        %v4133 = vunpack.c.l.b16 %v2765
        %v4134 = vunpack.c.h.b16 %v2765
        %v4135 = vunpack.c.l.b16 %v2766
        %v4136 = vunpack.c.h.b16 %v2766
        %v4137 = vunpack.c.l.b16 %v2767
        %v4138 = vunpack.c.h.b16 %v2767
        %v4139 = vunpack.c.l.b16 %v2768
        %v4140 = vunpack.c.h.b16 %v2768
        %v4141 = vunpack.c.l.b16 %v2769
        %v4142 = vunpack.c.h.b16 %v2769
        %v4143 = vunpack.c.l.b16 %v2770
        %v4144 = vunpack.c.h.b16 %v2770
        %v4145 = vunpack.c.l.b16 %v2771
        %v4146 = vunpack.c.h.b16 %v2771
        %v4147 = vunpack.c.l.b16 %v2772
        %v4148 = vunpack.c.h.b16 %v2772
        %v4149 = vunpack.c.l.b16 %v2773
        %v4150 = vunpack.c.h.b16 %v2773
        %v4151 = vunpack.c.l.b16 %v2774
        %v4152 = vunpack.c.h.b16 %v2774
        %v4153 = vunpack.c.l.b16 %v2775
        %v4154 = vunpack.c.h.b16 %v2775
        %v4155 = vunpack.c.l.b16 %v2776
        %v4156 = vunpack.c.h.b16 %v2776
        %v4157 = vunpack.c.l.b16 %v2777
        %v4158 = vunpack.c.h.b16 %v2777
        %v4159 = vunpack.c.l.b16 %v2778
        %v4160 = vunpack.c.h.b16 %v2778
        %v4161 = vunpack.c.l.b16 %v2779
        %v4162 = vunpack.c.h.b16 %v2779
        %v4163 = vunpack.c.l.b16 %v2780
        %v4164 = vunpack.c.h.b16 %v2780
        %v4165 = vunpack.c.l.b16 %v2781
        %v4166 = vunpack.c.h.b16 %v2781
        %v4167 = vunpack.c.l.b16 %v2782
        %v4168 = vunpack.c.h.b16 %v2782
        %v4169 = vunpack.c.l.b16 %v2783
        %v4170 = vunpack.c.h.b16 %v2783
        %v4171 = vunpack.c.l.b16 %v2784
        %v4172 = vunpack.c.h.b16 %v2784
        %v4173 = vunpack.c.l.b16 %v2785
        %v4174 = vunpack.c.h.b16 %v2785
        %v4175 = vunpack.c.l.b16 %v2786
        %v4176 = vunpack.c.h.b16 %v2786
        %v4177 = vunpack.c.l.b16 %v2787
        %v4178 = vunpack.c.h.b16 %v2787
        %v4179 = vunpack.c.l.b16 %v2788
        %v4180 = vunpack.c.h.b16 %v2788
        %v4181 = vunpack.c.l.b16 %v2789
        %v4182 = vunpack.c.h.b16 %v2789
        %v4183 = vunpack.c.l.b16 %v2790
        %v4184 = vunpack.c.h.b16 %v2790
        %v4185 = vunpack.c.l.b16 %v2791
        %v4186 = vunpack.c.h.b16 %v2791
        %v4187 = vunpack.c.l.b16 %v2792
        %v4188 = vunpack.c.h.b16 %v2792
        %v4189 = vunpack.c.l.b16 %v2793
        %v4190 = vunpack.c.h.b16 %v2793
        %v4191 = vunpack.c.l.b16 %v2794
        %v4192 = vunpack.c.h.b16 %v2794
        %v4193 = vunpack.c.l.b16 %v2795
        %v4194 = vunpack.c.h.b16 %v2795
        %v4195 = vunpack.c.l.b16 %v2796
        %v4196 = vunpack.c.h.b16 %v2796
        %v4197 = vunpack.c.l.b16 %v2797
        %v4198 = vunpack.c.h.b16 %v2797
        %v4199 = vunpack.c.l.b16 %v2798
        %v4200 = vunpack.c.h.b16 %v2798
        %v4201 = vunpack.c.l.b16 %v2799
        %v4202 = vunpack.c.h.b16 %v2799
        %v4203 = vunpack.c.l.b16 %v2800
        %v4204 = vunpack.c.h.b16 %v2800
        %v4205 = vunpack.c.l.b16 %v2801
        %v4206 = vunpack.c.h.b16 %v2801
        %v4207 = vunpack.c.l.b16 %v2802
        %v4208 = vunpack.c.h.b16 %v2802
        %v4209 = vunpack.c.l.b16 %v2803
        %v4210 = vunpack.c.h.b16 %v2803
        %v4211 = vunpack.c.l.b16 %v2804
        %v4212 = vunpack.c.h.b16 %v2804
        %v4213 = vunpack.c.l.b16 %v2805
        %v4214 = vunpack.c.h.b16 %v2805
        %v4215 = vunpack.c.l.b16 %v2806
        %v4216 = vunpack.c.h.b16 %v2806
        %v4217 = vunpack.c.l.b16 %v2807
        %v4218 = vunpack.c.h.b16 %v2807
        %v4219 = vunpack.c.l.b16 %v2808
        %v4220 = vunpack.c.h.b16 %v2808
        %v4221 = vunpack.c.l.b16 %v2809
        %v4222 = vunpack.c.h.b16 %v2809
        %v4223 = vunpack.c.l.b16 %v2810
        %v4224 = vunpack.c.h.b16 %v2810
        %v4225 = vunpack.c.l.b16 %v2811
        %v4226 = vunpack.c.h.b16 %v2811
        %v4227 = vunpack.c.l.b16 %v2812
        %v4228 = vunpack.c.h.b16 %v2812
        %v4229 = vunpack.c.l.b16 %v2813
        %v4230 = vunpack.c.h.b16 %v2813
        %v4231 = vunpack.c.l.b16 %v2814
        %v4232 = vunpack.c.h.b16 %v2814
        %v4233 = vunpack.c.l.b16 %v2815
        %v4234 = vunpack.c.h.b16 %v2815
        %v4235 = vunpack.c.l.b16 %v2816
        %v4236 = vunpack.c.h.b16 %v2816
        %v4237 = vunpack.c.l.b16 %v2817
        %v4238 = vunpack.c.h.b16 %v2817
        %v4239 = vunpack.c.l.b16 %v2818
        %v4240 = vunpack.c.h.b16 %v2818
        %v4241 = vunpack.c.l.b16 %v2819
        %v4242 = vunpack.c.h.b16 %v2819
        %v4243 = vunpack.c.l.b16 %v2820
        %v4244 = vunpack.c.h.b16 %v2820
        %v4245 = vunpack.c.l.b16 %v2821
        %v4246 = vunpack.c.h.b16 %v2821
        %v4247 = vunpack.c.l.b16 %v2822
        %v4248 = vunpack.c.h.b16 %v2822
        %v4249 = vunpack.c.l.b16 %v2823
        %v4250 = vunpack.c.h.b16 %v2823
        %v4251 = vunpack.c.l.b16 %v2824
        %v4252 = vunpack.c.h.b16 %v2824
        %v4253 = vunpack.c.l.b16 %v2825
        %v4254 = vunpack.c.h.b16 %v2825
        %v4255 = vunpack.c.l.b16 %v2826
        %v4256 = vunpack.c.h.b16 %v2826
        %v4257 = vunpack.c.l.b16 %v2827
        %v4258 = vunpack.c.h.b16 %v2827
        %v4259 = vunpack.c.l.b16 %v2828
        %v4260 = vunpack.c.h.b16 %v2828
        %v4261 = vunpack.c.l.b16 %v2829
        %v4262 = vunpack.c.h.b16 %v2829
        %v4263 = vunpack.c.l.b16 %v2830
        %v4264 = vunpack.c.h.b16 %v2830
        %v4265 = vunpack.c.l.b16 %v2831
        %v4266 = vunpack.c.h.b16 %v2831
        %v4267 = vunpack.c.l.b16 %v2832
        %v4268 = vunpack.c.h.b16 %v2832
        %v4269 = vunpack.c.l.b16 %v2833
        %v4270 = vunpack.c.h.b16 %v2833
        %v4271 = vunpack.c.l.b16 %v2834
        %v4272 = vunpack.c.h.b16 %v2834
        %v4273 = vunpack.c.l.b16 %v2835
        %v4274 = vunpack.c.h.b16 %v2835
        %v4275 = vunpack.c.l.b16 %v2836
        %v4276 = vunpack.c.h.b16 %v2836
        %v4277 = vunpack.c.l.b16 %v2837
        %v4278 = vunpack.c.h.b16 %v2837
        %v4279 = vunpack.c.l.b16 %v2838
        %v4280 = vunpack.c.h.b16 %v2838
        %v4281 = vunpack.c.l.b16 %v2839
        %v4282 = vunpack.c.h.b16 %v2839
        %v4283 = vunpack.c.l.b16 %v2840
        %v4284 = vunpack.c.h.b16 %v2840
        %v4285 = vunpack.c.l.b16 %v2841
        %v4286 = vunpack.c.h.b16 %v2841
        %v4287 = vunpack.c.l.b16 %v2842
        %v4288 = vunpack.c.h.b16 %v2842
        %v4289 = vunpack.c.l.b16 %v2843
        %v4290 = vunpack.c.h.b16 %v2843
        %v4291 = vunpack.c.l.b16 %v2844
        %v4292 = vunpack.c.h.b16 %v2844
        %v4293 = vunpack.c.l.b16 %v2845
        %v4294 = vunpack.c.h.b16 %v2845
        %v4295 = vunpack.c.l.b16 %v2846
        %v4296 = vunpack.c.h.b16 %v2846
        %v4297 = vunpack.c.l.b16 %v2847
        %v4298 = vunpack.c.h.b16 %v2847
        %v4299 = vunpack.c.l.b16 %v2848
        %v4300 = vunpack.c.h.b16 %v2848
        %v4301 = vunpack.c.l.b16 %v2849
        %v4302 = vunpack.c.h.b16 %v2849
        %v4303 = vunpack.c.l.b16 %v2850
        %v4304 = vunpack.c.h.b16 %v2850
        %v4305 = vunpack.c.l.b16 %v2851
        %v4306 = vunpack.c.h.b16 %v2851
        %v4307 = vunpack.c.l.b16 %v2852
        %v4308 = vunpack.c.h.b16 %v2852
        %v4309 = vunpack.c.l.b16 %v2853
        %v4310 = vunpack.c.h.b16 %v2853
        %v4311 = vunpack.c.l.b16 %v2854
        %v4312 = vunpack.c.h.b16 %v2854
        %v4313 = vunpack.c.l.b16 %v2855
        %v4314 = vunpack.c.h.b16 %v2855
        %v4315 = vunpack.c.l.b16 %v2856
        %v4316 = vunpack.c.h.b16 %v2856
        %v4317 = vunpack.c.l.b16 %v2857
        %v4318 = vunpack.c.h.b16 %v2857
        %v4319 = vunpack.c.l.b16 %v2858
        %v4320 = vunpack.c.h.b16 %v2858
        %v4321 = vunpack.c.l.b16 %v2859
        %v4322 = vunpack.c.h.b16 %v2859
        %v4323 = vunpack.c.l.b16 %v2860
        %v4324 = vunpack.c.h.b16 %v2860
        %v4325 = vunpack.c.l.b16 %v2861
        %v4326 = vunpack.c.h.b16 %v2861
        %v4327 = vunpack.c.l.b16 %v2862
        %v4328 = vunpack.c.h.b16 %v2862
        %v4329 = vunpack.c.l.b16 %v2863
        %v4330 = vunpack.c.h.b16 %v2863
        %v4331 = vunpack.c.l.b16 %v2864
        %v4332 = vunpack.c.h.b16 %v2864
        %v4333 = vunpack.c.l.b16 %v2865
        %v4334 = vunpack.c.h.b16 %v2865
        %v4335 = vunpack.c.l.b16 %v2866
        %v4336 = vunpack.c.h.b16 %v2866
        %v4337 = vunpack.c.l.b16 %v2867
        %v4338 = vunpack.c.h.b16 %v2867
        %v4339 = vunpack.c.l.b16 %v2868
        %v4340 = vunpack.c.h.b16 %v2868
        %v4341 = vunpack.c.l.b16 %v2869
        %v4342 = vunpack.c.h.b16 %v2869
        %v4343 = vunpack.c.l.b16 %v2870
        %v4344 = vunpack.c.h.b16 %v2870
        %v4345 = vunpack.c.l.b16 %v2871
        %v4346 = vunpack.c.h.b16 %v2871
        %v4347 = vunpack.c.l.b16 %v2872
        %v4348 = vunpack.c.h.b16 %v2872
        %v4349 = vunpack.c.l.b16 %v2873
        %v4350 = vunpack.c.h.b16 %v2873
        %v4351 = vunpack.c.l.b16 %v2874
        %v4352 = vunpack.c.h.b16 %v2874
        %v4353 = vunpack.c.l.b16 %v2875
        %v4354 = vunpack.c.h.b16 %v2875
        %v4355 = vunpack.c.l.b16 %v2876
        %v4356 = vunpack.c.h.b16 %v2876
        %v4357 = vunpack.c.l.b16 %v2877
        %v4358 = vunpack.c.h.b16 %v2877
        %v4359 = vunpack.c.l.b16 %v2878
        %v4360 = vunpack.c.h.b16 %v2878
        %v4361 = vunpack.c.l.b16 %v2879
        %v4362 = vunpack.c.h.b16 %v2879
        %v4363 = vunpack.c.l.b16 %v2880
        %v4364 = vunpack.c.h.b16 %v2880
        %v4365 = vunpack.c.l.b16 %v2881
        %v4366 = vunpack.c.h.b16 %v2881
        %v4367 = vunpack.c.l.b16 %v2882
        %v4368 = vunpack.c.h.b16 %v2882
        %v4369 = vunpack.c.l.b16 %v2883
        %v4370 = vunpack.c.h.b16 %v2883
        %v4371 = vunpack.c.l.b16 %v2884
        %v4372 = vunpack.c.h.b16 %v2884
        %v4373 = vunpack.c.l.b16 %v2885
        %v4374 = vunpack.c.h.b16 %v2885
        %v4375 = vunpack.c.l.b16 %v2886
        %v4376 = vunpack.c.h.b16 %v2886
        %v4377 = vunpack.c.l.b16 %v2887
        %v4378 = vunpack.c.h.b16 %v2887
        %v4379 = vunpack.c.l.b16 %v2888
        %v4380 = vunpack.c.h.b16 %v2888
        %v4381 = vunpack.c.l.b16 %v2889
        %v4382 = vunpack.c.h.b16 %v2889
        %v4383 = vunpack.c.l.b16 %v2890
        %v4384 = vunpack.c.h.b16 %v2890
        %v4385 = vunpack.c.l.b16 %v2891
        %v4386 = vunpack.c.h.b16 %v2891
        %v4387 = vunpack.c.l.b16 %v2892
        %v4388 = vunpack.c.h.b16 %v2892
        %v4389 = vunpack.c.l.b16 %v2893
        %v4390 = vunpack.c.h.b16 %v2893
        %v4391 = vunpack.c.l.b16 %v2894
        %v4392 = vunpack.c.h.b16 %v2894
        %v4393 = vunpack.c.l.b16 %v2895
        %v4394 = vunpack.c.h.b16 %v2895
        %v4395 = vunpack.c.l.b16 %v2896
        %v4396 = vunpack.c.h.b16 %v2896
        %v4397 = vunpack.c.l.b16 %v2897
        %v4398 = vunpack.c.h.b16 %v2897
        %v4399 = vunpack.c.l.b16 %v2898
        %v4400 = vunpack.c.h.b16 %v2898
        %v4401 = vunpack.c.l.b16 %v2899
        %v4402 = vunpack.c.h.b16 %v2899
        %v4403 = vunpack.c.l.b16 %v2900
        %v4404 = vunpack.c.h.b16 %v2900
        %v4405 = vunpack.c.l.b16 %v2901
        %v4406 = vunpack.c.h.b16 %v2901
        %v4407 = vunpack.c.l.b16 %v2902
        %v4408 = vunpack.c.h.b16 %v2902
        %v4409 = vunpack.c.l.b16 %v2903
        %v4410 = vunpack.c.h.b16 %v2903
        %v4411 = vunpack.c.l.b16 %v2904
        %v4412 = vunpack.c.h.b16 %v2904
        %v4413 = vunpack.c.l.b16 %v2905
        %v4414 = vunpack.c.h.b16 %v2905
        %v4415 = vunpack.c.l.b16 %v2906
        %v4416 = vunpack.c.h.b16 %v2906
        %v4417 = vunpack.c.l.b16 %v2907
        %v4418 = vunpack.c.h.b16 %v2907
        %v4419 = vunpack.c.l.b16 %v2908
        %v4420 = vunpack.c.h.b16 %v2908
        %v4421 = vunpack.c.l.b16 %v2909
        %v4422 = vunpack.c.h.b16 %v2909
        %v4423 = vunpack.c.l.b16 %v2910
        %v4424 = vunpack.c.h.b16 %v2910
        %v4425 = vunpack.c.l.b16 %v2911
        %v4426 = vunpack.c.h.b16 %v2911
        %v4427 = vunpack.c.l.b16 %v2912
        %v4428 = vunpack.c.h.b16 %v2912
        %v4429 = vunpack.c.l.b16 %v2913
        %v4430 = vunpack.c.h.b16 %v2913
        %v4431 = vunpack.c.l.b16 %v2914
        %v4432 = vunpack.c.h.b16 %v2914
        %v4433 = vunpack.c.l.b16 %v2915
        %v4434 = vunpack.c.h.b16 %v2915
        %v4435 = vunpack.c.l.b16 %v2916
        %v4436 = vunpack.c.h.b16 %v2916
        %v4437 = vunpack.c.l.b16 %v2917
        %v4438 = vunpack.c.h.b16 %v2917
        %v4439 = vunpack.c.l.b16 %v2918
        %v4440 = vunpack.c.h.b16 %v2918
        %v4441 = vunpack.c.l.b16 %v2919
        %v4442 = vunpack.c.h.b16 %v2919
        %v4443 = vunpack.c.l.b16 %v2920
        %v4444 = vunpack.c.h.b16 %v2920
        %v4445 = vunpack.c.l.b16 %v2921
        %v4446 = vunpack.c.h.b16 %v2921
        %v4447 = vunpack.c.l.b16 %v2922
        %v4448 = vunpack.c.h.b16 %v2922
        %v4449 = vunpack.c.l.b16 %v2923
        %v4450 = vunpack.c.h.b16 %v2923
        %v4451 = vunpack.c.l.b16 %v2924
        %v4452 = vunpack.c.h.b16 %v2924
        %v4453 = vunpack.c.l.b16 %v2925
        %v4454 = vunpack.c.h.b16 %v2925
        %v4455 = vunpack.c.l.b16 %v2926
        %v4456 = vunpack.c.h.b16 %v2926
        %v4457 = vunpack.c.l.b16 %v2927
        %v4458 = vunpack.c.h.b16 %v2927
        %v4459 = vunpack.c.l.b16 %v2928
        %v4460 = vunpack.c.h.b16 %v2928
        %v4461 = vunpack.c.l.b16 %v2929
        %v4462 = vunpack.c.h.b16 %v2929
        %v4463 = vunpack.c.l.b16 %v2930
        %v4464 = vunpack.c.h.b16 %v2930
        %v4465 = vunpack.c.l.b16 %v2931
        %v4466 = vunpack.c.h.b16 %v2931
        %v4467 = vunpack.c.l.b16 %v2932
        %v4468 = vunpack.c.h.b16 %v2932
        %v4469 = vunpack.c.l.b16 %v2933
        %v4470 = vunpack.c.h.b16 %v2933
        %v4471 = vunpack.c.l.b16 %v2934
        %v4472 = vunpack.c.h.b16 %v2934
        %v4473 = vunpack.c.l.b16 %v2935
        %v4474 = vunpack.c.h.b16 %v2935
        %v4475 = vunpack.c.l.b16 %v2936
        %v4476 = vunpack.c.h.b16 %v2936
        %v4477 = vunpack.c.l.b16 %v2937
        %v4478 = vunpack.c.h.b16 %v2937
        %v4479 = vunpack.c.l.b16 %v2938
        %v4480 = vunpack.c.h.b16 %v2938
        %v4481 = vunpack.c.l.b16 %v2939
        %v4482 = vunpack.c.h.b16 %v2939
        %v4483 = vunpack.c.l.b16 %v2940
        %v4484 = vunpack.c.h.b16 %v2940
        %v4485 = vunpack.c.l.b16 %v2941
        %v4486 = vunpack.c.h.b16 %v2941
        %v4487 = vunpack.c.l.b16 %v2942
        %v4488 = vunpack.c.h.b16 %v2942
        %v4489 = vunpack.c.l.b16 %v2943
        %v4490 = vunpack.c.h.b16 %v2943
        %v4491 = vunpack.c.l.b16 %v2944
        %v4492 = vunpack.c.h.b16 %v2944
        %v4493 = vunpack.c.l.b16 %v2945
        %v4494 = vunpack.c.h.b16 %v2945
        %v4495 = vunpack.c.l.b16 %v2946
        %v4496 = vunpack.c.h.b16 %v2946
        %v4497 = vunpack.c.l.b16 %v2947
        %v4498 = vunpack.c.h.b16 %v2947
        %v4499 = vunpack.c.l.b16 %v2948
        %v4500 = vunpack.c.h.b16 %v2948
        %v4501 = vunpack.c.l.b16 %v2949
        %v4502 = vunpack.c.h.b16 %v2949
        %v4503 = vunpack.c.l.b16 %v2950
        %v4504 = vunpack.c.h.b16 %v2950
        %v4505 = vunpack.c.l.b16 %v2951
        %v4506 = vunpack.c.h.b16 %v2951
        %v4507 = vunpack.c.l.b16 %v2952
        %v4508 = vunpack.c.h.b16 %v2952
        %v4509 = vunpack.c.l.b16 %v2953
        %v4510 = vunpack.c.h.b16 %v2953
        %v4511 = vunpack.c.l.b16 %v2954
        %v4512 = vunpack.c.h.b16 %v2954
        %v4513 = vunpack.c.l.b16 %v2955
        %v4514 = vunpack.c.h.b16 %v2955
        %v4515 = vunpack.c.l.b16 %v2956
        %v4516 = vunpack.c.h.b16 %v2956
        %v4517 = vunpack.c.l.b16 %v2957
        %v4518 = vunpack.c.h.b16 %v2957
        %v4519 = vunpack.c.l.b16 %v2958
        %v4520 = vunpack.c.h.b16 %v2958
        %v4521 = vunpack.c.l.b16 %v2959
        %v4522 = vunpack.c.h.b16 %v2959
        %v4523 = vunpack.c.l.b16 %v2960
        %v4524 = vunpack.c.h.b16 %v2960
        %v4525 = vunpack.c.l.b16 %v2961
        %v4526 = vunpack.c.h.b16 %v2961
        %v4527 = vunpack.c.l.b16 %v2962
        %v4528 = vunpack.c.h.b16 %v2962
        %v4529 = vunpack.c.l.b16 %v2963
        %v4530 = vunpack.c.h.b16 %v2963
        %v4531 = vunpack.c.l.b16 %v2964
        %v4532 = vunpack.c.h.b16 %v2964
        %v4533 = vunpack.c.l.b16 %v2965
        %v4534 = vunpack.c.h.b16 %v2965
        %v4535 = vunpack.c.l.b16 %v2966
        %v4536 = vunpack.c.h.b16 %v2966
        %v4537 = vunpack.c.l.b16 %v2967
        %v4538 = vunpack.c.h.b16 %v2967
        %v4539 = vunpack.c.l.b16 %v2968
        %v4540 = vunpack.c.h.b16 %v2968
        %v4541 = vunpack.c.l.b16 %v2969
        %v4542 = vunpack.c.h.b16 %v2969
        %v4543 = vunpack.c.l.b16 %v2970
        %v4544 = vunpack.c.h.b16 %v2970
        %v4545 = vunpack.c.l.b16 %v2971
        %v4546 = vunpack.c.h.b16 %v2971
        %v4547 = vunpack.c.l.b16 %v2972
        %v4548 = vunpack.c.h.b16 %v2972
        %v4549 = vunpack.c.l.b16 %v2973
        %v4550 = vunpack.c.h.b16 %v2973
        %v4551 = vunpack.c.l.b16 %v2974
        %v4552 = vunpack.c.h.b16 %v2974
        %v4553 = vpack.c.b16 %v3537, %v3529
        %v4554 = vpack.c.b16 %v3538, %v3530
        %v4555 = vpack.c.b16 %v3539, %v3531
        %v4556 = vpack.c.b16 %v3540, %v3532
        %v4557 = vpack.c.b16 %v3541, %v3533
        %v4558 = vpack.c.b16 %v3542, %v3534
        %v4559 = vpack.c.b16 %v3543, %v3535
        %v4560 = vpack.c.b16 %v3544, %v3536
        %v4561 = vpack.c.b16 %v3553, %v3545
        %v4562 = vpack.c.b16 %v3554, %v3546
        %v4563 = vpack.c.b16 %v3555, %v3547
        %v4564 = vpack.c.b16 %v3556, %v3548
        %v4565 = vpack.c.b16 %v3557, %v3549
        %v4566 = vpack.c.b16 %v3558, %v3550
        %v4567 = vpack.c.b16 %v3559, %v3551
        %v4568 = vpack.c.b16 %v3560, %v3552
        %v4569 = vpack.c.b16 %v3569, %v3561
        %v4570 = vpack.c.b16 %v3570, %v3562
        %v4571 = vpack.c.b16 %v3571, %v3563
        %v4572 = vpack.c.b16 %v3572, %v3564
        %v4573 = vpack.c.b16 %v3573, %v3565
        %v4574 = vpack.c.b16 %v3574, %v3566
        %v4575 = vpack.c.b16 %v3575, %v3567
        %v4576 = vpack.c.b16 %v3576, %v3568
        %v4577 = vpack.c.b16 %v3585, %v3577
        %v4578 = vpack.c.b16 %v3586, %v3578
        %v4579 = vpack.c.b16 %v3587, %v3579
        %v4580 = vpack.c.b16 %v3588, %v3580
        %v4581 = vpack.c.b16 %v3589, %v3581
        %v4582 = vpack.c.b16 %v3590, %v3582
        %v4583 = vpack.c.b16 %v3591, %v3583
        %v4584 = vpack.c.b16 %v3592, %v3584
        %v4585 = vpack.c.b16 %v3601, %v3593
        %v4586 = vpack.c.b16 %v3602, %v3594
        %v4587 = vpack.c.b16 %v3603, %v3595
        %v4588 = vpack.c.b16 %v3604, %v3596
        %v4589 = vpack.c.b16 %v3605, %v3597
        %v4590 = vpack.c.b16 %v3606, %v3598
        %v4591 = vpack.c.b16 %v3607, %v3599
        %v4592 = vpack.c.b16 %v3608, %v3600
        %v4593 = vpack.c.b16 %v3617, %v3609
        %v4594 = vpack.c.b16 %v3618, %v3610
        %v4595 = vpack.c.b16 %v3619, %v3611
        %v4596 = vpack.c.b16 %v3620, %v3612
        %v4597 = vpack.c.b16 %v3621, %v3613
        %v4598 = vpack.c.b16 %v3622, %v3614
        %v4599 = vpack.c.b16 %v3623, %v3615
        %v4600 = vpack.c.b16 %v3624, %v3616
        %v4601 = vpack.c.b16 %v3633, %v3625
        %v4602 = vpack.c.b16 %v3634, %v3626
        %v4603 = vpack.c.b16 %v3635, %v3627
        %v4604 = vpack.c.b16 %v3636, %v3628
        %v4605 = vpack.c.b16 %v3637, %v3629
        %v4606 = vpack.c.b16 %v3638, %v3630
        %v4607 = vpack.c.b16 %v3639, %v3631
        %v4608 = vpack.c.b16 %v3640, %v3632
        %v4609 = vpack.c.b16 %v3649, %v3641
        %v4610 = vpack.c.b16 %v3650, %v3642
        %v4611 = vpack.c.b16 %v3651, %v3643
        %v4612 = vpack.c.b16 %v3652, %v3644
        %v4613 = vpack.c.b16 %v3653, %v3645
        %v4614 = vpack.c.b16 %v3654, %v3646
        %v4615 = vpack.c.b16 %v3655, %v3647
        %v4616 = vpack.c.b16 %v3656, %v3648
        %v4617 = vpack.c.b16 %v3665, %v3657
        %v4618 = vpack.c.b16 %v3666, %v3658
        %v4619 = vpack.c.b16 %v3667, %v3659
        %v4620 = vpack.c.b16 %v3668, %v3660
        %v4621 = vpack.c.b16 %v3669, %v3661
        %v4622 = vpack.c.b16 %v3670, %v3662
        %v4623 = vpack.c.b16 %v3671, %v3663
        %v4624 = vpack.c.b16 %v3672, %v3664
        %v4625 = vpack.c.b16 %v3681, %v3673
        %v4626 = vpack.c.b16 %v3682, %v3674
        %v4627 = vpack.c.b16 %v3683, %v3675
        %v4628 = vpack.c.b16 %v3684, %v3676
        %v4629 = vpack.c.b16 %v3685, %v3677
        %v4630 = vpack.c.b16 %v3686, %v3678
        %v4631 = vpack.c.b16 %v3687, %v3679
        %v4632 = vpack.c.b16 %v3688, %v3680
        %v4633 = vpack.c.b16 %v3697, %v3689
        %v4634 = vpack.c.b16 %v3698, %v3690
        %v4635 = vpack.c.b16 %v3699, %v3691
        %v4636 = vpack.c.b16 %v3700, %v3692
        %v4637 = vpack.c.b16 %v3701, %v3693
        %v4638 = vpack.c.b16 %v3702, %v3694
        %v4639 = vpack.c.b16 %v3703, %v3695
        %v4640 = vpack.c.b16 %v3704, %v3696
        %v4641 = vpack.c.b16 %v3713, %v3705
        %v4642 = vpack.c.b16 %v3714, %v3706
        %v4643 = vpack.c.b16 %v3715, %v3707
        %v4644 = vpack.c.b16 %v3716, %v3708
        %v4645 = vpack.c.b16 %v3717, %v3709
        %v4646 = vpack.c.b16 %v3718, %v3710
        %v4647 = vpack.c.b16 %v3719, %v3711
        %v4648 = vpack.c.b16 %v3720, %v3712
        %v4649 = vpack.c.b16 %v3729, %v3721
        %v4650 = vpack.c.b16 %v3730, %v3722
        %v4651 = vpack.c.b16 %v3731, %v3723
        %v4652 = vpack.c.b16 %v3732, %v3724
        %v4653 = vpack.c.b16 %v3733, %v3725
        %v4654 = vpack.c.b16 %v3734, %v3726
        %v4655 = vpack.c.b16 %v3735, %v3727
        %v4656 = vpack.c.b16 %v3736, %v3728
        %v4657 = vpack.c.b16 %v3745, %v3737
        %v4658 = vpack.c.b16 %v3746, %v3738
        %v4659 = vpack.c.b16 %v3747, %v3739
        %v4660 = vpack.c.b16 %v3748, %v3740
        %v4661 = vpack.c.b16 %v3749, %v3741
        %v4662 = vpack.c.b16 %v3750, %v3742
        %v4663 = vpack.c.b16 %v3751, %v3743
        %v4664 = vpack.c.b16 %v3752, %v3744
        %v4665 = vpack.c.b16 %v3761, %v3753
        %v4666 = vpack.c.b16 %v3762, %v3754
        %v4667 = vpack.c.b16 %v3763, %v3755
        %v4668 = vpack.c.b16 %v3764, %v3756
        %v4669 = vpack.c.b16 %v3765, %v3757
        %v4670 = vpack.c.b16 %v3766, %v3758
        %v4671 = vpack.c.b16 %v3767, %v3759
        %v4672 = vpack.c.b16 %v3768, %v3760
        %v4673 = vpack.c.b16 %v3777, %v3769
        %v4674 = vpack.c.b16 %v3778, %v3770
        %v4675 = vpack.c.b16 %v3779, %v3771
        %v4676 = vpack.c.b16 %v3780, %v3772
        %v4677 = vpack.c.b16 %v3781, %v3773
        %v4678 = vpack.c.b16 %v3782, %v3774
        %v4679 = vpack.c.b16 %v3783, %v3775
        %v4680 = vpack.c.b16 %v3784, %v3776
        %v4681 = vpack.c.b16 %v3793, %v3785
        %v4682 = vpack.c.b16 %v3794, %v3786
        %v4683 = vpack.c.b16 %v3795, %v3787
        %v4684 = vpack.c.b16 %v3796, %v3788
        %v4685 = vpack.c.b16 %v3797, %v3789
        %v4686 = vpack.c.b16 %v3798, %v3790
        %v4687 = vpack.c.b16 %v3799, %v3791
        %v4688 = vpack.c.b16 %v3800, %v3792
        %v4689 = vpack.c.b16 %v3809, %v3801
        %v4690 = vpack.c.b16 %v3810, %v3802
        %v4691 = vpack.c.b16 %v3811, %v3803
        %v4692 = vpack.c.b16 %v3812, %v3804
        %v4693 = vpack.c.b16 %v3813, %v3805
        %v4694 = vpack.c.b16 %v3814, %v3806
        %v4695 = vpack.c.b16 %v3815, %v3807
        %v4696 = vpack.c.b16 %v3816, %v3808
        %v4697 = vpack.c.b16 %v3825, %v3817
        %v4698 = vpack.c.b16 %v3826, %v3818
        %v4699 = vpack.c.b16 %v3827, %v3819
        %v4700 = vpack.c.b16 %v3828, %v3820
        %v4701 = vpack.c.b16 %v3829, %v3821
        %v4702 = vpack.c.b16 %v3830, %v3822
        %v4703 = vpack.c.b16 %v3831, %v3823
        %v4704 = vpack.c.b16 %v3832, %v3824
        %v4705 = vpack.c.b16 %v3841, %v3833
        %v4706 = vpack.c.b16 %v3842, %v3834
        %v4707 = vpack.c.b16 %v3843, %v3835
        %v4708 = vpack.c.b16 %v3844, %v3836
        %v4709 = vpack.c.b16 %v3845, %v3837
        %v4710 = vpack.c.b16 %v3846, %v3838
        %v4711 = vpack.c.b16 %v3847, %v3839
        %v4712 = vpack.c.b16 %v3848, %v3840
        %v4713 = vpack.c.b16 %v3857, %v3849
        %v4714 = vpack.c.b16 %v3858, %v3850
        %v4715 = vpack.c.b16 %v3859, %v3851
        %v4716 = vpack.c.b16 %v3860, %v3852
        %v4717 = vpack.c.b16 %v3861, %v3853
        %v4718 = vpack.c.b16 %v3862, %v3854
        %v4719 = vpack.c.b16 %v3863, %v3855
        %v4720 = vpack.c.b16 %v3864, %v3856
        %v4721 = vpack.c.b16 %v3873, %v3865
        %v4722 = vpack.c.b16 %v3874, %v3866
        %v4723 = vpack.c.b16 %v3875, %v3867
        %v4724 = vpack.c.b16 %v3876, %v3868
        %v4725 = vpack.c.b16 %v3877, %v3869
        %v4726 = vpack.c.b16 %v3878, %v3870
        %v4727 = vpack.c.b16 %v3879, %v3871
        %v4728 = vpack.c.b16 %v3880, %v3872
        %v4729 = vpack.c.b16 %v3889, %v3881
        %v4730 = vpack.c.b16 %v3890, %v3882
        %v4731 = vpack.c.b16 %v3891, %v3883
        %v4732 = vpack.c.b16 %v3892, %v3884
        %v4733 = vpack.c.b16 %v3893, %v3885
        %v4734 = vpack.c.b16 %v3894, %v3886
        %v4735 = vpack.c.b16 %v3895, %v3887
        %v4736 = vpack.c.b16 %v3896, %v3888
        %v4737 = vpack.c.b16 %v3905, %v3897
        %v4738 = vpack.c.b16 %v3906, %v3898
        %v4739 = vpack.c.b16 %v3907, %v3899
        %v4740 = vpack.c.b16 %v3908, %v3900
        %v4741 = vpack.c.b16 %v3909, %v3901
        %v4742 = vpack.c.b16 %v3910, %v3902
        %v4743 = vpack.c.b16 %v3911, %v3903
        %v4744 = vpack.c.b16 %v3912, %v3904
        %v4745 = vpack.c.b16 %v3921, %v3913
        %v4746 = vpack.c.b16 %v3922, %v3914
        %v4747 = vpack.c.b16 %v3923, %v3915
        %v4748 = vpack.c.b16 %v3924, %v3916
        %v4749 = vpack.c.b16 %v3925, %v3917
        %v4750 = vpack.c.b16 %v3926, %v3918
        %v4751 = vpack.c.b16 %v3927, %v3919
        %v4752 = vpack.c.b16 %v3928, %v3920
        %v4753 = vpack.c.b16 %v3937, %v3929
        %v4754 = vpack.c.b16 %v3938, %v3930
        %v4755 = vpack.c.b16 %v3939, %v3931
        %v4756 = vpack.c.b16 %v3940, %v3932
        %v4757 = vpack.c.b16 %v3941, %v3933
        %v4758 = vpack.c.b16 %v3942, %v3934
        %v4759 = vpack.c.b16 %v3943, %v3935
        %v4760 = vpack.c.b16 %v3944, %v3936
        %v4761 = vpack.c.b16 %v3953, %v3945
        %v4762 = vpack.c.b16 %v3954, %v3946
        %v4763 = vpack.c.b16 %v3955, %v3947
        %v4764 = vpack.c.b16 %v3956, %v3948
        %v4765 = vpack.c.b16 %v3957, %v3949
        %v4766 = vpack.c.b16 %v3958, %v3950
        %v4767 = vpack.c.b16 %v3959, %v3951
        %v4768 = vpack.c.b16 %v3960, %v3952
        %v4769 = vpack.c.b16 %v3969, %v3961
        %v4770 = vpack.c.b16 %v3970, %v3962
        %v4771 = vpack.c.b16 %v3971, %v3963
        %v4772 = vpack.c.b16 %v3972, %v3964
        %v4773 = vpack.c.b16 %v3973, %v3965
        %v4774 = vpack.c.b16 %v3974, %v3966
        %v4775 = vpack.c.b16 %v3975, %v3967
        %v4776 = vpack.c.b16 %v3976, %v3968
        %v4777 = vpack.c.b16 %v3985, %v3977
        %v4778 = vpack.c.b16 %v3986, %v3978
        %v4779 = vpack.c.b16 %v3987, %v3979
        %v4780 = vpack.c.b16 %v3988, %v3980
        %v4781 = vpack.c.b16 %v3989, %v3981
        %v4782 = vpack.c.b16 %v3990, %v3982
        %v4783 = vpack.c.b16 %v3991, %v3983
        %v4784 = vpack.c.b16 %v3992, %v3984
        %v4785 = vpack.c.b16 %v4001, %v3993
        %v4786 = vpack.c.b16 %v4002, %v3994
        %v4787 = vpack.c.b16 %v4003, %v3995
        %v4788 = vpack.c.b16 %v4004, %v3996
        %v4789 = vpack.c.b16 %v4005, %v3997
        %v4790 = vpack.c.b16 %v4006, %v3998
        %v4791 = vpack.c.b16 %v4007, %v3999
        %v4792 = vpack.c.b16 %v4008, %v4000
        %v4793 = vpack.c.b16 %v4017, %v4009
        %v4794 = vpack.c.b16 %v4018, %v4010
        %v4795 = vpack.c.b16 %v4019, %v4011
        %v4796 = vpack.c.b16 %v4020, %v4012
        %v4797 = vpack.c.b16 %v4021, %v4013
        %v4798 = vpack.c.b16 %v4022, %v4014
        %v4799 = vpack.c.b16 %v4023, %v4015
        %v4800 = vpack.c.b16 %v4024, %v4016
        %v4801 = vpack.c.b16 %v4033, %v4025
        %v4802 = vpack.c.b16 %v4034, %v4026
        %v4803 = vpack.c.b16 %v4035, %v4027
        %v4804 = vpack.c.b16 %v4036, %v4028
        %v4805 = vpack.c.b16 %v4037, %v4029
        %v4806 = vpack.c.b16 %v4038, %v4030
        %v4807 = vpack.c.b16 %v4039, %v4031
        %v4808 = vpack.c.b16 %v4040, %v4032
        %v4809 = vpack.c.b16 %v4049, %v4041
        %v4810 = vpack.c.b16 %v4050, %v4042
        %v4811 = vpack.c.b16 %v4051, %v4043
        %v4812 = vpack.c.b16 %v4052, %v4044
        %v4813 = vpack.c.b16 %v4053, %v4045
        %v4814 = vpack.c.b16 %v4054, %v4046
        %v4815 = vpack.c.b16 %v4055, %v4047
        %v4816 = vpack.c.b16 %v4056, %v4048
        %v4817 = vpack.c.b16 %v4065, %v4057
        %v4818 = vpack.c.b16 %v4066, %v4058
        %v4819 = vpack.c.b16 %v4067, %v4059
        %v4820 = vpack.c.b16 %v4068, %v4060
        %v4821 = vpack.c.b16 %v4069, %v4061
        %v4822 = vpack.c.b16 %v4070, %v4062
        %v4823 = vpack.c.b16 %v4071, %v4063
        %v4824 = vpack.c.b16 %v4072, %v4064
        %v4825 = vpack.c.b16 %v4081, %v4073
        %v4826 = vpack.c.b16 %v4082, %v4074
        %v4827 = vpack.c.b16 %v4083, %v4075
        %v4828 = vpack.c.b16 %v4084, %v4076
        %v4829 = vpack.c.b16 %v4085, %v4077
        %v4830 = vpack.c.b16 %v4086, %v4078
        %v4831 = vpack.c.b16 %v4087, %v4079
        %v4832 = vpack.c.b16 %v4088, %v4080
        %v4833 = vpack.c.b16 %v4097, %v4089
        %v4834 = vpack.c.b16 %v4098, %v4090
        %v4835 = vpack.c.b16 %v4099, %v4091
        %v4836 = vpack.c.b16 %v4100, %v4092
        %v4837 = vpack.c.b16 %v4101, %v4093
        %v4838 = vpack.c.b16 %v4102, %v4094
        %v4839 = vpack.c.b16 %v4103, %v4095
        %v4840 = vpack.c.b16 %v4104, %v4096
        %v4841 = vpack.c.b16 %v4113, %v4105
        %v4842 = vpack.c.b16 %v4114, %v4106
        %v4843 = vpack.c.b16 %v4115, %v4107
        %v4844 = vpack.c.b16 %v4116, %v4108
        %v4845 = vpack.c.b16 %v4117, %v4109
        %v4846 = vpack.c.b16 %v4118, %v4110
        %v4847 = vpack.c.b16 %v4119, %v4111
        %v4848 = vpack.c.b16 %v4120, %v4112
        %v4849 = vpack.c.b16 %v4129, %v4121
        %v4850 = vpack.c.b16 %v4130, %v4122
        %v4851 = vpack.c.b16 %v4131, %v4123
        %v4852 = vpack.c.b16 %v4132, %v4124
        %v4853 = vpack.c.b16 %v4133, %v4125
        %v4854 = vpack.c.b16 %v4134, %v4126
        %v4855 = vpack.c.b16 %v4135, %v4127
        %v4856 = vpack.c.b16 %v4136, %v4128
        %v4857 = vpack.c.b16 %v4145, %v4137
        %v4858 = vpack.c.b16 %v4146, %v4138
        %v4859 = vpack.c.b16 %v4147, %v4139
        %v4860 = vpack.c.b16 %v4148, %v4140
        %v4861 = vpack.c.b16 %v4149, %v4141
        %v4862 = vpack.c.b16 %v4150, %v4142
        %v4863 = vpack.c.b16 %v4151, %v4143
        %v4864 = vpack.c.b16 %v4152, %v4144
        %v4865 = vpack.c.b16 %v4161, %v4153
        %v4866 = vpack.c.b16 %v4162, %v4154
        %v4867 = vpack.c.b16 %v4163, %v4155
        %v4868 = vpack.c.b16 %v4164, %v4156
        %v4869 = vpack.c.b16 %v4165, %v4157
        %v4870 = vpack.c.b16 %v4166, %v4158
        %v4871 = vpack.c.b16 %v4167, %v4159
        %v4872 = vpack.c.b16 %v4168, %v4160
        %v4873 = vpack.c.b16 %v4177, %v4169
        %v4874 = vpack.c.b16 %v4178, %v4170
        %v4875 = vpack.c.b16 %v4179, %v4171
        %v4876 = vpack.c.b16 %v4180, %v4172
        %v4877 = vpack.c.b16 %v4181, %v4173
        %v4878 = vpack.c.b16 %v4182, %v4174
        %v4879 = vpack.c.b16 %v4183, %v4175
        %v4880 = vpack.c.b16 %v4184, %v4176
        %v4881 = vpack.c.b16 %v4193, %v4185
        %v4882 = vpack.c.b16 %v4194, %v4186
        %v4883 = vpack.c.b16 %v4195, %v4187
        %v4884 = vpack.c.b16 %v4196, %v4188
        %v4885 = vpack.c.b16 %v4197, %v4189
        %v4886 = vpack.c.b16 %v4198, %v4190
        %v4887 = vpack.c.b16 %v4199, %v4191
        %v4888 = vpack.c.b16 %v4200, %v4192
        %v4889 = vpack.c.b16 %v4209, %v4201
        %v4890 = vpack.c.b16 %v4210, %v4202
        %v4891 = vpack.c.b16 %v4211, %v4203
        %v4892 = vpack.c.b16 %v4212, %v4204
        %v4893 = vpack.c.b16 %v4213, %v4205
        %v4894 = vpack.c.b16 %v4214, %v4206
        %v4895 = vpack.c.b16 %v4215, %v4207
        %v4896 = vpack.c.b16 %v4216, %v4208
        %v4897 = vpack.c.b16 %v4225, %v4217
        %v4898 = vpack.c.b16 %v4226, %v4218
        %v4899 = vpack.c.b16 %v4227, %v4219
        %v4900 = vpack.c.b16 %v4228, %v4220
        %v4901 = vpack.c.b16 %v4229, %v4221
        %v4902 = vpack.c.b16 %v4230, %v4222
        %v4903 = vpack.c.b16 %v4231, %v4223
        %v4904 = vpack.c.b16 %v4232, %v4224
        %v4905 = vpack.c.b16 %v4241, %v4233
        %v4906 = vpack.c.b16 %v4242, %v4234
        %v4907 = vpack.c.b16 %v4243, %v4235
        %v4908 = vpack.c.b16 %v4244, %v4236
        %v4909 = vpack.c.b16 %v4245, %v4237
        %v4910 = vpack.c.b16 %v4246, %v4238
        %v4911 = vpack.c.b16 %v4247, %v4239
        %v4912 = vpack.c.b16 %v4248, %v4240
        %v4913 = vpack.c.b16 %v4257, %v4249
        %v4914 = vpack.c.b16 %v4258, %v4250
        %v4915 = vpack.c.b16 %v4259, %v4251
        %v4916 = vpack.c.b16 %v4260, %v4252
        %v4917 = vpack.c.b16 %v4261, %v4253
        %v4918 = vpack.c.b16 %v4262, %v4254
        %v4919 = vpack.c.b16 %v4263, %v4255
        %v4920 = vpack.c.b16 %v4264, %v4256
        %v4921 = vpack.c.b16 %v4273, %v4265
        %v4922 = vpack.c.b16 %v4274, %v4266
        %v4923 = vpack.c.b16 %v4275, %v4267
        %v4924 = vpack.c.b16 %v4276, %v4268
        %v4925 = vpack.c.b16 %v4277, %v4269
        %v4926 = vpack.c.b16 %v4278, %v4270
        %v4927 = vpack.c.b16 %v4279, %v4271
        %v4928 = vpack.c.b16 %v4280, %v4272
        %v4929 = vpack.c.b16 %v4289, %v4281
        %v4930 = vpack.c.b16 %v4290, %v4282
        %v4931 = vpack.c.b16 %v4291, %v4283
        %v4932 = vpack.c.b16 %v4292, %v4284
        %v4933 = vpack.c.b16 %v4293, %v4285
        %v4934 = vpack.c.b16 %v4294, %v4286
        %v4935 = vpack.c.b16 %v4295, %v4287
        %v4936 = vpack.c.b16 %v4296, %v4288
        %v4937 = vpack.c.b16 %v4305, %v4297
        %v4938 = vpack.c.b16 %v4306, %v4298
        %v4939 = vpack.c.b16 %v4307, %v4299
        %v4940 = vpack.c.b16 %v4308, %v4300
        %v4941 = vpack.c.b16 %v4309, %v4301
        %v4942 = vpack.c.b16 %v4310, %v4302
        %v4943 = vpack.c.b16 %v4311, %v4303
        %v4944 = vpack.c.b16 %v4312, %v4304
        %v4945 = vpack.c.b16 %v4321, %v4313
        %v4946 = vpack.c.b16 %v4322, %v4314
        %v4947 = vpack.c.b16 %v4323, %v4315
        %v4948 = vpack.c.b16 %v4324, %v4316
        %v4949 = vpack.c.b16 %v4325, %v4317
        %v4950 = vpack.c.b16 %v4326, %v4318
        %v4951 = vpack.c.b16 %v4327, %v4319
        %v4952 = vpack.c.b16 %v4328, %v4320
        %v4953 = vpack.c.b16 %v4337, %v4329
        %v4954 = vpack.c.b16 %v4338, %v4330
        %v4955 = vpack.c.b16 %v4339, %v4331
        %v4956 = vpack.c.b16 %v4340, %v4332
        %v4957 = vpack.c.b16 %v4341, %v4333
        %v4958 = vpack.c.b16 %v4342, %v4334
        %v4959 = vpack.c.b16 %v4343, %v4335
        %v4960 = vpack.c.b16 %v4344, %v4336
        %v4961 = vpack.c.b16 %v4353, %v4345
        %v4962 = vpack.c.b16 %v4354, %v4346
        %v4963 = vpack.c.b16 %v4355, %v4347
        %v4964 = vpack.c.b16 %v4356, %v4348
        %v4965 = vpack.c.b16 %v4357, %v4349
        %v4966 = vpack.c.b16 %v4358, %v4350
        %v4967 = vpack.c.b16 %v4359, %v4351
        %v4968 = vpack.c.b16 %v4360, %v4352
        %v4969 = vpack.c.b16 %v4369, %v4361
        %v4970 = vpack.c.b16 %v4370, %v4362
        %v4971 = vpack.c.b16 %v4371, %v4363
        %v4972 = vpack.c.b16 %v4372, %v4364
        %v4973 = vpack.c.b16 %v4373, %v4365
        %v4974 = vpack.c.b16 %v4374, %v4366
        %v4975 = vpack.c.b16 %v4375, %v4367
        %v4976 = vpack.c.b16 %v4376, %v4368
        %v4977 = vpack.c.b16 %v4385, %v4377
        %v4978 = vpack.c.b16 %v4386, %v4378
        %v4979 = vpack.c.b16 %v4387, %v4379
        %v4980 = vpack.c.b16 %v4388, %v4380
        %v4981 = vpack.c.b16 %v4389, %v4381
        %v4982 = vpack.c.b16 %v4390, %v4382
        %v4983 = vpack.c.b16 %v4391, %v4383
        %v4984 = vpack.c.b16 %v4392, %v4384
        %v4985 = vpack.c.b16 %v4401, %v4393
        %v4986 = vpack.c.b16 %v4402, %v4394
        %v4987 = vpack.c.b16 %v4403, %v4395
        %v4988 = vpack.c.b16 %v4404, %v4396
        %v4989 = vpack.c.b16 %v4405, %v4397
        %v4990 = vpack.c.b16 %v4406, %v4398
        %v4991 = vpack.c.b16 %v4407, %v4399
        %v4992 = vpack.c.b16 %v4408, %v4400
        %v4993 = vpack.c.b16 %v4417, %v4409
        %v4994 = vpack.c.b16 %v4418, %v4410
        %v4995 = vpack.c.b16 %v4419, %v4411
        %v4996 = vpack.c.b16 %v4420, %v4412
        %v4997 = vpack.c.b16 %v4421, %v4413
        %v4998 = vpack.c.b16 %v4422, %v4414
        %v4999 = vpack.c.b16 %v4423, %v4415
        %v5000 = vpack.c.b16 %v4424, %v4416
        %v5001 = vpack.c.b16 %v4433, %v4425
        %v5002 = vpack.c.b16 %v4434, %v4426
        %v5003 = vpack.c.b16 %v4435, %v4427
        %v5004 = vpack.c.b16 %v4436, %v4428
        %v5005 = vpack.c.b16 %v4437, %v4429
        %v5006 = vpack.c.b16 %v4438, %v4430
        %v5007 = vpack.c.b16 %v4439, %v4431
        %v5008 = vpack.c.b16 %v4440, %v4432
        %v5009 = vpack.c.b16 %v4449, %v4441
        %v5010 = vpack.c.b16 %v4450, %v4442
        %v5011 = vpack.c.b16 %v4451, %v4443
        %v5012 = vpack.c.b16 %v4452, %v4444
        %v5013 = vpack.c.b16 %v4453, %v4445
        %v5014 = vpack.c.b16 %v4454, %v4446
        %v5015 = vpack.c.b16 %v4455, %v4447
        %v5016 = vpack.c.b16 %v4456, %v4448
        %v5017 = vpack.c.b16 %v4465, %v4457
        %v5018 = vpack.c.b16 %v4466, %v4458
        %v5019 = vpack.c.b16 %v4467, %v4459
        %v5020 = vpack.c.b16 %v4468, %v4460
        %v5021 = vpack.c.b16 %v4469, %v4461
        %v5022 = vpack.c.b16 %v4470, %v4462
        %v5023 = vpack.c.b16 %v4471, %v4463
        %v5024 = vpack.c.b16 %v4472, %v4464
        %v5025 = vpack.c.b16 %v4481, %v4473
        %v5026 = vpack.c.b16 %v4482, %v4474
        %v5027 = vpack.c.b16 %v4483, %v4475
        %v5028 = vpack.c.b16 %v4484, %v4476
        %v5029 = vpack.c.b16 %v4485, %v4477
        %v5030 = vpack.c.b16 %v4486, %v4478
        %v5031 = vpack.c.b16 %v4487, %v4479
        %v5032 = vpack.c.b16 %v4488, %v4480
        %v5033 = vpack.c.b16 %v4497, %v4489
        %v5034 = vpack.c.b16 %v4498, %v4490
        %v5035 = vpack.c.b16 %v4499, %v4491
        %v5036 = vpack.c.b16 %v4500, %v4492
        %v5037 = vpack.c.b16 %v4501, %v4493
        %v5038 = vpack.c.b16 %v4502, %v4494
        %v5039 = vpack.c.b16 %v4503, %v4495
        %v5040 = vpack.c.b16 %v4504, %v4496
        %v5041 = vpack.c.b16 %v4513, %v4505
        %v5042 = vpack.c.b16 %v4514, %v4506
        %v5043 = vpack.c.b16 %v4515, %v4507
        %v5044 = vpack.c.b16 %v4516, %v4508
        %v5045 = vpack.c.b16 %v4517, %v4509
        %v5046 = vpack.c.b16 %v4518, %v4510
        %v5047 = vpack.c.b16 %v4519, %v4511
        %v5048 = vpack.c.b16 %v4520, %v4512
        %v5049 = vpack.c.b16 %v4529, %v4521
        %v5050 = vpack.c.b16 %v4530, %v4522
        %v5051 = vpack.c.b16 %v4531, %v4523
        %v5052 = vpack.c.b16 %v4532, %v4524
        %v5053 = vpack.c.b16 %v4533, %v4525
        %v5054 = vpack.c.b16 %v4534, %v4526
        %v5055 = vpack.c.b16 %v4535, %v4527
        %v5056 = vpack.c.b16 %v4536, %v4528
        %v5057 = vpack.c.b16 %v4545, %v4537
        %v5058 = vpack.c.b16 %v4546, %v4538
        %v5059 = vpack.c.b16 %v4547, %v4539
        %v5060 = vpack.c.b16 %v4548, %v4540
        %v5061 = vpack.c.b16 %v4549, %v4541
        %v5062 = vpack.c.b16 %v4550, %v4542
        %v5063 = vpack.c.b16 %v4551, %v4543
        %v5064 = vpack.c.b16 %v4552, %v4544
        %5577 = vmatprep.subr.bf16.mxu0 %v4554
        %5578 = vmatpush1.bf16.msra.mxu0 %v4553
        %5579 = vmatprep.subr.bf16.mxu0 %v4562
        %5580 = vmatpush1.bf16.msra.mxu0 %v4561
        %5581 = vmatprep.subr.bf16.mxu0 %v4570
        %5582 = vmatpush1.bf16.msra.mxu0 %v4569
        %5583 = vmatprep.subr.bf16.mxu0 %v4578
        %5584 = vmatpush1.bf16.msra.mxu0 %v4577
        %5585 = vmatprep.subr.bf16.mxu0 %v4586
        %5586 = vmatpush1.bf16.msra.mxu0 %v4585
        %5587 = vmatprep.subr.bf16.mxu0 %v4594
        %5588 = vmatpush1.bf16.msra.mxu0 %v4593
        %5589 = vmatprep.subr.bf16.mxu0 %v4602
        %5590 = vmatpush1.bf16.msra.mxu0 %v4601
        %5591 = vmatprep.subr.bf16.mxu0 %v4610
        %5592 = vmatpush1.bf16.msra.mxu0 %v4609
        %5593 = vmatprep.subr.bf16.mxu0 %v4618
        %5594 = vmatpush1.bf16.msra.mxu0 %v4617
        %5595 = vmatprep.subr.bf16.mxu0 %v4626
        %5596 = vmatpush1.bf16.msra.mxu0 %v4625
        %5597 = vmatprep.subr.bf16.mxu0 %v4634
        %5598 = vmatpush1.bf16.msra.mxu0 %v4633
        %5599 = vmatprep.subr.bf16.mxu0 %v4642
        %5600 = vmatpush1.bf16.msra.mxu0 %v4641
        %5601 = vmatprep.subr.bf16.mxu0 %v4650
        %5602 = vmatpush1.bf16.msra.mxu0 %v4649
        %5603 = vmatprep.subr.bf16.mxu0 %v4658
        %5604 = vmatpush1.bf16.msra.mxu0 %v4657
        %5605 = vmatprep.subr.bf16.mxu0 %v4666
        %5606 = vmatpush1.bf16.msra.mxu0 %v4665
        %5607 = vmatprep.subr.bf16.mxu0 %v4674
        %5608 = vmatpush1.bf16.msra.mxu0 %v4673
        %5609 = vmatprep.mubr.bf16.mxu0 %v2456
        %5610 = vmatmul.mubr.bf16.gmra.mrb[0].mxu0 %v2455
        %v5611 = vpop.f32.mrb[0].mxu0
        %v5612 = vadd.f32 %v2980, %v5611
        %v5613 = vpop.f32.mrb[0].mxu0
        %v5614 = vadd.f32 %v2984, %v5613
        %v5615 = vpop.f32.mrb[0].mxu0
        %v5616 = vpop.f32.mrb[0].mxu0
        %5617 = vdwg.mxu0
        %5618 = vmatprep.subr.bf16.mxu0 %v4682
        %5619 = vmatpush1.bf16.msra.mxu0 %v4681
        %5620 = vmatprep.subr.bf16.mxu0 %v4690
        %5621 = vmatpush1.bf16.msra.mxu0 %v4689
        %5622 = vmatprep.subr.bf16.mxu0 %v4698
        %5623 = vmatpush1.bf16.msra.mxu0 %v4697
        %5624 = vmatprep.subr.bf16.mxu0 %v4706
        %5625 = vmatpush1.bf16.msra.mxu0 %v4705
        %5626 = vmatprep.subr.bf16.mxu0 %v4714
        %5627 = vmatpush1.bf16.msra.mxu0 %v4713
        %5628 = vmatprep.subr.bf16.mxu0 %v4722
        %5629 = vmatpush1.bf16.msra.mxu0 %v4721
        %5630 = vmatprep.subr.bf16.mxu0 %v4730
        %5631 = vmatpush1.bf16.msra.mxu0 %v4729
        %5632 = vmatprep.subr.bf16.mxu0 %v4738
        %5633 = vmatpush1.bf16.msra.mxu0 %v4737
        %5634 = vmatprep.subr.bf16.mxu0 %v4746
        %5635 = vmatpush1.bf16.msra.mxu0 %v4745
        %5636 = vmatprep.subr.bf16.mxu0 %v4754
        %5637 = vmatpush1.bf16.msra.mxu0 %v4753
        %5638 = vmatprep.subr.bf16.mxu0 %v4762
        %5639 = vmatpush1.bf16.msra.mxu0 %v4761
        %5640 = vmatprep.subr.bf16.mxu0 %v4770
        %5641 = vmatpush1.bf16.msra.mxu0 %v4769
        %5642 = vmatprep.subr.bf16.mxu0 %v4778
        %5643 = vmatpush1.bf16.msra.mxu0 %v4777
        %5644 = vmatprep.subr.bf16.mxu0 %v4786
        %5645 = vmatpush1.bf16.msra.mxu0 %v4785
        %5646 = vmatprep.subr.bf16.mxu0 %v4794
        %5647 = vmatpush1.bf16.msra.mxu0 %v4793
        %5648 = vmatprep.subr.bf16.mxu0 %v4802
        %5649 = vmatpush1.bf16.msra.mxu0 %v4801
        %5650 = vmatprep.mubr.bf16.mxu0 %v2458
        %5651 = vmatmul.mubr.bf16.gmra.mrb[0].mxu0 %v2457
        %v5652 = vpop.f32.mrb[0].mxu0
        %v5653 = vadd.f32 %v5612, %v5652
        %v5654 = vpop.f32.mrb[0].mxu0
        %v5655 = vadd.f32 %v5614, %v5654
        %v5656 = vpop.f32.mrb[0].mxu0
        %v5657 = vpop.f32.mrb[0].mxu0
        %5658 = vdwg.mxu0
        %5659 = vmatprep.subr.bf16.mxu0 %v4810
        %5660 = vmatpush1.bf16.msra.mxu0 %v4809
        %5661 = vmatprep.subr.bf16.mxu0 %v4818
        %5662 = vmatpush1.bf16.msra.mxu0 %v4817
        %5663 = vmatprep.subr.bf16.mxu0 %v4826
        %5664 = vmatpush1.bf16.msra.mxu0 %v4825
        %5665 = vmatprep.subr.bf16.mxu0 %v4834
        %5666 = vmatpush1.bf16.msra.mxu0 %v4833
        %5667 = vmatprep.subr.bf16.mxu0 %v4842
        %5668 = vmatpush1.bf16.msra.mxu0 %v4841
        %5669 = vmatprep.subr.bf16.mxu0 %v4850
        %5670 = vmatpush1.bf16.msra.mxu0 %v4849
        %5671 = vmatprep.subr.bf16.mxu0 %v4858
        %5672 = vmatpush1.bf16.msra.mxu0 %v4857
        %5673 = vmatprep.subr.bf16.mxu0 %v4866
        %5674 = vmatpush1.bf16.msra.mxu0 %v4865
        %5675 = vmatprep.subr.bf16.mxu0 %v4874
        %5676 = vmatpush1.bf16.msra.mxu0 %v4873
        %5677 = vmatprep.subr.bf16.mxu0 %v4882
        %5678 = vmatpush1.bf16.msra.mxu0 %v4881
        %5679 = vmatprep.subr.bf16.mxu0 %v4890
        %5680 = vmatpush1.bf16.msra.mxu0 %v4889
        %5681 = vmatprep.subr.bf16.mxu0 %v4898
        %5682 = vmatpush1.bf16.msra.mxu0 %v4897
        %5683 = vmatprep.subr.bf16.mxu0 %v4906
        %5684 = vmatpush1.bf16.msra.mxu0 %v4905
        %5685 = vmatprep.subr.bf16.mxu0 %v4914
        %5686 = vmatpush1.bf16.msra.mxu0 %v4913
        %5687 = vmatprep.subr.bf16.mxu0 %v4922
        %5688 = vmatpush1.bf16.msra.mxu0 %v4921
        %5689 = vmatprep.subr.bf16.mxu0 %v4930
        %5690 = vmatpush1.bf16.msra.mxu0 %v4929
        %5691 = vmatprep.mubr.bf16.mxu0 %v2460
        %5692 = vmatmul.mubr.bf16.gmra.mrb[0].mxu0 %v2459
        %v5693 = vpop.f32.mrb[0].mxu0
        %v5694 = vadd.f32 %v5653, %v5693
        %v5695 = vpop.f32.mrb[0].mxu0
        %v5696 = vadd.f32 %v5655, %v5695
        %v5697 = vpop.f32.mrb[0].mxu0
        %v5698 = vpop.f32.mrb[0].mxu0
        %5699 = vdwg.mxu0
        %5700 = vmatprep.subr.bf16.mxu0 %v4938
        %5701 = vmatpush1.bf16.msra.mxu0 %v4937
        %5702 = vmatprep.subr.bf16.mxu0 %v4946
        %5703 = vmatpush1.bf16.msra.mxu0 %v4945
        %5704 = vmatprep.subr.bf16.mxu0 %v4954
        %5705 = vmatpush1.bf16.msra.mxu0 %v4953
        %5706 = vmatprep.subr.bf16.mxu0 %v4962
        %5707 = vmatpush1.bf16.msra.mxu0 %v4961
        %5708 = vmatprep.subr.bf16.mxu0 %v4970
        %5709 = vmatpush1.bf16.msra.mxu0 %v4969
        %5710 = vmatprep.subr.bf16.mxu0 %v4978
        %5711 = vmatpush1.bf16.msra.mxu0 %v4977
        %5712 = vmatprep.subr.bf16.mxu0 %v4986
        %5713 = vmatpush1.bf16.msra.mxu0 %v4985
        %5714 = vmatprep.subr.bf16.mxu0 %v4994
        %5715 = vmatpush1.bf16.msra.mxu0 %v4993
        %5716 = vmatprep.subr.bf16.mxu0 %v5002
        %5717 = vmatpush1.bf16.msra.mxu0 %v5001
        %5718 = vmatprep.subr.bf16.mxu0 %v5010
        %5719 = vmatpush1.bf16.msra.mxu0 %v5009
        %5720 = vmatprep.subr.bf16.mxu0 %v5018
        %5721 = vmatpush1.bf16.msra.mxu0 %v5017
        %5722 = vmatprep.subr.bf16.mxu0 %v5026
        %5723 = vmatpush1.bf16.msra.mxu0 %v5025
        %5724 = vmatprep.subr.bf16.mxu0 %v5034
        %5725 = vmatpush1.bf16.msra.mxu0 %v5033
        %5726 = vmatprep.subr.bf16.mxu0 %v5042
        %5727 = vmatpush1.bf16.msra.mxu0 %v5041
        %5728 = vmatprep.subr.bf16.mxu0 %v5050
        %5729 = vmatpush1.bf16.msra.mxu0 %v5049
        %5730 = vmatprep.subr.bf16.mxu0 %v5058
        %5731 = vmatpush1.bf16.msra.mxu0 %v5057
        %5732 = vmatprep.mubr.bf16.mxu0 %v2462
        %5733 = vmatmul.mubr.bf16.gmra.mrb[0].mxu0 %v2461
        %v5734 = vpop.f32.mrb[0].mxu0
        %v5735 = vadd.f32 %v5694, %v5734
        %v5736 = vpop.f32.mrb[0].mxu0
        %v5737 = vadd.f32 %v5696, %v5736
        %v5738 = vpop.f32.mrb[0].mxu0
        %v5739 = vpop.f32.mrb[0].mxu0
        %5740 = vdwg.mxu0
        %5741 = vmatprep.subr.bf16.mxu0 %v4556
        %5742 = vmatpush1.bf16.msra.mxu0 %v4555
        %5743 = vmatprep.subr.bf16.mxu0 %v4564
        %5744 = vmatpush1.bf16.msra.mxu0 %v4563
        %5745 = vmatprep.subr.bf16.mxu0 %v4572
        %5746 = vmatpush1.bf16.msra.mxu0 %v4571
        %5747 = vmatprep.subr.bf16.mxu0 %v4580
        %5748 = vmatpush1.bf16.msra.mxu0 %v4579
        %5749 = vmatprep.subr.bf16.mxu0 %v4588
        %5750 = vmatpush1.bf16.msra.mxu0 %v4587
        %5751 = vmatprep.subr.bf16.mxu0 %v4596
        %5752 = vmatpush1.bf16.msra.mxu0 %v4595
        %5753 = vmatprep.subr.bf16.mxu0 %v4604
        %5754 = vmatpush1.bf16.msra.mxu0 %v4603
        %5755 = vmatprep.subr.bf16.mxu0 %v4612
        %5756 = vmatpush1.bf16.msra.mxu0 %v4611
        %5757 = vmatprep.subr.bf16.mxu0 %v4620
        %5758 = vmatpush1.bf16.msra.mxu0 %v4619
        %5759 = vmatprep.subr.bf16.mxu0 %v4628
        %5760 = vmatpush1.bf16.msra.mxu0 %v4627
        %5761 = vmatprep.subr.bf16.mxu0 %v4636
        %5762 = vmatpush1.bf16.msra.mxu0 %v4635
        %5763 = vmatprep.subr.bf16.mxu0 %v4644
        %5764 = vmatpush1.bf16.msra.mxu0 %v4643
        %5765 = vmatprep.subr.bf16.mxu0 %v4652
        %5766 = vmatpush1.bf16.msra.mxu0 %v4651
        %5767 = vmatprep.subr.bf16.mxu0 %v4660
        %5768 = vmatpush1.bf16.msra.mxu0 %v4659
        %5769 = vmatprep.subr.bf16.mxu0 %v4668
        %5770 = vmatpush1.bf16.msra.mxu0 %v4667
        %5771 = vmatprep.subr.bf16.mxu0 %v4676
        %5772 = vmatpush1.bf16.msra.mxu0 %v4675
        %5773 = vmatprep.mubr.bf16.mxu0 %v2456
        %5774 = vmatmul.mubr.bf16.gmra.mrb[0].mxu0 %v2455
        %v5775 = vpop.f32.mrb[0].mxu0
        %v5776 = vadd.f32 %v2988, %v5775
        %v5777 = vpop.f32.mrb[0].mxu0
        %v5778 = vadd.f32 %v2992, %v5777
        %v5779 = vpop.f32.mrb[0].mxu0
        %v5780 = vpop.f32.mrb[0].mxu0
        %5781 = vdwg.mxu0
        %5782 = vmatprep.subr.bf16.mxu0 %v4684
        %5783 = vmatpush1.bf16.msra.mxu0 %v4683
        %5784 = vmatprep.subr.bf16.mxu0 %v4692
        %5785 = vmatpush1.bf16.msra.mxu0 %v4691
        %5786 = vmatprep.subr.bf16.mxu0 %v4700
        %5787 = vmatpush1.bf16.msra.mxu0 %v4699
        %5788 = vmatprep.subr.bf16.mxu0 %v4708
        %5789 = vmatpush1.bf16.msra.mxu0 %v4707
        %5790 = vmatprep.subr.bf16.mxu0 %v4716
        %5791 = vmatpush1.bf16.msra.mxu0 %v4715
        %5792 = vmatprep.subr.bf16.mxu0 %v4724
        %5793 = vmatpush1.bf16.msra.mxu0 %v4723
        %5794 = vmatprep.subr.bf16.mxu0 %v4732
        %5795 = vmatpush1.bf16.msra.mxu0 %v4731
        %5796 = vmatprep.subr.bf16.mxu0 %v4740
        %5797 = vmatpush1.bf16.msra.mxu0 %v4739
        %5798 = vmatprep.subr.bf16.mxu0 %v4748
        %5799 = vmatpush1.bf16.msra.mxu0 %v4747
        %5800 = vmatprep.subr.bf16.mxu0 %v4756
        %5801 = vmatpush1.bf16.msra.mxu0 %v4755
        %5802 = vmatprep.subr.bf16.mxu0 %v4764
        %5803 = vmatpush1.bf16.msra.mxu0 %v4763
        %5804 = vmatprep.subr.bf16.mxu0 %v4772
        %5805 = vmatpush1.bf16.msra.mxu0 %v4771
        %5806 = vmatprep.subr.bf16.mxu0 %v4780
        %5807 = vmatpush1.bf16.msra.mxu0 %v4779
        %5808 = vmatprep.subr.bf16.mxu0 %v4788
        %5809 = vmatpush1.bf16.msra.mxu0 %v4787
        %5810 = vmatprep.subr.bf16.mxu0 %v4796
        %5811 = vmatpush1.bf16.msra.mxu0 %v4795
        %5812 = vmatprep.subr.bf16.mxu0 %v4804
        %5813 = vmatpush1.bf16.msra.mxu0 %v4803
        %5814 = vmatprep.mubr.bf16.mxu0 %v2458
        %5815 = vmatmul.mubr.bf16.gmra.mrb[0].mxu0 %v2457
        %v5816 = vpop.f32.mrb[0].mxu0
        %v5817 = vadd.f32 %v5776, %v5816
        %v5818 = vpop.f32.mrb[0].mxu0
        %v5819 = vadd.f32 %v5778, %v5818
        %v5820 = vpop.f32.mrb[0].mxu0
        %v5821 = vpop.f32.mrb[0].mxu0
        %5822 = vdwg.mxu0
        %5823 = vmatprep.subr.bf16.mxu0 %v4812
        %5824 = vmatpush1.bf16.msra.mxu0 %v4811
        %5825 = vmatprep.subr.bf16.mxu0 %v4820
        %5826 = vmatpush1.bf16.msra.mxu0 %v4819
        %5827 = vmatprep.subr.bf16.mxu0 %v4828
        %5828 = vmatpush1.bf16.msra.mxu0 %v4827
        %5829 = vmatprep.subr.bf16.mxu0 %v4836
        %5830 = vmatpush1.bf16.msra.mxu0 %v4835
        %5831 = vmatprep.subr.bf16.mxu0 %v4844
        %5832 = vmatpush1.bf16.msra.mxu0 %v4843
        %5833 = vmatprep.subr.bf16.mxu0 %v4852
        %5834 = vmatpush1.bf16.msra.mxu0 %v4851
        %5835 = vmatprep.subr.bf16.mxu0 %v4860
        %5836 = vmatpush1.bf16.msra.mxu0 %v4859
        %5837 = vmatprep.subr.bf16.mxu0 %v4868
        %5838 = vmatpush1.bf16.msra.mxu0 %v4867
        %5839 = vmatprep.subr.bf16.mxu0 %v4876
        %5840 = vmatpush1.bf16.msra.mxu0 %v4875
        %5841 = vmatprep.subr.bf16.mxu0 %v4884
        %5842 = vmatpush1.bf16.msra.mxu0 %v4883
        %5843 = vmatprep.subr.bf16.mxu0 %v4892
        %5844 = vmatpush1.bf16.msra.mxu0 %v4891
        %5845 = vmatprep.subr.bf16.mxu0 %v4900
        %5846 = vmatpush1.bf16.msra.mxu0 %v4899
        %5847 = vmatprep.subr.bf16.mxu0 %v4908
        %5848 = vmatpush1.bf16.msra.mxu0 %v4907
        %5849 = vmatprep.subr.bf16.mxu0 %v4916
        %5850 = vmatpush1.bf16.msra.mxu0 %v4915
        %5851 = vmatprep.subr.bf16.mxu0 %v4924
        %5852 = vmatpush1.bf16.msra.mxu0 %v4923
        %5853 = vmatprep.subr.bf16.mxu0 %v4932
        %5854 = vmatpush1.bf16.msra.mxu0 %v4931
        %5855 = vmatprep.mubr.bf16.mxu0 %v2460
        %5856 = vmatmul.mubr.bf16.gmra.mrb[0].mxu0 %v2459
        %v5857 = vpop.f32.mrb[0].mxu0
        %v5858 = vadd.f32 %v5817, %v5857
        %v5859 = vpop.f32.mrb[0].mxu0
        %v5860 = vadd.f32 %v5819, %v5859
        %v5861 = vpop.f32.mrb[0].mxu0
        %v5862 = vpop.f32.mrb[0].mxu0
        %5863 = vdwg.mxu0
        %5864 = vmatprep.subr.bf16.mxu0 %v4940
        %5865 = vmatpush1.bf16.msra.mxu0 %v4939
        %5866 = vmatprep.subr.bf16.mxu0 %v4948
        %5867 = vmatpush1.bf16.msra.mxu0 %v4947
        %5868 = vmatprep.subr.bf16.mxu0 %v4956
        %5869 = vmatpush1.bf16.msra.mxu0 %v4955
        %5870 = vmatprep.subr.bf16.mxu0 %v4964
        %5871 = vmatpush1.bf16.msra.mxu0 %v4963
        %5872 = vmatprep.subr.bf16.mxu0 %v4972
        %5873 = vmatpush1.bf16.msra.mxu0 %v4971
        %5874 = vmatprep.subr.bf16.mxu0 %v4980
        %5875 = vmatpush1.bf16.msra.mxu0 %v4979
        %5876 = vmatprep.subr.bf16.mxu0 %v4988
        %5877 = vmatpush1.bf16.msra.mxu0 %v4987
        %5878 = vmatprep.subr.bf16.mxu0 %v4996
        %5879 = vmatpush1.bf16.msra.mxu0 %v4995
        %5880 = vmatprep.subr.bf16.mxu0 %v5004
        %5881 = vmatpush1.bf16.msra.mxu0 %v5003
        %5882 = vmatprep.subr.bf16.mxu0 %v5012
        %5883 = vmatpush1.bf16.msra.mxu0 %v5011
        %5884 = vmatprep.subr.bf16.mxu0 %v5020
        %5885 = vmatpush1.bf16.msra.mxu0 %v5019
        %5886 = vmatprep.subr.bf16.mxu0 %v5028
        %5887 = vmatpush1.bf16.msra.mxu0 %v5027
        %5888 = vmatprep.subr.bf16.mxu0 %v5036
        %5889 = vmatpush1.bf16.msra.mxu0 %v5035
        %5890 = vmatprep.subr.bf16.mxu0 %v5044
        %5891 = vmatpush1.bf16.msra.mxu0 %v5043
        %5892 = vmatprep.subr.bf16.mxu0 %v5052
        %5893 = vmatpush1.bf16.msra.mxu0 %v5051
        %5894 = vmatprep.subr.bf16.mxu0 %v5060
        %5895 = vmatpush1.bf16.msra.mxu0 %v5059
        %5896 = vmatprep.mubr.bf16.mxu0 %v2462
        %5897 = vmatmul.mubr.bf16.gmra.mrb[0].mxu0 %v2461
        %v5898 = vpop.f32.mrb[0].mxu0
        %v5899 = vadd.f32 %v5858, %v5898
        %v5900 = vpop.f32.mrb[0].mxu0
        %v5901 = vadd.f32 %v5860, %v5900
        %v5902 = vpop.f32.mrb[0].mxu0
        %v5903 = vpop.f32.mrb[0].mxu0
        %5904 = vdwg.mxu0
        %5905 = vmatprep.subr.bf16.mxu0 %v4558
        %5906 = vmatpush1.bf16.msra.mxu0 %v4557
        %5907 = vmatprep.subr.bf16.mxu0 %v4566
        %5908 = vmatpush1.bf16.msra.mxu0 %v4565
        %5909 = vmatprep.subr.bf16.mxu0 %v4574
        %5910 = vmatpush1.bf16.msra.mxu0 %v4573
        %5911 = vmatprep.subr.bf16.mxu0 %v4582
        %5912 = vmatpush1.bf16.msra.mxu0 %v4581
        %5913 = vmatprep.subr.bf16.mxu0 %v4590
        %5914 = vmatpush1.bf16.msra.mxu0 %v4589
        %5915 = vmatprep.subr.bf16.mxu0 %v4598
        %5916 = vmatpush1.bf16.msra.mxu0 %v4597
        %5917 = vmatprep.subr.bf16.mxu0 %v4606
        %5918 = vmatpush1.bf16.msra.mxu0 %v4605
        %5919 = vmatprep.subr.bf16.mxu0 %v4614
        %5920 = vmatpush1.bf16.msra.mxu0 %v4613
        %5921 = vmatprep.subr.bf16.mxu0 %v4622
        %5922 = vmatpush1.bf16.msra.mxu0 %v4621
        %5923 = vmatprep.subr.bf16.mxu0 %v4630
        %5924 = vmatpush1.bf16.msra.mxu0 %v4629
        %5925 = vmatprep.subr.bf16.mxu0 %v4638
        %5926 = vmatpush1.bf16.msra.mxu0 %v4637
        %5927 = vmatprep.subr.bf16.mxu0 %v4646
        %5928 = vmatpush1.bf16.msra.mxu0 %v4645
        %5929 = vmatprep.subr.bf16.mxu0 %v4654
        %5930 = vmatpush1.bf16.msra.mxu0 %v4653
        %5931 = vmatprep.subr.bf16.mxu0 %v4662
        %5932 = vmatpush1.bf16.msra.mxu0 %v4661
        %5933 = vmatprep.subr.bf16.mxu0 %v4670
        %5934 = vmatpush1.bf16.msra.mxu0 %v4669
        %5935 = vmatprep.subr.bf16.mxu0 %v4678
        %5936 = vmatpush1.bf16.msra.mxu0 %v4677
        %5937 = vmatprep.mubr.bf16.mxu0 %v2456
        %5938 = vmatmul.mubr.bf16.gmra.mrb[0].mxu0 %v2455
        %v5939 = vpop.f32.mrb[0].mxu0
        %v5940 = vadd.f32 %v2996, %v5939
        %v5941 = vpop.f32.mrb[0].mxu0
        %v5942 = vadd.f32 %v3000, %v5941
        %v5943 = vpop.f32.mrb[0].mxu0
        %v5944 = vpop.f32.mrb[0].mxu0
        %5945 = vdwg.mxu0
        %5946 = vmatprep.subr.bf16.mxu0 %v4686
        %5947 = vmatpush1.bf16.msra.mxu0 %v4685
        %5948 = vmatprep.subr.bf16.mxu0 %v4694
        %5949 = vmatpush1.bf16.msra.mxu0 %v4693
        %5950 = vmatprep.subr.bf16.mxu0 %v4702
        %5951 = vmatpush1.bf16.msra.mxu0 %v4701
        %5952 = vmatprep.subr.bf16.mxu0 %v4710
        %5953 = vmatpush1.bf16.msra.mxu0 %v4709
        %5954 = vmatprep.subr.bf16.mxu0 %v4718
        %5955 = vmatpush1.bf16.msra.mxu0 %v4717
        %5956 = vmatprep.subr.bf16.mxu0 %v4726
        %5957 = vmatpush1.bf16.msra.mxu0 %v4725
        %5958 = vmatprep.subr.bf16.mxu0 %v4734
        %5959 = vmatpush1.bf16.msra.mxu0 %v4733
        %5960 = vmatprep.subr.bf16.mxu0 %v4742
        %5961 = vmatpush1.bf16.msra.mxu0 %v4741
        %5962 = vmatprep.subr.bf16.mxu0 %v4750
        %5963 = vmatpush1.bf16.msra.mxu0 %v4749
        %5964 = vmatprep.subr.bf16.mxu0 %v4758
        %5965 = vmatpush1.bf16.msra.mxu0 %v4757
        %5966 = vmatprep.subr.bf16.mxu0 %v4766
        %5967 = vmatpush1.bf16.msra.mxu0 %v4765
        %5968 = vmatprep.subr.bf16.mxu0 %v4774
        %5969 = vmatpush1.bf16.msra.mxu0 %v4773
        %5970 = vmatprep.subr.bf16.mxu0 %v4782
        %5971 = vmatpush1.bf16.msra.mxu0 %v4781
        %5972 = vmatprep.subr.bf16.mxu0 %v4790
        %5973 = vmatpush1.bf16.msra.mxu0 %v4789
        %5974 = vmatprep.subr.bf16.mxu0 %v4798
        %5975 = vmatpush1.bf16.msra.mxu0 %v4797
        %5976 = vmatprep.subr.bf16.mxu0 %v4806
        %5977 = vmatpush1.bf16.msra.mxu0 %v4805
        %5978 = vmatprep.mubr.bf16.mxu0 %v2458
        %5979 = vmatmul.mubr.bf16.gmra.mrb[0].mxu0 %v2457
        %v5980 = vpop.f32.mrb[0].mxu0
        %v5981 = vadd.f32 %v5940, %v5980
        %v5982 = vpop.f32.mrb[0].mxu0
        %v5983 = vadd.f32 %v5942, %v5982
        %v5984 = vpop.f32.mrb[0].mxu0
        %v5985 = vpop.f32.mrb[0].mxu0
        %5986 = vdwg.mxu0
        %5987 = vmatprep.subr.bf16.mxu0 %v4814
        %5988 = vmatpush1.bf16.msra.mxu0 %v4813
        %5989 = vmatprep.subr.bf16.mxu0 %v4822
        %5990 = vmatpush1.bf16.msra.mxu0 %v4821
        %5991 = vmatprep.subr.bf16.mxu0 %v4830
        %5992 = vmatpush1.bf16.msra.mxu0 %v4829
        %5993 = vmatprep.subr.bf16.mxu0 %v4838
        %5994 = vmatpush1.bf16.msra.mxu0 %v4837
        %5995 = vmatprep.subr.bf16.mxu0 %v4846
        %5996 = vmatpush1.bf16.msra.mxu0 %v4845
        %5997 = vmatprep.subr.bf16.mxu0 %v4854
        %5998 = vmatpush1.bf16.msra.mxu0 %v4853
        %5999 = vmatprep.subr.bf16.mxu0 %v4862
        %6000 = vmatpush1.bf16.msra.mxu0 %v4861
        %6001 = vmatprep.subr.bf16.mxu0 %v4870
        %6002 = vmatpush1.bf16.msra.mxu0 %v4869
        %6003 = vmatprep.subr.bf16.mxu0 %v4878
        %6004 = vmatpush1.bf16.msra.mxu0 %v4877
        %6005 = vmatprep.subr.bf16.mxu0 %v4886
        %6006 = vmatpush1.bf16.msra.mxu0 %v4885
        %6007 = vmatprep.subr.bf16.mxu0 %v4894
        %6008 = vmatpush1.bf16.msra.mxu0 %v4893
        %6009 = vmatprep.subr.bf16.mxu0 %v4902
        %6010 = vmatpush1.bf16.msra.mxu0 %v4901
        %6011 = vmatprep.subr.bf16.mxu0 %v4910
        %6012 = vmatpush1.bf16.msra.mxu0 %v4909
        %6013 = vmatprep.subr.bf16.mxu0 %v4918
        %6014 = vmatpush1.bf16.msra.mxu0 %v4917
        %6015 = vmatprep.subr.bf16.mxu0 %v4926
        %6016 = vmatpush1.bf16.msra.mxu0 %v4925
        %6017 = vmatprep.subr.bf16.mxu0 %v4934
        %6018 = vmatpush1.bf16.msra.mxu0 %v4933
        %6019 = vmatprep.mubr.bf16.mxu0 %v2460
        %6020 = vmatmul.mubr.bf16.gmra.mrb[0].mxu0 %v2459
        %v6021 = vpop.f32.mrb[0].mxu0
        %v6022 = vadd.f32 %v5981, %v6021
        %v6023 = vpop.f32.mrb[0].mxu0
        %v6024 = vadd.f32 %v5983, %v6023
        %v6025 = vpop.f32.mrb[0].mxu0
        %v6026 = vpop.f32.mrb[0].mxu0
        %6027 = vdwg.mxu0
        %6028 = vmatprep.subr.bf16.mxu0 %v4942
        %6029 = vmatpush1.bf16.msra.mxu0 %v4941
        %6030 = vmatprep.subr.bf16.mxu0 %v4950
        %6031 = vmatpush1.bf16.msra.mxu0 %v4949
        %6032 = vmatprep.subr.bf16.mxu0 %v4958
        %6033 = vmatpush1.bf16.msra.mxu0 %v4957
        %6034 = vmatprep.subr.bf16.mxu0 %v4966
        %6035 = vmatpush1.bf16.msra.mxu0 %v4965
        %6036 = vmatprep.subr.bf16.mxu0 %v4974
        %6037 = vmatpush1.bf16.msra.mxu0 %v4973
        %6038 = vmatprep.subr.bf16.mxu0 %v4982
        %6039 = vmatpush1.bf16.msra.mxu0 %v4981
        %6040 = vmatprep.subr.bf16.mxu0 %v4990
        %6041 = vmatpush1.bf16.msra.mxu0 %v4989
        %6042 = vmatprep.subr.bf16.mxu0 %v4998
        %6043 = vmatpush1.bf16.msra.mxu0 %v4997
        %6044 = vmatprep.subr.bf16.mxu0 %v5006
        %6045 = vmatpush1.bf16.msra.mxu0 %v5005
        %6046 = vmatprep.subr.bf16.mxu0 %v5014
        %6047 = vmatpush1.bf16.msra.mxu0 %v5013
        %6048 = vmatprep.subr.bf16.mxu0 %v5022
        %6049 = vmatpush1.bf16.msra.mxu0 %v5021
        %6050 = vmatprep.subr.bf16.mxu0 %v5030
        %6051 = vmatpush1.bf16.msra.mxu0 %v5029
        %6052 = vmatprep.subr.bf16.mxu0 %v5038
        %6053 = vmatpush1.bf16.msra.mxu0 %v5037
        %6054 = vmatprep.subr.bf16.mxu0 %v5046
        %6055 = vmatpush1.bf16.msra.mxu0 %v5045
        %6056 = vmatprep.subr.bf16.mxu0 %v5054
        %6057 = vmatpush1.bf16.msra.mxu0 %v5053
        %6058 = vmatprep.subr.bf16.mxu0 %v5062
        %6059 = vmatpush1.bf16.msra.mxu0 %v5061
        %6060 = vmatprep.mubr.bf16.mxu0 %v2462
        %6061 = vmatmul.mubr.bf16.gmra.mrb[0].mxu0 %v2461
        %v6062 = vpop.f32.mrb[0].mxu0
        %v6063 = vadd.f32 %v6022, %v6062
        %v6064 = vpop.f32.mrb[0].mxu0
        %v6065 = vadd.f32 %v6024, %v6064
        %v6066 = vpop.f32.mrb[0].mxu0
        %v6067 = vpop.f32.mrb[0].mxu0
        %6068 = vdwg.mxu0
        %6069 = vmatprep.subr.bf16.mxu0 %v4560
        %6070 = vmatpush1.bf16.msra.mxu0 %v4559
        %6071 = vmatprep.subr.bf16.mxu0 %v4568
        %6072 = vmatpush1.bf16.msra.mxu0 %v4567
        %6073 = vmatprep.subr.bf16.mxu0 %v4576
        %6074 = vmatpush1.bf16.msra.mxu0 %v4575
        %6075 = vmatprep.subr.bf16.mxu0 %v4584
        %6076 = vmatpush1.bf16.msra.mxu0 %v4583
        %6077 = vmatprep.subr.bf16.mxu0 %v4592
        %6078 = vmatpush1.bf16.msra.mxu0 %v4591
        %6079 = vmatprep.subr.bf16.mxu0 %v4600
        %6080 = vmatpush1.bf16.msra.mxu0 %v4599
        %6081 = vmatprep.subr.bf16.mxu0 %v4608
        %6082 = vmatpush1.bf16.msra.mxu0 %v4607
        %6083 = vmatprep.subr.bf16.mxu0 %v4616
        %6084 = vmatpush1.bf16.msra.mxu0 %v4615
        %6085 = vmatprep.subr.bf16.mxu0 %v4624
        %6086 = vmatpush1.bf16.msra.mxu0 %v4623
        %6087 = vmatprep.subr.bf16.mxu0 %v4632
        %6088 = vmatpush1.bf16.msra.mxu0 %v4631
        %6089 = vmatprep.subr.bf16.mxu0 %v4640
        %6090 = vmatpush1.bf16.msra.mxu0 %v4639
        %6091 = vmatprep.subr.bf16.mxu0 %v4648
        %6092 = vmatpush1.bf16.msra.mxu0 %v4647
        %6093 = vmatprep.subr.bf16.mxu0 %v4656
        %6094 = vmatpush1.bf16.msra.mxu0 %v4655
        %6095 = vmatprep.subr.bf16.mxu0 %v4664
        %6096 = vmatpush1.bf16.msra.mxu0 %v4663
        %6097 = vmatprep.subr.bf16.mxu0 %v4672
        %6098 = vmatpush1.bf16.msra.mxu0 %v4671
        %6099 = vmatprep.subr.bf16.mxu0 %v4680
        %6100 = vmatpush1.bf16.msra.mxu0 %v4679
        %6101 = vmatprep.mubr.bf16.mxu0 %v2456
        %6102 = vmatmul.mubr.bf16.gmra.mrb[0].mxu0 %v2455
        %v6103 = vpop.f32.mrb[0].mxu0
        %v6104 = vadd.f32 %v3004, %v6103
        %v6105 = vpop.f32.mrb[0].mxu0
        %v6106 = vadd.f32 %v3008, %v6105
        %v6107 = vpop.f32.mrb[0].mxu0
        %v6108 = vpop.f32.mrb[0].mxu0
        %6109 = vdwg.mxu0
        %6110 = vmatprep.subr.bf16.mxu0 %v4688
        %6111 = vmatpush1.bf16.msra.mxu0 %v4687
        %6112 = vmatprep.subr.bf16.mxu0 %v4696
        %6113 = vmatpush1.bf16.msra.mxu0 %v4695
        %6114 = vmatprep.subr.bf16.mxu0 %v4704
        %6115 = vmatpush1.bf16.msra.mxu0 %v4703
        %6116 = vmatprep.subr.bf16.mxu0 %v4712
        %6117 = vmatpush1.bf16.msra.mxu0 %v4711
        %6118 = vmatprep.subr.bf16.mxu0 %v4720
        %6119 = vmatpush1.bf16.msra.mxu0 %v4719
        %6120 = vmatprep.subr.bf16.mxu0 %v4728
        %6121 = vmatpush1.bf16.msra.mxu0 %v4727
        %6122 = vmatprep.subr.bf16.mxu0 %v4736
        %6123 = vmatpush1.bf16.msra.mxu0 %v4735
        %6124 = vmatprep.subr.bf16.mxu0 %v4744
        %6125 = vmatpush1.bf16.msra.mxu0 %v4743
        %6126 = vmatprep.subr.bf16.mxu0 %v4752
        %6127 = vmatpush1.bf16.msra.mxu0 %v4751
        %6128 = vmatprep.subr.bf16.mxu0 %v4760
        %6129 = vmatpush1.bf16.msra.mxu0 %v4759
        %6130 = vmatprep.subr.bf16.mxu0 %v4768
        %6131 = vmatpush1.bf16.msra.mxu0 %v4767
        %6132 = vmatprep.subr.bf16.mxu0 %v4776
        %6133 = vmatpush1.bf16.msra.mxu0 %v4775
        %6134 = vmatprep.subr.bf16.mxu0 %v4784
        %6135 = vmatpush1.bf16.msra.mxu0 %v4783
        %6136 = vmatprep.subr.bf16.mxu0 %v4792
        %6137 = vmatpush1.bf16.msra.mxu0 %v4791
        %6138 = vmatprep.subr.bf16.mxu0 %v4800
        %6139 = vmatpush1.bf16.msra.mxu0 %v4799
        %6140 = vmatprep.subr.bf16.mxu0 %v4808
        %6141 = vmatpush1.bf16.msra.mxu0 %v4807
        %6142 = vmatprep.mubr.bf16.mxu0 %v2458
        %6143 = vmatmul.mubr.bf16.gmra.mrb[0].mxu0 %v2457
        %v6144 = vpop.f32.mrb[0].mxu0
        %v6145 = vadd.f32 %v6104, %v6144
        %v6146 = vpop.f32.mrb[0].mxu0
        %v6147 = vadd.f32 %v6106, %v6146
        %v6148 = vpop.f32.mrb[0].mxu0
        %v6149 = vpop.f32.mrb[0].mxu0
        %6150 = vdwg.mxu0
        %6151 = vmatprep.subr.bf16.mxu0 %v4816
        %6152 = vmatpush1.bf16.msra.mxu0 %v4815
        %6153 = vmatprep.subr.bf16.mxu0 %v4824
        %6154 = vmatpush1.bf16.msra.mxu0 %v4823
        %6155 = vmatprep.subr.bf16.mxu0 %v4832
        %6156 = vmatpush1.bf16.msra.mxu0 %v4831
        %6157 = vmatprep.subr.bf16.mxu0 %v4840
        %6158 = vmatpush1.bf16.msra.mxu0 %v4839
        %6159 = vmatprep.subr.bf16.mxu0 %v4848
        %6160 = vmatpush1.bf16.msra.mxu0 %v4847
        %6161 = vmatprep.subr.bf16.mxu0 %v4856
        %6162 = vmatpush1.bf16.msra.mxu0 %v4855
        %6163 = vmatprep.subr.bf16.mxu0 %v4864
        %6164 = vmatpush1.bf16.msra.mxu0 %v4863
        %6165 = vmatprep.subr.bf16.mxu0 %v4872
        %6166 = vmatpush1.bf16.msra.mxu0 %v4871
        %6167 = vmatprep.subr.bf16.mxu0 %v4880
        %6168 = vmatpush1.bf16.msra.mxu0 %v4879
        %6169 = vmatprep.subr.bf16.mxu0 %v4888
        %6170 = vmatpush1.bf16.msra.mxu0 %v4887
        %6171 = vmatprep.subr.bf16.mxu0 %v4896
        %6172 = vmatpush1.bf16.msra.mxu0 %v4895
        %6173 = vmatprep.subr.bf16.mxu0 %v4904
        %6174 = vmatpush1.bf16.msra.mxu0 %v4903
        %6175 = vmatprep.subr.bf16.mxu0 %v4912
        %6176 = vmatpush1.bf16.msra.mxu0 %v4911
        %6177 = vmatprep.subr.bf16.mxu0 %v4920
        %6178 = vmatpush1.bf16.msra.mxu0 %v4919
        %6179 = vmatprep.subr.bf16.mxu0 %v4928
        %6180 = vmatpush1.bf16.msra.mxu0 %v4927
        %6181 = vmatprep.subr.bf16.mxu0 %v4936
        %6182 = vmatpush1.bf16.msra.mxu0 %v4935
        %6183 = vmatprep.mubr.bf16.mxu0 %v2460
        %6184 = vmatmul.mubr.bf16.gmra.mrb[0].mxu0 %v2459
        %v6185 = vpop.f32.mrb[0].mxu0
        %v6186 = vadd.f32 %v6145, %v6185
        %v6187 = vpop.f32.mrb[0].mxu0
        %v6188 = vadd.f32 %v6147, %v6187
        %v6189 = vpop.f32.mrb[0].mxu0
        %v6190 = vpop.f32.mrb[0].mxu0
        %6191 = vdwg.mxu0
        %6192 = vmatprep.subr.bf16.mxu0 %v4944
        %6193 = vmatpush1.bf16.msra.mxu0 %v4943
        %6194 = vmatprep.subr.bf16.mxu0 %v4952
        %6195 = vmatpush1.bf16.msra.mxu0 %v4951
        %6196 = vmatprep.subr.bf16.mxu0 %v4960
        %6197 = vmatpush1.bf16.msra.mxu0 %v4959
        %6198 = vmatprep.subr.bf16.mxu0 %v4968
        %6199 = vmatpush1.bf16.msra.mxu0 %v4967
        %6200 = vmatprep.subr.bf16.mxu0 %v4976
        %6201 = vmatpush1.bf16.msra.mxu0 %v4975
        %6202 = vmatprep.subr.bf16.mxu0 %v4984
        %6203 = vmatpush1.bf16.msra.mxu0 %v4983
        %6204 = vmatprep.subr.bf16.mxu0 %v4992
        %6205 = vmatpush1.bf16.msra.mxu0 %v4991
        %6206 = vmatprep.subr.bf16.mxu0 %v5000
        %6207 = vmatpush1.bf16.msra.mxu0 %v4999
        %6208 = vmatprep.subr.bf16.mxu0 %v5008
        %6209 = vmatpush1.bf16.msra.mxu0 %v5007
        %6210 = vmatprep.subr.bf16.mxu0 %v5016
        %6211 = vmatpush1.bf16.msra.mxu0 %v5015
        %6212 = vmatprep.subr.bf16.mxu0 %v5024
        %6213 = vmatpush1.bf16.msra.mxu0 %v5023
        %6214 = vmatprep.subr.bf16.mxu0 %v5032
        %6215 = vmatpush1.bf16.msra.mxu0 %v5031
        %6216 = vmatprep.subr.bf16.mxu0 %v5040
        %6217 = vmatpush1.bf16.msra.mxu0 %v5039
        %6218 = vmatprep.subr.bf16.mxu0 %v5048
        %6219 = vmatpush1.bf16.msra.mxu0 %v5047
        %6220 = vmatprep.subr.bf16.mxu0 %v5056
        %6221 = vmatpush1.bf16.msra.mxu0 %v5055
        %6222 = vmatprep.subr.bf16.mxu0 %v5064
        %6223 = vmatpush1.bf16.msra.mxu0 %v5063
        %6224 = vmatprep.mubr.bf16.mxu0 %v2462
        %6225 = vmatmul.mubr.bf16.gmra.mrb[0].mxu0 %v2461
        %v6226 = vpop.f32.mrb[0].mxu0
        %v6227 = vadd.f32 %v6186, %v6226
        %v6228 = vpop.f32.mrb[0].mxu0
        %v6229 = vadd.f32 %v6188, %v6228
        %v6230 = vpop.f32.mrb[0].mxu0
        %v6231 = vpop.f32.mrb[0].mxu0
        %6232 = vdwg.mxu0
        %v6233 = vmax.f32 %v5735, 0.0
        %v6234 = vmax.f32 %v5737, 0.0
        %v6235 = vmax.f32 %v5899, 0.0
        %v6236 = vmax.f32 %v5901, 0.0
        %v6237 = vmax.f32 %v6063, 0.0
        %v6238 = vmax.f32 %v6065, 0.0
        %v6239 = vmax.f32 %v6227, 0.0
        %v6240 = vmax.f32 %v6229, 0.0
        %v6241 = vpack.c.bf16 %v6233, %v6233
        %v6242 = vpack.c.bf16 %v6234, %v6234
        %v6243 = vpack.c.bf16 %v6235, %v6235
        %v6244 = vpack.c.bf16 %v6236, %v6236
        %v6245 = vpack.c.bf16 %v6237, %v6237
        %v6246 = vpack.c.bf16 %v6238, %v6238
        %v6247 = vpack.c.bf16 %v6239, %v6239
        %v6248 = vpack.c.bf16 %v6240, %v6240
        %v6249 = vld [vmem:[%s505] sm:$0xff]
        %v6250 = vld [vmem:[%s505 + $0x8] sm:$0xff]
        %v6251 = vld [vmem:[%s505 + $0x10] sm:$0xff]
        %v6252 = vld [vmem:[%s505 + $0x18] sm:$0xff]
        %v6253 = vld [vmem:[%s505 + $0x20] sm:$0xff]
        %v6254 = vld [vmem:[%s505 + $0x28] sm:$0xff]
        %v6255 = vld [vmem:[%s505 + $0x30] sm:$0xff]
        %v6256 = vld [vmem:[%s505 + $0x38] sm:$0xff]
        %v6257 = vld [vmem:[%s505 + $0x40] sm:$0xff]
        %v6258 = vld [vmem:[%s505 + $0x48] sm:$0xff]
        %v6259 = vld [vmem:[%s505 + $0x50] sm:$0xff]
        %v6260 = vld [vmem:[%s505 + $0x58] sm:$0xff]
        %v6261 = vld [vmem:[%s505 + $0x60] sm:$0xff]
        %v6262 = vld [vmem:[%s505 + $0x68] sm:$0xff]
        %v6263 = vld [vmem:[%s505 + $0x70] sm:$0xff]
        %v6264 = vld [vmem:[%s505 + $0x78] sm:$0xff]
        %v6265 = vld [vmem:[%s505 + $0x80] sm:$0xff]
        %v6266 = vld [vmem:[%s505 + $0x88] sm:$0xff]
        %v6267 = vld [vmem:[%s505 + $0x90] sm:$0xff]
        %v6268 = vld [vmem:[%s505 + $0x98] sm:$0xff]
        %v6269 = vld [vmem:[%s505 + $0xa0] sm:$0xff]
        %v6270 = vld [vmem:[%s505 + $0xa8] sm:$0xff]
        %v6271 = vld [vmem:[%s505 + $0xb0] sm:$0xff]
        %v6272 = vld [vmem:[%s505 + $0xb8] sm:$0xff]
        %v6273 = vld [vmem:[%s505 + $0xc0] sm:$0xff]
        %v6274 = vld [vmem:[%s505 + $0xc8] sm:$0xff]
        %v6275 = vld [vmem:[%s505 + $0xd0] sm:$0xff]
        %v6276 = vld [vmem:[%s505 + $0xd8] sm:$0xff]
        %v6277 = vld [vmem:[%s505 + $0xe0] sm:$0xff]
        %v6278 = vld [vmem:[%s505 + $0xe8] sm:$0xff]
        %v6279 = vld [vmem:[%s505 + $0xf0] sm:$0xff]
        %v6280 = vld [vmem:[%s505 + $0xf8] sm:$0xff]
        %v6281 = vld [vmem:[%s505 + $0x100] sm:$0xff]
        %v6282 = vld [vmem:[%s505 + $0x108] sm:$0xff]
        %v6283 = vld [vmem:[%s505 + $0x110] sm:$0xff]
        %v6284 = vld [vmem:[%s505 + $0x118] sm:$0xff]
        %v6285 = vld [vmem:[%s505 + $0x120] sm:$0xff]
        %v6286 = vld [vmem:[%s505 + $0x128] sm:$0xff]
        %v6287 = vld [vmem:[%s505 + $0x130] sm:$0xff]
        %v6288 = vld [vmem:[%s505 + $0x138] sm:$0xff]
        %v6289 = vld [vmem:[%s505 + $0x140] sm:$0xff]
        %v6290 = vld [vmem:[%s505 + $0x148] sm:$0xff]
        %v6291 = vld [vmem:[%s505 + $0x150] sm:$0xff]
        %v6292 = vld [vmem:[%s505 + $0x158] sm:$0xff]
        %v6293 = vld [vmem:[%s505 + $0x160] sm:$0xff]
        %v6294 = vld [vmem:[%s505 + $0x168] sm:$0xff]
        %v6295 = vld [vmem:[%s505 + $0x170] sm:$0xff]
        %v6296 = vld [vmem:[%s505 + $0x178] sm:$0xff]
        %v6297 = vld [vmem:[%s505 + $0x180] sm:$0xff]
        %v6298 = vld [vmem:[%s505 + $0x188] sm:$0xff]
        %v6299 = vld [vmem:[%s505 + $0x190] sm:$0xff]
        %v6300 = vld [vmem:[%s505 + $0x198] sm:$0xff]
        %v6301 = vld [vmem:[%s505 + $0x1a0] sm:$0xff]
        %v6302 = vld [vmem:[%s505 + $0x1a8] sm:$0xff]
        %v6303 = vld [vmem:[%s505 + $0x1b0] sm:$0xff]
        %v6304 = vld [vmem:[%s505 + $0x1b8] sm:$0xff]
        %v6305 = vld [vmem:[%s505 + $0x1c0] sm:$0xff]
        %v6306 = vld [vmem:[%s505 + $0x1c8] sm:$0xff]
        %v6307 = vld [vmem:[%s505 + $0x1d0] sm:$0xff]
        %v6308 = vld [vmem:[%s505 + $0x1d8] sm:$0xff]
        %v6309 = vld [vmem:[%s505 + $0x1e0] sm:$0xff]
        %v6310 = vld [vmem:[%s505 + $0x1e8] sm:$0xff]
        %v6311 = vld [vmem:[%s505 + $0x1f0] sm:$0xff]
        %v6312 = vld [vmem:[%s505 + $0x1f8] sm:$0xff]
        %v6313 = vld [vmem:[%s505 + $0x200] sm:$0xff]
        %v6314 = vld [vmem:[%s505 + $0x208] sm:$0xff]
        %v6315 = vld [vmem:[%s505 + $0x210] sm:$0xff]
        %v6316 = vld [vmem:[%s505 + $0x218] sm:$0xff]
        %v6317 = vld [vmem:[%s505 + $0x220] sm:$0xff]
        %v6318 = vld [vmem:[%s505 + $0x228] sm:$0xff]
        %v6319 = vld [vmem:[%s505 + $0x230] sm:$0xff]
        %v6320 = vld [vmem:[%s505 + $0x238] sm:$0xff]
        %v6321 = vld [vmem:[%s505 + $0x240] sm:$0xff]
        %v6322 = vld [vmem:[%s505 + $0x248] sm:$0xff]
        %v6323 = vld [vmem:[%s505 + $0x250] sm:$0xff]
        %v6324 = vld [vmem:[%s505 + $0x258] sm:$0xff]
        %v6325 = vld [vmem:[%s505 + $0x260] sm:$0xff]
        %v6326 = vld [vmem:[%s505 + $0x268] sm:$0xff]
        %v6327 = vld [vmem:[%s505 + $0x270] sm:$0xff]
        %v6328 = vld [vmem:[%s505 + $0x278] sm:$0xff]
        %v6329 = vld [vmem:[%s505 + $0x280] sm:$0xff]
        %v6330 = vld [vmem:[%s505 + $0x288] sm:$0xff]
        %v6331 = vld [vmem:[%s505 + $0x290] sm:$0xff]
        %v6332 = vld [vmem:[%s505 + $0x298] sm:$0xff]
        %v6333 = vld [vmem:[%s505 + $0x2a0] sm:$0xff]
        %v6334 = vld [vmem:[%s505 + $0x2a8] sm:$0xff]
        %v6335 = vld [vmem:[%s505 + $0x2b0] sm:$0xff]
        %v6336 = vld [vmem:[%s505 + $0x2b8] sm:$0xff]
        %v6337 = vld [vmem:[%s505 + $0x2c0] sm:$0xff]
        %v6338 = vld [vmem:[%s505 + $0x2c8] sm:$0xff]
        %v6339 = vld [vmem:[%s505 + $0x2d0] sm:$0xff]
        %v6340 = vld [vmem:[%s505 + $0x2d8] sm:$0xff]
        %v6341 = vld [vmem:[%s505 + $0x2e0] sm:$0xff]
        %v6342 = vld [vmem:[%s505 + $0x2e8] sm:$0xff]
        %v6343 = vld [vmem:[%s505 + $0x2f0] sm:$0xff]
        %v6344 = vld [vmem:[%s505 + $0x2f8] sm:$0xff]
        %v6345 = vld [vmem:[%s505 + $0x300] sm:$0xff]
        %v6346 = vld [vmem:[%s505 + $0x308] sm:$0xff]
        %v6347 = vld [vmem:[%s505 + $0x310] sm:$0xff]
        %v6348 = vld [vmem:[%s505 + $0x318] sm:$0xff]
        %v6349 = vld [vmem:[%s505 + $0x320] sm:$0xff]
        %v6350 = vld [vmem:[%s505 + $0x328] sm:$0xff]
        %v6351 = vld [vmem:[%s505 + $0x330] sm:$0xff]
        %v6352 = vld [vmem:[%s505 + $0x338] sm:$0xff]
        %v6353 = vld [vmem:[%s505 + $0x340] sm:$0xff]
        %v6354 = vld [vmem:[%s505 + $0x348] sm:$0xff]
        %v6355 = vld [vmem:[%s505 + $0x350] sm:$0xff]
        %v6356 = vld [vmem:[%s505 + $0x358] sm:$0xff]
        %v6357 = vld [vmem:[%s505 + $0x360] sm:$0xff]
        %v6358 = vld [vmem:[%s505 + $0x368] sm:$0xff]
        %v6359 = vld [vmem:[%s505 + $0x370] sm:$0xff]
        %v6360 = vld [vmem:[%s505 + $0x378] sm:$0xff]
        %v6361 = vld [vmem:[%s505 + $0x380] sm:$0xff]
        %v6362 = vld [vmem:[%s505 + $0x388] sm:$0xff]
        %v6363 = vld [vmem:[%s505 + $0x390] sm:$0xff]
        %v6364 = vld [vmem:[%s505 + $0x398] sm:$0xff]
        %v6365 = vld [vmem:[%s505 + $0x3a0] sm:$0xff]
        %v6366 = vld [vmem:[%s505 + $0x3a8] sm:$0xff]
        %v6367 = vld [vmem:[%s505 + $0x3b0] sm:$0xff]
        %v6368 = vld [vmem:[%s505 + $0x3b8] sm:$0xff]
        %v6369 = vld [vmem:[%s505 + $0x3c0] sm:$0xff]
        %v6370 = vld [vmem:[%s505 + $0x3c8] sm:$0xff]
        %v6371 = vld [vmem:[%s505 + $0x3d0] sm:$0xff]
        %v6372 = vld [vmem:[%s505 + $0x3d8] sm:$0xff]
        %v6373 = vld [vmem:[%s505 + $0x3e0] sm:$0xff]
        %v6374 = vld [vmem:[%s505 + $0x3e8] sm:$0xff]
        %v6375 = vld [vmem:[%s505 + $0x3f0] sm:$0xff]
        %v6376 = vld [vmem:[%s505 + $0x3f8] sm:$0xff]
        %v6377 = vld [vmem:[%s505 + $0x400] sm:$0xff]
        %v6378 = vld [vmem:[%s505 + $0x408] sm:$0xff]
        %v6379 = vld [vmem:[%s505 + $0x410] sm:$0xff]
        %v6380 = vld [vmem:[%s505 + $0x418] sm:$0xff]
        %v6381 = vld [vmem:[%s505 + $0x420] sm:$0xff]
        %v6382 = vld [vmem:[%s505 + $0x428] sm:$0xff]
        %v6383 = vld [vmem:[%s505 + $0x430] sm:$0xff]
        %v6384 = vld [vmem:[%s505 + $0x438] sm:$0xff]
        %v6385 = vld [vmem:[%s505 + $0x440] sm:$0xff]
        %v6386 = vld [vmem:[%s505 + $0x448] sm:$0xff]
        %v6387 = vld [vmem:[%s505 + $0x450] sm:$0xff]
        %v6388 = vld [vmem:[%s505 + $0x458] sm:$0xff]
        %v6389 = vld [vmem:[%s505 + $0x460] sm:$0xff]
        %v6390 = vld [vmem:[%s505 + $0x468] sm:$0xff]
        %v6391 = vld [vmem:[%s505 + $0x470] sm:$0xff]
        %v6392 = vld [vmem:[%s505 + $0x478] sm:$0xff]
        %v6393 = vld [vmem:[%s505 + $0x480] sm:$0xff]
        %v6394 = vld [vmem:[%s505 + $0x488] sm:$0xff]
        %v6395 = vld [vmem:[%s505 + $0x490] sm:$0xff]
        %v6396 = vld [vmem:[%s505 + $0x498] sm:$0xff]
        %v6397 = vld [vmem:[%s505 + $0x4a0] sm:$0xff]
        %v6398 = vld [vmem:[%s505 + $0x4a8] sm:$0xff]
        %v6399 = vld [vmem:[%s505 + $0x4b0] sm:$0xff]
        %v6400 = vld [vmem:[%s505 + $0x4b8] sm:$0xff]
        %v6401 = vld [vmem:[%s505 + $0x4c0] sm:$0xff]
        %v6402 = vld [vmem:[%s505 + $0x4c8] sm:$0xff]
        %v6403 = vld [vmem:[%s505 + $0x4d0] sm:$0xff]
        %v6404 = vld [vmem:[%s505 + $0x4d8] sm:$0xff]
        %v6405 = vld [vmem:[%s505 + $0x4e0] sm:$0xff]
        %v6406 = vld [vmem:[%s505 + $0x4e8] sm:$0xff]
        %v6407 = vld [vmem:[%s505 + $0x4f0] sm:$0xff]
        %v6408 = vld [vmem:[%s505 + $0x4f8] sm:$0xff]
        %v6409 = vld [vmem:[%s505 + $0x500] sm:$0xff]
        %v6410 = vld [vmem:[%s505 + $0x508] sm:$0xff]
        %v6411 = vld [vmem:[%s505 + $0x510] sm:$0xff]
        %v6412 = vld [vmem:[%s505 + $0x518] sm:$0xff]
        %v6413 = vld [vmem:[%s505 + $0x520] sm:$0xff]
        %v6414 = vld [vmem:[%s505 + $0x528] sm:$0xff]
        %v6415 = vld [vmem:[%s505 + $0x530] sm:$0xff]
        %v6416 = vld [vmem:[%s505 + $0x538] sm:$0xff]
        %v6417 = vld [vmem:[%s505 + $0x540] sm:$0xff]
        %v6418 = vld [vmem:[%s505 + $0x548] sm:$0xff]
        %v6419 = vld [vmem:[%s505 + $0x550] sm:$0xff]
        %v6420 = vld [vmem:[%s505 + $0x558] sm:$0xff]
        %v6421 = vld [vmem:[%s505 + $0x560] sm:$0xff]
        %v6422 = vld [vmem:[%s505 + $0x568] sm:$0xff]
        %v6423 = vld [vmem:[%s505 + $0x570] sm:$0xff]
        %v6424 = vld [vmem:[%s505 + $0x578] sm:$0xff]
        %v6425 = vld [vmem:[%s505 + $0x580] sm:$0xff]
        %v6426 = vld [vmem:[%s505 + $0x588] sm:$0xff]
        %v6427 = vld [vmem:[%s505 + $0x590] sm:$0xff]
        %v6428 = vld [vmem:[%s505 + $0x598] sm:$0xff]
        %v6429 = vld [vmem:[%s505 + $0x5a0] sm:$0xff]
        %v6430 = vld [vmem:[%s505 + $0x5a8] sm:$0xff]
        %v6431 = vld [vmem:[%s505 + $0x5b0] sm:$0xff]
        %v6432 = vld [vmem:[%s505 + $0x5b8] sm:$0xff]
        %v6433 = vld [vmem:[%s505 + $0x5c0] sm:$0xff]
        %v6434 = vld [vmem:[%s505 + $0x5c8] sm:$0xff]
        %v6435 = vld [vmem:[%s505 + $0x5d0] sm:$0xff]
        %v6436 = vld [vmem:[%s505 + $0x5d8] sm:$0xff]
        %v6437 = vld [vmem:[%s505 + $0x5e0] sm:$0xff]
        %v6438 = vld [vmem:[%s505 + $0x5e8] sm:$0xff]
        %v6439 = vld [vmem:[%s505 + $0x5f0] sm:$0xff]
        %v6440 = vld [vmem:[%s505 + $0x5f8] sm:$0xff]
        %v6441 = vld [vmem:[%s505 + $0x600] sm:$0xff]
        %v6442 = vld [vmem:[%s505 + $0x608] sm:$0xff]
        %v6443 = vld [vmem:[%s505 + $0x610] sm:$0xff]
        %v6444 = vld [vmem:[%s505 + $0x618] sm:$0xff]
        %v6445 = vld [vmem:[%s505 + $0x620] sm:$0xff]
        %v6446 = vld [vmem:[%s505 + $0x628] sm:$0xff]
        %v6447 = vld [vmem:[%s505 + $0x630] sm:$0xff]
        %v6448 = vld [vmem:[%s505 + $0x638] sm:$0xff]
        %v6449 = vld [vmem:[%s505 + $0x640] sm:$0xff]
        %v6450 = vld [vmem:[%s505 + $0x648] sm:$0xff]
        %v6451 = vld [vmem:[%s505 + $0x650] sm:$0xff]
        %v6452 = vld [vmem:[%s505 + $0x658] sm:$0xff]
        %v6453 = vld [vmem:[%s505 + $0x660] sm:$0xff]
        %v6454 = vld [vmem:[%s505 + $0x668] sm:$0xff]
        %v6455 = vld [vmem:[%s505 + $0x670] sm:$0xff]
        %v6456 = vld [vmem:[%s505 + $0x678] sm:$0xff]
        %v6457 = vld [vmem:[%s505 + $0x680] sm:$0xff]
        %v6458 = vld [vmem:[%s505 + $0x688] sm:$0xff]
        %v6459 = vld [vmem:[%s505 + $0x690] sm:$0xff]
        %v6460 = vld [vmem:[%s505 + $0x698] sm:$0xff]
        %v6461 = vld [vmem:[%s505 + $0x6a0] sm:$0xff]
        %v6462 = vld [vmem:[%s505 + $0x6a8] sm:$0xff]
        %v6463 = vld [vmem:[%s505 + $0x6b0] sm:$0xff]
        %v6464 = vld [vmem:[%s505 + $0x6b8] sm:$0xff]
        %v6465 = vld [vmem:[%s505 + $0x6c0] sm:$0xff]
        %v6466 = vld [vmem:[%s505 + $0x6c8] sm:$0xff]
        %v6467 = vld [vmem:[%s505 + $0x6d0] sm:$0xff]
        %v6468 = vld [vmem:[%s505 + $0x6d8] sm:$0xff]
        %v6469 = vld [vmem:[%s505 + $0x6e0] sm:$0xff]
        %v6470 = vld [vmem:[%s505 + $0x6e8] sm:$0xff]
        %v6471 = vld [vmem:[%s505 + $0x6f0] sm:$0xff]
        %v6472 = vld [vmem:[%s505 + $0x6f8] sm:$0xff]
        %v6473 = vld [vmem:[%s505 + $0x700] sm:$0xff]
        %v6474 = vld [vmem:[%s505 + $0x708] sm:$0xff]
        %v6475 = vld [vmem:[%s505 + $0x710] sm:$0xff]
        %v6476 = vld [vmem:[%s505 + $0x718] sm:$0xff]
        %v6477 = vld [vmem:[%s505 + $0x720] sm:$0xff]
        %v6478 = vld [vmem:[%s505 + $0x728] sm:$0xff]
        %v6479 = vld [vmem:[%s505 + $0x730] sm:$0xff]
        %v6480 = vld [vmem:[%s505 + $0x738] sm:$0xff]
        %v6481 = vld [vmem:[%s505 + $0x740] sm:$0xff]
        %v6482 = vld [vmem:[%s505 + $0x748] sm:$0xff]
        %v6483 = vld [vmem:[%s505 + $0x750] sm:$0xff]
        %v6484 = vld [vmem:[%s505 + $0x758] sm:$0xff]
        %v6485 = vld [vmem:[%s505 + $0x760] sm:$0xff]
        %v6486 = vld [vmem:[%s505 + $0x768] sm:$0xff]
        %v6487 = vld [vmem:[%s505 + $0x770] sm:$0xff]
        %v6488 = vld [vmem:[%s505 + $0x778] sm:$0xff]
        %v6489 = vld [vmem:[%s505 + $0x780] sm:$0xff]
        %v6490 = vld [vmem:[%s505 + $0x788] sm:$0xff]
        %v6491 = vld [vmem:[%s505 + $0x790] sm:$0xff]
        %v6492 = vld [vmem:[%s505 + $0x798] sm:$0xff]
        %v6493 = vld [vmem:[%s505 + $0x7a0] sm:$0xff]
        %v6494 = vld [vmem:[%s505 + $0x7a8] sm:$0xff]
        %v6495 = vld [vmem:[%s505 + $0x7b0] sm:$0xff]
        %v6496 = vld [vmem:[%s505 + $0x7b8] sm:$0xff]
        %v6497 = vld [vmem:[%s505 + $0x7c0] sm:$0xff]
        %v6498 = vld [vmem:[%s505 + $0x7c8] sm:$0xff]
        %v6499 = vld [vmem:[%s505 + $0x7d0] sm:$0xff]
        %v6500 = vld [vmem:[%s505 + $0x7d8] sm:$0xff]
        %v6501 = vld [vmem:[%s505 + $0x7e0] sm:$0xff]
        %v6502 = vld [vmem:[%s505 + $0x7e8] sm:$0xff]
        %v6503 = vld [vmem:[%s505 + $0x7f0] sm:$0xff]
        %v6504 = vld [vmem:[%s505 + $0x7f8] sm:$0xff]
        %v6505 = vld [vmem:[%s505 + $0x800] sm:$0xff]
        %v6506 = vld [vmem:[%s505 + $0x808] sm:$0xff]
        %v6507 = vld [vmem:[%s505 + $0x810] sm:$0xff]
        %v6508 = vld [vmem:[%s505 + $0x818] sm:$0xff]
        %v6509 = vld [vmem:[%s505 + $0x820] sm:$0xff]
        %v6510 = vld [vmem:[%s505 + $0x828] sm:$0xff]
        %v6511 = vld [vmem:[%s505 + $0x830] sm:$0xff]
        %v6512 = vld [vmem:[%s505 + $0x838] sm:$0xff]
        %v6513 = vld [vmem:[%s505 + $0x840] sm:$0xff]
        %v6514 = vld [vmem:[%s505 + $0x848] sm:$0xff]
        %v6515 = vld [vmem:[%s505 + $0x850] sm:$0xff]
        %v6516 = vld [vmem:[%s505 + $0x858] sm:$0xff]
        %v6517 = vld [vmem:[%s505 + $0x860] sm:$0xff]
        %v6518 = vld [vmem:[%s505 + $0x868] sm:$0xff]
        %v6519 = vld [vmem:[%s505 + $0x870] sm:$0xff]
        %v6520 = vld [vmem:[%s505 + $0x878] sm:$0xff]
        %v6521 = vld [vmem:[%s505 + $0x880] sm:$0xff]
        %v6522 = vld [vmem:[%s505 + $0x888] sm:$0xff]
        %v6523 = vld [vmem:[%s505 + $0x890] sm:$0xff]
        %v6524 = vld [vmem:[%s505 + $0x898] sm:$0xff]
        %v6525 = vld [vmem:[%s505 + $0x8a0] sm:$0xff]
        %v6526 = vld [vmem:[%s505 + $0x8a8] sm:$0xff]
        %v6527 = vld [vmem:[%s505 + $0x8b0] sm:$0xff]
        %v6528 = vld [vmem:[%s505 + $0x8b8] sm:$0xff]
        %v6529 = vld [vmem:[%s505 + $0x8c0] sm:$0xff]
        %v6530 = vld [vmem:[%s505 + $0x8c8] sm:$0xff]
        %v6531 = vld [vmem:[%s505 + $0x8d0] sm:$0xff]
        %v6532 = vld [vmem:[%s505 + $0x8d8] sm:$0xff]
        %v6533 = vld [vmem:[%s505 + $0x8e0] sm:$0xff]
        %v6534 = vld [vmem:[%s505 + $0x8e8] sm:$0xff]
        %v6535 = vld [vmem:[%s505 + $0x8f0] sm:$0xff]
        %v6536 = vld [vmem:[%s505 + $0x8f8] sm:$0xff]
        %v6537 = vld [vmem:[%s505 + $0x900] sm:$0xff]
        %v6538 = vld [vmem:[%s505 + $0x908] sm:$0xff]
        %v6539 = vld [vmem:[%s505 + $0x910] sm:$0xff]
        %v6540 = vld [vmem:[%s505 + $0x918] sm:$0xff]
        %v6541 = vld [vmem:[%s505 + $0x920] sm:$0xff]
        %v6542 = vld [vmem:[%s505 + $0x928] sm:$0xff]
        %v6543 = vld [vmem:[%s505 + $0x930] sm:$0xff]
        %v6544 = vld [vmem:[%s505 + $0x938] sm:$0xff]
        %v6545 = vld [vmem:[%s505 + $0x940] sm:$0xff]
        %v6546 = vld [vmem:[%s505 + $0x948] sm:$0xff]
        %v6547 = vld [vmem:[%s505 + $0x950] sm:$0xff]
        %v6548 = vld [vmem:[%s505 + $0x958] sm:$0xff]
        %v6549 = vld [vmem:[%s505 + $0x960] sm:$0xff]
        %v6550 = vld [vmem:[%s505 + $0x968] sm:$0xff]
        %v6551 = vld [vmem:[%s505 + $0x970] sm:$0xff]
        %v6552 = vld [vmem:[%s505 + $0x978] sm:$0xff]
        %v6553 = vld [vmem:[%s505 + $0x980] sm:$0xff]
        %v6554 = vld [vmem:[%s505 + $0x988] sm:$0xff]
        %v6555 = vld [vmem:[%s505 + $0x990] sm:$0xff]
        %v6556 = vld [vmem:[%s505 + $0x998] sm:$0xff]
        %v6557 = vld [vmem:[%s505 + $0x9a0] sm:$0xff]
        %v6558 = vld [vmem:[%s505 + $0x9a8] sm:$0xff]
        %v6559 = vld [vmem:[%s505 + $0x9b0] sm:$0xff]
        %v6560 = vld [vmem:[%s505 + $0x9b8] sm:$0xff]
        %v6561 = vld [vmem:[%s505 + $0x9c0] sm:$0xff]
        %v6562 = vld [vmem:[%s505 + $0x9c8] sm:$0xff]
        %v6563 = vld [vmem:[%s505 + $0x9d0] sm:$0xff]
        %v6564 = vld [vmem:[%s505 + $0x9d8] sm:$0xff]
        %v6565 = vld [vmem:[%s505 + $0x9e0] sm:$0xff]
        %v6566 = vld [vmem:[%s505 + $0x9e8] sm:$0xff]
        %v6567 = vld [vmem:[%s505 + $0x9f0] sm:$0xff]
        %v6568 = vld [vmem:[%s505 + $0x9f8] sm:$0xff]
        %v6569 = vld [vmem:[%s505 + $0xa00] sm:$0xff]
        %v6570 = vld [vmem:[%s505 + $0xa08] sm:$0xff]
        %v6571 = vld [vmem:[%s505 + $0xa10] sm:$0xff]
        %v6572 = vld [vmem:[%s505 + $0xa18] sm:$0xff]
        %v6573 = vld [vmem:[%s505 + $0xa20] sm:$0xff]
        %v6574 = vld [vmem:[%s505 + $0xa28] sm:$0xff]
        %v6575 = vld [vmem:[%s505 + $0xa30] sm:$0xff]
        %v6576 = vld [vmem:[%s505 + $0xa38] sm:$0xff]
        %v6577 = vld [vmem:[%s505 + $0xa40] sm:$0xff]
        %v6578 = vld [vmem:[%s505 + $0xa48] sm:$0xff]
        %v6579 = vld [vmem:[%s505 + $0xa50] sm:$0xff]
        %v6580 = vld [vmem:[%s505 + $0xa58] sm:$0xff]
        %v6581 = vld [vmem:[%s505 + $0xa60] sm:$0xff]
        %v6582 = vld [vmem:[%s505 + $0xa68] sm:$0xff]
        %v6583 = vld [vmem:[%s505 + $0xa70] sm:$0xff]
        %v6584 = vld [vmem:[%s505 + $0xa78] sm:$0xff]
        %v6585 = vld [vmem:[%s505 + $0xa80] sm:$0xff]
        %v6586 = vld [vmem:[%s505 + $0xa88] sm:$0xff]
        %v6587 = vld [vmem:[%s505 + $0xa90] sm:$0xff]
        %v6588 = vld [vmem:[%s505 + $0xa98] sm:$0xff]
        %v6589 = vld [vmem:[%s505 + $0xaa0] sm:$0xff]
        %v6590 = vld [vmem:[%s505 + $0xaa8] sm:$0xff]
        %v6591 = vld [vmem:[%s505 + $0xab0] sm:$0xff]
        %v6592 = vld [vmem:[%s505 + $0xab8] sm:$0xff]
        %v6593 = vld [vmem:[%s505 + $0xac0] sm:$0xff]
        %v6594 = vld [vmem:[%s505 + $0xac8] sm:$0xff]
        %v6595 = vld [vmem:[%s505 + $0xad0] sm:$0xff]
        %v6596 = vld [vmem:[%s505 + $0xad8] sm:$0xff]
        %v6597 = vld [vmem:[%s505 + $0xae0] sm:$0xff]
        %v6598 = vld [vmem:[%s505 + $0xae8] sm:$0xff]
        %v6599 = vld [vmem:[%s505 + $0xaf0] sm:$0xff]
        %v6600 = vld [vmem:[%s505 + $0xaf8] sm:$0xff]
        %v6601 = vld [vmem:[%s505 + $0xb00] sm:$0xff]
        %v6602 = vld [vmem:[%s505 + $0xb08] sm:$0xff]
        %v6603 = vld [vmem:[%s505 + $0xb10] sm:$0xff]
        %v6604 = vld [vmem:[%s505 + $0xb18] sm:$0xff]
        %v6605 = vld [vmem:[%s505 + $0xb20] sm:$0xff]
        %v6606 = vld [vmem:[%s505 + $0xb28] sm:$0xff]
        %v6607 = vld [vmem:[%s505 + $0xb30] sm:$0xff]
        %v6608 = vld [vmem:[%s505 + $0xb38] sm:$0xff]
        %v6609 = vld [vmem:[%s505 + $0xb40] sm:$0xff]
        %v6610 = vld [vmem:[%s505 + $0xb48] sm:$0xff]
        %v6611 = vld [vmem:[%s505 + $0xb50] sm:$0xff]
        %v6612 = vld [vmem:[%s505 + $0xb58] sm:$0xff]
        %v6613 = vld [vmem:[%s505 + $0xb60] sm:$0xff]
        %v6614 = vld [vmem:[%s505 + $0xb68] sm:$0xff]
        %v6615 = vld [vmem:[%s505 + $0xb70] sm:$0xff]
        %v6616 = vld [vmem:[%s505 + $0xb78] sm:$0xff]
        %v6617 = vld [vmem:[%s505 + $0xb80] sm:$0xff]
        %v6618 = vld [vmem:[%s505 + $0xb88] sm:$0xff]
        %v6619 = vld [vmem:[%s505 + $0xb90] sm:$0xff]
        %v6620 = vld [vmem:[%s505 + $0xb98] sm:$0xff]
        %v6621 = vld [vmem:[%s505 + $0xba0] sm:$0xff]
        %v6622 = vld [vmem:[%s505 + $0xba8] sm:$0xff]
        %v6623 = vld [vmem:[%s505 + $0xbb0] sm:$0xff]
        %v6624 = vld [vmem:[%s505 + $0xbb8] sm:$0xff]
        %v6625 = vld [vmem:[%s505 + $0xbc0] sm:$0xff]
        %v6626 = vld [vmem:[%s505 + $0xbc8] sm:$0xff]
        %v6627 = vld [vmem:[%s505 + $0xbd0] sm:$0xff]
        %v6628 = vld [vmem:[%s505 + $0xbd8] sm:$0xff]
        %v6629 = vld [vmem:[%s505 + $0xbe0] sm:$0xff]
        %v6630 = vld [vmem:[%s505 + $0xbe8] sm:$0xff]
        %v6631 = vld [vmem:[%s505 + $0xbf0] sm:$0xff]
        %v6632 = vld [vmem:[%s505 + $0xbf8] sm:$0xff]
        %v6633 = vld [vmem:[%s505 + $0xc00] sm:$0xff]
        %v6634 = vld [vmem:[%s505 + $0xc08] sm:$0xff]
        %v6635 = vld [vmem:[%s505 + $0xc10] sm:$0xff]
        %v6636 = vld [vmem:[%s505 + $0xc18] sm:$0xff]
        %v6637 = vld [vmem:[%s505 + $0xc20] sm:$0xff]
        %v6638 = vld [vmem:[%s505 + $0xc28] sm:$0xff]
        %v6639 = vld [vmem:[%s505 + $0xc30] sm:$0xff]
        %v6640 = vld [vmem:[%s505 + $0xc38] sm:$0xff]
        %v6641 = vld [vmem:[%s505 + $0xc40] sm:$0xff]
        %v6642 = vld [vmem:[%s505 + $0xc48] sm:$0xff]
        %v6643 = vld [vmem:[%s505 + $0xc50] sm:$0xff]
        %v6644 = vld [vmem:[%s505 + $0xc58] sm:$0xff]
        %v6645 = vld [vmem:[%s505 + $0xc60] sm:$0xff]
        %v6646 = vld [vmem:[%s505 + $0xc68] sm:$0xff]
        %v6647 = vld [vmem:[%s505 + $0xc70] sm:$0xff]
        %v6648 = vld [vmem:[%s505 + $0xc78] sm:$0xff]
        %v6649 = vld [vmem:[%s505 + $0xc80] sm:$0xff]
        %v6650 = vld [vmem:[%s505 + $0xc88] sm:$0xff]
        %v6651 = vld [vmem:[%s505 + $0xc90] sm:$0xff]
        %v6652 = vld [vmem:[%s505 + $0xc98] sm:$0xff]
        %v6653 = vld [vmem:[%s505 + $0xca0] sm:$0xff]
        %v6654 = vld [vmem:[%s505 + $0xca8] sm:$0xff]
        %v6655 = vld [vmem:[%s505 + $0xcb0] sm:$0xff]
        %v6656 = vld [vmem:[%s505 + $0xcb8] sm:$0xff]
        %v6657 = vld [vmem:[%s505 + $0xcc0] sm:$0xff]
        %v6658 = vld [vmem:[%s505 + $0xcc8] sm:$0xff]
        %v6659 = vld [vmem:[%s505 + $0xcd0] sm:$0xff]
        %v6660 = vld [vmem:[%s505 + $0xcd8] sm:$0xff]
        %v6661 = vld [vmem:[%s505 + $0xce0] sm:$0xff]
        %v6662 = vld [vmem:[%s505 + $0xce8] sm:$0xff]
        %v6663 = vld [vmem:[%s505 + $0xcf0] sm:$0xff]
        %v6664 = vld [vmem:[%s505 + $0xcf8] sm:$0xff]
        %v6665 = vld [vmem:[%s505 + $0xd00] sm:$0xff]
        %v6666 = vld [vmem:[%s505 + $0xd08] sm:$0xff]
        %v6667 = vld [vmem:[%s505 + $0xd10] sm:$0xff]
        %v6668 = vld [vmem:[%s505 + $0xd18] sm:$0xff]
        %v6669 = vld [vmem:[%s505 + $0xd20] sm:$0xff]
        %v6670 = vld [vmem:[%s505 + $0xd28] sm:$0xff]
        %v6671 = vld [vmem:[%s505 + $0xd30] sm:$0xff]
        %v6672 = vld [vmem:[%s505 + $0xd38] sm:$0xff]
        %v6673 = vld [vmem:[%s505 + $0xd40] sm:$0xff]
        %v6674 = vld [vmem:[%s505 + $0xd48] sm:$0xff]
        %v6675 = vld [vmem:[%s505 + $0xd50] sm:$0xff]
        %v6676 = vld [vmem:[%s505 + $0xd58] sm:$0xff]
        %v6677 = vld [vmem:[%s505 + $0xd60] sm:$0xff]
        %v6678 = vld [vmem:[%s505 + $0xd68] sm:$0xff]
        %v6679 = vld [vmem:[%s505 + $0xd70] sm:$0xff]
        %v6680 = vld [vmem:[%s505 + $0xd78] sm:$0xff]
        %v6681 = vld [vmem:[%s505 + $0xd80] sm:$0xff]
        %v6682 = vld [vmem:[%s505 + $0xd88] sm:$0xff]
        %v6683 = vld [vmem:[%s505 + $0xd90] sm:$0xff]
        %v6684 = vld [vmem:[%s505 + $0xd98] sm:$0xff]
        %v6685 = vld [vmem:[%s505 + $0xda0] sm:$0xff]
        %v6686 = vld [vmem:[%s505 + $0xda8] sm:$0xff]
        %v6687 = vld [vmem:[%s505 + $0xdb0] sm:$0xff]
        %v6688 = vld [vmem:[%s505 + $0xdb8] sm:$0xff]
        %v6689 = vld [vmem:[%s505 + $0xdc0] sm:$0xff]
        %v6690 = vld [vmem:[%s505 + $0xdc8] sm:$0xff]
        %v6691 = vld [vmem:[%s505 + $0xdd0] sm:$0xff]
        %v6692 = vld [vmem:[%s505 + $0xdd8] sm:$0xff]
        %v6693 = vld [vmem:[%s505 + $0xde0] sm:$0xff]
        %v6694 = vld [vmem:[%s505 + $0xde8] sm:$0xff]
        %v6695 = vld [vmem:[%s505 + $0xdf0] sm:$0xff]
        %v6696 = vld [vmem:[%s505 + $0xdf8] sm:$0xff]
        %v6697 = vld [vmem:[%s505 + $0xe00] sm:$0xff]
        %v6698 = vld [vmem:[%s505 + $0xe08] sm:$0xff]
        %v6699 = vld [vmem:[%s505 + $0xe10] sm:$0xff]
        %v6700 = vld [vmem:[%s505 + $0xe18] sm:$0xff]
        %v6701 = vld [vmem:[%s505 + $0xe20] sm:$0xff]
        %v6702 = vld [vmem:[%s505 + $0xe28] sm:$0xff]
        %v6703 = vld [vmem:[%s505 + $0xe30] sm:$0xff]
        %v6704 = vld [vmem:[%s505 + $0xe38] sm:$0xff]
        %v6705 = vld [vmem:[%s505 + $0xe40] sm:$0xff]
        %v6706 = vld [vmem:[%s505 + $0xe48] sm:$0xff]
        %v6707 = vld [vmem:[%s505 + $0xe50] sm:$0xff]
        %v6708 = vld [vmem:[%s505 + $0xe58] sm:$0xff]
        %v6709 = vld [vmem:[%s505 + $0xe60] sm:$0xff]
        %v6710 = vld [vmem:[%s505 + $0xe68] sm:$0xff]
        %v6711 = vld [vmem:[%s505 + $0xe70] sm:$0xff]
        %v6712 = vld [vmem:[%s505 + $0xe78] sm:$0xff]
        %v6713 = vld [vmem:[%s505 + $0xe80] sm:$0xff]
        %v6714 = vld [vmem:[%s505 + $0xe88] sm:$0xff]
        %v6715 = vld [vmem:[%s505 + $0xe90] sm:$0xff]
        %v6716 = vld [vmem:[%s505 + $0xe98] sm:$0xff]
        %v6717 = vld [vmem:[%s505 + $0xea0] sm:$0xff]
        %v6718 = vld [vmem:[%s505 + $0xea8] sm:$0xff]
        %v6719 = vld [vmem:[%s505 + $0xeb0] sm:$0xff]
        %v6720 = vld [vmem:[%s505 + $0xeb8] sm:$0xff]
        %v6721 = vld [vmem:[%s505 + $0xec0] sm:$0xff]
        %v6722 = vld [vmem:[%s505 + $0xec8] sm:$0xff]
        %v6723 = vld [vmem:[%s505 + $0xed0] sm:$0xff]
        %v6724 = vld [vmem:[%s505 + $0xed8] sm:$0xff]
        %v6725 = vld [vmem:[%s505 + $0xee0] sm:$0xff]
        %v6726 = vld [vmem:[%s505 + $0xee8] sm:$0xff]
        %v6727 = vld [vmem:[%s505 + $0xef0] sm:$0xff]
        %v6728 = vld [vmem:[%s505 + $0xef8] sm:$0xff]
        %v6729 = vld [vmem:[%s505 + $0xf00] sm:$0xff]
        %v6730 = vld [vmem:[%s505 + $0xf08] sm:$0xff]
        %v6731 = vld [vmem:[%s505 + $0xf10] sm:$0xff]
        %v6732 = vld [vmem:[%s505 + $0xf18] sm:$0xff]
        %v6733 = vld [vmem:[%s505 + $0xf20] sm:$0xff]
        %v6734 = vld [vmem:[%s505 + $0xf28] sm:$0xff]
        %v6735 = vld [vmem:[%s505 + $0xf30] sm:$0xff]
        %v6736 = vld [vmem:[%s505 + $0xf38] sm:$0xff]
        %v6737 = vld [vmem:[%s505 + $0xf40] sm:$0xff]
        %v6738 = vld [vmem:[%s505 + $0xf48] sm:$0xff]
        %v6739 = vld [vmem:[%s505 + $0xf50] sm:$0xff]
        %v6740 = vld [vmem:[%s505 + $0xf58] sm:$0xff]
        %v6741 = vld [vmem:[%s505 + $0xf60] sm:$0xff]
        %v6742 = vld [vmem:[%s505 + $0xf68] sm:$0xff]
        %v6743 = vld [vmem:[%s505 + $0xf70] sm:$0xff]
        %v6744 = vld [vmem:[%s505 + $0xf78] sm:$0xff]
        %v6745 = vld [vmem:[%s505 + $0xf80] sm:$0xff]
        %v6746 = vld [vmem:[%s505 + $0xf88] sm:$0xff]
        %v6747 = vld [vmem:[%s505 + $0xf90] sm:$0xff]
        %v6748 = vld [vmem:[%s505 + $0xf98] sm:$0xff]
        %v6749 = vld [vmem:[%s505 + $0xfa0] sm:$0xff]
        %v6750 = vld [vmem:[%s505 + $0xfa8] sm:$0xff]
        %v6751 = vld [vmem:[%s505 + $0xfb0] sm:$0xff]
        %v6752 = vld [vmem:[%s505 + $0xfb8] sm:$0xff]
        %v6753 = vld [vmem:[%s505 + $0xfc0] sm:$0xff]
        %v6754 = vld [vmem:[%s505 + $0xfc8] sm:$0xff]
        %v6755 = vld [vmem:[%s505 + $0xfd0] sm:$0xff]
        %v6756 = vld [vmem:[%s505 + $0xfd8] sm:$0xff]
        %v6757 = vld [vmem:[%s505 + $0xfe0] sm:$0xff]
        %v6758 = vld [vmem:[%s505 + $0xfe8] sm:$0xff]
        %v6759 = vld [vmem:[%s505 + $0xff0] sm:$0xff]
        %v6760 = vld [vmem:[%s505 + $0xff8] sm:$0xff]
        %v6761 = vld [vmem:[%s441] sm:$0xff]
        %v6763 = vlaneseq
        %v6764 = vshrl.u32 %v6763, 7
        %v6765 = vsub.s32 0, %v6764
        %v6766 = vrot.slane %v6761, %v6765
        %v6767 = vlaneseq
        %v6768 = vshrl.u32 %v6767, 7
        %v6769 = vsub.s32 1, %v6768
        %v6770 = vrot.slane %v6761, %v6769
        %v6771 = vlaneseq
        %v6772 = vshrl.u32 %v6771, 7
        %v6773 = vsub.s32 2, %v6772
        %v6774 = vrot.slane %v6761, %v6773
        %v6775 = vlaneseq
        %v6776 = vshrl.u32 %v6775, 7
        %v6777 = vsub.s32 3, %v6776
        %v6778 = vrot.slane %v6761, %v6777
        %v6779 = vlaneseq
        %v6780 = vshrl.u32 %v6779, 7
        %v6781 = vsub.s32 4, %v6780
        %v6782 = vrot.slane %v6761, %v6781
        %v6783 = vlaneseq
        %v6784 = vshrl.u32 %v6783, 7
        %v6785 = vsub.s32 5, %v6784
        %v6786 = vrot.slane %v6761, %v6785
        %v6787 = vlaneseq
        %v6788 = vshrl.u32 %v6787, 7
        %v6789 = vsub.s32 6, %v6788
        %v6790 = vrot.slane %v6761, %v6789
        %v6791 = vlaneseq
        %v6792 = vshrl.u32 %v6791, 7
        %v6793 = vsub.s32 7, %v6792
        %v6794 = vrot.slane %v6761, %v6793
        %v7315 = vunpack.c.l.b16 %v6249
        %v7316 = vunpack.c.h.b16 %v6249
        %v7317 = vunpack.c.l.b16 %v6250
        %v7318 = vunpack.c.h.b16 %v6250
        %v7319 = vunpack.c.l.b16 %v6251
        %v7320 = vunpack.c.h.b16 %v6251
        %v7321 = vunpack.c.l.b16 %v6252
        %v7322 = vunpack.c.h.b16 %v6252
        %v7323 = vunpack.c.l.b16 %v6253
        %v7324 = vunpack.c.h.b16 %v6253
        %v7325 = vunpack.c.l.b16 %v6254
        %v7326 = vunpack.c.h.b16 %v6254
        %v7327 = vunpack.c.l.b16 %v6255
        %v7328 = vunpack.c.h.b16 %v6255
        %v7329 = vunpack.c.l.b16 %v6256
        %v7330 = vunpack.c.h.b16 %v6256
        %v7331 = vunpack.c.l.b16 %v6257
        %v7332 = vunpack.c.h.b16 %v6257
        %v7333 = vunpack.c.l.b16 %v6258
        %v7334 = vunpack.c.h.b16 %v6258
        %v7335 = vunpack.c.l.b16 %v6259
        %v7336 = vunpack.c.h.b16 %v6259
        %v7337 = vunpack.c.l.b16 %v6260
        %v7338 = vunpack.c.h.b16 %v6260
        %v7339 = vunpack.c.l.b16 %v6261
        %v7340 = vunpack.c.h.b16 %v6261
        %v7341 = vunpack.c.l.b16 %v6262
        %v7342 = vunpack.c.h.b16 %v6262
        %v7343 = vunpack.c.l.b16 %v6263
        %v7344 = vunpack.c.h.b16 %v6263
        %v7345 = vunpack.c.l.b16 %v6264
        %v7346 = vunpack.c.h.b16 %v6264
        %v7347 = vunpack.c.l.b16 %v6265
        %v7348 = vunpack.c.h.b16 %v6265
        %v7349 = vunpack.c.l.b16 %v6266
        %v7350 = vunpack.c.h.b16 %v6266
        %v7351 = vunpack.c.l.b16 %v6267
        %v7352 = vunpack.c.h.b16 %v6267
        %v7353 = vunpack.c.l.b16 %v6268
        %v7354 = vunpack.c.h.b16 %v6268
        %v7355 = vunpack.c.l.b16 %v6269
        %v7356 = vunpack.c.h.b16 %v6269
        %v7357 = vunpack.c.l.b16 %v6270
        %v7358 = vunpack.c.h.b16 %v6270
        %v7359 = vunpack.c.l.b16 %v6271
        %v7360 = vunpack.c.h.b16 %v6271
        %v7361 = vunpack.c.l.b16 %v6272
        %v7362 = vunpack.c.h.b16 %v6272
        %v7363 = vunpack.c.l.b16 %v6273
        %v7364 = vunpack.c.h.b16 %v6273
        %v7365 = vunpack.c.l.b16 %v6274
        %v7366 = vunpack.c.h.b16 %v6274
        %v7367 = vunpack.c.l.b16 %v6275
        %v7368 = vunpack.c.h.b16 %v6275
        %v7369 = vunpack.c.l.b16 %v6276
        %v7370 = vunpack.c.h.b16 %v6276
        %v7371 = vunpack.c.l.b16 %v6277
        %v7372 = vunpack.c.h.b16 %v6277
        %v7373 = vunpack.c.l.b16 %v6278
        %v7374 = vunpack.c.h.b16 %v6278
        %v7375 = vunpack.c.l.b16 %v6279
        %v7376 = vunpack.c.h.b16 %v6279
        %v7377 = vunpack.c.l.b16 %v6280
        %v7378 = vunpack.c.h.b16 %v6280
        %v7379 = vunpack.c.l.b16 %v6281
        %v7380 = vunpack.c.h.b16 %v6281
        %v7381 = vunpack.c.l.b16 %v6282
        %v7382 = vunpack.c.h.b16 %v6282
        %v7383 = vunpack.c.l.b16 %v6283
        %v7384 = vunpack.c.h.b16 %v6283
        %v7385 = vunpack.c.l.b16 %v6284
        %v7386 = vunpack.c.h.b16 %v6284
        %v7387 = vunpack.c.l.b16 %v6285
        %v7388 = vunpack.c.h.b16 %v6285
        %v7389 = vunpack.c.l.b16 %v6286
        %v7390 = vunpack.c.h.b16 %v6286
        %v7391 = vunpack.c.l.b16 %v6287
        %v7392 = vunpack.c.h.b16 %v6287
        %v7393 = vunpack.c.l.b16 %v6288
        %v7394 = vunpack.c.h.b16 %v6288
        %v7395 = vunpack.c.l.b16 %v6289
        %v7396 = vunpack.c.h.b16 %v6289
        %v7397 = vunpack.c.l.b16 %v6290
        %v7398 = vunpack.c.h.b16 %v6290
        %v7399 = vunpack.c.l.b16 %v6291
        %v7400 = vunpack.c.h.b16 %v6291
        %v7401 = vunpack.c.l.b16 %v6292
        %v7402 = vunpack.c.h.b16 %v6292
        %v7403 = vunpack.c.l.b16 %v6293
        %v7404 = vunpack.c.h.b16 %v6293
        %v7405 = vunpack.c.l.b16 %v6294
        %v7406 = vunpack.c.h.b16 %v6294
        %v7407 = vunpack.c.l.b16 %v6295
        %v7408 = vunpack.c.h.b16 %v6295
        %v7409 = vunpack.c.l.b16 %v6296
        %v7410 = vunpack.c.h.b16 %v6296
        %v7411 = vunpack.c.l.b16 %v6297
        %v7412 = vunpack.c.h.b16 %v6297
        %v7413 = vunpack.c.l.b16 %v6298
        %v7414 = vunpack.c.h.b16 %v6298
        %v7415 = vunpack.c.l.b16 %v6299
        %v7416 = vunpack.c.h.b16 %v6299
        %v7417 = vunpack.c.l.b16 %v6300
        %v7418 = vunpack.c.h.b16 %v6300
        %v7419 = vunpack.c.l.b16 %v6301
        %v7420 = vunpack.c.h.b16 %v6301
        %v7421 = vunpack.c.l.b16 %v6302
        %v7422 = vunpack.c.h.b16 %v6302
        %v7423 = vunpack.c.l.b16 %v6303
        %v7424 = vunpack.c.h.b16 %v6303
        %v7425 = vunpack.c.l.b16 %v6304
        %v7426 = vunpack.c.h.b16 %v6304
        %v7427 = vunpack.c.l.b16 %v6305
        %v7428 = vunpack.c.h.b16 %v6305
        %v7429 = vunpack.c.l.b16 %v6306
        %v7430 = vunpack.c.h.b16 %v6306
        %v7431 = vunpack.c.l.b16 %v6307
        %v7432 = vunpack.c.h.b16 %v6307
        %v7433 = vunpack.c.l.b16 %v6308
        %v7434 = vunpack.c.h.b16 %v6308
        %v7435 = vunpack.c.l.b16 %v6309
        %v7436 = vunpack.c.h.b16 %v6309
        %v7437 = vunpack.c.l.b16 %v6310
        %v7438 = vunpack.c.h.b16 %v6310
        %v7439 = vunpack.c.l.b16 %v6311
        %v7440 = vunpack.c.h.b16 %v6311
        %v7441 = vunpack.c.l.b16 %v6312
        %v7442 = vunpack.c.h.b16 %v6312
        %v7443 = vunpack.c.l.b16 %v6313
        %v7444 = vunpack.c.h.b16 %v6313
        %v7445 = vunpack.c.l.b16 %v6314
        %v7446 = vunpack.c.h.b16 %v6314
        %v7447 = vunpack.c.l.b16 %v6315
        %v7448 = vunpack.c.h.b16 %v6315
        %v7449 = vunpack.c.l.b16 %v6316
        %v7450 = vunpack.c.h.b16 %v6316
        %v7451 = vunpack.c.l.b16 %v6317
        %v7452 = vunpack.c.h.b16 %v6317
        %v7453 = vunpack.c.l.b16 %v6318
        %v7454 = vunpack.c.h.b16 %v6318
        %v7455 = vunpack.c.l.b16 %v6319
        %v7456 = vunpack.c.h.b16 %v6319
        %v7457 = vunpack.c.l.b16 %v6320
        %v7458 = vunpack.c.h.b16 %v6320
        %v7459 = vunpack.c.l.b16 %v6321
        %v7460 = vunpack.c.h.b16 %v6321
        %v7461 = vunpack.c.l.b16 %v6322
        %v7462 = vunpack.c.h.b16 %v6322
        %v7463 = vunpack.c.l.b16 %v6323
        %v7464 = vunpack.c.h.b16 %v6323
        %v7465 = vunpack.c.l.b16 %v6324
        %v7466 = vunpack.c.h.b16 %v6324
        %v7467 = vunpack.c.l.b16 %v6325
        %v7468 = vunpack.c.h.b16 %v6325
        %v7469 = vunpack.c.l.b16 %v6326
        %v7470 = vunpack.c.h.b16 %v6326
        %v7471 = vunpack.c.l.b16 %v6327
        %v7472 = vunpack.c.h.b16 %v6327
        %v7473 = vunpack.c.l.b16 %v6328
        %v7474 = vunpack.c.h.b16 %v6328
        %v7475 = vunpack.c.l.b16 %v6329
        %v7476 = vunpack.c.h.b16 %v6329
        %v7477 = vunpack.c.l.b16 %v6330
        %v7478 = vunpack.c.h.b16 %v6330
        %v7479 = vunpack.c.l.b16 %v6331
        %v7480 = vunpack.c.h.b16 %v6331
        %v7481 = vunpack.c.l.b16 %v6332
        %v7482 = vunpack.c.h.b16 %v6332
        %v7483 = vunpack.c.l.b16 %v6333
        %v7484 = vunpack.c.h.b16 %v6333
        %v7485 = vunpack.c.l.b16 %v6334
        %v7486 = vunpack.c.h.b16 %v6334
        %v7487 = vunpack.c.l.b16 %v6335
        %v7488 = vunpack.c.h.b16 %v6335
        %v7489 = vunpack.c.l.b16 %v6336
        %v7490 = vunpack.c.h.b16 %v6336
        %v7491 = vunpack.c.l.b16 %v6337
        %v7492 = vunpack.c.h.b16 %v6337
        %v7493 = vunpack.c.l.b16 %v6338
        %v7494 = vunpack.c.h.b16 %v6338
        %v7495 = vunpack.c.l.b16 %v6339
        %v7496 = vunpack.c.h.b16 %v6339
        %v7497 = vunpack.c.l.b16 %v6340
        %v7498 = vunpack.c.h.b16 %v6340
        %v7499 = vunpack.c.l.b16 %v6341
        %v7500 = vunpack.c.h.b16 %v6341
        %v7501 = vunpack.c.l.b16 %v6342
        %v7502 = vunpack.c.h.b16 %v6342
        %v7503 = vunpack.c.l.b16 %v6343
        %v7504 = vunpack.c.h.b16 %v6343
        %v7505 = vunpack.c.l.b16 %v6344
        %v7506 = vunpack.c.h.b16 %v6344
        %v7507 = vunpack.c.l.b16 %v6345
        %v7508 = vunpack.c.h.b16 %v6345
        %v7509 = vunpack.c.l.b16 %v6346
        %v7510 = vunpack.c.h.b16 %v6346
        %v7511 = vunpack.c.l.b16 %v6347
        %v7512 = vunpack.c.h.b16 %v6347
        %v7513 = vunpack.c.l.b16 %v6348
        %v7514 = vunpack.c.h.b16 %v6348
        %v7515 = vunpack.c.l.b16 %v6349
        %v7516 = vunpack.c.h.b16 %v6349
        %v7517 = vunpack.c.l.b16 %v6350
        %v7518 = vunpack.c.h.b16 %v6350
        %v7519 = vunpack.c.l.b16 %v6351
        %v7520 = vunpack.c.h.b16 %v6351
        %v7521 = vunpack.c.l.b16 %v6352
        %v7522 = vunpack.c.h.b16 %v6352
        %v7523 = vunpack.c.l.b16 %v6353
        %v7524 = vunpack.c.h.b16 %v6353
        %v7525 = vunpack.c.l.b16 %v6354
        %v7526 = vunpack.c.h.b16 %v6354
        %v7527 = vunpack.c.l.b16 %v6355
        %v7528 = vunpack.c.h.b16 %v6355
        %v7529 = vunpack.c.l.b16 %v6356
        %v7530 = vunpack.c.h.b16 %v6356
        %v7531 = vunpack.c.l.b16 %v6357
        %v7532 = vunpack.c.h.b16 %v6357
        %v7533 = vunpack.c.l.b16 %v6358
        %v7534 = vunpack.c.h.b16 %v6358
        %v7535 = vunpack.c.l.b16 %v6359
        %v7536 = vunpack.c.h.b16 %v6359
        %v7537 = vunpack.c.l.b16 %v6360
        %v7538 = vunpack.c.h.b16 %v6360
        %v7539 = vunpack.c.l.b16 %v6361
        %v7540 = vunpack.c.h.b16 %v6361
        %v7541 = vunpack.c.l.b16 %v6362
        %v7542 = vunpack.c.h.b16 %v6362
        %v7543 = vunpack.c.l.b16 %v6363
        %v7544 = vunpack.c.h.b16 %v6363
        %v7545 = vunpack.c.l.b16 %v6364
        %v7546 = vunpack.c.h.b16 %v6364
        %v7547 = vunpack.c.l.b16 %v6365
        %v7548 = vunpack.c.h.b16 %v6365
        %v7549 = vunpack.c.l.b16 %v6366
        %v7550 = vunpack.c.h.b16 %v6366
        %v7551 = vunpack.c.l.b16 %v6367
        %v7552 = vunpack.c.h.b16 %v6367
        %v7553 = vunpack.c.l.b16 %v6368
        %v7554 = vunpack.c.h.b16 %v6368
        %v7555 = vunpack.c.l.b16 %v6369
        %v7556 = vunpack.c.h.b16 %v6369
        %v7557 = vunpack.c.l.b16 %v6370
        %v7558 = vunpack.c.h.b16 %v6370
        %v7559 = vunpack.c.l.b16 %v6371
        %v7560 = vunpack.c.h.b16 %v6371
        %v7561 = vunpack.c.l.b16 %v6372
        %v7562 = vunpack.c.h.b16 %v6372
        %v7563 = vunpack.c.l.b16 %v6373
        %v7564 = vunpack.c.h.b16 %v6373
        %v7565 = vunpack.c.l.b16 %v6374
        %v7566 = vunpack.c.h.b16 %v6374
        %v7567 = vunpack.c.l.b16 %v6375
        %v7568 = vunpack.c.h.b16 %v6375
        %v7569 = vunpack.c.l.b16 %v6376
        %v7570 = vunpack.c.h.b16 %v6376
        %v7571 = vunpack.c.l.b16 %v6377
        %v7572 = vunpack.c.h.b16 %v6377
        %v7573 = vunpack.c.l.b16 %v6378
        %v7574 = vunpack.c.h.b16 %v6378
        %v7575 = vunpack.c.l.b16 %v6379
        %v7576 = vunpack.c.h.b16 %v6379
        %v7577 = vunpack.c.l.b16 %v6380
        %v7578 = vunpack.c.h.b16 %v6380
        %v7579 = vunpack.c.l.b16 %v6381
        %v7580 = vunpack.c.h.b16 %v6381
        %v7581 = vunpack.c.l.b16 %v6382
        %v7582 = vunpack.c.h.b16 %v6382
        %v7583 = vunpack.c.l.b16 %v6383
        %v7584 = vunpack.c.h.b16 %v6383
        %v7585 = vunpack.c.l.b16 %v6384
        %v7586 = vunpack.c.h.b16 %v6384
        %v7587 = vunpack.c.l.b16 %v6385
        %v7588 = vunpack.c.h.b16 %v6385
        %v7589 = vunpack.c.l.b16 %v6386
        %v7590 = vunpack.c.h.b16 %v6386
        %v7591 = vunpack.c.l.b16 %v6387
        %v7592 = vunpack.c.h.b16 %v6387
        %v7593 = vunpack.c.l.b16 %v6388
        %v7594 = vunpack.c.h.b16 %v6388
        %v7595 = vunpack.c.l.b16 %v6389
        %v7596 = vunpack.c.h.b16 %v6389
        %v7597 = vunpack.c.l.b16 %v6390
        %v7598 = vunpack.c.h.b16 %v6390
        %v7599 = vunpack.c.l.b16 %v6391
        %v7600 = vunpack.c.h.b16 %v6391
        %v7601 = vunpack.c.l.b16 %v6392
        %v7602 = vunpack.c.h.b16 %v6392
        %v7603 = vunpack.c.l.b16 %v6393
        %v7604 = vunpack.c.h.b16 %v6393
        %v7605 = vunpack.c.l.b16 %v6394
        %v7606 = vunpack.c.h.b16 %v6394
        %v7607 = vunpack.c.l.b16 %v6395
        %v7608 = vunpack.c.h.b16 %v6395
        %v7609 = vunpack.c.l.b16 %v6396
        %v7610 = vunpack.c.h.b16 %v6396
        %v7611 = vunpack.c.l.b16 %v6397
        %v7612 = vunpack.c.h.b16 %v6397
        %v7613 = vunpack.c.l.b16 %v6398
        %v7614 = vunpack.c.h.b16 %v6398
        %v7615 = vunpack.c.l.b16 %v6399
        %v7616 = vunpack.c.h.b16 %v6399
        %v7617 = vunpack.c.l.b16 %v6400
        %v7618 = vunpack.c.h.b16 %v6400
        %v7619 = vunpack.c.l.b16 %v6401
        %v7620 = vunpack.c.h.b16 %v6401
        %v7621 = vunpack.c.l.b16 %v6402
        %v7622 = vunpack.c.h.b16 %v6402
        %v7623 = vunpack.c.l.b16 %v6403
        %v7624 = vunpack.c.h.b16 %v6403
        %v7625 = vunpack.c.l.b16 %v6404
        %v7626 = vunpack.c.h.b16 %v6404
        %v7627 = vunpack.c.l.b16 %v6405
        %v7628 = vunpack.c.h.b16 %v6405
        %v7629 = vunpack.c.l.b16 %v6406
        %v7630 = vunpack.c.h.b16 %v6406
        %v7631 = vunpack.c.l.b16 %v6407
        %v7632 = vunpack.c.h.b16 %v6407
        %v7633 = vunpack.c.l.b16 %v6408
        %v7634 = vunpack.c.h.b16 %v6408
        %v7635 = vunpack.c.l.b16 %v6409
        %v7636 = vunpack.c.h.b16 %v6409
        %v7637 = vunpack.c.l.b16 %v6410
        %v7638 = vunpack.c.h.b16 %v6410
        %v7639 = vunpack.c.l.b16 %v6411
        %v7640 = vunpack.c.h.b16 %v6411
        %v7641 = vunpack.c.l.b16 %v6412
        %v7642 = vunpack.c.h.b16 %v6412
        %v7643 = vunpack.c.l.b16 %v6413
        %v7644 = vunpack.c.h.b16 %v6413
        %v7645 = vunpack.c.l.b16 %v6414
        %v7646 = vunpack.c.h.b16 %v6414
        %v7647 = vunpack.c.l.b16 %v6415
        %v7648 = vunpack.c.h.b16 %v6415
        %v7649 = vunpack.c.l.b16 %v6416
        %v7650 = vunpack.c.h.b16 %v6416
        %v7651 = vunpack.c.l.b16 %v6417
        %v7652 = vunpack.c.h.b16 %v6417
        %v7653 = vunpack.c.l.b16 %v6418
        %v7654 = vunpack.c.h.b16 %v6418
        %v7655 = vunpack.c.l.b16 %v6419
        %v7656 = vunpack.c.h.b16 %v6419
        %v7657 = vunpack.c.l.b16 %v6420
        %v7658 = vunpack.c.h.b16 %v6420
        %v7659 = vunpack.c.l.b16 %v6421
        %v7660 = vunpack.c.h.b16 %v6421
        %v7661 = vunpack.c.l.b16 %v6422
        %v7662 = vunpack.c.h.b16 %v6422
        %v7663 = vunpack.c.l.b16 %v6423
        %v7664 = vunpack.c.h.b16 %v6423
        %v7665 = vunpack.c.l.b16 %v6424
        %v7666 = vunpack.c.h.b16 %v6424
        %v7667 = vunpack.c.l.b16 %v6425
        %v7668 = vunpack.c.h.b16 %v6425
        %v7669 = vunpack.c.l.b16 %v6426
        %v7670 = vunpack.c.h.b16 %v6426
        %v7671 = vunpack.c.l.b16 %v6427
        %v7672 = vunpack.c.h.b16 %v6427
        %v7673 = vunpack.c.l.b16 %v6428
        %v7674 = vunpack.c.h.b16 %v6428
        %v7675 = vunpack.c.l.b16 %v6429
        %v7676 = vunpack.c.h.b16 %v6429
        %v7677 = vunpack.c.l.b16 %v6430
        %v7678 = vunpack.c.h.b16 %v6430
        %v7679 = vunpack.c.l.b16 %v6431
        %v7680 = vunpack.c.h.b16 %v6431
        %v7681 = vunpack.c.l.b16 %v6432
        %v7682 = vunpack.c.h.b16 %v6432
        %v7683 = vunpack.c.l.b16 %v6433
        %v7684 = vunpack.c.h.b16 %v6433
        %v7685 = vunpack.c.l.b16 %v6434
        %v7686 = vunpack.c.h.b16 %v6434
        %v7687 = vunpack.c.l.b16 %v6435
        %v7688 = vunpack.c.h.b16 %v6435
        %v7689 = vunpack.c.l.b16 %v6436
        %v7690 = vunpack.c.h.b16 %v6436
        %v7691 = vunpack.c.l.b16 %v6437
        %v7692 = vunpack.c.h.b16 %v6437
        %v7693 = vunpack.c.l.b16 %v6438
        %v7694 = vunpack.c.h.b16 %v6438
        %v7695 = vunpack.c.l.b16 %v6439
        %v7696 = vunpack.c.h.b16 %v6439
        %v7697 = vunpack.c.l.b16 %v6440
        %v7698 = vunpack.c.h.b16 %v6440
        %v7699 = vunpack.c.l.b16 %v6441
        %v7700 = vunpack.c.h.b16 %v6441
        %v7701 = vunpack.c.l.b16 %v6442
        %v7702 = vunpack.c.h.b16 %v6442
        %v7703 = vunpack.c.l.b16 %v6443
        %v7704 = vunpack.c.h.b16 %v6443
        %v7705 = vunpack.c.l.b16 %v6444
        %v7706 = vunpack.c.h.b16 %v6444
        %v7707 = vunpack.c.l.b16 %v6445
        %v7708 = vunpack.c.h.b16 %v6445
        %v7709 = vunpack.c.l.b16 %v6446
        %v7710 = vunpack.c.h.b16 %v6446
        %v7711 = vunpack.c.l.b16 %v6447
        %v7712 = vunpack.c.h.b16 %v6447
        %v7713 = vunpack.c.l.b16 %v6448
        %v7714 = vunpack.c.h.b16 %v6448
        %v7715 = vunpack.c.l.b16 %v6449
        %v7716 = vunpack.c.h.b16 %v6449
        %v7717 = vunpack.c.l.b16 %v6450
        %v7718 = vunpack.c.h.b16 %v6450
        %v7719 = vunpack.c.l.b16 %v6451
        %v7720 = vunpack.c.h.b16 %v6451
        %v7721 = vunpack.c.l.b16 %v6452
        %v7722 = vunpack.c.h.b16 %v6452
        %v7723 = vunpack.c.l.b16 %v6453
        %v7724 = vunpack.c.h.b16 %v6453
        %v7725 = vunpack.c.l.b16 %v6454
        %v7726 = vunpack.c.h.b16 %v6454
        %v7727 = vunpack.c.l.b16 %v6455
        %v7728 = vunpack.c.h.b16 %v6455
        %v7729 = vunpack.c.l.b16 %v6456
        %v7730 = vunpack.c.h.b16 %v6456
        %v7731 = vunpack.c.l.b16 %v6457
        %v7732 = vunpack.c.h.b16 %v6457
        %v7733 = vunpack.c.l.b16 %v6458
        %v7734 = vunpack.c.h.b16 %v6458
        %v7735 = vunpack.c.l.b16 %v6459
        %v7736 = vunpack.c.h.b16 %v6459
        %v7737 = vunpack.c.l.b16 %v6460
        %v7738 = vunpack.c.h.b16 %v6460
        %v7739 = vunpack.c.l.b16 %v6461
        %v7740 = vunpack.c.h.b16 %v6461
        %v7741 = vunpack.c.l.b16 %v6462
        %v7742 = vunpack.c.h.b16 %v6462
        %v7743 = vunpack.c.l.b16 %v6463
        %v7744 = vunpack.c.h.b16 %v6463
        %v7745 = vunpack.c.l.b16 %v6464
        %v7746 = vunpack.c.h.b16 %v6464
        %v7747 = vunpack.c.l.b16 %v6465
        %v7748 = vunpack.c.h.b16 %v6465
        %v7749 = vunpack.c.l.b16 %v6466
        %v7750 = vunpack.c.h.b16 %v6466
        %v7751 = vunpack.c.l.b16 %v6467
        %v7752 = vunpack.c.h.b16 %v6467
        %v7753 = vunpack.c.l.b16 %v6468
        %v7754 = vunpack.c.h.b16 %v6468
        %v7755 = vunpack.c.l.b16 %v6469
        %v7756 = vunpack.c.h.b16 %v6469
        %v7757 = vunpack.c.l.b16 %v6470
        %v7758 = vunpack.c.h.b16 %v6470
        %v7759 = vunpack.c.l.b16 %v6471
        %v7760 = vunpack.c.h.b16 %v6471
        %v7761 = vunpack.c.l.b16 %v6472
        %v7762 = vunpack.c.h.b16 %v6472
        %v7763 = vunpack.c.l.b16 %v6473
        %v7764 = vunpack.c.h.b16 %v6473
        %v7765 = vunpack.c.l.b16 %v6474
        %v7766 = vunpack.c.h.b16 %v6474
        %v7767 = vunpack.c.l.b16 %v6475
        %v7768 = vunpack.c.h.b16 %v6475
        %v7769 = vunpack.c.l.b16 %v6476
        %v7770 = vunpack.c.h.b16 %v6476
        %v7771 = vunpack.c.l.b16 %v6477
        %v7772 = vunpack.c.h.b16 %v6477
        %v7773 = vunpack.c.l.b16 %v6478
        %v7774 = vunpack.c.h.b16 %v6478
        %v7775 = vunpack.c.l.b16 %v6479
        %v7776 = vunpack.c.h.b16 %v6479
        %v7777 = vunpack.c.l.b16 %v6480
        %v7778 = vunpack.c.h.b16 %v6480
        %v7779 = vunpack.c.l.b16 %v6481
        %v7780 = vunpack.c.h.b16 %v6481
        %v7781 = vunpack.c.l.b16 %v6482
        %v7782 = vunpack.c.h.b16 %v6482
        %v7783 = vunpack.c.l.b16 %v6483
        %v7784 = vunpack.c.h.b16 %v6483
        %v7785 = vunpack.c.l.b16 %v6484
        %v7786 = vunpack.c.h.b16 %v6484
        %v7787 = vunpack.c.l.b16 %v6485
        %v7788 = vunpack.c.h.b16 %v6485
        %v7789 = vunpack.c.l.b16 %v6486
        %v7790 = vunpack.c.h.b16 %v6486
        %v7791 = vunpack.c.l.b16 %v6487
        %v7792 = vunpack.c.h.b16 %v6487
        %v7793 = vunpack.c.l.b16 %v6488
        %v7794 = vunpack.c.h.b16 %v6488
        %v7795 = vunpack.c.l.b16 %v6489
        %v7796 = vunpack.c.h.b16 %v6489
        %v7797 = vunpack.c.l.b16 %v6490
        %v7798 = vunpack.c.h.b16 %v6490
        %v7799 = vunpack.c.l.b16 %v6491
        %v7800 = vunpack.c.h.b16 %v6491
        %v7801 = vunpack.c.l.b16 %v6492
        %v7802 = vunpack.c.h.b16 %v6492
        %v7803 = vunpack.c.l.b16 %v6493
        %v7804 = vunpack.c.h.b16 %v6493
        %v7805 = vunpack.c.l.b16 %v6494
        %v7806 = vunpack.c.h.b16 %v6494
        %v7807 = vunpack.c.l.b16 %v6495
        %v7808 = vunpack.c.h.b16 %v6495
        %v7809 = vunpack.c.l.b16 %v6496
        %v7810 = vunpack.c.h.b16 %v6496
        %v7811 = vunpack.c.l.b16 %v6497
        %v7812 = vunpack.c.h.b16 %v6497
        %v7813 = vunpack.c.l.b16 %v6498
        %v7814 = vunpack.c.h.b16 %v6498
        %v7815 = vunpack.c.l.b16 %v6499
        %v7816 = vunpack.c.h.b16 %v6499
        %v7817 = vunpack.c.l.b16 %v6500
        %v7818 = vunpack.c.h.b16 %v6500
        %v7819 = vunpack.c.l.b16 %v6501
        %v7820 = vunpack.c.h.b16 %v6501
        %v7821 = vunpack.c.l.b16 %v6502
        %v7822 = vunpack.c.h.b16 %v6502
        %v7823 = vunpack.c.l.b16 %v6503
        %v7824 = vunpack.c.h.b16 %v6503
        %v7825 = vunpack.c.l.b16 %v6504
        %v7826 = vunpack.c.h.b16 %v6504
        %v7827 = vunpack.c.l.b16 %v6505
        %v7828 = vunpack.c.h.b16 %v6505
        %v7829 = vunpack.c.l.b16 %v6506
        %v7830 = vunpack.c.h.b16 %v6506
        %v7831 = vunpack.c.l.b16 %v6507
        %v7832 = vunpack.c.h.b16 %v6507
        %v7833 = vunpack.c.l.b16 %v6508
        %v7834 = vunpack.c.h.b16 %v6508
        %v7835 = vunpack.c.l.b16 %v6509
        %v7836 = vunpack.c.h.b16 %v6509
        %v7837 = vunpack.c.l.b16 %v6510
        %v7838 = vunpack.c.h.b16 %v6510
        %v7839 = vunpack.c.l.b16 %v6511
        %v7840 = vunpack.c.h.b16 %v6511
        %v7841 = vunpack.c.l.b16 %v6512
        %v7842 = vunpack.c.h.b16 %v6512
        %v7843 = vunpack.c.l.b16 %v6513
        %v7844 = vunpack.c.h.b16 %v6513
        %v7845 = vunpack.c.l.b16 %v6514
        %v7846 = vunpack.c.h.b16 %v6514
        %v7847 = vunpack.c.l.b16 %v6515
        %v7848 = vunpack.c.h.b16 %v6515
        %v7849 = vunpack.c.l.b16 %v6516
        %v7850 = vunpack.c.h.b16 %v6516
        %v7851 = vunpack.c.l.b16 %v6517
        %v7852 = vunpack.c.h.b16 %v6517
        %v7853 = vunpack.c.l.b16 %v6518
        %v7854 = vunpack.c.h.b16 %v6518
        %v7855 = vunpack.c.l.b16 %v6519
        %v7856 = vunpack.c.h.b16 %v6519
        %v7857 = vunpack.c.l.b16 %v6520
        %v7858 = vunpack.c.h.b16 %v6520
        %v7859 = vunpack.c.l.b16 %v6521
        %v7860 = vunpack.c.h.b16 %v6521
        %v7861 = vunpack.c.l.b16 %v6522
        %v7862 = vunpack.c.h.b16 %v6522
        %v7863 = vunpack.c.l.b16 %v6523
        %v7864 = vunpack.c.h.b16 %v6523
        %v7865 = vunpack.c.l.b16 %v6524
        %v7866 = vunpack.c.h.b16 %v6524
        %v7867 = vunpack.c.l.b16 %v6525
        %v7868 = vunpack.c.h.b16 %v6525
        %v7869 = vunpack.c.l.b16 %v6526
        %v7870 = vunpack.c.h.b16 %v6526
        %v7871 = vunpack.c.l.b16 %v6527
        %v7872 = vunpack.c.h.b16 %v6527
        %v7873 = vunpack.c.l.b16 %v6528
        %v7874 = vunpack.c.h.b16 %v6528
        %v7875 = vunpack.c.l.b16 %v6529
        %v7876 = vunpack.c.h.b16 %v6529
        %v7877 = vunpack.c.l.b16 %v6530
        %v7878 = vunpack.c.h.b16 %v6530
        %v7879 = vunpack.c.l.b16 %v6531
        %v7880 = vunpack.c.h.b16 %v6531
        %v7881 = vunpack.c.l.b16 %v6532
        %v7882 = vunpack.c.h.b16 %v6532
        %v7883 = vunpack.c.l.b16 %v6533
        %v7884 = vunpack.c.h.b16 %v6533
        %v7885 = vunpack.c.l.b16 %v6534
        %v7886 = vunpack.c.h.b16 %v6534
        %v7887 = vunpack.c.l.b16 %v6535
        %v7888 = vunpack.c.h.b16 %v6535
        %v7889 = vunpack.c.l.b16 %v6536
        %v7890 = vunpack.c.h.b16 %v6536
        %v7891 = vunpack.c.l.b16 %v6537
        %v7892 = vunpack.c.h.b16 %v6537
        %v7893 = vunpack.c.l.b16 %v6538
        %v7894 = vunpack.c.h.b16 %v6538
        %v7895 = vunpack.c.l.b16 %v6539
        %v7896 = vunpack.c.h.b16 %v6539
        %v7897 = vunpack.c.l.b16 %v6540
        %v7898 = vunpack.c.h.b16 %v6540
        %v7899 = vunpack.c.l.b16 %v6541
        %v7900 = vunpack.c.h.b16 %v6541
        %v7901 = vunpack.c.l.b16 %v6542
        %v7902 = vunpack.c.h.b16 %v6542
        %v7903 = vunpack.c.l.b16 %v6543
        %v7904 = vunpack.c.h.b16 %v6543
        %v7905 = vunpack.c.l.b16 %v6544
        %v7906 = vunpack.c.h.b16 %v6544
        %v7907 = vunpack.c.l.b16 %v6545
        %v7908 = vunpack.c.h.b16 %v6545
        %v7909 = vunpack.c.l.b16 %v6546
        %v7910 = vunpack.c.h.b16 %v6546
        %v7911 = vunpack.c.l.b16 %v6547
        %v7912 = vunpack.c.h.b16 %v6547
        %v7913 = vunpack.c.l.b16 %v6548
        %v7914 = vunpack.c.h.b16 %v6548
        %v7915 = vunpack.c.l.b16 %v6549
        %v7916 = vunpack.c.h.b16 %v6549
        %v7917 = vunpack.c.l.b16 %v6550
        %v7918 = vunpack.c.h.b16 %v6550
        %v7919 = vunpack.c.l.b16 %v6551
        %v7920 = vunpack.c.h.b16 %v6551
        %v7921 = vunpack.c.l.b16 %v6552
        %v7922 = vunpack.c.h.b16 %v6552
        %v7923 = vunpack.c.l.b16 %v6553
        %v7924 = vunpack.c.h.b16 %v6553
        %v7925 = vunpack.c.l.b16 %v6554
        %v7926 = vunpack.c.h.b16 %v6554
        %v7927 = vunpack.c.l.b16 %v6555
        %v7928 = vunpack.c.h.b16 %v6555
        %v7929 = vunpack.c.l.b16 %v6556
        %v7930 = vunpack.c.h.b16 %v6556
        %v7931 = vunpack.c.l.b16 %v6557
        %v7932 = vunpack.c.h.b16 %v6557
        %v7933 = vunpack.c.l.b16 %v6558
        %v7934 = vunpack.c.h.b16 %v6558
        %v7935 = vunpack.c.l.b16 %v6559
        %v7936 = vunpack.c.h.b16 %v6559
        %v7937 = vunpack.c.l.b16 %v6560
        %v7938 = vunpack.c.h.b16 %v6560
        %v7939 = vunpack.c.l.b16 %v6561
        %v7940 = vunpack.c.h.b16 %v6561
        %v7941 = vunpack.c.l.b16 %v6562
        %v7942 = vunpack.c.h.b16 %v6562
        %v7943 = vunpack.c.l.b16 %v6563
        %v7944 = vunpack.c.h.b16 %v6563
        %v7945 = vunpack.c.l.b16 %v6564
        %v7946 = vunpack.c.h.b16 %v6564
        %v7947 = vunpack.c.l.b16 %v6565
        %v7948 = vunpack.c.h.b16 %v6565
        %v7949 = vunpack.c.l.b16 %v6566
        %v7950 = vunpack.c.h.b16 %v6566
        %v7951 = vunpack.c.l.b16 %v6567
        %v7952 = vunpack.c.h.b16 %v6567
        %v7953 = vunpack.c.l.b16 %v6568
        %v7954 = vunpack.c.h.b16 %v6568
        %v7955 = vunpack.c.l.b16 %v6569
        %v7956 = vunpack.c.h.b16 %v6569
        %v7957 = vunpack.c.l.b16 %v6570
        %v7958 = vunpack.c.h.b16 %v6570
        %v7959 = vunpack.c.l.b16 %v6571
        %v7960 = vunpack.c.h.b16 %v6571
        %v7961 = vunpack.c.l.b16 %v6572
        %v7962 = vunpack.c.h.b16 %v6572
        %v7963 = vunpack.c.l.b16 %v6573
        %v7964 = vunpack.c.h.b16 %v6573
        %v7965 = vunpack.c.l.b16 %v6574
        %v7966 = vunpack.c.h.b16 %v6574
        %v7967 = vunpack.c.l.b16 %v6575
        %v7968 = vunpack.c.h.b16 %v6575
        %v7969 = vunpack.c.l.b16 %v6576
        %v7970 = vunpack.c.h.b16 %v6576
        %v7971 = vunpack.c.l.b16 %v6577
        %v7972 = vunpack.c.h.b16 %v6577
        %v7973 = vunpack.c.l.b16 %v6578
        %v7974 = vunpack.c.h.b16 %v6578
        %v7975 = vunpack.c.l.b16 %v6579
        %v7976 = vunpack.c.h.b16 %v6579
        %v7977 = vunpack.c.l.b16 %v6580
        %v7978 = vunpack.c.h.b16 %v6580
        %v7979 = vunpack.c.l.b16 %v6581
        %v7980 = vunpack.c.h.b16 %v6581
        %v7981 = vunpack.c.l.b16 %v6582
        %v7982 = vunpack.c.h.b16 %v6582
        %v7983 = vunpack.c.l.b16 %v6583
        %v7984 = vunpack.c.h.b16 %v6583
        %v7985 = vunpack.c.l.b16 %v6584
        %v7986 = vunpack.c.h.b16 %v6584
        %v7987 = vunpack.c.l.b16 %v6585
        %v7988 = vunpack.c.h.b16 %v6585
        %v7989 = vunpack.c.l.b16 %v6586
        %v7990 = vunpack.c.h.b16 %v6586
        %v7991 = vunpack.c.l.b16 %v6587
        %v7992 = vunpack.c.h.b16 %v6587
        %v7993 = vunpack.c.l.b16 %v6588
        %v7994 = vunpack.c.h.b16 %v6588
        %v7995 = vunpack.c.l.b16 %v6589
        %v7996 = vunpack.c.h.b16 %v6589
        %v7997 = vunpack.c.l.b16 %v6590
        %v7998 = vunpack.c.h.b16 %v6590
        %v7999 = vunpack.c.l.b16 %v6591
        %v8000 = vunpack.c.h.b16 %v6591
        %v8001 = vunpack.c.l.b16 %v6592
        %v8002 = vunpack.c.h.b16 %v6592
        %v8003 = vunpack.c.l.b16 %v6593
        %v8004 = vunpack.c.h.b16 %v6593
        %v8005 = vunpack.c.l.b16 %v6594
        %v8006 = vunpack.c.h.b16 %v6594
        %v8007 = vunpack.c.l.b16 %v6595
        %v8008 = vunpack.c.h.b16 %v6595
        %v8009 = vunpack.c.l.b16 %v6596
        %v8010 = vunpack.c.h.b16 %v6596
        %v8011 = vunpack.c.l.b16 %v6597
        %v8012 = vunpack.c.h.b16 %v6597
        %v8013 = vunpack.c.l.b16 %v6598
        %v8014 = vunpack.c.h.b16 %v6598
        %v8015 = vunpack.c.l.b16 %v6599
        %v8016 = vunpack.c.h.b16 %v6599
        %v8017 = vunpack.c.l.b16 %v6600
        %v8018 = vunpack.c.h.b16 %v6600
        %v8019 = vunpack.c.l.b16 %v6601
        %v8020 = vunpack.c.h.b16 %v6601
        %v8021 = vunpack.c.l.b16 %v6602
        %v8022 = vunpack.c.h.b16 %v6602
        %v8023 = vunpack.c.l.b16 %v6603
        %v8024 = vunpack.c.h.b16 %v6603
        %v8025 = vunpack.c.l.b16 %v6604
        %v8026 = vunpack.c.h.b16 %v6604
        %v8027 = vunpack.c.l.b16 %v6605
        %v8028 = vunpack.c.h.b16 %v6605
        %v8029 = vunpack.c.l.b16 %v6606
        %v8030 = vunpack.c.h.b16 %v6606
        %v8031 = vunpack.c.l.b16 %v6607
        %v8032 = vunpack.c.h.b16 %v6607
        %v8033 = vunpack.c.l.b16 %v6608
        %v8034 = vunpack.c.h.b16 %v6608
        %v8035 = vunpack.c.l.b16 %v6609
        %v8036 = vunpack.c.h.b16 %v6609
        %v8037 = vunpack.c.l.b16 %v6610
        %v8038 = vunpack.c.h.b16 %v6610
        %v8039 = vunpack.c.l.b16 %v6611
        %v8040 = vunpack.c.h.b16 %v6611
        %v8041 = vunpack.c.l.b16 %v6612
        %v8042 = vunpack.c.h.b16 %v6612
        %v8043 = vunpack.c.l.b16 %v6613
        %v8044 = vunpack.c.h.b16 %v6613
        %v8045 = vunpack.c.l.b16 %v6614
        %v8046 = vunpack.c.h.b16 %v6614
        %v8047 = vunpack.c.l.b16 %v6615
        %v8048 = vunpack.c.h.b16 %v6615
        %v8049 = vunpack.c.l.b16 %v6616
        %v8050 = vunpack.c.h.b16 %v6616
        %v8051 = vunpack.c.l.b16 %v6617
        %v8052 = vunpack.c.h.b16 %v6617
        %v8053 = vunpack.c.l.b16 %v6618
        %v8054 = vunpack.c.h.b16 %v6618
        %v8055 = vunpack.c.l.b16 %v6619
        %v8056 = vunpack.c.h.b16 %v6619
        %v8057 = vunpack.c.l.b16 %v6620
        %v8058 = vunpack.c.h.b16 %v6620
        %v8059 = vunpack.c.l.b16 %v6621
        %v8060 = vunpack.c.h.b16 %v6621
        %v8061 = vunpack.c.l.b16 %v6622
        %v8062 = vunpack.c.h.b16 %v6622
        %v8063 = vunpack.c.l.b16 %v6623
        %v8064 = vunpack.c.h.b16 %v6623
        %v8065 = vunpack.c.l.b16 %v6624
        %v8066 = vunpack.c.h.b16 %v6624
        %v8067 = vunpack.c.l.b16 %v6625
        %v8068 = vunpack.c.h.b16 %v6625
        %v8069 = vunpack.c.l.b16 %v6626
        %v8070 = vunpack.c.h.b16 %v6626
        %v8071 = vunpack.c.l.b16 %v6627
        %v8072 = vunpack.c.h.b16 %v6627
        %v8073 = vunpack.c.l.b16 %v6628
        %v8074 = vunpack.c.h.b16 %v6628
        %v8075 = vunpack.c.l.b16 %v6629
        %v8076 = vunpack.c.h.b16 %v6629
        %v8077 = vunpack.c.l.b16 %v6630
        %v8078 = vunpack.c.h.b16 %v6630
        %v8079 = vunpack.c.l.b16 %v6631
        %v8080 = vunpack.c.h.b16 %v6631
        %v8081 = vunpack.c.l.b16 %v6632
        %v8082 = vunpack.c.h.b16 %v6632
        %v8083 = vunpack.c.l.b16 %v6633
        %v8084 = vunpack.c.h.b16 %v6633
        %v8085 = vunpack.c.l.b16 %v6634
        %v8086 = vunpack.c.h.b16 %v6634
        %v8087 = vunpack.c.l.b16 %v6635
        %v8088 = vunpack.c.h.b16 %v6635
        %v8089 = vunpack.c.l.b16 %v6636
        %v8090 = vunpack.c.h.b16 %v6636
        %v8091 = vunpack.c.l.b16 %v6637
        %v8092 = vunpack.c.h.b16 %v6637
        %v8093 = vunpack.c.l.b16 %v6638
        %v8094 = vunpack.c.h.b16 %v6638
        %v8095 = vunpack.c.l.b16 %v6639
        %v8096 = vunpack.c.h.b16 %v6639
        %v8097 = vunpack.c.l.b16 %v6640
        %v8098 = vunpack.c.h.b16 %v6640
        %v8099 = vunpack.c.l.b16 %v6641
        %v8100 = vunpack.c.h.b16 %v6641
        %v8101 = vunpack.c.l.b16 %v6642
        %v8102 = vunpack.c.h.b16 %v6642
        %v8103 = vunpack.c.l.b16 %v6643
        %v8104 = vunpack.c.h.b16 %v6643
        %v8105 = vunpack.c.l.b16 %v6644
        %v8106 = vunpack.c.h.b16 %v6644
        %v8107 = vunpack.c.l.b16 %v6645
        %v8108 = vunpack.c.h.b16 %v6645
        %v8109 = vunpack.c.l.b16 %v6646
        %v8110 = vunpack.c.h.b16 %v6646
        %v8111 = vunpack.c.l.b16 %v6647
        %v8112 = vunpack.c.h.b16 %v6647
        %v8113 = vunpack.c.l.b16 %v6648
        %v8114 = vunpack.c.h.b16 %v6648
        %v8115 = vunpack.c.l.b16 %v6649
        %v8116 = vunpack.c.h.b16 %v6649
        %v8117 = vunpack.c.l.b16 %v6650
        %v8118 = vunpack.c.h.b16 %v6650
        %v8119 = vunpack.c.l.b16 %v6651
        %v8120 = vunpack.c.h.b16 %v6651
        %v8121 = vunpack.c.l.b16 %v6652
        %v8122 = vunpack.c.h.b16 %v6652
        %v8123 = vunpack.c.l.b16 %v6653
        %v8124 = vunpack.c.h.b16 %v6653
        %v8125 = vunpack.c.l.b16 %v6654
        %v8126 = vunpack.c.h.b16 %v6654
        %v8127 = vunpack.c.l.b16 %v6655
        %v8128 = vunpack.c.h.b16 %v6655
        %v8129 = vunpack.c.l.b16 %v6656
        %v8130 = vunpack.c.h.b16 %v6656
        %v8131 = vunpack.c.l.b16 %v6657
        %v8132 = vunpack.c.h.b16 %v6657
        %v8133 = vunpack.c.l.b16 %v6658
        %v8134 = vunpack.c.h.b16 %v6658
        %v8135 = vunpack.c.l.b16 %v6659
        %v8136 = vunpack.c.h.b16 %v6659
        %v8137 = vunpack.c.l.b16 %v6660
        %v8138 = vunpack.c.h.b16 %v6660
        %v8139 = vunpack.c.l.b16 %v6661
        %v8140 = vunpack.c.h.b16 %v6661
        %v8141 = vunpack.c.l.b16 %v6662
        %v8142 = vunpack.c.h.b16 %v6662
        %v8143 = vunpack.c.l.b16 %v6663
        %v8144 = vunpack.c.h.b16 %v6663
        %v8145 = vunpack.c.l.b16 %v6664
        %v8146 = vunpack.c.h.b16 %v6664
        %v8147 = vunpack.c.l.b16 %v6665
        %v8148 = vunpack.c.h.b16 %v6665
        %v8149 = vunpack.c.l.b16 %v6666
        %v8150 = vunpack.c.h.b16 %v6666
        %v8151 = vunpack.c.l.b16 %v6667
        %v8152 = vunpack.c.h.b16 %v6667
        %v8153 = vunpack.c.l.b16 %v6668
        %v8154 = vunpack.c.h.b16 %v6668
        %v8155 = vunpack.c.l.b16 %v6669
        %v8156 = vunpack.c.h.b16 %v6669
        %v8157 = vunpack.c.l.b16 %v6670
        %v8158 = vunpack.c.h.b16 %v6670
        %v8159 = vunpack.c.l.b16 %v6671
        %v8160 = vunpack.c.h.b16 %v6671
        %v8161 = vunpack.c.l.b16 %v6672
        %v8162 = vunpack.c.h.b16 %v6672
        %v8163 = vunpack.c.l.b16 %v6673
        %v8164 = vunpack.c.h.b16 %v6673
        %v8165 = vunpack.c.l.b16 %v6674
        %v8166 = vunpack.c.h.b16 %v6674
        %v8167 = vunpack.c.l.b16 %v6675
        %v8168 = vunpack.c.h.b16 %v6675
        %v8169 = vunpack.c.l.b16 %v6676
        %v8170 = vunpack.c.h.b16 %v6676
        %v8171 = vunpack.c.l.b16 %v6677
        %v8172 = vunpack.c.h.b16 %v6677
        %v8173 = vunpack.c.l.b16 %v6678
        %v8174 = vunpack.c.h.b16 %v6678
        %v8175 = vunpack.c.l.b16 %v6679
        %v8176 = vunpack.c.h.b16 %v6679
        %v8177 = vunpack.c.l.b16 %v6680
        %v8178 = vunpack.c.h.b16 %v6680
        %v8179 = vunpack.c.l.b16 %v6681
        %v8180 = vunpack.c.h.b16 %v6681
        %v8181 = vunpack.c.l.b16 %v6682
        %v8182 = vunpack.c.h.b16 %v6682
        %v8183 = vunpack.c.l.b16 %v6683
        %v8184 = vunpack.c.h.b16 %v6683
        %v8185 = vunpack.c.l.b16 %v6684
        %v8186 = vunpack.c.h.b16 %v6684
        %v8187 = vunpack.c.l.b16 %v6685
        %v8188 = vunpack.c.h.b16 %v6685
        %v8189 = vunpack.c.l.b16 %v6686
        %v8190 = vunpack.c.h.b16 %v6686
        %v8191 = vunpack.c.l.b16 %v6687
        %v8192 = vunpack.c.h.b16 %v6687
        %v8193 = vunpack.c.l.b16 %v6688
        %v8194 = vunpack.c.h.b16 %v6688
        %v8195 = vunpack.c.l.b16 %v6689
        %v8196 = vunpack.c.h.b16 %v6689
        %v8197 = vunpack.c.l.b16 %v6690
        %v8198 = vunpack.c.h.b16 %v6690
        %v8199 = vunpack.c.l.b16 %v6691
        %v8200 = vunpack.c.h.b16 %v6691
        %v8201 = vunpack.c.l.b16 %v6692
        %v8202 = vunpack.c.h.b16 %v6692
        %v8203 = vunpack.c.l.b16 %v6693
        %v8204 = vunpack.c.h.b16 %v6693
        %v8205 = vunpack.c.l.b16 %v6694
        %v8206 = vunpack.c.h.b16 %v6694
        %v8207 = vunpack.c.l.b16 %v6695
        %v8208 = vunpack.c.h.b16 %v6695
        %v8209 = vunpack.c.l.b16 %v6696
        %v8210 = vunpack.c.h.b16 %v6696
        %v8211 = vunpack.c.l.b16 %v6697
        %v8212 = vunpack.c.h.b16 %v6697
        %v8213 = vunpack.c.l.b16 %v6698
        %v8214 = vunpack.c.h.b16 %v6698
        %v8215 = vunpack.c.l.b16 %v6699
        %v8216 = vunpack.c.h.b16 %v6699
        %v8217 = vunpack.c.l.b16 %v6700
        %v8218 = vunpack.c.h.b16 %v6700
        %v8219 = vunpack.c.l.b16 %v6701
        %v8220 = vunpack.c.h.b16 %v6701
        %v8221 = vunpack.c.l.b16 %v6702
        %v8222 = vunpack.c.h.b16 %v6702
        %v8223 = vunpack.c.l.b16 %v6703
        %v8224 = vunpack.c.h.b16 %v6703
        %v8225 = vunpack.c.l.b16 %v6704
        %v8226 = vunpack.c.h.b16 %v6704
        %v8227 = vunpack.c.l.b16 %v6705
        %v8228 = vunpack.c.h.b16 %v6705
        %v8229 = vunpack.c.l.b16 %v6706
        %v8230 = vunpack.c.h.b16 %v6706
        %v8231 = vunpack.c.l.b16 %v6707
        %v8232 = vunpack.c.h.b16 %v6707
        %v8233 = vunpack.c.l.b16 %v6708
        %v8234 = vunpack.c.h.b16 %v6708
        %v8235 = vunpack.c.l.b16 %v6709
        %v8236 = vunpack.c.h.b16 %v6709
        %v8237 = vunpack.c.l.b16 %v6710
        %v8238 = vunpack.c.h.b16 %v6710
        %v8239 = vunpack.c.l.b16 %v6711
        %v8240 = vunpack.c.h.b16 %v6711
        %v8241 = vunpack.c.l.b16 %v6712
        %v8242 = vunpack.c.h.b16 %v6712
        %v8243 = vunpack.c.l.b16 %v6713
        %v8244 = vunpack.c.h.b16 %v6713
        %v8245 = vunpack.c.l.b16 %v6714
        %v8246 = vunpack.c.h.b16 %v6714
        %v8247 = vunpack.c.l.b16 %v6715
        %v8248 = vunpack.c.h.b16 %v6715
        %v8249 = vunpack.c.l.b16 %v6716
        %v8250 = vunpack.c.h.b16 %v6716
        %v8251 = vunpack.c.l.b16 %v6717
        %v8252 = vunpack.c.h.b16 %v6717
        %v8253 = vunpack.c.l.b16 %v6718
        %v8254 = vunpack.c.h.b16 %v6718
        %v8255 = vunpack.c.l.b16 %v6719
        %v8256 = vunpack.c.h.b16 %v6719
        %v8257 = vunpack.c.l.b16 %v6720
        %v8258 = vunpack.c.h.b16 %v6720
        %v8259 = vunpack.c.l.b16 %v6721
        %v8260 = vunpack.c.h.b16 %v6721
        %v8261 = vunpack.c.l.b16 %v6722
        %v8262 = vunpack.c.h.b16 %v6722
        %v8263 = vunpack.c.l.b16 %v6723
        %v8264 = vunpack.c.h.b16 %v6723
        %v8265 = vunpack.c.l.b16 %v6724
        %v8266 = vunpack.c.h.b16 %v6724
        %v8267 = vunpack.c.l.b16 %v6725
        %v8268 = vunpack.c.h.b16 %v6725
        %v8269 = vunpack.c.l.b16 %v6726
        %v8270 = vunpack.c.h.b16 %v6726
        %v8271 = vunpack.c.l.b16 %v6727
        %v8272 = vunpack.c.h.b16 %v6727
        %v8273 = vunpack.c.l.b16 %v6728
        %v8274 = vunpack.c.h.b16 %v6728
        %v8275 = vunpack.c.l.b16 %v6729
        %v8276 = vunpack.c.h.b16 %v6729
        %v8277 = vunpack.c.l.b16 %v6730
        %v8278 = vunpack.c.h.b16 %v6730
        %v8279 = vunpack.c.l.b16 %v6731
        %v8280 = vunpack.c.h.b16 %v6731
        %v8281 = vunpack.c.l.b16 %v6732
        %v8282 = vunpack.c.h.b16 %v6732
        %v8283 = vunpack.c.l.b16 %v6733
        %v8284 = vunpack.c.h.b16 %v6733
        %v8285 = vunpack.c.l.b16 %v6734
        %v8286 = vunpack.c.h.b16 %v6734
        %v8287 = vunpack.c.l.b16 %v6735
        %v8288 = vunpack.c.h.b16 %v6735
        %v8289 = vunpack.c.l.b16 %v6736
        %v8290 = vunpack.c.h.b16 %v6736
        %v8291 = vunpack.c.l.b16 %v6737
        %v8292 = vunpack.c.h.b16 %v6737
        %v8293 = vunpack.c.l.b16 %v6738
        %v8294 = vunpack.c.h.b16 %v6738
        %v8295 = vunpack.c.l.b16 %v6739
        %v8296 = vunpack.c.h.b16 %v6739
        %v8297 = vunpack.c.l.b16 %v6740
        %v8298 = vunpack.c.h.b16 %v6740
        %v8299 = vunpack.c.l.b16 %v6741
        %v8300 = vunpack.c.h.b16 %v6741
        %v8301 = vunpack.c.l.b16 %v6742
        %v8302 = vunpack.c.h.b16 %v6742
        %v8303 = vunpack.c.l.b16 %v6743
        %v8304 = vunpack.c.h.b16 %v6743
        %v8305 = vunpack.c.l.b16 %v6744
        %v8306 = vunpack.c.h.b16 %v6744
        %v8307 = vunpack.c.l.b16 %v6745
        %v8308 = vunpack.c.h.b16 %v6745
        %v8309 = vunpack.c.l.b16 %v6746
        %v8310 = vunpack.c.h.b16 %v6746
        %v8311 = vunpack.c.l.b16 %v6747
        %v8312 = vunpack.c.h.b16 %v6747
        %v8313 = vunpack.c.l.b16 %v6748
        %v8314 = vunpack.c.h.b16 %v6748
        %v8315 = vunpack.c.l.b16 %v6749
        %v8316 = vunpack.c.h.b16 %v6749
        %v8317 = vunpack.c.l.b16 %v6750
        %v8318 = vunpack.c.h.b16 %v6750
        %v8319 = vunpack.c.l.b16 %v6751
        %v8320 = vunpack.c.h.b16 %v6751
        %v8321 = vunpack.c.l.b16 %v6752
        %v8322 = vunpack.c.h.b16 %v6752
        %v8323 = vunpack.c.l.b16 %v6753
        %v8324 = vunpack.c.h.b16 %v6753
        %v8325 = vunpack.c.l.b16 %v6754
        %v8326 = vunpack.c.h.b16 %v6754
        %v8327 = vunpack.c.l.b16 %v6755
        %v8328 = vunpack.c.h.b16 %v6755
        %v8329 = vunpack.c.l.b16 %v6756
        %v8330 = vunpack.c.h.b16 %v6756
        %v8331 = vunpack.c.l.b16 %v6757
        %v8332 = vunpack.c.h.b16 %v6757
        %v8333 = vunpack.c.l.b16 %v6758
        %v8334 = vunpack.c.h.b16 %v6758
        %v8335 = vunpack.c.l.b16 %v6759
        %v8336 = vunpack.c.h.b16 %v6759
        %v8337 = vunpack.c.l.b16 %v6760
        %v8338 = vunpack.c.h.b16 %v6760
        %v8339 = vpack.c.b16 %v7323, %v7315
        %v8340 = vpack.c.b16 %v7324, %v7316
        %v8341 = vpack.c.b16 %v7325, %v7317
        %v8342 = vpack.c.b16 %v7326, %v7318
        %v8343 = vpack.c.b16 %v7327, %v7319
        %v8344 = vpack.c.b16 %v7328, %v7320
        %v8345 = vpack.c.b16 %v7329, %v7321
        %v8346 = vpack.c.b16 %v7330, %v7322
        %v8347 = vpack.c.b16 %v7339, %v7331
        %v8348 = vpack.c.b16 %v7340, %v7332
        %v8349 = vpack.c.b16 %v7341, %v7333
        %v8350 = vpack.c.b16 %v7342, %v7334
        %v8351 = vpack.c.b16 %v7343, %v7335
        %v8352 = vpack.c.b16 %v7344, %v7336
        %v8353 = vpack.c.b16 %v7345, %v7337
        %v8354 = vpack.c.b16 %v7346, %v7338
        %v8355 = vpack.c.b16 %v7355, %v7347
        %v8356 = vpack.c.b16 %v7356, %v7348
        %v8357 = vpack.c.b16 %v7357, %v7349
        %v8358 = vpack.c.b16 %v7358, %v7350
        %v8359 = vpack.c.b16 %v7359, %v7351
        %v8360 = vpack.c.b16 %v7360, %v7352
        %v8361 = vpack.c.b16 %v7361, %v7353
        %v8362 = vpack.c.b16 %v7362, %v7354
        %v8363 = vpack.c.b16 %v7371, %v7363
        %v8364 = vpack.c.b16 %v7372, %v7364
        %v8365 = vpack.c.b16 %v7373, %v7365
        %v8366 = vpack.c.b16 %v7374, %v7366
        %v8367 = vpack.c.b16 %v7375, %v7367
        %v8368 = vpack.c.b16 %v7376, %v7368
        %v8369 = vpack.c.b16 %v7377, %v7369
        %v8370 = vpack.c.b16 %v7378, %v7370
        %v8371 = vpack.c.b16 %v7387, %v7379
        %v8372 = vpack.c.b16 %v7388, %v7380
        %v8373 = vpack.c.b16 %v7389, %v7381
        %v8374 = vpack.c.b16 %v7390, %v7382
        %v8375 = vpack.c.b16 %v7391, %v7383
        %v8376 = vpack.c.b16 %v7392, %v7384
        %v8377 = vpack.c.b16 %v7393, %v7385
        %v8378 = vpack.c.b16 %v7394, %v7386
        %v8379 = vpack.c.b16 %v7403, %v7395
        %v8380 = vpack.c.b16 %v7404, %v7396
        %v8381 = vpack.c.b16 %v7405, %v7397
        %v8382 = vpack.c.b16 %v7406, %v7398
        %v8383 = vpack.c.b16 %v7407, %v7399
        %v8384 = vpack.c.b16 %v7408, %v7400
        %v8385 = vpack.c.b16 %v7409, %v7401
        %v8386 = vpack.c.b16 %v7410, %v7402
        %v8387 = vpack.c.b16 %v7419, %v7411
        %v8388 = vpack.c.b16 %v7420, %v7412
        %v8389 = vpack.c.b16 %v7421, %v7413
        %v8390 = vpack.c.b16 %v7422, %v7414
        %v8391 = vpack.c.b16 %v7423, %v7415
        %v8392 = vpack.c.b16 %v7424, %v7416
        %v8393 = vpack.c.b16 %v7425, %v7417
        %v8394 = vpack.c.b16 %v7426, %v7418
        %v8395 = vpack.c.b16 %v7435, %v7427
        %v8396 = vpack.c.b16 %v7436, %v7428
        %v8397 = vpack.c.b16 %v7437, %v7429
        %v8398 = vpack.c.b16 %v7438, %v7430
        %v8399 = vpack.c.b16 %v7439, %v7431
        %v8400 = vpack.c.b16 %v7440, %v7432
        %v8401 = vpack.c.b16 %v7441, %v7433
        %v8402 = vpack.c.b16 %v7442, %v7434
        %v8403 = vpack.c.b16 %v7451, %v7443
        %v8404 = vpack.c.b16 %v7452, %v7444
        %v8405 = vpack.c.b16 %v7453, %v7445
        %v8406 = vpack.c.b16 %v7454, %v7446
        %v8407 = vpack.c.b16 %v7455, %v7447
        %v8408 = vpack.c.b16 %v7456, %v7448
        %v8409 = vpack.c.b16 %v7457, %v7449
        %v8410 = vpack.c.b16 %v7458, %v7450
        %v8411 = vpack.c.b16 %v7467, %v7459
        %v8412 = vpack.c.b16 %v7468, %v7460
        %v8413 = vpack.c.b16 %v7469, %v7461
        %v8414 = vpack.c.b16 %v7470, %v7462
        %v8415 = vpack.c.b16 %v7471, %v7463
        %v8416 = vpack.c.b16 %v7472, %v7464
        %v8417 = vpack.c.b16 %v7473, %v7465
        %v8418 = vpack.c.b16 %v7474, %v7466
        %v8419 = vpack.c.b16 %v7483, %v7475
        %v8420 = vpack.c.b16 %v7484, %v7476
        %v8421 = vpack.c.b16 %v7485, %v7477
        %v8422 = vpack.c.b16 %v7486, %v7478
        %v8423 = vpack.c.b16 %v7487, %v7479
        %v8424 = vpack.c.b16 %v7488, %v7480
        %v8425 = vpack.c.b16 %v7489, %v7481
        %v8426 = vpack.c.b16 %v7490, %v7482
        %v8427 = vpack.c.b16 %v7499, %v7491
        %v8428 = vpack.c.b16 %v7500, %v7492
        %v8429 = vpack.c.b16 %v7501, %v7493
        %v8430 = vpack.c.b16 %v7502, %v7494
        %v8431 = vpack.c.b16 %v7503, %v7495
        %v8432 = vpack.c.b16 %v7504, %v7496
        %v8433 = vpack.c.b16 %v7505, %v7497
        %v8434 = vpack.c.b16 %v7506, %v7498
        %v8435 = vpack.c.b16 %v7515, %v7507
        %v8436 = vpack.c.b16 %v7516, %v7508
        %v8437 = vpack.c.b16 %v7517, %v7509
        %v8438 = vpack.c.b16 %v7518, %v7510
        %v8439 = vpack.c.b16 %v7519, %v7511
        %v8440 = vpack.c.b16 %v7520, %v7512
        %v8441 = vpack.c.b16 %v7521, %v7513
        %v8442 = vpack.c.b16 %v7522, %v7514
        %v8443 = vpack.c.b16 %v7531, %v7523
        %v8444 = vpack.c.b16 %v7532, %v7524
        %v8445 = vpack.c.b16 %v7533, %v7525
        %v8446 = vpack.c.b16 %v7534, %v7526
        %v8447 = vpack.c.b16 %v7535, %v7527
        %v8448 = vpack.c.b16 %v7536, %v7528
        %v8449 = vpack.c.b16 %v7537, %v7529
        %v8450 = vpack.c.b16 %v7538, %v7530
        %v8451 = vpack.c.b16 %v7547, %v7539
        %v8452 = vpack.c.b16 %v7548, %v7540
        %v8453 = vpack.c.b16 %v7549, %v7541
        %v8454 = vpack.c.b16 %v7550, %v7542
        %v8455 = vpack.c.b16 %v7551, %v7543
        %v8456 = vpack.c.b16 %v7552, %v7544
        %v8457 = vpack.c.b16 %v7553, %v7545
        %v8458 = vpack.c.b16 %v7554, %v7546
        %v8459 = vpack.c.b16 %v7563, %v7555
        %v8460 = vpack.c.b16 %v7564, %v7556
        %v8461 = vpack.c.b16 %v7565, %v7557
        %v8462 = vpack.c.b16 %v7566, %v7558
        %v8463 = vpack.c.b16 %v7567, %v7559
        %v8464 = vpack.c.b16 %v7568, %v7560
        %v8465 = vpack.c.b16 %v7569, %v7561
        %v8466 = vpack.c.b16 %v7570, %v7562
        %v8467 = vpack.c.b16 %v7579, %v7571
        %v8468 = vpack.c.b16 %v7580, %v7572
        %v8469 = vpack.c.b16 %v7581, %v7573
        %v8470 = vpack.c.b16 %v7582, %v7574
        %v8471 = vpack.c.b16 %v7583, %v7575
        %v8472 = vpack.c.b16 %v7584, %v7576
        %v8473 = vpack.c.b16 %v7585, %v7577
        %v8474 = vpack.c.b16 %v7586, %v7578
        %v8475 = vpack.c.b16 %v7595, %v7587
        %v8476 = vpack.c.b16 %v7596, %v7588
        %v8477 = vpack.c.b16 %v7597, %v7589
        %v8478 = vpack.c.b16 %v7598, %v7590
        %v8479 = vpack.c.b16 %v7599, %v7591
        %v8480 = vpack.c.b16 %v7600, %v7592
        %v8481 = vpack.c.b16 %v7601, %v7593
        %v8482 = vpack.c.b16 %v7602, %v7594
        %v8483 = vpack.c.b16 %v7611, %v7603
        %v8484 = vpack.c.b16 %v7612, %v7604
        %v8485 = vpack.c.b16 %v7613, %v7605
        %v8486 = vpack.c.b16 %v7614, %v7606
        %v8487 = vpack.c.b16 %v7615, %v7607
        %v8488 = vpack.c.b16 %v7616, %v7608
        %v8489 = vpack.c.b16 %v7617, %v7609
        %v8490 = vpack.c.b16 %v7618, %v7610
        %v8491 = vpack.c.b16 %v7627, %v7619
        %v8492 = vpack.c.b16 %v7628, %v7620
        %v8493 = vpack.c.b16 %v7629, %v7621
        %v8494 = vpack.c.b16 %v7630, %v7622
        %v8495 = vpack.c.b16 %v7631, %v7623
        %v8496 = vpack.c.b16 %v7632, %v7624
        %v8497 = vpack.c.b16 %v7633, %v7625
        %v8498 = vpack.c.b16 %v7634, %v7626
        %v8499 = vpack.c.b16 %v7643, %v7635
        %v8500 = vpack.c.b16 %v7644, %v7636
        %v8501 = vpack.c.b16 %v7645, %v7637
        %v8502 = vpack.c.b16 %v7646, %v7638
        %v8503 = vpack.c.b16 %v7647, %v7639
        %v8504 = vpack.c.b16 %v7648, %v7640
        %v8505 = vpack.c.b16 %v7649, %v7641
        %v8506 = vpack.c.b16 %v7650, %v7642
        %v8507 = vpack.c.b16 %v7659, %v7651
        %v8508 = vpack.c.b16 %v7660, %v7652
        %v8509 = vpack.c.b16 %v7661, %v7653
        %v8510 = vpack.c.b16 %v7662, %v7654
        %v8511 = vpack.c.b16 %v7663, %v7655
        %v8512 = vpack.c.b16 %v7664, %v7656
        %v8513 = vpack.c.b16 %v7665, %v7657
        %v8514 = vpack.c.b16 %v7666, %v7658
        %v8515 = vpack.c.b16 %v7675, %v7667
        %v8516 = vpack.c.b16 %v7676, %v7668
        %v8517 = vpack.c.b16 %v7677, %v7669
        %v8518 = vpack.c.b16 %v7678, %v7670
        %v8519 = vpack.c.b16 %v7679, %v7671
        %v8520 = vpack.c.b16 %v7680, %v7672
        %v8521 = vpack.c.b16 %v7681, %v7673
        %v8522 = vpack.c.b16 %v7682, %v7674
        %v8523 = vpack.c.b16 %v7691, %v7683
        %v8524 = vpack.c.b16 %v7692, %v7684
        %v8525 = vpack.c.b16 %v7693, %v7685
        %v8526 = vpack.c.b16 %v7694, %v7686
        %v8527 = vpack.c.b16 %v7695, %v7687
        %v8528 = vpack.c.b16 %v7696, %v7688
        %v8529 = vpack.c.b16 %v7697, %v7689
        %v8530 = vpack.c.b16 %v7698, %v7690
        %v8531 = vpack.c.b16 %v7707, %v7699
        %v8532 = vpack.c.b16 %v7708, %v7700
        %v8533 = vpack.c.b16 %v7709, %v7701
        %v8534 = vpack.c.b16 %v7710, %v7702
        %v8535 = vpack.c.b16 %v7711, %v7703
        %v8536 = vpack.c.b16 %v7712, %v7704
        %v8537 = vpack.c.b16 %v7713, %v7705
        %v8538 = vpack.c.b16 %v7714, %v7706
        %v8539 = vpack.c.b16 %v7723, %v7715
        %v8540 = vpack.c.b16 %v7724, %v7716
        %v8541 = vpack.c.b16 %v7725, %v7717
        %v8542 = vpack.c.b16 %v7726, %v7718
        %v8543 = vpack.c.b16 %v7727, %v7719
        %v8544 = vpack.c.b16 %v7728, %v7720
        %v8545 = vpack.c.b16 %v7729, %v7721
        %v8546 = vpack.c.b16 %v7730, %v7722
        %v8547 = vpack.c.b16 %v7739, %v7731
        %v8548 = vpack.c.b16 %v7740, %v7732
        %v8549 = vpack.c.b16 %v7741, %v7733
        %v8550 = vpack.c.b16 %v7742, %v7734
        %v8551 = vpack.c.b16 %v7743, %v7735
        %v8552 = vpack.c.b16 %v7744, %v7736
        %v8553 = vpack.c.b16 %v7745, %v7737
        %v8554 = vpack.c.b16 %v7746, %v7738
        %v8555 = vpack.c.b16 %v7755, %v7747
        %v8556 = vpack.c.b16 %v7756, %v7748
        %v8557 = vpack.c.b16 %v7757, %v7749
        %v8558 = vpack.c.b16 %v7758, %v7750
        %v8559 = vpack.c.b16 %v7759, %v7751
        %v8560 = vpack.c.b16 %v7760, %v7752
        %v8561 = vpack.c.b16 %v7761, %v7753
        %v8562 = vpack.c.b16 %v7762, %v7754
        %v8563 = vpack.c.b16 %v7771, %v7763
        %v8564 = vpack.c.b16 %v7772, %v7764
        %v8565 = vpack.c.b16 %v7773, %v7765
        %v8566 = vpack.c.b16 %v7774, %v7766
        %v8567 = vpack.c.b16 %v7775, %v7767
        %v8568 = vpack.c.b16 %v7776, %v7768
        %v8569 = vpack.c.b16 %v7777, %v7769
        %v8570 = vpack.c.b16 %v7778, %v7770
        %v8571 = vpack.c.b16 %v7787, %v7779
        %v8572 = vpack.c.b16 %v7788, %v7780
        %v8573 = vpack.c.b16 %v7789, %v7781
        %v8574 = vpack.c.b16 %v7790, %v7782
        %v8575 = vpack.c.b16 %v7791, %v7783
        %v8576 = vpack.c.b16 %v7792, %v7784
        %v8577 = vpack.c.b16 %v7793, %v7785
        %v8578 = vpack.c.b16 %v7794, %v7786
        %v8579 = vpack.c.b16 %v7803, %v7795
        %v8580 = vpack.c.b16 %v7804, %v7796
        %v8581 = vpack.c.b16 %v7805, %v7797
        %v8582 = vpack.c.b16 %v7806, %v7798
        %v8583 = vpack.c.b16 %v7807, %v7799
        %v8584 = vpack.c.b16 %v7808, %v7800
        %v8585 = vpack.c.b16 %v7809, %v7801
        %v8586 = vpack.c.b16 %v7810, %v7802
        %v8587 = vpack.c.b16 %v7819, %v7811
        %v8588 = vpack.c.b16 %v7820, %v7812
        %v8589 = vpack.c.b16 %v7821, %v7813
        %v8590 = vpack.c.b16 %v7822, %v7814
        %v8591 = vpack.c.b16 %v7823, %v7815
        %v8592 = vpack.c.b16 %v7824, %v7816
        %v8593 = vpack.c.b16 %v7825, %v7817
        %v8594 = vpack.c.b16 %v7826, %v7818
        %v8595 = vpack.c.b16 %v7835, %v7827
        %v8596 = vpack.c.b16 %v7836, %v7828
        %v8597 = vpack.c.b16 %v7837, %v7829
        %v8598 = vpack.c.b16 %v7838, %v7830
        %v8599 = vpack.c.b16 %v7839, %v7831
        %v8600 = vpack.c.b16 %v7840, %v7832
        %v8601 = vpack.c.b16 %v7841, %v7833
        %v8602 = vpack.c.b16 %v7842, %v7834
        %v8603 = vpack.c.b16 %v7851, %v7843
        %v8604 = vpack.c.b16 %v7852, %v7844
        %v8605 = vpack.c.b16 %v7853, %v7845
        %v8606 = vpack.c.b16 %v7854, %v7846
        %v8607 = vpack.c.b16 %v7855, %v7847
        %v8608 = vpack.c.b16 %v7856, %v7848
        %v8609 = vpack.c.b16 %v7857, %v7849
        %v8610 = vpack.c.b16 %v7858, %v7850
        %v8611 = vpack.c.b16 %v7867, %v7859
        %v8612 = vpack.c.b16 %v7868, %v7860
        %v8613 = vpack.c.b16 %v7869, %v7861
        %v8614 = vpack.c.b16 %v7870, %v7862
        %v8615 = vpack.c.b16 %v7871, %v7863
        %v8616 = vpack.c.b16 %v7872, %v7864
        %v8617 = vpack.c.b16 %v7873, %v7865
        %v8618 = vpack.c.b16 %v7874, %v7866
        %v8619 = vpack.c.b16 %v7883, %v7875
        %v8620 = vpack.c.b16 %v7884, %v7876
        %v8621 = vpack.c.b16 %v7885, %v7877
        %v8622 = vpack.c.b16 %v7886, %v7878
        %v8623 = vpack.c.b16 %v7887, %v7879
        %v8624 = vpack.c.b16 %v7888, %v7880
        %v8625 = vpack.c.b16 %v7889, %v7881
        %v8626 = vpack.c.b16 %v7890, %v7882
        %v8627 = vpack.c.b16 %v7899, %v7891
        %v8628 = vpack.c.b16 %v7900, %v7892
        %v8629 = vpack.c.b16 %v7901, %v7893
        %v8630 = vpack.c.b16 %v7902, %v7894
        %v8631 = vpack.c.b16 %v7903, %v7895
        %v8632 = vpack.c.b16 %v7904, %v7896
        %v8633 = vpack.c.b16 %v7905, %v7897
        %v8634 = vpack.c.b16 %v7906, %v7898
        %v8635 = vpack.c.b16 %v7915, %v7907
        %v8636 = vpack.c.b16 %v7916, %v7908
        %v8637 = vpack.c.b16 %v7917, %v7909
        %v8638 = vpack.c.b16 %v7918, %v7910
        %v8639 = vpack.c.b16 %v7919, %v7911
        %v8640 = vpack.c.b16 %v7920, %v7912
        %v8641 = vpack.c.b16 %v7921, %v7913
        %v8642 = vpack.c.b16 %v7922, %v7914
        %v8643 = vpack.c.b16 %v7931, %v7923
        %v8644 = vpack.c.b16 %v7932, %v7924
        %v8645 = vpack.c.b16 %v7933, %v7925
        %v8646 = vpack.c.b16 %v7934, %v7926
        %v8647 = vpack.c.b16 %v7935, %v7927
        %v8648 = vpack.c.b16 %v7936, %v7928
        %v8649 = vpack.c.b16 %v7937, %v7929
        %v8650 = vpack.c.b16 %v7938, %v7930
        %v8651 = vpack.c.b16 %v7947, %v7939
        %v8652 = vpack.c.b16 %v7948, %v7940
        %v8653 = vpack.c.b16 %v7949, %v7941
        %v8654 = vpack.c.b16 %v7950, %v7942
        %v8655 = vpack.c.b16 %v7951, %v7943
        %v8656 = vpack.c.b16 %v7952, %v7944
        %v8657 = vpack.c.b16 %v7953, %v7945
        %v8658 = vpack.c.b16 %v7954, %v7946
        %v8659 = vpack.c.b16 %v7963, %v7955
        %v8660 = vpack.c.b16 %v7964, %v7956
        %v8661 = vpack.c.b16 %v7965, %v7957
        %v8662 = vpack.c.b16 %v7966, %v7958
        %v8663 = vpack.c.b16 %v7967, %v7959
        %v8664 = vpack.c.b16 %v7968, %v7960
        %v8665 = vpack.c.b16 %v7969, %v7961
        %v8666 = vpack.c.b16 %v7970, %v7962
        %v8667 = vpack.c.b16 %v7979, %v7971
        %v8668 = vpack.c.b16 %v7980, %v7972
        %v8669 = vpack.c.b16 %v7981, %v7973
        %v8670 = vpack.c.b16 %v7982, %v7974
        %v8671 = vpack.c.b16 %v7983, %v7975
        %v8672 = vpack.c.b16 %v7984, %v7976
        %v8673 = vpack.c.b16 %v7985, %v7977
        %v8674 = vpack.c.b16 %v7986, %v7978
        %v8675 = vpack.c.b16 %v7995, %v7987
        %v8676 = vpack.c.b16 %v7996, %v7988
        %v8677 = vpack.c.b16 %v7997, %v7989
        %v8678 = vpack.c.b16 %v7998, %v7990
        %v8679 = vpack.c.b16 %v7999, %v7991
        %v8680 = vpack.c.b16 %v8000, %v7992
        %v8681 = vpack.c.b16 %v8001, %v7993
        %v8682 = vpack.c.b16 %v8002, %v7994
        %v8683 = vpack.c.b16 %v8011, %v8003
        %v8684 = vpack.c.b16 %v8012, %v8004
        %v8685 = vpack.c.b16 %v8013, %v8005
        %v8686 = vpack.c.b16 %v8014, %v8006
        %v8687 = vpack.c.b16 %v8015, %v8007
        %v8688 = vpack.c.b16 %v8016, %v8008
        %v8689 = vpack.c.b16 %v8017, %v8009
        %v8690 = vpack.c.b16 %v8018, %v8010
        %v8691 = vpack.c.b16 %v8027, %v8019
        %v8692 = vpack.c.b16 %v8028, %v8020
        %v8693 = vpack.c.b16 %v8029, %v8021
        %v8694 = vpack.c.b16 %v8030, %v8022
        %v8695 = vpack.c.b16 %v8031, %v8023
        %v8696 = vpack.c.b16 %v8032, %v8024
        %v8697 = vpack.c.b16 %v8033, %v8025
        %v8698 = vpack.c.b16 %v8034, %v8026
        %v8699 = vpack.c.b16 %v8043, %v8035
        %v8700 = vpack.c.b16 %v8044, %v8036
        %v8701 = vpack.c.b16 %v8045, %v8037
        %v8702 = vpack.c.b16 %v8046, %v8038
        %v8703 = vpack.c.b16 %v8047, %v8039
        %v8704 = vpack.c.b16 %v8048, %v8040
        %v8705 = vpack.c.b16 %v8049, %v8041
        %v8706 = vpack.c.b16 %v8050, %v8042
        %v8707 = vpack.c.b16 %v8059, %v8051
        %v8708 = vpack.c.b16 %v8060, %v8052
        %v8709 = vpack.c.b16 %v8061, %v8053
        %v8710 = vpack.c.b16 %v8062, %v8054
        %v8711 = vpack.c.b16 %v8063, %v8055
        %v8712 = vpack.c.b16 %v8064, %v8056
        %v8713 = vpack.c.b16 %v8065, %v8057
        %v8714 = vpack.c.b16 %v8066, %v8058
        %v8715 = vpack.c.b16 %v8075, %v8067
        %v8716 = vpack.c.b16 %v8076, %v8068
        %v8717 = vpack.c.b16 %v8077, %v8069
        %v8718 = vpack.c.b16 %v8078, %v8070
        %v8719 = vpack.c.b16 %v8079, %v8071
        %v8720 = vpack.c.b16 %v8080, %v8072
        %v8721 = vpack.c.b16 %v8081, %v8073
        %v8722 = vpack.c.b16 %v8082, %v8074
        %v8723 = vpack.c.b16 %v8091, %v8083
        %v8724 = vpack.c.b16 %v8092, %v8084
        %v8725 = vpack.c.b16 %v8093, %v8085
        %v8726 = vpack.c.b16 %v8094, %v8086
        %v8727 = vpack.c.b16 %v8095, %v8087
        %v8728 = vpack.c.b16 %v8096, %v8088
        %v8729 = vpack.c.b16 %v8097, %v8089
        %v8730 = vpack.c.b16 %v8098, %v8090
        %v8731 = vpack.c.b16 %v8107, %v8099
        %v8732 = vpack.c.b16 %v8108, %v8100
        %v8733 = vpack.c.b16 %v8109, %v8101
        %v8734 = vpack.c.b16 %v8110, %v8102
        %v8735 = vpack.c.b16 %v8111, %v8103
        %v8736 = vpack.c.b16 %v8112, %v8104
        %v8737 = vpack.c.b16 %v8113, %v8105
        %v8738 = vpack.c.b16 %v8114, %v8106
        %v8739 = vpack.c.b16 %v8123, %v8115
        %v8740 = vpack.c.b16 %v8124, %v8116
        %v8741 = vpack.c.b16 %v8125, %v8117
        %v8742 = vpack.c.b16 %v8126, %v8118
        %v8743 = vpack.c.b16 %v8127, %v8119
        %v8744 = vpack.c.b16 %v8128, %v8120
        %v8745 = vpack.c.b16 %v8129, %v8121
        %v8746 = vpack.c.b16 %v8130, %v8122
        %v8747 = vpack.c.b16 %v8139, %v8131
        %v8748 = vpack.c.b16 %v8140, %v8132
        %v8749 = vpack.c.b16 %v8141, %v8133
        %v8750 = vpack.c.b16 %v8142, %v8134
        %v8751 = vpack.c.b16 %v8143, %v8135
        %v8752 = vpack.c.b16 %v8144, %v8136
        %v8753 = vpack.c.b16 %v8145, %v8137
        %v8754 = vpack.c.b16 %v8146, %v8138
        %v8755 = vpack.c.b16 %v8155, %v8147
        %v8756 = vpack.c.b16 %v8156, %v8148
        %v8757 = vpack.c.b16 %v8157, %v8149
        %v8758 = vpack.c.b16 %v8158, %v8150
        %v8759 = vpack.c.b16 %v8159, %v8151
        %v8760 = vpack.c.b16 %v8160, %v8152
        %v8761 = vpack.c.b16 %v8161, %v8153
        %v8762 = vpack.c.b16 %v8162, %v8154
        %v8763 = vpack.c.b16 %v8171, %v8163
        %v8764 = vpack.c.b16 %v8172, %v8164
        %v8765 = vpack.c.b16 %v8173, %v8165
        %v8766 = vpack.c.b16 %v8174, %v8166
        %v8767 = vpack.c.b16 %v8175, %v8167
        %v8768 = vpack.c.b16 %v8176, %v8168
        %v8769 = vpack.c.b16 %v8177, %v8169
        %v8770 = vpack.c.b16 %v8178, %v8170
        %v8771 = vpack.c.b16 %v8187, %v8179
        %v8772 = vpack.c.b16 %v8188, %v8180
        %v8773 = vpack.c.b16 %v8189, %v8181
        %v8774 = vpack.c.b16 %v8190, %v8182
        %v8775 = vpack.c.b16 %v8191, %v8183
        %v8776 = vpack.c.b16 %v8192, %v8184
        %v8777 = vpack.c.b16 %v8193, %v8185
        %v8778 = vpack.c.b16 %v8194, %v8186
        %v8779 = vpack.c.b16 %v8203, %v8195
        %v8780 = vpack.c.b16 %v8204, %v8196
        %v8781 = vpack.c.b16 %v8205, %v8197
        %v8782 = vpack.c.b16 %v8206, %v8198
        %v8783 = vpack.c.b16 %v8207, %v8199
        %v8784 = vpack.c.b16 %v8208, %v8200
        %v8785 = vpack.c.b16 %v8209, %v8201
        %v8786 = vpack.c.b16 %v8210, %v8202
        %v8787 = vpack.c.b16 %v8219, %v8211
        %v8788 = vpack.c.b16 %v8220, %v8212
        %v8789 = vpack.c.b16 %v8221, %v8213
        %v8790 = vpack.c.b16 %v8222, %v8214
        %v8791 = vpack.c.b16 %v8223, %v8215
        %v8792 = vpack.c.b16 %v8224, %v8216
        %v8793 = vpack.c.b16 %v8225, %v8217
        %v8794 = vpack.c.b16 %v8226, %v8218
        %v8795 = vpack.c.b16 %v8235, %v8227
        %v8796 = vpack.c.b16 %v8236, %v8228
        %v8797 = vpack.c.b16 %v8237, %v8229
        %v8798 = vpack.c.b16 %v8238, %v8230
        %v8799 = vpack.c.b16 %v8239, %v8231
        %v8800 = vpack.c.b16 %v8240, %v8232
        %v8801 = vpack.c.b16 %v8241, %v8233
        %v8802 = vpack.c.b16 %v8242, %v8234
        %v8803 = vpack.c.b16 %v8251, %v8243
        %v8804 = vpack.c.b16 %v8252, %v8244
        %v8805 = vpack.c.b16 %v8253, %v8245
        %v8806 = vpack.c.b16 %v8254, %v8246
        %v8807 = vpack.c.b16 %v8255, %v8247
        %v8808 = vpack.c.b16 %v8256, %v8248
        %v8809 = vpack.c.b16 %v8257, %v8249
        %v8810 = vpack.c.b16 %v8258, %v8250
        %v8811 = vpack.c.b16 %v8267, %v8259
        %v8812 = vpack.c.b16 %v8268, %v8260
        %v8813 = vpack.c.b16 %v8269, %v8261
        %v8814 = vpack.c.b16 %v8270, %v8262
        %v8815 = vpack.c.b16 %v8271, %v8263
        %v8816 = vpack.c.b16 %v8272, %v8264
        %v8817 = vpack.c.b16 %v8273, %v8265
        %v8818 = vpack.c.b16 %v8274, %v8266
        %v8819 = vpack.c.b16 %v8283, %v8275
        %v8820 = vpack.c.b16 %v8284, %v8276
        %v8821 = vpack.c.b16 %v8285, %v8277
        %v8822 = vpack.c.b16 %v8286, %v8278
        %v8823 = vpack.c.b16 %v8287, %v8279
        %v8824 = vpack.c.b16 %v8288, %v8280
        %v8825 = vpack.c.b16 %v8289, %v8281
        %v8826 = vpack.c.b16 %v8290, %v8282
        %v8827 = vpack.c.b16 %v8299, %v8291
        %v8828 = vpack.c.b16 %v8300, %v8292
        %v8829 = vpack.c.b16 %v8301, %v8293
        %v8830 = vpack.c.b16 %v8302, %v8294
        %v8831 = vpack.c.b16 %v8303, %v8295
        %v8832 = vpack.c.b16 %v8304, %v8296
        %v8833 = vpack.c.b16 %v8305, %v8297
        %v8834 = vpack.c.b16 %v8306, %v8298
        %v8835 = vpack.c.b16 %v8315, %v8307
        %v8836 = vpack.c.b16 %v8316, %v8308
        %v8837 = vpack.c.b16 %v8317, %v8309
        %v8838 = vpack.c.b16 %v8318, %v8310
        %v8839 = vpack.c.b16 %v8319, %v8311
        %v8840 = vpack.c.b16 %v8320, %v8312
        %v8841 = vpack.c.b16 %v8321, %v8313
        %v8842 = vpack.c.b16 %v8322, %v8314
        %v8843 = vpack.c.b16 %v8331, %v8323
        %v8844 = vpack.c.b16 %v8332, %v8324
        %v8845 = vpack.c.b16 %v8333, %v8325
        %v8846 = vpack.c.b16 %v8334, %v8326
        %v8847 = vpack.c.b16 %v8335, %v8327
        %v8848 = vpack.c.b16 %v8336, %v8328
        %v8849 = vpack.c.b16 %v8337, %v8329
        %v8850 = vpack.c.b16 %v8338, %v8330
        %9363 = vmatprep.subr.bf16.mxu0 %v8340
        %9364 = vmatpush1.bf16.msra.mxu0 %v8339
        %9365 = vmatprep.subr.bf16.mxu0 %v8348
        %9366 = vmatpush1.bf16.msra.mxu0 %v8347
        %9367 = vmatprep.subr.bf16.mxu0 %v8356
        %9368 = vmatpush1.bf16.msra.mxu0 %v8355
        %9369 = vmatprep.subr.bf16.mxu0 %v8364
        %9370 = vmatpush1.bf16.msra.mxu0 %v8363
        %9371 = vmatprep.subr.bf16.mxu0 %v8372
        %9372 = vmatpush1.bf16.msra.mxu0 %v8371
        %9373 = vmatprep.subr.bf16.mxu0 %v8380
        %9374 = vmatpush1.bf16.msra.mxu0 %v8379
        %9375 = vmatprep.subr.bf16.mxu0 %v8388
        %9376 = vmatpush1.bf16.msra.mxu0 %v8387
        %9377 = vmatprep.subr.bf16.mxu0 %v8396
        %9378 = vmatpush1.bf16.msra.mxu0 %v8395
        %9379 = vmatprep.subr.bf16.mxu0 %v8404
        %9380 = vmatpush1.bf16.msra.mxu0 %v8403
        %9381 = vmatprep.subr.bf16.mxu0 %v8412
        %9382 = vmatpush1.bf16.msra.mxu0 %v8411
        %9383 = vmatprep.subr.bf16.mxu0 %v8420
        %9384 = vmatpush1.bf16.msra.mxu0 %v8419
        %9385 = vmatprep.subr.bf16.mxu0 %v8428
        %9386 = vmatpush1.bf16.msra.mxu0 %v8427
        %9387 = vmatprep.subr.bf16.mxu0 %v8436
        %9388 = vmatpush1.bf16.msra.mxu0 %v8435
        %9389 = vmatprep.subr.bf16.mxu0 %v8444
        %9390 = vmatpush1.bf16.msra.mxu0 %v8443
        %9391 = vmatprep.subr.bf16.mxu0 %v8452
        %9392 = vmatpush1.bf16.msra.mxu0 %v8451
        %9393 = vmatprep.subr.bf16.mxu0 %v8460
        %9394 = vmatpush1.bf16.msra.mxu0 %v8459
        %9395 = vmatprep.mubr.bf16.mxu0 %v6242
        %9396 = vmatmul.mubr.bf16.gmra.mrb[0].mxu0 %v6241
        %v9397 = vpop.f32.mrb[0].mxu0
        %v9398 = vadd.f32 %v6766, %v9397
        %v9399 = vpop.f32.mrb[0].mxu0
        %v9400 = vadd.f32 %v6770, %v9399
        %v9401 = vpop.f32.mrb[0].mxu0
        %v9402 = vpop.f32.mrb[0].mxu0
        %9403 = vdwg.mxu0
        %9404 = vmatprep.subr.bf16.mxu0 %v8468
        %9405 = vmatpush1.bf16.msra.mxu0 %v8467
        %9406 = vmatprep.subr.bf16.mxu0 %v8476
        %9407 = vmatpush1.bf16.msra.mxu0 %v8475
        %9408 = vmatprep.subr.bf16.mxu0 %v8484
        %9409 = vmatpush1.bf16.msra.mxu0 %v8483
        %9410 = vmatprep.subr.bf16.mxu0 %v8492
        %9411 = vmatpush1.bf16.msra.mxu0 %v8491
        %9412 = vmatprep.subr.bf16.mxu0 %v8500
        %9413 = vmatpush1.bf16.msra.mxu0 %v8499
        %9414 = vmatprep.subr.bf16.mxu0 %v8508
        %9415 = vmatpush1.bf16.msra.mxu0 %v8507
        %9416 = vmatprep.subr.bf16.mxu0 %v8516
        %9417 = vmatpush1.bf16.msra.mxu0 %v8515
        %9418 = vmatprep.subr.bf16.mxu0 %v8524
        %9419 = vmatpush1.bf16.msra.mxu0 %v8523
        %9420 = vmatprep.subr.bf16.mxu0 %v8532
        %9421 = vmatpush1.bf16.msra.mxu0 %v8531
        %9422 = vmatprep.subr.bf16.mxu0 %v8540
        %9423 = vmatpush1.bf16.msra.mxu0 %v8539
        %9424 = vmatprep.subr.bf16.mxu0 %v8548
        %9425 = vmatpush1.bf16.msra.mxu0 %v8547
        %9426 = vmatprep.subr.bf16.mxu0 %v8556
        %9427 = vmatpush1.bf16.msra.mxu0 %v8555
        %9428 = vmatprep.subr.bf16.mxu0 %v8564
        %9429 = vmatpush1.bf16.msra.mxu0 %v8563
        %9430 = vmatprep.subr.bf16.mxu0 %v8572
        %9431 = vmatpush1.bf16.msra.mxu0 %v8571
        %9432 = vmatprep.subr.bf16.mxu0 %v8580
        %9433 = vmatpush1.bf16.msra.mxu0 %v8579
        %9434 = vmatprep.subr.bf16.mxu0 %v8588
        %9435 = vmatpush1.bf16.msra.mxu0 %v8587
        %9436 = vmatprep.mubr.bf16.mxu0 %v6244
        %9437 = vmatmul.mubr.bf16.gmra.mrb[0].mxu0 %v6243
        %v9438 = vpop.f32.mrb[0].mxu0
        %v9439 = vadd.f32 %v9398, %v9438
        %v9440 = vpop.f32.mrb[0].mxu0
        %v9441 = vadd.f32 %v9400, %v9440
        %v9442 = vpop.f32.mrb[0].mxu0
        %v9443 = vpop.f32.mrb[0].mxu0
        %9444 = vdwg.mxu0
        %9445 = vmatprep.subr.bf16.mxu0 %v8596
        %9446 = vmatpush1.bf16.msra.mxu0 %v8595
        %9447 = vmatprep.subr.bf16.mxu0 %v8604
        %9448 = vmatpush1.bf16.msra.mxu0 %v8603
        %9449 = vmatprep.subr.bf16.mxu0 %v8612
        %9450 = vmatpush1.bf16.msra.mxu0 %v8611
        %9451 = vmatprep.subr.bf16.mxu0 %v8620
        %9452 = vmatpush1.bf16.msra.mxu0 %v8619
        %9453 = vmatprep.subr.bf16.mxu0 %v8628
        %9454 = vmatpush1.bf16.msra.mxu0 %v8627
        %9455 = vmatprep.subr.bf16.mxu0 %v8636
        %9456 = vmatpush1.bf16.msra.mxu0 %v8635
        %9457 = vmatprep.subr.bf16.mxu0 %v8644
        %9458 = vmatpush1.bf16.msra.mxu0 %v8643
        %9459 = vmatprep.subr.bf16.mxu0 %v8652
        %9460 = vmatpush1.bf16.msra.mxu0 %v8651
        %9461 = vmatprep.subr.bf16.mxu0 %v8660
        %9462 = vmatpush1.bf16.msra.mxu0 %v8659
        %9463 = vmatprep.subr.bf16.mxu0 %v8668
        %9464 = vmatpush1.bf16.msra.mxu0 %v8667
        %9465 = vmatprep.subr.bf16.mxu0 %v8676
        %9466 = vmatpush1.bf16.msra.mxu0 %v8675
        %9467 = vmatprep.subr.bf16.mxu0 %v8684
        %9468 = vmatpush1.bf16.msra.mxu0 %v8683
        %9469 = vmatprep.subr.bf16.mxu0 %v8692
        %9470 = vmatpush1.bf16.msra.mxu0 %v8691
        %9471 = vmatprep.subr.bf16.mxu0 %v8700
        %9472 = vmatpush1.bf16.msra.mxu0 %v8699
        %9473 = vmatprep.subr.bf16.mxu0 %v8708
        %9474 = vmatpush1.bf16.msra.mxu0 %v8707
        %9475 = vmatprep.subr.bf16.mxu0 %v8716
        %9476 = vmatpush1.bf16.msra.mxu0 %v8715
        %9477 = vmatprep.mubr.bf16.mxu0 %v6246
        %9478 = vmatmul.mubr.bf16.gmra.mrb[0].mxu0 %v6245
        %v9479 = vpop.f32.mrb[0].mxu0
        %v9480 = vadd.f32 %v9439, %v9479
        %v9481 = vpop.f32.mrb[0].mxu0
        %v9482 = vadd.f32 %v9441, %v9481
        %v9483 = vpop.f32.mrb[0].mxu0
        %v9484 = vpop.f32.mrb[0].mxu0
        %9485 = vdwg.mxu0
        %9486 = vmatprep.subr.bf16.mxu0 %v8724
        %9487 = vmatpush1.bf16.msra.mxu0 %v8723
        %9488 = vmatprep.subr.bf16.mxu0 %v8732
        %9489 = vmatpush1.bf16.msra.mxu0 %v8731
        %9490 = vmatprep.subr.bf16.mxu0 %v8740
        %9491 = vmatpush1.bf16.msra.mxu0 %v8739
        %9492 = vmatprep.subr.bf16.mxu0 %v8748
        %9493 = vmatpush1.bf16.msra.mxu0 %v8747
        %9494 = vmatprep.subr.bf16.mxu0 %v8756
        %9495 = vmatpush1.bf16.msra.mxu0 %v8755
        %9496 = vmatprep.subr.bf16.mxu0 %v8764
        %9497 = vmatpush1.bf16.msra.mxu0 %v8763
        %9498 = vmatprep.subr.bf16.mxu0 %v8772
        %9499 = vmatpush1.bf16.msra.mxu0 %v8771
        %9500 = vmatprep.subr.bf16.mxu0 %v8780
        %9501 = vmatpush1.bf16.msra.mxu0 %v8779
        %9502 = vmatprep.subr.bf16.mxu0 %v8788
        %9503 = vmatpush1.bf16.msra.mxu0 %v8787
        %9504 = vmatprep.subr.bf16.mxu0 %v8796
        %9505 = vmatpush1.bf16.msra.mxu0 %v8795
        %9506 = vmatprep.subr.bf16.mxu0 %v8804
        %9507 = vmatpush1.bf16.msra.mxu0 %v8803
        %9508 = vmatprep.subr.bf16.mxu0 %v8812
        %9509 = vmatpush1.bf16.msra.mxu0 %v8811
        %9510 = vmatprep.subr.bf16.mxu0 %v8820
        %9511 = vmatpush1.bf16.msra.mxu0 %v8819
        %9512 = vmatprep.subr.bf16.mxu0 %v8828
        %9513 = vmatpush1.bf16.msra.mxu0 %v8827
        %9514 = vmatprep.subr.bf16.mxu0 %v8836
        %9515 = vmatpush1.bf16.msra.mxu0 %v8835
        %9516 = vmatprep.subr.bf16.mxu0 %v8844
        %9517 = vmatpush1.bf16.msra.mxu0 %v8843
        %9518 = vmatprep.mubr.bf16.mxu0 %v6248
        %9519 = vmatmul.mubr.bf16.gmra.mrb[0].mxu0 %v6247
        %v9520 = vpop.f32.mrb[0].mxu0
        %v9521 = vadd.f32 %v9480, %v9520
        %v9522 = vpop.f32.mrb[0].mxu0
        %v9523 = vadd.f32 %v9482, %v9522
        %v9524 = vpop.f32.mrb[0].mxu0
        %v9525 = vpop.f32.mrb[0].mxu0
        %9526 = vdwg.mxu0
        %9527 = vmatprep.subr.bf16.mxu0 %v8342
        %9528 = vmatpush1.bf16.msra.mxu0 %v8341
        %9529 = vmatprep.subr.bf16.mxu0 %v8350
        %9530 = vmatpush1.bf16.msra.mxu0 %v8349
        %9531 = vmatprep.subr.bf16.mxu0 %v8358
        %9532 = vmatpush1.bf16.msra.mxu0 %v8357
        %9533 = vmatprep.subr.bf16.mxu0 %v8366
        %9534 = vmatpush1.bf16.msra.mxu0 %v8365
        %9535 = vmatprep.subr.bf16.mxu0 %v8374
        %9536 = vmatpush1.bf16.msra.mxu0 %v8373
        %9537 = vmatprep.subr.bf16.mxu0 %v8382
        %9538 = vmatpush1.bf16.msra.mxu0 %v8381
        %9539 = vmatprep.subr.bf16.mxu0 %v8390
        %9540 = vmatpush1.bf16.msra.mxu0 %v8389
        %9541 = vmatprep.subr.bf16.mxu0 %v8398
        %9542 = vmatpush1.bf16.msra.mxu0 %v8397
        %9543 = vmatprep.subr.bf16.mxu0 %v8406
        %9544 = vmatpush1.bf16.msra.mxu0 %v8405
        %9545 = vmatprep.subr.bf16.mxu0 %v8414
        %9546 = vmatpush1.bf16.msra.mxu0 %v8413
        %9547 = vmatprep.subr.bf16.mxu0 %v8422
        %9548 = vmatpush1.bf16.msra.mxu0 %v8421
        %9549 = vmatprep.subr.bf16.mxu0 %v8430
        %9550 = vmatpush1.bf16.msra.mxu0 %v8429
        %9551 = vmatprep.subr.bf16.mxu0 %v8438
        %9552 = vmatpush1.bf16.msra.mxu0 %v8437
        %9553 = vmatprep.subr.bf16.mxu0 %v8446
        %9554 = vmatpush1.bf16.msra.mxu0 %v8445
        %9555 = vmatprep.subr.bf16.mxu0 %v8454
        %9556 = vmatpush1.bf16.msra.mxu0 %v8453
        %9557 = vmatprep.subr.bf16.mxu0 %v8462
        %9558 = vmatpush1.bf16.msra.mxu0 %v8461
        %9559 = vmatprep.mubr.bf16.mxu0 %v6242
        %9560 = vmatmul.mubr.bf16.gmra.mrb[0].mxu0 %v6241
        %v9561 = vpop.f32.mrb[0].mxu0
        %v9562 = vadd.f32 %v6774, %v9561
        %v9563 = vpop.f32.mrb[0].mxu0
        %v9564 = vadd.f32 %v6778, %v9563
        %v9565 = vpop.f32.mrb[0].mxu0
        %v9566 = vpop.f32.mrb[0].mxu0
        %9567 = vdwg.mxu0
        %9568 = vmatprep.subr.bf16.mxu0 %v8470
        %9569 = vmatpush1.bf16.msra.mxu0 %v8469
        %9570 = vmatprep.subr.bf16.mxu0 %v8478
        %9571 = vmatpush1.bf16.msra.mxu0 %v8477
        %9572 = vmatprep.subr.bf16.mxu0 %v8486
        %9573 = vmatpush1.bf16.msra.mxu0 %v8485
        %9574 = vmatprep.subr.bf16.mxu0 %v8494
        %9575 = vmatpush1.bf16.msra.mxu0 %v8493
        %9576 = vmatprep.subr.bf16.mxu0 %v8502
        %9577 = vmatpush1.bf16.msra.mxu0 %v8501
        %9578 = vmatprep.subr.bf16.mxu0 %v8510
        %9579 = vmatpush1.bf16.msra.mxu0 %v8509
        %9580 = vmatprep.subr.bf16.mxu0 %v8518
        %9581 = vmatpush1.bf16.msra.mxu0 %v8517
        %9582 = vmatprep.subr.bf16.mxu0 %v8526
        %9583 = vmatpush1.bf16.msra.mxu0 %v8525
        %9584 = vmatprep.subr.bf16.mxu0 %v8534
        %9585 = vmatpush1.bf16.msra.mxu0 %v8533
        %9586 = vmatprep.subr.bf16.mxu0 %v8542
        %9587 = vmatpush1.bf16.msra.mxu0 %v8541
        %9588 = vmatprep.subr.bf16.mxu0 %v8550
        %9589 = vmatpush1.bf16.msra.mxu0 %v8549
        %9590 = vmatprep.subr.bf16.mxu0 %v8558
        %9591 = vmatpush1.bf16.msra.mxu0 %v8557
        %9592 = vmatprep.subr.bf16.mxu0 %v8566
        %9593 = vmatpush1.bf16.msra.mxu0 %v8565
        %9594 = vmatprep.subr.bf16.mxu0 %v8574
        %9595 = vmatpush1.bf16.msra.mxu0 %v8573
        %9596 = vmatprep.subr.bf16.mxu0 %v8582
        %9597 = vmatpush1.bf16.msra.mxu0 %v8581
        %9598 = vmatprep.subr.bf16.mxu0 %v8590
        %9599 = vmatpush1.bf16.msra.mxu0 %v8589
        %9600 = vmatprep.mubr.bf16.mxu0 %v6244
        %9601 = vmatmul.mubr.bf16.gmra.mrb[0].mxu0 %v6243
        %v9602 = vpop.f32.mrb[0].mxu0
        %v9603 = vadd.f32 %v9562, %v9602
        %v9604 = vpop.f32.mrb[0].mxu0
        %v9605 = vadd.f32 %v9564, %v9604
        %v9606 = vpop.f32.mrb[0].mxu0
        %v9607 = vpop.f32.mrb[0].mxu0
        %9608 = vdwg.mxu0
        %9609 = vmatprep.subr.bf16.mxu0 %v8598
        %9610 = vmatpush1.bf16.msra.mxu0 %v8597
        %9611 = vmatprep.subr.bf16.mxu0 %v8606
        %9612 = vmatpush1.bf16.msra.mxu0 %v8605
        %9613 = vmatprep.subr.bf16.mxu0 %v8614
        %9614 = vmatpush1.bf16.msra.mxu0 %v8613
        %9615 = vmatprep.subr.bf16.mxu0 %v8622
        %9616 = vmatpush1.bf16.msra.mxu0 %v8621
        %9617 = vmatprep.subr.bf16.mxu0 %v8630
        %9618 = vmatpush1.bf16.msra.mxu0 %v8629
        %9619 = vmatprep.subr.bf16.mxu0 %v8638
        %9620 = vmatpush1.bf16.msra.mxu0 %v8637
        %9621 = vmatprep.subr.bf16.mxu0 %v8646
        %9622 = vmatpush1.bf16.msra.mxu0 %v8645
        %9623 = vmatprep.subr.bf16.mxu0 %v8654
        %9624 = vmatpush1.bf16.msra.mxu0 %v8653
        %9625 = vmatprep.subr.bf16.mxu0 %v8662
        %9626 = vmatpush1.bf16.msra.mxu0 %v8661
        %9627 = vmatprep.subr.bf16.mxu0 %v8670
        %9628 = vmatpush1.bf16.msra.mxu0 %v8669
        %9629 = vmatprep.subr.bf16.mxu0 %v8678
        %9630 = vmatpush1.bf16.msra.mxu0 %v8677
        %9631 = vmatprep.subr.bf16.mxu0 %v8686
        %9632 = vmatpush1.bf16.msra.mxu0 %v8685
        %9633 = vmatprep.subr.bf16.mxu0 %v8694
        %9634 = vmatpush1.bf16.msra.mxu0 %v8693
        %9635 = vmatprep.subr.bf16.mxu0 %v8702
        %9636 = vmatpush1.bf16.msra.mxu0 %v8701
        %9637 = vmatprep.subr.bf16.mxu0 %v8710
        %9638 = vmatpush1.bf16.msra.mxu0 %v8709
        %9639 = vmatprep.subr.bf16.mxu0 %v8718
        %9640 = vmatpush1.bf16.msra.mxu0 %v8717
        %9641 = vmatprep.mubr.bf16.mxu0 %v6246
        %9642 = vmatmul.mubr.bf16.gmra.mrb[0].mxu0 %v6245
        %v9643 = vpop.f32.mrb[0].mxu0
        %v9644 = vadd.f32 %v9603, %v9643
        %v9645 = vpop.f32.mrb[0].mxu0
        %v9646 = vadd.f32 %v9605, %v9645
        %v9647 = vpop.f32.mrb[0].mxu0
        %v9648 = vpop.f32.mrb[0].mxu0
        %9649 = vdwg.mxu0
        %9650 = vmatprep.subr.bf16.mxu0 %v8726
        %9651 = vmatpush1.bf16.msra.mxu0 %v8725
        %9652 = vmatprep.subr.bf16.mxu0 %v8734
        %9653 = vmatpush1.bf16.msra.mxu0 %v8733
        %9654 = vmatprep.subr.bf16.mxu0 %v8742
        %9655 = vmatpush1.bf16.msra.mxu0 %v8741
        %9656 = vmatprep.subr.bf16.mxu0 %v8750
        %9657 = vmatpush1.bf16.msra.mxu0 %v8749
        %9658 = vmatprep.subr.bf16.mxu0 %v8758
        %9659 = vmatpush1.bf16.msra.mxu0 %v8757
        %9660 = vmatprep.subr.bf16.mxu0 %v8766
        %9661 = vmatpush1.bf16.msra.mxu0 %v8765
        %9662 = vmatprep.subr.bf16.mxu0 %v8774
        %9663 = vmatpush1.bf16.msra.mxu0 %v8773
        %9664 = vmatprep.subr.bf16.mxu0 %v8782
        %9665 = vmatpush1.bf16.msra.mxu0 %v8781
        %9666 = vmatprep.subr.bf16.mxu0 %v8790
        %9667 = vmatpush1.bf16.msra.mxu0 %v8789
        %9668 = vmatprep.subr.bf16.mxu0 %v8798
        %9669 = vmatpush1.bf16.msra.mxu0 %v8797
        %9670 = vmatprep.subr.bf16.mxu0 %v8806
        %9671 = vmatpush1.bf16.msra.mxu0 %v8805
        %9672 = vmatprep.subr.bf16.mxu0 %v8814
        %9673 = vmatpush1.bf16.msra.mxu0 %v8813
        %9674 = vmatprep.subr.bf16.mxu0 %v8822
        %9675 = vmatpush1.bf16.msra.mxu0 %v8821
        %9676 = vmatprep.subr.bf16.mxu0 %v8830
        %9677 = vmatpush1.bf16.msra.mxu0 %v8829
        %9678 = vmatprep.subr.bf16.mxu0 %v8838
        %9679 = vmatpush1.bf16.msra.mxu0 %v8837
        %9680 = vmatprep.subr.bf16.mxu0 %v8846
        %9681 = vmatpush1.bf16.msra.mxu0 %v8845
        %9682 = vmatprep.mubr.bf16.mxu0 %v6248
        %9683 = vmatmul.mubr.bf16.gmra.mrb[0].mxu0 %v6247
        %v9684 = vpop.f32.mrb[0].mxu0
        %v9685 = vadd.f32 %v9644, %v9684
        %v9686 = vpop.f32.mrb[0].mxu0
        %v9687 = vadd.f32 %v9646, %v9686
        %v9688 = vpop.f32.mrb[0].mxu0
        %v9689 = vpop.f32.mrb[0].mxu0
        %9690 = vdwg.mxu0
        %9691 = vmatprep.subr.bf16.mxu0 %v8344
        %9692 = vmatpush1.bf16.msra.mxu0 %v8343
        %9693 = vmatprep.subr.bf16.mxu0 %v8352
        %9694 = vmatpush1.bf16.msra.mxu0 %v8351
        %9695 = vmatprep.subr.bf16.mxu0 %v8360
        %9696 = vmatpush1.bf16.msra.mxu0 %v8359
        %9697 = vmatprep.subr.bf16.mxu0 %v8368
        %9698 = vmatpush1.bf16.msra.mxu0 %v8367
        %9699 = vmatprep.subr.bf16.mxu0 %v8376
        %9700 = vmatpush1.bf16.msra.mxu0 %v8375
        %9701 = vmatprep.subr.bf16.mxu0 %v8384
        %9702 = vmatpush1.bf16.msra.mxu0 %v8383
        %9703 = vmatprep.subr.bf16.mxu0 %v8392
        %9704 = vmatpush1.bf16.msra.mxu0 %v8391
        %9705 = vmatprep.subr.bf16.mxu0 %v8400
        %9706 = vmatpush1.bf16.msra.mxu0 %v8399
        %9707 = vmatprep.subr.bf16.mxu0 %v8408
        %9708 = vmatpush1.bf16.msra.mxu0 %v8407
        %9709 = vmatprep.subr.bf16.mxu0 %v8416
        %9710 = vmatpush1.bf16.msra.mxu0 %v8415
        %9711 = vmatprep.subr.bf16.mxu0 %v8424
        %9712 = vmatpush1.bf16.msra.mxu0 %v8423
        %9713 = vmatprep.subr.bf16.mxu0 %v8432
        %9714 = vmatpush1.bf16.msra.mxu0 %v8431
        %9715 = vmatprep.subr.bf16.mxu0 %v8440
        %9716 = vmatpush1.bf16.msra.mxu0 %v8439
        %9717 = vmatprep.subr.bf16.mxu0 %v8448
        %9718 = vmatpush1.bf16.msra.mxu0 %v8447
        %9719 = vmatprep.subr.bf16.mxu0 %v8456
        %9720 = vmatpush1.bf16.msra.mxu0 %v8455
        %9721 = vmatprep.subr.bf16.mxu0 %v8464
        %9722 = vmatpush1.bf16.msra.mxu0 %v8463
        %9723 = vmatprep.mubr.bf16.mxu0 %v6242
        %9724 = vmatmul.mubr.bf16.gmra.mrb[0].mxu0 %v6241
        %v9725 = vpop.f32.mrb[0].mxu0
        %v9726 = vadd.f32 %v6782, %v9725
        %v9727 = vpop.f32.mrb[0].mxu0
        %v9728 = vadd.f32 %v6786, %v9727
        %v9729 = vpop.f32.mrb[0].mxu0
        %v9730 = vpop.f32.mrb[0].mxu0
        %9731 = vdwg.mxu0
        %9732 = vmatprep.subr.bf16.mxu0 %v8472
        %9733 = vmatpush1.bf16.msra.mxu0 %v8471
        %9734 = vmatprep.subr.bf16.mxu0 %v8480
        %9735 = vmatpush1.bf16.msra.mxu0 %v8479
        %9736 = vmatprep.subr.bf16.mxu0 %v8488
        %9737 = vmatpush1.bf16.msra.mxu0 %v8487
        %9738 = vmatprep.subr.bf16.mxu0 %v8496
        %9739 = vmatpush1.bf16.msra.mxu0 %v8495
        %9740 = vmatprep.subr.bf16.mxu0 %v8504
        %9741 = vmatpush1.bf16.msra.mxu0 %v8503
        %9742 = vmatprep.subr.bf16.mxu0 %v8512
        %9743 = vmatpush1.bf16.msra.mxu0 %v8511
        %9744 = vmatprep.subr.bf16.mxu0 %v8520
        %9745 = vmatpush1.bf16.msra.mxu0 %v8519
        %9746 = vmatprep.subr.bf16.mxu0 %v8528
        %9747 = vmatpush1.bf16.msra.mxu0 %v8527
        %9748 = vmatprep.subr.bf16.mxu0 %v8536
        %9749 = vmatpush1.bf16.msra.mxu0 %v8535
        %9750 = vmatprep.subr.bf16.mxu0 %v8544
        %9751 = vmatpush1.bf16.msra.mxu0 %v8543
        %9752 = vmatprep.subr.bf16.mxu0 %v8552
        %9753 = vmatpush1.bf16.msra.mxu0 %v8551
        %9754 = vmatprep.subr.bf16.mxu0 %v8560
        %9755 = vmatpush1.bf16.msra.mxu0 %v8559
        %9756 = vmatprep.subr.bf16.mxu0 %v8568
        %9757 = vmatpush1.bf16.msra.mxu0 %v8567
        %9758 = vmatprep.subr.bf16.mxu0 %v8576
        %9759 = vmatpush1.bf16.msra.mxu0 %v8575
        %9760 = vmatprep.subr.bf16.mxu0 %v8584
        %9761 = vmatpush1.bf16.msra.mxu0 %v8583
        %9762 = vmatprep.subr.bf16.mxu0 %v8592
        %9763 = vmatpush1.bf16.msra.mxu0 %v8591
        %9764 = vmatprep.mubr.bf16.mxu0 %v6244
        %9765 = vmatmul.mubr.bf16.gmra.mrb[0].mxu0 %v6243
        %v9766 = vpop.f32.mrb[0].mxu0
        %v9767 = vadd.f32 %v9726, %v9766
        %v9768 = vpop.f32.mrb[0].mxu0
        %v9769 = vadd.f32 %v9728, %v9768
        %v9770 = vpop.f32.mrb[0].mxu0
        %v9771 = vpop.f32.mrb[0].mxu0
        %9772 = vdwg.mxu0
        %9773 = vmatprep.subr.bf16.mxu0 %v8600
        %9774 = vmatpush1.bf16.msra.mxu0 %v8599
        %9775 = vmatprep.subr.bf16.mxu0 %v8608
        %9776 = vmatpush1.bf16.msra.mxu0 %v8607
        %9777 = vmatprep.subr.bf16.mxu0 %v8616
        %9778 = vmatpush1.bf16.msra.mxu0 %v8615
        %9779 = vmatprep.subr.bf16.mxu0 %v8624
        %9780 = vmatpush1.bf16.msra.mxu0 %v8623
        %9781 = vmatprep.subr.bf16.mxu0 %v8632
        %9782 = vmatpush1.bf16.msra.mxu0 %v8631
        %9783 = vmatprep.subr.bf16.mxu0 %v8640
        %9784 = vmatpush1.bf16.msra.mxu0 %v8639
        %9785 = vmatprep.subr.bf16.mxu0 %v8648
        %9786 = vmatpush1.bf16.msra.mxu0 %v8647
        %9787 = vmatprep.subr.bf16.mxu0 %v8656
        %9788 = vmatpush1.bf16.msra.mxu0 %v8655
        %9789 = vmatprep.subr.bf16.mxu0 %v8664
        %9790 = vmatpush1.bf16.msra.mxu0 %v8663
        %9791 = vmatprep.subr.bf16.mxu0 %v8672
        %9792 = vmatpush1.bf16.msra.mxu0 %v8671
        %9793 = vmatprep.subr.bf16.mxu0 %v8680
        %9794 = vmatpush1.bf16.msra.mxu0 %v8679
        %9795 = vmatprep.subr.bf16.mxu0 %v8688
        %9796 = vmatpush1.bf16.msra.mxu0 %v8687
        %9797 = vmatprep.subr.bf16.mxu0 %v8696
        %9798 = vmatpush1.bf16.msra.mxu0 %v8695
        %9799 = vmatprep.subr.bf16.mxu0 %v8704
        %9800 = vmatpush1.bf16.msra.mxu0 %v8703
        %9801 = vmatprep.subr.bf16.mxu0 %v8712
        %9802 = vmatpush1.bf16.msra.mxu0 %v8711
        %9803 = vmatprep.subr.bf16.mxu0 %v8720
        %9804 = vmatpush1.bf16.msra.mxu0 %v8719
        %9805 = vmatprep.mubr.bf16.mxu0 %v6246
        %9806 = vmatmul.mubr.bf16.gmra.mrb[0].mxu0 %v6245
        %v9807 = vpop.f32.mrb[0].mxu0
        %v9808 = vadd.f32 %v9767, %v9807
        %v9809 = vpop.f32.mrb[0].mxu0
        %v9810 = vadd.f32 %v9769, %v9809
        %v9811 = vpop.f32.mrb[0].mxu0
        %v9812 = vpop.f32.mrb[0].mxu0
        %9813 = vdwg.mxu0
        %9814 = vmatprep.subr.bf16.mxu0 %v8728
        %9815 = vmatpush1.bf16.msra.mxu0 %v8727
        %9816 = vmatprep.subr.bf16.mxu0 %v8736
        %9817 = vmatpush1.bf16.msra.mxu0 %v8735
        %9818 = vmatprep.subr.bf16.mxu0 %v8744
        %9819 = vmatpush1.bf16.msra.mxu0 %v8743
        %9820 = vmatprep.subr.bf16.mxu0 %v8752
        %9821 = vmatpush1.bf16.msra.mxu0 %v8751
        %9822 = vmatprep.subr.bf16.mxu0 %v8760
        %9823 = vmatpush1.bf16.msra.mxu0 %v8759
        %9824 = vmatprep.subr.bf16.mxu0 %v8768
        %9825 = vmatpush1.bf16.msra.mxu0 %v8767
        %9826 = vmatprep.subr.bf16.mxu0 %v8776
        %9827 = vmatpush1.bf16.msra.mxu0 %v8775
        %9828 = vmatprep.subr.bf16.mxu0 %v8784
        %9829 = vmatpush1.bf16.msra.mxu0 %v8783
        %9830 = vmatprep.subr.bf16.mxu0 %v8792
        %9831 = vmatpush1.bf16.msra.mxu0 %v8791
        %9832 = vmatprep.subr.bf16.mxu0 %v8800
        %9833 = vmatpush1.bf16.msra.mxu0 %v8799
        %9834 = vmatprep.subr.bf16.mxu0 %v8808
        %9835 = vmatpush1.bf16.msra.mxu0 %v8807
        %9836 = vmatprep.subr.bf16.mxu0 %v8816
        %9837 = vmatpush1.bf16.msra.mxu0 %v8815
        %9838 = vmatprep.subr.bf16.mxu0 %v8824
        %9839 = vmatpush1.bf16.msra.mxu0 %v8823
        %9840 = vmatprep.subr.bf16.mxu0 %v8832
        %9841 = vmatpush1.bf16.msra.mxu0 %v8831
        %9842 = vmatprep.subr.bf16.mxu0 %v8840
        %9843 = vmatpush1.bf16.msra.mxu0 %v8839
        %9844 = vmatprep.subr.bf16.mxu0 %v8848
        %9845 = vmatpush1.bf16.msra.mxu0 %v8847
        %9846 = vmatprep.mubr.bf16.mxu0 %v6248
        %9847 = vmatmul.mubr.bf16.gmra.mrb[0].mxu0 %v6247
        %v9848 = vpop.f32.mrb[0].mxu0
        %v9849 = vadd.f32 %v9808, %v9848
        %v9850 = vpop.f32.mrb[0].mxu0
        %v9851 = vadd.f32 %v9810, %v9850
        %v9852 = vpop.f32.mrb[0].mxu0
        %v9853 = vpop.f32.mrb[0].mxu0
        %9854 = vdwg.mxu0
        %9855 = vmatprep.subr.bf16.mxu0 %v8346
        %9856 = vmatpush1.bf16.msra.mxu0 %v8345
        %9857 = vmatprep.subr.bf16.mxu0 %v8354
        %9858 = vmatpush1.bf16.msra.mxu0 %v8353
        %9859 = vmatprep.subr.bf16.mxu0 %v8362
        %9860 = vmatpush1.bf16.msra.mxu0 %v8361
        %9861 = vmatprep.subr.bf16.mxu0 %v8370
        %9862 = vmatpush1.bf16.msra.mxu0 %v8369
        %9863 = vmatprep.subr.bf16.mxu0 %v8378
        %9864 = vmatpush1.bf16.msra.mxu0 %v8377
        %9865 = vmatprep.subr.bf16.mxu0 %v8386
        %9866 = vmatpush1.bf16.msra.mxu0 %v8385
        %9867 = vmatprep.subr.bf16.mxu0 %v8394
        %9868 = vmatpush1.bf16.msra.mxu0 %v8393
        %9869 = vmatprep.subr.bf16.mxu0 %v8402
        %9870 = vmatpush1.bf16.msra.mxu0 %v8401
        %9871 = vmatprep.subr.bf16.mxu0 %v8410
        %9872 = vmatpush1.bf16.msra.mxu0 %v8409
        %9873 = vmatprep.subr.bf16.mxu0 %v8418
        %9874 = vmatpush1.bf16.msra.mxu0 %v8417
        %9875 = vmatprep.subr.bf16.mxu0 %v8426
        %9876 = vmatpush1.bf16.msra.mxu0 %v8425
        %9877 = vmatprep.subr.bf16.mxu0 %v8434
        %9878 = vmatpush1.bf16.msra.mxu0 %v8433
        %9879 = vmatprep.subr.bf16.mxu0 %v8442
        %9880 = vmatpush1.bf16.msra.mxu0 %v8441
        %9881 = vmatprep.subr.bf16.mxu0 %v8450
        %9882 = vmatpush1.bf16.msra.mxu0 %v8449
        %9883 = vmatprep.subr.bf16.mxu0 %v8458
        %9884 = vmatpush1.bf16.msra.mxu0 %v8457
        %9885 = vmatprep.subr.bf16.mxu0 %v8466
        %9886 = vmatpush1.bf16.msra.mxu0 %v8465
        %9887 = vmatprep.mubr.bf16.mxu0 %v6242
        %9888 = vmatmul.mubr.bf16.gmra.mrb[0].mxu0 %v6241
        %v9889 = vpop.f32.mrb[0].mxu0
        %v9890 = vadd.f32 %v6790, %v9889
        %v9891 = vpop.f32.mrb[0].mxu0
        %v9892 = vadd.f32 %v6794, %v9891
        %v9893 = vpop.f32.mrb[0].mxu0
        %v9894 = vpop.f32.mrb[0].mxu0
        %9895 = vdwg.mxu0
        %9896 = vmatprep.subr.bf16.mxu0 %v8474
        %9897 = vmatpush1.bf16.msra.mxu0 %v8473
        %9898 = vmatprep.subr.bf16.mxu0 %v8482
        %9899 = vmatpush1.bf16.msra.mxu0 %v8481
        %9900 = vmatprep.subr.bf16.mxu0 %v8490
        %9901 = vmatpush1.bf16.msra.mxu0 %v8489
        %9902 = vmatprep.subr.bf16.mxu0 %v8498
        %9903 = vmatpush1.bf16.msra.mxu0 %v8497
        %9904 = vmatprep.subr.bf16.mxu0 %v8506
        %9905 = vmatpush1.bf16.msra.mxu0 %v8505
        %9906 = vmatprep.subr.bf16.mxu0 %v8514
        %9907 = vmatpush1.bf16.msra.mxu0 %v8513
        %9908 = vmatprep.subr.bf16.mxu0 %v8522
        %9909 = vmatpush1.bf16.msra.mxu0 %v8521
        %9910 = vmatprep.subr.bf16.mxu0 %v8530
        %9911 = vmatpush1.bf16.msra.mxu0 %v8529
        %9912 = vmatprep.subr.bf16.mxu0 %v8538
        %9913 = vmatpush1.bf16.msra.mxu0 %v8537
        %9914 = vmatprep.subr.bf16.mxu0 %v8546
        %9915 = vmatpush1.bf16.msra.mxu0 %v8545
        %9916 = vmatprep.subr.bf16.mxu0 %v8554
        %9917 = vmatpush1.bf16.msra.mxu0 %v8553
        %9918 = vmatprep.subr.bf16.mxu0 %v8562
        %9919 = vmatpush1.bf16.msra.mxu0 %v8561
        %9920 = vmatprep.subr.bf16.mxu0 %v8570
        %9921 = vmatpush1.bf16.msra.mxu0 %v8569
        %9922 = vmatprep.subr.bf16.mxu0 %v8578
        %9923 = vmatpush1.bf16.msra.mxu0 %v8577
        %9924 = vmatprep.subr.bf16.mxu0 %v8586
        %9925 = vmatpush1.bf16.msra.mxu0 %v8585
        %9926 = vmatprep.subr.bf16.mxu0 %v8594
        %9927 = vmatpush1.bf16.msra.mxu0 %v8593
        %9928 = vmatprep.mubr.bf16.mxu0 %v6244
        %9929 = vmatmul.mubr.bf16.gmra.mrb[0].mxu0 %v6243
        %v9930 = vpop.f32.mrb[0].mxu0
        %v9931 = vadd.f32 %v9890, %v9930
        %v9932 = vpop.f32.mrb[0].mxu0
        %v9933 = vadd.f32 %v9892, %v9932
        %v9934 = vpop.f32.mrb[0].mxu0
        %v9935 = vpop.f32.mrb[0].mxu0
        %9936 = vdwg.mxu0
        %9937 = vmatprep.subr.bf16.mxu0 %v8602
        %9938 = vmatpush1.bf16.msra.mxu0 %v8601
        %9939 = vmatprep.subr.bf16.mxu0 %v8610
        %9940 = vmatpush1.bf16.msra.mxu0 %v8609
        %9941 = vmatprep.subr.bf16.mxu0 %v8618
        %9942 = vmatpush1.bf16.msra.mxu0 %v8617
        %9943 = vmatprep.subr.bf16.mxu0 %v8626
        %9944 = vmatpush1.bf16.msra.mxu0 %v8625
        %9945 = vmatprep.subr.bf16.mxu0 %v8634
        %9946 = vmatpush1.bf16.msra.mxu0 %v8633
        %9947 = vmatprep.subr.bf16.mxu0 %v8642
        %9948 = vmatpush1.bf16.msra.mxu0 %v8641
        %9949 = vmatprep.subr.bf16.mxu0 %v8650
        %9950 = vmatpush1.bf16.msra.mxu0 %v8649
        %9951 = vmatprep.subr.bf16.mxu0 %v8658
        %9952 = vmatpush1.bf16.msra.mxu0 %v8657
        %9953 = vmatprep.subr.bf16.mxu0 %v8666
        %9954 = vmatpush1.bf16.msra.mxu0 %v8665
        %9955 = vmatprep.subr.bf16.mxu0 %v8674
        %9956 = vmatpush1.bf16.msra.mxu0 %v8673
        %9957 = vmatprep.subr.bf16.mxu0 %v8682
        %9958 = vmatpush1.bf16.msra.mxu0 %v8681
        %9959 = vmatprep.subr.bf16.mxu0 %v8690
        %9960 = vmatpush1.bf16.msra.mxu0 %v8689
        %9961 = vmatprep.subr.bf16.mxu0 %v8698
        %9962 = vmatpush1.bf16.msra.mxu0 %v8697
        %9963 = vmatprep.subr.bf16.mxu0 %v8706
        %9964 = vmatpush1.bf16.msra.mxu0 %v8705
        %9965 = vmatprep.subr.bf16.mxu0 %v8714
        %9966 = vmatpush1.bf16.msra.mxu0 %v8713
        %9967 = vmatprep.subr.bf16.mxu0 %v8722
        %9968 = vmatpush1.bf16.msra.mxu0 %v8721
        %9969 = vmatprep.mubr.bf16.mxu0 %v6246
        %9970 = vmatmul.mubr.bf16.gmra.mrb[0].mxu0 %v6245
        %v9971 = vpop.f32.mrb[0].mxu0
        %v9972 = vadd.f32 %v9931, %v9971
        %v9973 = vpop.f32.mrb[0].mxu0
        %v9974 = vadd.f32 %v9933, %v9973
        %v9975 = vpop.f32.mrb[0].mxu0
        %v9976 = vpop.f32.mrb[0].mxu0
        %9977 = vdwg.mxu0
        %9978 = vmatprep.subr.bf16.mxu0 %v8730
        %9979 = vmatpush1.bf16.msra.mxu0 %v8729
        %9980 = vmatprep.subr.bf16.mxu0 %v8738
        %9981 = vmatpush1.bf16.msra.mxu0 %v8737
        %9982 = vmatprep.subr.bf16.mxu0 %v8746
        %9983 = vmatpush1.bf16.msra.mxu0 %v8745
        %9984 = vmatprep.subr.bf16.mxu0 %v8754
        %9985 = vmatpush1.bf16.msra.mxu0 %v8753
        %9986 = vmatprep.subr.bf16.mxu0 %v8762
        %9987 = vmatpush1.bf16.msra.mxu0 %v8761
        %9988 = vmatprep.subr.bf16.mxu0 %v8770
        %9989 = vmatpush1.bf16.msra.mxu0 %v8769
        %9990 = vmatprep.subr.bf16.mxu0 %v8778
        %9991 = vmatpush1.bf16.msra.mxu0 %v8777
        %9992 = vmatprep.subr.bf16.mxu0 %v8786
        %9993 = vmatpush1.bf16.msra.mxu0 %v8785
        %9994 = vmatprep.subr.bf16.mxu0 %v8794
        %9995 = vmatpush1.bf16.msra.mxu0 %v8793
        %9996 = vmatprep.subr.bf16.mxu0 %v8802
        %9997 = vmatpush1.bf16.msra.mxu0 %v8801
        %9998 = vmatprep.subr.bf16.mxu0 %v8810
        %9999 = vmatpush1.bf16.msra.mxu0 %v8809
        %10000 = vmatprep.subr.bf16.mxu0 %v8818
        %10001 = vmatpush1.bf16.msra.mxu0 %v8817
        %10002 = vmatprep.subr.bf16.mxu0 %v8826
        %10003 = vmatpush1.bf16.msra.mxu0 %v8825
        %10004 = vmatprep.subr.bf16.mxu0 %v8834
        %10005 = vmatpush1.bf16.msra.mxu0 %v8833
        %10006 = vmatprep.subr.bf16.mxu0 %v8842
        %10007 = vmatpush1.bf16.msra.mxu0 %v8841
        %10008 = vmatprep.subr.bf16.mxu0 %v8850
        %10009 = vmatpush1.bf16.msra.mxu0 %v8849
        %10010 = vmatprep.mubr.bf16.mxu0 %v6248
        %10011 = vmatmul.mubr.bf16.gmra.mrb[0].mxu0 %v6247
        %v10012 = vpop.f32.mrb[0].mxu0
        %v10013 = vadd.f32 %v9972, %v10012
        %v10014 = vpop.f32.mrb[0].mxu0
        %v10015 = vadd.f32 %v9974, %v10014
        %v10016 = vpop.f32.mrb[0].mxu0
        %v10017 = vpop.f32.mrb[0].mxu0
        %10018 = vdwg.mxu0
        %v10019 = vtanh.pop %v9849
        %v10020 = vtanh.pop %v9851
        %v10021 = vtanh.pop %v10013
        %v10022 = vtanh.pop %v10015
        %v10023 = vmul.f32 %v10019, 1.442695
        %v10024 = vpow.pop %v10023
        %v10025 = vmul.f32 %v10020, 1.442695
        %v10026 = vpow.pop %v10025
        %v10027 = vmul.f32 %v10021, 1.442695
        %v10028 = vpow.pop %v10027
        %v10029 = vmul.f32 %v10022, 1.442695
        %v10030 = vpow.pop %v10029
        %v10031 = vmul.f32 %v533, %v10024
        %v10032 = vmul.f32 %v534, %v10026
        %v10033 = vmul.f32 %v535, %v10028
        %v10034 = vmul.f32 %v536, %v10030
        %v10035 = vadd.f32 %v10031, %v9521
        %v10036 = vadd.f32 %v10032, %v9523
        %v10037 = vadd.f32 %v10033, %v9685
        %v10038 = vadd.f32 %v10034, %v9687
        %10039 = vst [vmem:[#allocation11] sm:$0xff] %v10035
        %10040 = vst [vmem:[#allocation11 + $0x8] sm:$0xff] %v10036
        %10041 = vst [vmem:[#allocation11 + $0x10] sm:$0xff] %v10037
        %10042 = vst [vmem:[#allocation11 + $0x18] sm:$0xff] %v10038
        %10043 = vst [vmem:[#allocation11 + $0x20] sm:$0xff] %v529
        %10044 = vst [vmem:[#allocation11 + $0x28] sm:$0xff] %v530
        %10045 = vst [vmem:[#allocation11 + $0x30] sm:$0xff] %v531
        %10046 = vst [vmem:[#allocation11 + $0x38] sm:$0xff] %v532
        %v10047 = vld [vmem:[#allocation12] sm:$0xff]
        %v10048 = vadd.f32 %v10019, %v10020
        %v10049 = vadd.f32 %v10048, %v10021
        %v10050 = vadd.f32 %v10049, %v10022
        %10051 = vadd.xlane.f32.xlu0 %v10050
        %v10052 = vpop.xlane.xlu0 %10051
        %v10053 = vadd.f32 %v10047, %v10052
        %vm10054 = vcmask 7168
        %10055 = vst.msk [vmem:[#allocation12] sm:$0xff] %vm10054, %v10053
        // Predicated region
        $region81: #{_lambda_.1} parent=51 // pred_check
          %p10056 = pneg %p236
        $region82: #{_lambda_.1} parent=51 // pred_check_branch
          %10058 = sbr.rel (%p10056) target = $region84
        $region83: #{_lambda_.1} parent=51 // pred_region
          %s10060 = ssub.s32 1024, 1024
          %10061 = vsyncadd [#allocation4], %s10060
          %s10063 = sshll.u32 [#allocation11], 4
          %s10064 = int_to_ptr.vmem [resolvable:$true] %s10063
          %10066 = dma.vmem_to_hbm [thread:$0]  %s10064, 1024, %s8, [#allocation4]
        $region84: #{_lambda_.1} parent=51 // pred_fallthru
          _
        // Predicated region
        $region85: #{_lambda_.1} parent=51 // pred_check
          %p10067 = pneg %p257
        $region86: #{_lambda_.1} parent=51 // pred_check_branch
          %10069 = sbr.rel (%p10067) target = $region88
        $region87: #{_lambda_.1} parent=51 // pred_region
          %s10071 = ssub.s32 128, 128
          %10072 = vsyncadd [#allocation13], %s10071
          %s10074 = sshll.u32 [#allocation12], 4
          %s10075 = int_to_ptr.vmem [resolvable:$true] %s10074
          %10077 = dma.vmem_to_hbm [thread:$0]  %s10075, 128, %s9, [#allocation13]
        $region88: #{_lambda_.1} parent=51 // pred_fallthru
          _
        // Predicated region
        $region89: #{_lambda_.1} parent=51 // pred_check
          %p10078 = pneg %p236
        $region90: #{_lambda_.1} parent=51 // pred_check_branch
          %10080 = sbr.rel (%p10078) target = $region92
        $region91: #{_lambda_.1} parent=51 // pred_region
          %10081 = dma.done [#allocation4], 1024
        $region92: #{_lambda_.1} parent=51 // pred_fallthru
          _
        // Predicated region
        $region93: #{_lambda_.1} parent=51 // pred_check
          %p10082 = pneg %p257
        $region94: #{_lambda_.1} parent=51 // pred_check_branch
          %10084 = sbr.rel (%p10082) target = $region96
        $region95: #{_lambda_.1} parent=51 // pred_region
          %10085 = dma.done [#allocation13], 128
        $region96: #{_lambda_.1} parent=51 // pred_fallthru
          _
      $region52: #{_lambda_.1} parent=5 // pred_fallthru
        _
      %p10086 = scmp.le.s32.totalorder 2, %s20
      // Predicated region
      $region97: #{_lambda_.1} parent=5 // pred_check
        %p10087 = pneg %p10086
      $region98: #{_lambda_.1} parent=5 // pred_check_branch
        %10089 = sbr.rel (%p10087) target = $region100
      $region99: #{_lambda_.1} parent=5 // pred_region
        %s10090 = ssub.s32 %s20, 2
      $region100: #{_lambda_.1} parent=5 // pred_fallthru
        _
    $region6: #{_lambda_.1} parent=1 // loop_footer
      %s24 = sadd.s32 1, %s20
    $region7: #{_lambda_.1} parent=1 // loop_footer_branch
      %19 = sbr.rel target = $region3
    $region8: #{_lambda_.1} parent=1 // loop_exit
      _
    %10091 = vsyncpa [#allocation3], 1
    %s10092 = scalar_lea.sflag [#allocation3], 1
    %10093 = vsyncpa %s10092, 1
    %10094 = vsyncpa [#allocation6], 1
    %10095 = vsyncpa [#allocation4], 1
    %s10096 = scalar_lea.sflag [#allocation4], 1
    %10097 = vsyncpa %s10096, 1
    %10098 = vsyncpa [#allocation13], 1

</llo_original>
